<compile_context>
chip_gen: v5e
topology: v5e:2x2
jax: 0.10.0
libtpu: 0.0.40
codegen_flags: <defaults>
</compile_context>

<pallas_src>
import functools

import jax
import jax.numpy as jnp
from jax.experimental import pallas as pl
from jax.experimental.pallas import tpu as pltpu

_LN_EPS = 1e-5


def _layer_norm(h, gamma, beta):
    mu = jnp.mean(h, axis=-1, keepdims=True)
    var = jnp.mean((h - mu) ** 2, axis=-1, keepdims=True)
    return (h - mu) * jax.lax.rsqrt(var + _LN_EPS) * gamma + beta


def _mlp_tail(h1, wh_ref, b_ref, g_ref, bt_ref, cdt):
    """build_mlp() tail after the (fused) first Linear.

    h1: [M, H] f32 first-layer pre-activation (bias already added).
    Order: ReLU, LN0, L1, ReLU, LN1, L2, L3, ReLU, LN2, L4  (L2->L3 has no activation,
    exactly as the reference build_mlp constructs it).
    Weight matmuls run with `cdt` operands (bf16 on v6e/v7x); accumulate/elementwise in f32.
    """
    h = jnp.maximum(h1, 0.0)
    h = _layer_norm(h, g_ref[0:1, :], bt_ref[0:1, :])
    h = jnp.dot(h.astype(cdt), wh_ref[0], preferred_element_type=jnp.float32) + b_ref[1:2, :]
    h = jnp.maximum(h, 0.0)
    h = _layer_norm(h, g_ref[1:2, :], bt_ref[1:2, :])
    h = jnp.dot(h.astype(cdt), wh_ref[1], preferred_element_type=jnp.float32) + b_ref[2:3, :]
    h = jnp.dot(h.astype(cdt), wh_ref[2], preferred_element_type=jnp.float32) + b_ref[3:4, :]
    h = jnp.maximum(h, 0.0)
    h = _layer_norm(h, g_ref[2:3, :], bt_ref[2:3, :])
    h = jnp.dot(h.astype(cdt), wh_ref[3], preferred_element_type=jnp.float32) + b_ref[4:5, :]
    return h


def _graphnet_kernel(idx_ref, ea_ref, x_ref,
                     ew0_ref, ewh_ref, eb_ref, eg_ref, ebt_ref,
                     nw0_ref, nwh_ref, nb_ref, ng_ref, nbt_ref,
                     edge_out_ref, x_out_ref,
                     p_cat_ref, acc_ref,
                     *, compute_dtype):
    cdt = compute_dtype
    N, H = x_ref.shape
    TE = ea_ref.shape[0]
    i = pl.program_id(0)

    # ---- once, at the first grid step: per-node projections + accumulator init ----------
    @pl.when(i == 0)
    def _init():
        xc = x_ref[...].astype(cdt)
        # Edge first layer applied per NODE (not per edge):
        #   p_cat[0:N]  = x @ W0e[H:2H]   (sender slice of W0e)
        #   p_cat[N:2N] = x @ W0e[2H:3H]  (receiver slice of W0e)
        p_cat_ref[0:N, :] = jnp.dot(xc, ew0_ref[H:2 * H, :],
                                    preferred_element_type=jnp.float32)
        p_cat_ref[N:2 * N, :] = jnp.dot(xc, ew0_ref[2 * H:3 * H, :],
                                        preferred_element_type=jnp.float32)
        acc_ref[...] = jnp.zeros_like(acc_ref)

    src = idx_ref[0:1, :]                      # [1, TE] int32 (padded edges hold -(N+1))
    dst = idx_ref[1:2, :]                      # [1, TE] int32

    # ---- EdgeBlock on this edge tile: fused "concat + Linear0" ---------------------------
    # One f32 one-hot matmul gathers p_s[src] + p_d[dst] exactly.
    iota_2n = jax.lax.broadcasted_iota(jnp.int32, (2 * N, TE), 0)
    oh_cat_t = jnp.logical_or(iota_2n == src, iota_2n == dst + N).astype(jnp.float32)
    gathered = jax.lax.dot_general(                               # [TE, H]
        oh_cat_t, p_cat_ref[...],
        dimension_numbers=(((0,), (0,)), ((), ())),
        preferred_element_type=jnp.float32)

    ea = ea_ref[...]                                              # [TE, H] f32
    h1 = (jnp.dot(ea.astype(cdt), ew0_ref[0:H, :],
                  preferred_element_type=jnp.float32)
          + gathered + eb_ref[0:1, :])
    e_new = _mlp_tail(h1, ewh_ref, eb_ref, eg_ref, ebt_ref, cdt)  # [TE, H] f32

    # GraphNetBlock edge residual; lane-dense [TE, 128] store.
    edge_out_ref[...] = (ea + e_new).astype(edge_out_ref.dtype)

    # ---- NodeBlock scatter_add fused with the agg slice of the node first layer ---------
    #   acc += onehot(dst)^T @ (e_new @ Wn0[H:2H])  ==  scatter_add(e_new, dst) @ Wn0[H:2H]
    # Padded edges (dst == -(N+1)) produce an all-zero one-hot column -> no pollution.
    m = jnp.dot(e_new.astype(cdt), nw0_ref[H:2 * H, :],
                preferred_element_type=jnp.float32)               # [TE, H]
    iota_n = jax.lax.broadcasted_iota(jnp.int32, (N, TE), 0)
    oh_dst_t = (iota_n == dst).astype(jnp.float32)                # [N, TE]
    acc_ref[...] += jnp.dot(oh_dst_t, m, preferred_element_type=jnp.float32)

    # ---- once, at the last grid step: NodeBlock MLP + node residual ----------------------
    @pl.when(i == pl.num_programs(0) - 1)
    def _node_phase():
        xf = x_ref[...]
        h1n = (jnp.dot(xf.astype(cdt), nw0_ref[0:H, :],
                       preferred_element_type=jnp.float32)
               + acc_ref[...] + nb_ref[0:1, :])
        x_new = _mlp_tail(h1n, nwh_ref, nb_ref, ng_ref, nbt_ref, cdt)
        x_out_ref[...] = (xf + x_new).astype(x_out_ref.dtype)


def graphnet_block_forward(x, edge_attr, edge_index, edge_params, node_params,
                           *, tile_e=256, compute_dtype=jnp.bfloat16,
                           vmem_limit_bytes=32 * 1024 * 1024):
    """Fused GraphNetBlock forward.  Returns (x_out [N,H], edge_attr_out [E,H])."""
    N, H = x.shape
    E = edge_attr.shape[0]
    assert H % 128 == 0, "hidden size must be lane-dense (multiple of 128)"
    assert N % 8 == 0, "node count must be a multiple of 8 (sublane tiling)"
    assert tile_e % 128 == 0

    ew0, ewh, eb, eg, ebt = edge_params
    nw0, nwh, nb, ng, nbt = node_params
    # bf16 MXU operands on v6e/v7x (also halves weight DMA bytes); biases / LN params stay f32.
    ew0 = ew0.astype(compute_dtype)
    ewh = ewh.astype(compute_dtype)
    nw0 = nw0.astype(compute_dtype)
    nwh = nwh.astype(compute_dtype)

    num_tiles = pl.cdiv(E, tile_e)
    e_pad = num_tiles * tile_e
    pad = e_pad - E
    ea_p = jnp.pad(edge_attr, ((0, pad), (0, 0)))
    idx_p = jnp.pad(edge_index.astype(jnp.int32), ((0, 0), (0, pad)),
                    constant_values=-(N + 1))              # sentinel: matches no node

    resident2 = lambda i: (0, 0)
    resident3 = lambda i: (0, 0, 0)
    kernel = functools.partial(_graphnet_kernel, compute_dtype=compute_dtype)

    edge_out_p, x_out = pl.pallas_call(
        kernel,
        grid=(num_tiles,),
        in_specs=[
            pl.BlockSpec((2, tile_e), lambda i: (0, i)),   # edge_index tile  [2, TE]
            pl.BlockSpec((tile_e, H), lambda i: (i, 0)),   # edge_attr tile   [TE, H]
            pl.BlockSpec((N, H), resident2),               # x            (resident)
            pl.BlockSpec((3 * H, H), resident2),           # edge MLP W0  (resident)
            pl.BlockSpec((4, H, H), resident3),            # edge MLP W1..W4
            pl.BlockSpec((5, H), resident2),               # edge MLP biases
            pl.BlockSpec((3, H), resident2),               # edge MLP LN gammas
            pl.BlockSpec((3, H), resident2),               # edge MLP LN betas
            pl.BlockSpec((2 * H, H), resident2),           # node MLP W0
            pl.BlockSpec((4, H, H), resident3),            # node MLP W1..W4
            pl.BlockSpec((5, H), resident2),               # node MLP biases
            pl.BlockSpec((3, H), resident2),               # node MLP LN gammas
            pl.BlockSpec((3, H), resident2),               # node MLP LN betas
        ],
        out_specs=(
            pl.BlockSpec((tile_e, H), lambda i: (i, 0)),   # edge_attr + e_new (per tile)
            pl.BlockSpec((N, H), resident2),               # x + x_new  (written at last step)
        ),
        out_shape=(
            jax.ShapeDtypeStruct((e_pad, H), jnp.float32),
            jax.ShapeDtypeStruct((N, H), jnp.float32),
        ),
        scratch_shapes=[
            pltpu.VMEM((2 * N, H), jnp.float32),           # per-node gather projections p_cat
            pltpu.VMEM((N, H), jnp.float32),               # node aggregation accumulator
        ],
        compiler_params=pltpu.CompilerParams(
            # Edge axis carries the node accumulator + final node phase => "arbitrary".
            dimension_semantics=("arbitrary",),
            vmem_limit_bytes=vmem_limit_bytes,
        ),
    )(idx_p, ea_p, x, ew0, ewh, eb, eg, ebt, nw0, nwh, nb, ng, nbt)

    return x_out, edge_out_p[:E]


# ----------------------------- pure-JAX (f32) reference -----------------------------------
def _mlp_reference(z, params):
    w0, wh, b, g, bt = params
    mm = lambda a, w: jnp.dot(a, w, precision=jax.lax.Precision.HIGHEST)

    def ln(h, gamma, beta):
        mu = jnp.mean(h, axis=-1, keepdims=True)
        var = jnp.mean((h - mu) ** 2, axis=-1, keepdims=True)
        return (h - mu) / jnp.sqrt(var + _LN_EPS) * gamma + beta

    h = mm(z, w0) + b[0]
    h = jnp.maximum(h, 0.0)
    h = ln(h, g[0], bt[0])
    h = mm(h, wh[0]) + b[1]
    h = jnp.maximum(h, 0.0)
    h = ln(h, g[1], bt[1])
    h = mm(h, wh[1]) + b[2]
    h = mm(h, wh[2]) + b[3]          # build_mlp(): Linear directly followed by Linear
    h = jnp.maximum(h, 0.0)
    h = ln(h, g[2], bt[2])
    h = mm(h, wh[3]) + b[4]
    return h


def graphnet_block_reference(x, edge_attr, edge_index, edge_params, node_params):
    src, dst = edge_index[0], edge_index[1]
    edge_in = jnp.concatenate([edge_attr, x[src], x[dst]], axis=1)
    e_new = _mlp_reference(edge_in, edge_params)
    agg = jnp.zeros((x.shape[0], e_new.shape[1]), e_new.dtype).at[dst].add(e_new)
    node_in = jnp.concatenate([x, agg], axis=1)
    x_new = _mlp_reference(node_in, node_params)
    return x + x_new, edge_attr + e_new


def _init_mlp_params(key, in_size, hidden):
    ks = jax.random.split(key, 5)
    w0 = jax.random.normal(ks[0], (in_size, hidden), jnp.float32) * (in_size ** -0.5)
    wh = jax.random.normal(ks[1], (4, hidden, hidden), jnp.float32) * (hidden ** -0.5)
    b = 0.1 * jax.random.normal(ks[2], (5, hidden), jnp.float32)
    g = 1.0 + 0.1 * jax.random.normal(ks[3], (3, hidden), jnp.float32)
    bt = 0.1 * jax.random.normal(ks[4], (3, hidden), jnp.float32)
    return (w0, wh, b, g, bt)


if __name__ == "__main__":
    H = 128       # GraphNetBlock hidden_size (module default) -> lane-dense everywhere
    N = 64        # nodes
    E = 500       # edges (deliberately not a multiple of TILE_E: exercises padding/masking)
    TILE_E = 256

    key = jax.random.PRNGKey(0)
    k_x, k_ea, k_s, k_d, k_pos, k_em, k_nm = jax.random.split(key, 7)
    x = jax.random.normal(k_x, (N, H), jnp.float32)
    edge_attr = jax.random.normal(k_ea, (E, H), jnp.float32)
    edge_index = jnp.stack([
        jax.random.randint(k_s, (E,), 0, N, dtype=jnp.int32),    # senders   (edge_index[0])
        jax.random.randint(k_d, (E,), 0, N, dtype=jnp.int32),    # receivers (edge_index[1])
    ], axis=0)                                                   # [2, E]
    pos = jax.random.normal(k_pos, (N, 2), jnp.float32)          # carried through unchanged

    edge_params = _init_mlp_params(k_em, 3 * H, H)   # edge MLP: in_size = 3 * hidden
    node_params = _init_mlp_params(k_nm, 2 * H, H)   # node MLP: in_size = 2 * hidden

    x_gold, e_gold = graphnet_block_reference(x, edge_attr, edge_index,
                                              edge_params, node_params)

    # Run the review-recommended bf16-MXU mode and the f32 mode.  MXU operands are (at most)
    # bf16 precision and the tiled scatter/accumulation is reassociated, so ~1e-2-level
    # differences vs the f32 reference are expected; wiring bugs would show as O(1) errors.
    for cdt in (jnp.bfloat16, jnp.float32):
        x_out, e_out = graphnet_block_forward(
            x, edge_attr, edge_index, edge_params, node_params,
            tile_e=TILE_E, compute_dtype=cdt)
        jax.block_until_ready((x_out, e_out))
        assert x_out.shape == (N, H) and e_out.shape == (E, H)
        assert jnp.allclose(x_out, x_gold, atol=2e-1, rtol=2e-1), f"x mismatch ({cdt})"
        assert jnp.allclose(e_out, e_gold, atol=2e-1, rtol=2e-1), f"edge mismatch ({cdt})"

    # GraphNetBlock returns a graph with edge_index / pos unchanged.
    updated_graph = {"x": x_out, "edge_attr": e_out, "edge_index": edge_index, "pos": pos}
    del updated_graph

    print("KERNEL_OK")
</pallas_src>

<mosaic_0001>
module attributes {stable_mosaic.version = 11 : i64} {
  func.func @_graphnet_kernel(%arg0: i32, %arg1: memref<2x256xi32, #tpu.memory_space<vmem>>, %arg2: memref<256x128xf32, #tpu.memory_space<vmem>>, %arg3: memref<64x128xf32, #tpu.memory_space<vmem>>, %arg4: memref<384x128xbf16, #tpu.memory_space<vmem>>, %arg5: memref<4x128x128xbf16, #tpu.memory_space<vmem>>, %arg6: memref<5x128xf32, #tpu.memory_space<vmem>>, %arg7: memref<3x128xf32, #tpu.memory_space<vmem>>, %arg8: memref<3x128xf32, #tpu.memory_space<vmem>>, %arg9: memref<256x128xbf16, #tpu.memory_space<vmem>>, %arg10: memref<4x128x128xbf16, #tpu.memory_space<vmem>>, %arg11: memref<5x128xf32, #tpu.memory_space<vmem>>, %arg12: memref<3x128xf32, #tpu.memory_space<vmem>>, %arg13: memref<3x128xf32, #tpu.memory_space<vmem>>, %arg14: memref<256x128xf32, #tpu.memory_space<vmem>>, %arg15: memref<64x128xf32, #tpu.memory_space<vmem>>, %arg16: memref<128x128xf32, #tpu.memory_space<vmem>>, %arg17: memref<64x128xf32, #tpu.memory_space<vmem>>) attributes {dimension_semantics = [#tpu.dimension_semantics<arbitrary>], iteration_bounds = array<i64: 2>, scalar_prefetch = 0 : i64, scratch_operands = 2 : i64, tpu.core_type = #tpu.core_type<tc>, window_params = [{transform_indices = @transform_0, window_bounds = array<i64: 2, 256>}, {transform_indices = @transform_1, window_bounds = array<i64: 256, 128>}, {pipeline_mode = #tpu.pipeline_mode<synchronous>, transform_indices = @transform_2, window_bounds = array<i64: 64, 128>}, {pipeline_mode = #tpu.pipeline_mode<synchronous>, transform_indices = @transform_3, window_bounds = array<i64: 384, 128>}, {pipeline_mode = #tpu.pipeline_mode<synchronous>, transform_indices = @transform_4, window_bounds = array<i64: 4, 128, 128>}, {pipeline_mode = #tpu.pipeline_mode<synchronous>, transform_indices = @transform_5, window_bounds = array<i64: 5, 128>}, {pipeline_mode = #tpu.pipeline_mode<synchronous>, transform_indices = @transform_6, window_bounds = array<i64: 3, 128>}, {pipeline_mode = #tpu.pipeline_mode<synchronous>, transform_indices = @transform_7, window_bounds = array<i64: 3, 128>}, {pipeline_mode = #tpu.pipeline_mode<synchronous>, transform_indices = @transform_8, window_bounds = array<i64: 256, 128>}, {pipeline_mode = #tpu.pipeline_mode<synchronous>, transform_indices = @transform_9, window_bounds = array<i64: 4, 128, 128>}, {pipeline_mode = #tpu.pipeline_mode<synchronous>, transform_indices = @transform_10, window_bounds = array<i64: 5, 128>}, {pipeline_mode = #tpu.pipeline_mode<synchronous>, transform_indices = @transform_11, window_bounds = array<i64: 3, 128>}, {pipeline_mode = #tpu.pipeline_mode<synchronous>, transform_indices = @transform_12, window_bounds = array<i64: 3, 128>}, {transform_indices = @transform_13, window_bounds = array<i64: 256, 128>}, {pipeline_mode = #tpu.pipeline_mode<synchronous>, transform_indices = @transform_14, window_bounds = array<i64: 64, 128>}]} {
    %c0_i32 = arith.constant 0 : i32
    %0 = arith.cmpi eq, %arg0, %c0_i32 : i32
    %1 = arith.extui %0 : i1 to i32
    %c0_i32_0 = arith.constant 0 : i32
    %2 = arith.cmpi ne, %1, %c0_i32_0 : i32
    scf.if %2 {
      %c0_73 = arith.constant 0 : index
      %c0_74 = arith.constant 0 : index
      %148 = vector.load %arg3[%c0_73, %c0_74] : memref<64x128xf32, #tpu.memory_space<vmem>>, vector<64x128xf32>
      %149 = arith.truncf %148 : vector<64x128xf32> to vector<64x128xbf16>
      %c128_75 = arith.constant 128 : index
      %c0_76 = arith.constant 0 : index
      %150 = vector.load %arg4[%c128_75, %c0_76] : memref<384x128xbf16, #tpu.memory_space<vmem>>, vector<128x128xbf16>
      %cst_77 = arith.constant dense<0.000000e+00> : vector<64x128xf32>
      %151 = tpu.matmul %149, %150, %cst_77 {dimension_numbers = #tpu.dot_dimension_numbers<[1], [0], [0], [1], [0, 0, 1, 1], [], []>} : vector<64x128xbf16>, vector<128x128xbf16>, vector<64x128xf32> -> vector<64x128xf32>
      %c0_78 = arith.constant 0 : index
      %c0_79 = arith.constant 0 : index
      %152 = vector.load %arg16[%c0_78, %c0_79] : memref<128x128xf32, #tpu.memory_space<vmem>>, vector<64x128xf32>
      tpu.vector_store %arg16[%c0_78, %c0_79], %151 {strides = array<i32>} : memref<128x128xf32, #tpu.memory_space<vmem>>, vector<64x128xf32>,
      %c256 = arith.constant 256 : index
      %c0_80 = arith.constant 0 : index
      %153 = vector.load %arg4[%c256, %c0_80] : memref<384x128xbf16, #tpu.memory_space<vmem>>, vector<128x128xbf16>
      %cst_81 = arith.constant dense<0.000000e+00> : vector<64x128xf32>
      %154 = tpu.matmul %149, %153, %cst_81 {dimension_numbers = #tpu.dot_dimension_numbers<[1], [0], [0], [1], [0, 0, 1, 1], [], []>} : vector<64x128xbf16>, vector<128x128xbf16>, vector<64x128xf32> -> vector<64x128xf32>
      %c64 = arith.constant 64 : index
      %c0_82 = arith.constant 0 : index
      %155 = vector.load %arg16[%c64, %c0_82] : memref<128x128xf32, #tpu.memory_space<vmem>>, vector<64x128xf32>
      tpu.vector_store %arg16[%c64, %c0_82], %154 {strides = array<i32>} : memref<128x128xf32, #tpu.memory_space<vmem>>, vector<64x128xf32>,
      %cst_83 = arith.constant 0.000000e+00 : f32
      %156 = vector.broadcast %cst_83 : f32 to vector<64x128xf32>
      %c0_84 = arith.constant 0 : index
      %c0_85 = arith.constant 0 : index
      %157 = vector.load %arg17[%c0_84, %c0_85] : memref<64x128xf32, #tpu.memory_space<vmem>>, vector<64x128xf32>
      tpu.vector_store %arg17[%c0_84, %c0_85], %156 {strides = array<i32>} : memref<64x128xf32, #tpu.memory_space<vmem>>, vector<64x128xf32>,
    } else {
    }
    %c0 = arith.constant 0 : index
    %c0_1 = arith.constant 0 : index
    %3 = vector.load %arg1[%c0, %c0_1] : memref<2x256xi32, #tpu.memory_space<vmem>>, vector<1x256xi32>
    %c1 = arith.constant 1 : index
    %c0_2 = arith.constant 0 : index
    %4 = vector.load %arg1[%c1, %c0_2] : memref<2x256xi32, #tpu.memory_space<vmem>>, vector<1x256xi32>
    %5 = tpu.iota {dimensions = array<i32: 0>} : vector<128x256xi32>
    %6 = vector.broadcast %3 : vector<1x256xi32> to vector<128x256xi32>
    %7 = arith.cmpi eq, %5, %6 : vector<128x256xi32>
    %c64_i32 = arith.constant 64 : i32
    %8 = vector.broadcast %c64_i32 : i32 to vector<1x256xi32>
    %9 = arith.addi %4, %8 : vector<1x256xi32>
    %10 = vector.broadcast %9 : vector<1x256xi32> to vector<128x256xi32>
    %11 = arith.cmpi eq, %5, %10 : vector<128x256xi32>
    %12 = arith.ori %7, %11 : vector<128x256xi1>
    %13 = arith.extui %12 : vector<128x256xi1> to vector<128x256xi32>
    %14 = arith.sitofp %13 : vector<128x256xi32> to vector<128x256xf32>
    %c0_3 = arith.constant 0 : index
    %c0_4 = arith.constant 0 : index
    %15 = vector.load %arg16[%c0_3, %c0_4] : memref<128x128xf32, #tpu.memory_space<vmem>>, vector<128x128xf32>
    %cst = arith.constant dense<0.000000e+00> : vector<256x128xf32>
    %16 = tpu.matmul %14, %15, %cst {dimension_numbers = #tpu.dot_dimension_numbers<[0], [0], [1], [1], [0, 1, 1, 1], [], []>} : vector<128x256xf32>, vector<128x128xf32>, vector<256x128xf32> -> vector<256x128xf32>
    %c0_5 = arith.constant 0 : index
    %c0_6 = arith.constant 0 : index
    %17 = vector.load %arg2[%c0_5, %c0_6] : memref<256x128xf32, #tpu.memory_space<vmem>>, vector<256x128xf32>
    %18 = arith.truncf %17 : vector<256x128xf32> to vector<256x128xbf16>
    %c0_7 = arith.constant 0 : index
    %c0_8 = arith.constant 0 : index
    %19 = vector.load %arg4[%c0_7, %c0_8] : memref<384x128xbf16, #tpu.memory_space<vmem>>, vector<128x128xbf16>
    %cst_9 = arith.constant dense<0.000000e+00> : vector<256x128xf32>
    %20 = tpu.matmul %18, %19, %cst_9 {dimension_numbers = #tpu.dot_dimension_numbers<[1], [0], [0], [1], [0, 0, 1, 1], [], []>} : vector<256x128xbf16>, vector<128x128xbf16>, vector<256x128xf32> -> vector<256x128xf32>
    %21 = arith.addf %20, %16 : vector<256x128xf32>
    %c0_10 = arith.constant 0 : index
    %c0_11 = arith.constant 0 : index
    %22 = vector.load %arg6[%c0_10, %c0_11] : memref<5x128xf32, #tpu.memory_space<vmem>>, vector<1x128xf32>
    %23 = vector.broadcast %22 : vector<1x128xf32> to vector<256x128xf32>
    %24 = arith.addf %21, %23 : vector<256x128xf32>
    %cst_12 = arith.constant 0.000000e+00 : f32
    %25 = vector.broadcast %cst_12 : f32 to vector<256x128xf32>
    %26 = arith.maximumf %24, %25 : vector<256x128xf32>
    %c0_13 = arith.constant 0 : index
    %c0_14 = arith.constant 0 : index
    %27 = vector.load %arg7[%c0_13, %c0_14] : memref<3x128xf32, #tpu.memory_space<vmem>>, vector<1x128xf32>
    %c0_15 = arith.constant 0 : index
    %c0_16 = arith.constant 0 : index
    %28 = vector.load %arg8[%c0_15, %c0_16] : memref<3x128xf32, #tpu.memory_space<vmem>>, vector<1x128xf32>
    %cst_17 = arith.constant dense<0.000000e+00> : vector<256xf32>
    %29 = vector.multi_reduction <add>, %26, %cst_17 [1] : vector<256x128xf32> to vector<256xf32>
    %30 = vector.shape_cast %29 : vector<256xf32> to vector<256x1xf32>
    %cst_18 = arith.constant 1.280000e+02 : f32
    %31 = vector.broadcast %cst_18 : f32 to vector<256x1xf32>
    %32 = arith.divf %30, %31 : vector<256x1xf32>
    %33 = vector.broadcast %32 : vector<256x1xf32> to vector<256x128xf32>
    %34 = arith.subf %26, %33 : vector<256x128xf32>
    %35 = arith.mulf %34, %34 : vector<256x128xf32>
    %cst_19 = arith.constant dense<0.000000e+00> : vector<256xf32>
    %36 = vector.multi_reduction <add>, %35, %cst_19 [1] : vector<256x128xf32> to vector<256xf32>
    %37 = vector.shape_cast %36 : vector<256xf32> to vector<256x1xf32>
    %cst_20 = arith.constant 1.280000e+02 : f32
    %38 = vector.broadcast %cst_20 : f32 to vector<256x1xf32>
    %39 = arith.divf %37, %38 : vector<256x1xf32>
    %40 = vector.broadcast %32 : vector<256x1xf32> to vector<256x128xf32>
    %41 = arith.subf %26, %40 : vector<256x128xf32>
    %cst_21 = arith.constant 9.99999974E-6 : f32
    %42 = vector.broadcast %cst_21 : f32 to vector<256x1xf32>
    %43 = arith.addf %39, %42 : vector<256x1xf32>
    %44 = math.rsqrt %43 : vector<256x1xf32>
    %45 = vector.broadcast %44 : vector<256x1xf32> to vector<256x128xf32>
    %46 = arith.mulf %41, %45 : vector<256x128xf32>
    %47 = vector.broadcast %27 : vector<1x128xf32> to vector<256x128xf32>
    %48 = arith.mulf %46, %47 : vector<256x128xf32>
    %49 = vector.broadcast %28 : vector<1x128xf32> to vector<256x128xf32>
    %50 = arith.addf %48, %49 : vector<256x128xf32>
    %51 = arith.truncf %50 : vector<256x128xf32> to vector<256x128xbf16>
    %c0_22 = arith.constant 0 : index
    %c0_23 = arith.constant 0 : index
    %c0_24 = arith.constant 0 : index
    %52 = vector.load %arg5[%c0_22, %c0_23, %c0_24] : memref<4x128x128xbf16, #tpu.memory_space<vmem>>, vector<1x128x128xbf16>
    %53 = vector.shape_cast %52 : vector<1x128x128xbf16> to vector<128x128xbf16>
    %cst_25 = arith.constant dense<0.000000e+00> : vector<256x128xf32>
    %54 = tpu.matmul %51, %53, %cst_25 {dimension_numbers = #tpu.dot_dimension_numbers<[1], [0], [0], [1], [0, 0, 1, 1], [], []>} : vector<256x128xbf16>, vector<128x128xbf16>, vector<256x128xf32> -> vector<256x128xf32>
    %c1_26 = arith.constant 1 : index
    %c0_27 = arith.constant 0 : index
    %55 = vector.load %arg6[%c1_26, %c0_27] : memref<5x128xf32, #tpu.memory_space<vmem>>, vector<1x128xf32>
    %56 = vector.broadcast %55 : vector<1x128xf32> to vector<256x128xf32>
    %57 = arith.addf %54, %56 : vector<256x128xf32>
    %cst_28 = arith.constant 0.000000e+00 : f32
    %58 = vector.broadcast %cst_28 : f32 to vector<256x128xf32>
    %59 = arith.maximumf %57, %58 : vector<256x128xf32>
    %c1_29 = arith.constant 1 : index
    %c0_30 = arith.constant 0 : index
    %60 = vector.load %arg7[%c1_29, %c0_30] : memref<3x128xf32, #tpu.memory_space<vmem>>, vector<1x128xf32>
    %c1_31 = arith.constant 1 : index
    %c0_32 = arith.constant 0 : index
    %61 = vector.load %arg8[%c1_31, %c0_32] : memref<3x128xf32, #tpu.memory_space<vmem>>, vector<1x128xf32>
    %cst_33 = arith.constant dense<0.000000e+00> : vector<256xf32>
    %62 = vector.multi_reduction <add>, %59, %cst_33 [1] : vector<256x128xf32> to vector<256xf32>
    %63 = vector.shape_cast %62 : vector<256xf32> to vector<256x1xf32>
    %cst_34 = arith.constant 1.280000e+02 : f32
    %64 = vector.broadcast %cst_34 : f32 to vector<256x1xf32>
    %65 = arith.divf %63, %64 : vector<256x1xf32>
    %66 = vector.broadcast %65 : vector<256x1xf32> to vector<256x128xf32>
    %67 = arith.subf %59, %66 : vector<256x128xf32>
    %68 = arith.mulf %67, %67 : vector<256x128xf32>
    %cst_35 = arith.constant dense<0.000000e+00> : vector<256xf32>
    %69 = vector.multi_reduction <add>, %68, %cst_35 [1] : vector<256x128xf32> to vector<256xf32>
    %70 = vector.shape_cast %69 : vector<256xf32> to vector<256x1xf32>
    %cst_36 = arith.constant 1.280000e+02 : f32
    %71 = vector.broadcast %cst_36 : f32 to vector<256x1xf32>
    %72 = arith.divf %70, %71 : vector<256x1xf32>
    %73 = vector.broadcast %65 : vector<256x1xf32> to vector<256x128xf32>
    %74 = arith.subf %59, %73 : vector<256x128xf32>
    %cst_37 = arith.constant 9.99999974E-6 : f32
    %75 = vector.broadcast %cst_37 : f32 to vector<256x1xf32>
    %76 = arith.addf %72, %75 : vector<256x1xf32>
    %77 = math.rsqrt %76 : vector<256x1xf32>
    %78 = vector.broadcast %77 : vector<256x1xf32> to vector<256x128xf32>
    %79 = arith.mulf %74, %78 : vector<256x128xf32>
    %80 = vector.broadcast %60 : vector<1x128xf32> to vector<256x128xf32>
    %81 = arith.mulf %79, %80 : vector<256x128xf32>
    %82 = vector.broadcast %61 : vector<1x128xf32> to vector<256x128xf32>
    %83 = arith.addf %81, %82 : vector<256x128xf32>
    %84 = arith.truncf %83 : vector<256x128xf32> to vector<256x128xbf16>
    %c1_38 = arith.constant 1 : index
    %c0_39 = arith.constant 0 : index
    %c0_40 = arith.constant 0 : index
    %85 = vector.load %arg5[%c1_38, %c0_39, %c0_40] : memref<4x128x128xbf16, #tpu.memory_space<vmem>>, vector<1x128x128xbf16>
    %86 = vector.shape_cast %85 : vector<1x128x128xbf16> to vector<128x128xbf16>
    %cst_41 = arith.constant dense<0.000000e+00> : vector<256x128xf32>
    %87 = tpu.matmul %84, %86, %cst_41 {dimension_numbers = #tpu.dot_dimension_numbers<[1], [0], [0], [1], [0, 0, 1, 1], [], []>} : vector<256x128xbf16>, vector<128x128xbf16>, vector<256x128xf32> -> vector<256x128xf32>
    %c2 = arith.constant 2 : index
    %c0_42 = arith.constant 0 : index
    %88 = vector.load %arg6[%c2, %c0_42] : memref<5x128xf32, #tpu.memory_space<vmem>>, vector<1x128xf32>
    %89 = vector.broadcast %88 : vector<1x128xf32> to vector<256x128xf32>
    %90 = arith.addf %87, %89 : vector<256x128xf32>
    %91 = arith.truncf %90 : vector<256x128xf32> to vector<256x128xbf16>
    %c2_43 = arith.constant 2 : index
    %c0_44 = arith.constant 0 : index
    %c0_45 = arith.constant 0 : index
    %92 = vector.load %arg5[%c2_43, %c0_44, %c0_45] : memref<4x128x128xbf16, #tpu.memory_space<vmem>>, vector<1x128x128xbf16>
    %93 = vector.shape_cast %92 : vector<1x128x128xbf16> to vector<128x128xbf16>
    %cst_46 = arith.constant dense<0.000000e+00> : vector<256x128xf32>
    %94 = tpu.matmul %91, %93, %cst_46 {dimension_numbers = #tpu.dot_dimension_numbers<[1], [0], [0], [1], [0, 0, 1, 1], [], []>} : vector<256x128xbf16>, vector<128x128xbf16>, vector<256x128xf32> -> vector<256x128xf32>
    %c3 = arith.constant 3 : index
    %c0_47 = arith.constant 0 : index
    %95 = vector.load %arg6[%c3, %c0_47] : memref<5x128xf32, #tpu.memory_space<vmem>>, vector<1x128xf32>
    %96 = vector.broadcast %95 : vector<1x128xf32> to vector<256x128xf32>
    %97 = arith.addf %94, %96 : vector<256x128xf32>
    %cst_48 = arith.constant 0.000000e+00 : f32
    %98 = vector.broadcast %cst_48 : f32 to vector<256x128xf32>
    %99 = arith.maximumf %97, %98 : vector<256x128xf32>
    %c2_49 = arith.constant 2 : index
    %c0_50 = arith.constant 0 : index
    %100 = vector.load %arg7[%c2_49, %c0_50] : memref<3x128xf32, #tpu.memory_space<vmem>>, vector<1x128xf32>
    %c2_51 = arith.constant 2 : index
    %c0_52 = arith.constant 0 : index
    %101 = vector.load %arg8[%c2_51, %c0_52] : memref<3x128xf32, #tpu.memory_space<vmem>>, vector<1x128xf32>
    %cst_53 = arith.constant dense<0.000000e+00> : vector<256xf32>
    %102 = vector.multi_reduction <add>, %99, %cst_53 [1] : vector<256x128xf32> to vector<256xf32>
    %103 = vector.shape_cast %102 : vector<256xf32> to vector<256x1xf32>
    %cst_54 = arith.constant 1.280000e+02 : f32
    %104 = vector.broadcast %cst_54 : f32 to vector<256x1xf32>
    %105 = arith.divf %103, %104 : vector<256x1xf32>
    %106 = vector.broadcast %105 : vector<256x1xf32> to vector<256x128xf32>
    %107 = arith.subf %99, %106 : vector<256x128xf32>
    %108 = arith.mulf %107, %107 : vector<256x128xf32>
    %cst_55 = arith.constant dense<0.000000e+00> : vector<256xf32>
    %109 = vector.multi_reduction <add>, %108, %cst_55 [1] : vector<256x128xf32> to vector<256xf32>
    %110 = vector.shape_cast %109 : vector<256xf32> to vector<256x1xf32>
    %cst_56 = arith.constant 1.280000e+02 : f32
    %111 = vector.broadcast %cst_56 : f32 to vector<256x1xf32>
    %112 = arith.divf %110, %111 : vector<256x1xf32>
    %113 = vector.broadcast %105 : vector<256x1xf32> to vector<256x128xf32>
    %114 = arith.subf %99, %113 : vector<256x128xf32>
    %cst_57 = arith.constant 9.99999974E-6 : f32
    %115 = vector.broadcast %cst_57 : f32 to vector<256x1xf32>
    %116 = arith.addf %112, %115 : vector<256x1xf32>
    %117 = math.rsqrt %116 : vector<256x1xf32>
    %118 = vector.broadcast %117 : vector<256x1xf32> to vector<256x128xf32>
    %119 = arith.mulf %114, %118 : vector<256x128xf32>
    %120 = vector.broadcast %100 : vector<1x128xf32> to vector<256x128xf32>
    %121 = arith.mulf %119, %120 : vector<256x128xf32>
    %122 = vector.broadcast %101 : vector<1x128xf32> to vector<256x128xf32>
    %123 = arith.addf %121, %122 : vector<256x128xf32>
    %124 = arith.truncf %123 : vector<256x128xf32> to vector<256x128xbf16>
    %c3_58 = arith.constant 3 : index
    %c0_59 = arith.constant 0 : index
    %c0_60 = arith.constant 0 : index
    %125 = vector.load %arg5[%c3_58, %c0_59, %c0_60] : memref<4x128x128xbf16, #tpu.memory_space<vmem>>, vector<1x128x128xbf16>
    %126 = vector.shape_cast %125 : vector<1x128x128xbf16> to vector<128x128xbf16>
    %cst_61 = arith.constant dense<0.000000e+00> : vector<256x128xf32>
    %127 = tpu.matmul %124, %126, %cst_61 {dimension_numbers = #tpu.dot_dimension_numbers<[1], [0], [0], [1], [0, 0, 1, 1], [], []>} : vector<256x128xbf16>, vector<128x128xbf16>, vector<256x128xf32> -> vector<256x128xf32>
    %c4 = arith.constant 4 : index
    %c0_62 = arith.constant 0 : index
    %128 = vector.load %arg6[%c4, %c0_62] : memref<5x128xf32, #tpu.memory_space<vmem>>, vector<1x128xf32>
    %129 = vector.broadcast %128 : vector<1x128xf32> to vector<256x128xf32>
    %130 = arith.addf %127, %129 : vector<256x128xf32>
    %131 = arith.addf %17, %130 : vector<256x128xf32>
    %c0_63 = arith.constant 0 : index
    %c0_64 = arith.constant 0 : index
    %132 = vector.load %arg14[%c0_63, %c0_64] : memref<256x128xf32, #tpu.memory_space<vmem>>, vector<256x128xf32>
    tpu.vector_store %arg14[%c0_63, %c0_64], %131 {strides = array<i32>} : memref<256x128xf32, #tpu.memory_space<vmem>>, vector<256x128xf32>,
    %133 = arith.truncf %130 : vector<256x128xf32> to vector<256x128xbf16>
    %c128 = arith.constant 128 : index
    %c0_65 = arith.constant 0 : index
    %134 = vector.load %arg9[%c128, %c0_65] : memref<256x128xbf16, #tpu.memory_space<vmem>>, vector<128x128xbf16>
    %cst_66 = arith.constant dense<0.000000e+00> : vector<256x128xf32>
    %135 = tpu.matmul %133, %134, %cst_66 {dimension_numbers = #tpu.dot_dimension_numbers<[1], [0], [0], [1], [0, 0, 1, 1], [], []>} : vector<256x128xbf16>, vector<128x128xbf16>, vector<256x128xf32> -> vector<256x128xf32>
    %136 = tpu.iota {dimensions = array<i32: 0>} : vector<64x256xi32>
    %137 = vector.broadcast %4 : vector<1x256xi32> to vector<64x256xi32>
    %138 = arith.cmpi eq, %136, %137 : vector<64x256xi32>
    %139 = arith.extui %138 : vector<64x256xi1> to vector<64x256xi32>
    %140 = arith.sitofp %139 : vector<64x256xi32> to vector<64x256xf32>
    %c0_67 = arith.constant 0 : index
    %c0_68 = arith.constant 0 : index
    %141 = vector.load %arg17[%c0_67, %c0_68] : memref<64x128xf32, #tpu.memory_space<vmem>>, vector<64x128xf32>
    %cst_69 = arith.constant dense<0.000000e+00> : vector<64x128xf32>
    %142 = tpu.matmul %140, %135, %cst_69 {dimension_numbers = #tpu.dot_dimension_numbers<[1], [0], [0], [1], [0, 0, 1, 1], [], []>} : vector<64x256xf32>, vector<256x128xf32>, vector<64x128xf32> -> vector<64x128xf32>
    %143 = arith.addf %141, %142 : vector<64x128xf32>
    %c0_70 = arith.constant 0 : index
    %c0_71 = arith.constant 0 : index
    %144 = vector.load %arg17[%c0_70, %c0_71] : memref<64x128xf32, #tpu.memory_space<vmem>>, vector<64x128xf32>
    tpu.vector_store %arg17[%c0_70, %c0_71], %143 {strides = array<i32>} : memref<64x128xf32, #tpu.memory_space<vmem>>, vector<64x128xf32>,
    %c1_i32 = arith.constant 1 : i32
    %145 = arith.cmpi eq, %arg0, %c1_i32 : i32
    %146 = arith.extui %145 : i1 to i32
    %c0_i32_72 = arith.constant 0 : i32
    %147 = arith.cmpi ne, %146, %c0_i32_72 : i32
    scf.if %147 {
      %c0_73 = arith.constant 0 : index
      %c0_74 = arith.constant 0 : index
      %148 = vector.load %arg3[%c0_73, %c0_74] : memref<64x128xf32, #tpu.memory_space<vmem>>, vector<64x128xf32>
      %149 = arith.truncf %148 : vector<64x128xf32> to vector<64x128xbf16>
      %c0_75 = arith.constant 0 : index
      %c0_76 = arith.constant 0 : index
      %150 = vector.load %arg9[%c0_75, %c0_76] : memref<256x128xbf16, #tpu.memory_space<vmem>>, vector<128x128xbf16>
      %cst_77 = arith.constant dense<0.000000e+00> : vector<64x128xf32>
      %151 = tpu.matmul %149, %150, %cst_77 {dimension_numbers = #tpu.dot_dimension_numbers<[1], [0], [0], [1], [0, 0, 1, 1], [], []>} : vector<64x128xbf16>, vector<128x128xbf16>, vector<64x128xf32> -> vector<64x128xf32>
      %c0_78 = arith.constant 0 : index
      %c0_79 = arith.constant 0 : index
      %152 = vector.load %arg17[%c0_78, %c0_79] : memref<64x128xf32, #tpu.memory_space<vmem>>, vector<64x128xf32>
      %153 = arith.addf %151, %152 : vector<64x128xf32>
      %c0_80 = arith.constant 0 : index
      %c0_81 = arith.constant 0 : index
      %154 = vector.load %arg11[%c0_80, %c0_81] : memref<5x128xf32, #tpu.memory_space<vmem>>, vector<1x128xf32>
      %155 = vector.broadcast %154 : vector<1x128xf32> to vector<64x128xf32>
      %156 = arith.addf %153, %155 : vector<64x128xf32>
      %cst_82 = arith.constant 0.000000e+00 : f32
      %157 = vector.broadcast %cst_82 : f32 to vector<64x128xf32>
      %158 = arith.maximumf %156, %157 : vector<64x128xf32>
      %c0_83 = arith.constant 0 : index
      %c0_84 = arith.constant 0 : index
      %159 = vector.load %arg12[%c0_83, %c0_84] : memref<3x128xf32, #tpu.memory_space<vmem>>, vector<1x128xf32>
      %c0_85 = arith.constant 0 : index
      %c0_86 = arith.constant 0 : index
      %160 = vector.load %arg13[%c0_85, %c0_86] : memref<3x128xf32, #tpu.memory_space<vmem>>, vector<1x128xf32>
      %cst_87 = arith.constant dense<0.000000e+00> : vector<64xf32>
      %161 = vector.multi_reduction <add>, %158, %cst_87 [1] : vector<64x128xf32> to vector<64xf32>
      %162 = vector.shape_cast %161 : vector<64xf32> to vector<64x1xf32>
      %cst_88 = arith.constant 1.280000e+02 : f32
      %163 = vector.broadcast %cst_88 : f32 to vector<64x1xf32>
      %164 = arith.divf %162, %163 : vector<64x1xf32>
      %165 = vector.broadcast %164 : vector<64x1xf32> to vector<64x128xf32>
      %166 = arith.subf %158, %165 : vector<64x128xf32>
      %167 = arith.mulf %166, %166 : vector<64x128xf32>
      %cst_89 = arith.constant dense<0.000000e+00> : vector<64xf32>
      %168 = vector.multi_reduction <add>, %167, %cst_89 [1] : vector<64x128xf32> to vector<64xf32>
      %169 = vector.shape_cast %168 : vector<64xf32> to vector<64x1xf32>
      %cst_90 = arith.constant 1.280000e+02 : f32
      %170 = vector.broadcast %cst_90 : f32 to vector<64x1xf32>
      %171 = arith.divf %169, %170 : vector<64x1xf32>
      %172 = vector.broadcast %164 : vector<64x1xf32> to vector<64x128xf32>
      %173 = arith.subf %158, %172 : vector<64x128xf32>
      %cst_91 = arith.constant 9.99999974E-6 : f32
      %174 = vector.broadcast %cst_91 : f32 to vector<64x1xf32>
      %175 = arith.addf %171, %174 : vector<64x1xf32>
      %176 = math.rsqrt %175 : vector<64x1xf32>
      %177 = vector.broadcast %176 : vector<64x1xf32> to vector<64x128xf32>
      %178 = arith.mulf %173, %177 : vector<64x128xf32>
      %179 = vector.broadcast %159 : vector<1x128xf32> to vector<64x128xf32>
      %180 = arith.mulf %178, %179 : vector<64x128xf32>
      %181 = vector.broadcast %160 : vector<1x128xf32> to vector<64x128xf32>
      %182 = arith.addf %180, %181 : vector<64x128xf32>
      %183 = arith.truncf %182 : vector<64x128xf32> to vector<64x128xbf16>
      %c0_92 = arith.constant 0 : index
      %c0_93 = arith.constant 0 : index
      %c0_94 = arith.constant 0 : index
      %184 = vector.load %arg10[%c0_92, %c0_93, %c0_94] : memref<4x128x128xbf16, #tpu.memory_space<vmem>>, vector<1x128x128xbf16>
      %185 = vector.shape_cast %184 : vector<1x128x128xbf16> to vector<128x128xbf16>
      %cst_95 = arith.constant dense<0.000000e+00> : vector<64x128xf32>
      %186 = tpu.matmul %183, %185, %cst_95 {dimension_numbers = #tpu.dot_dimension_numbers<[1], [0], [0], [1], [0, 0, 1, 1], [], []>} : vector<64x128xbf16>, vector<128x128xbf16>, vector<64x128xf32> -> vector<64x128xf32>
      %c1_96 = arith.constant 1 : index
      %c0_97 = arith.constant 0 : index
      %187 = vector.load %arg11[%c1_96, %c0_97] : memref<5x128xf32, #tpu.memory_space<vmem>>, vector<1x128xf32>
      %188 = vector.broadcast %187 : vector<1x128xf32> to vector<64x128xf32>
      %189 = arith.addf %186, %188 : vector<64x128xf32>
      %cst_98 = arith.constant 0.000000e+00 : f32
      %190 = vector.broadcast %cst_98 : f32 to vector<64x128xf32>
      %191 = arith.maximumf %189, %190 : vector<64x128xf32>
      %c1_99 = arith.constant 1 : index
      %c0_100 = arith.constant 0 : index
      %192 = vector.load %arg12[%c1_99, %c0_100] : memref<3x128xf32, #tpu.memory_space<vmem>>, vector<1x128xf32>
      %c1_101 = arith.constant 1 : index
      %c0_102 = arith.constant 0 : index
      %193 = vector.load %arg13[%c1_101, %c0_102] : memref<3x128xf32, #tpu.memory_space<vmem>>, vector<1x128xf32>
      %cst_103 = arith.constant dense<0.000000e+00> : vector<64xf32>
      %194 = vector.multi_reduction <add>, %191, %cst_103 [1] : vector<64x128xf32> to vector<64xf32>
      %195 = vector.shape_cast %194 : vector<64xf32> to vector<64x1xf32>
      %cst_104 = arith.constant 1.280000e+02 : f32
      %196 = vector.broadcast %cst_104 : f32 to vector<64x1xf32>
      %197 = arith.divf %195, %196 : vector<64x1xf32>
      %198 = vector.broadcast %197 : vector<64x1xf32> to vector<64x128xf32>
      %199 = arith.subf %191, %198 : vector<64x128xf32>
      %200 = arith.mulf %199, %199 : vector<64x128xf32>
      %cst_105 = arith.constant dense<0.000000e+00> : vector<64xf32>
      %201 = vector.multi_reduction <add>, %200, %cst_105 [1] : vector<64x128xf32> to vector<64xf32>
      %202 = vector.shape_cast %201 : vector<64xf32> to vector<64x1xf32>
      %cst_106 = arith.constant 1.280000e+02 : f32
      %203 = vector.broadcast %cst_106 : f32 to vector<64x1xf32>
      %204 = arith.divf %202, %203 : vector<64x1xf32>
      %205 = vector.broadcast %197 : vector<64x1xf32> to vector<64x128xf32>
      %206 = arith.subf %191, %205 : vector<64x128xf32>
      %cst_107 = arith.constant 9.99999974E-6 : f32
      %207 = vector.broadcast %cst_107 : f32 to vector<64x1xf32>
      %208 = arith.addf %204, %207 : vector<64x1xf32>
      %209 = math.rsqrt %208 : vector<64x1xf32>
      %210 = vector.broadcast %209 : vector<64x1xf32> to vector<64x128xf32>
      %211 = arith.mulf %206, %210 : vector<64x128xf32>
      %212 = vector.broadcast %192 : vector<1x128xf32> to vector<64x128xf32>
      %213 = arith.mulf %211, %212 : vector<64x128xf32>
      %214 = vector.broadcast %193 : vector<1x128xf32> to vector<64x128xf32>
      %215 = arith.addf %213, %214 : vector<64x128xf32>
      %216 = arith.truncf %215 : vector<64x128xf32> to vector<64x128xbf16>
      %c1_108 = arith.constant 1 : index
      %c0_109 = arith.constant 0 : index
      %c0_110 = arith.constant 0 : index
      %217 = vector.load %arg10[%c1_108, %c0_109, %c0_110] : memref<4x128x128xbf16, #tpu.memory_space<vmem>>, vector<1x128x128xbf16>
      %218 = vector.shape_cast %217 : vector<1x128x128xbf16> to vector<128x128xbf16>
      %cst_111 = arith.constant dense<0.000000e+00> : vector<64x128xf32>
      %219 = tpu.matmul %216, %218, %cst_111 {dimension_numbers = #tpu.dot_dimension_numbers<[1], [0], [0], [1], [0, 0, 1, 1], [], []>} : vector<64x128xbf16>, vector<128x128xbf16>, vector<64x128xf32> -> vector<64x128xf32>
      %c2_112 = arith.constant 2 : index
      %c0_113 = arith.constant 0 : index
      %220 = vector.load %arg11[%c2_112, %c0_113] : memref<5x128xf32, #tpu.memory_space<vmem>>, vector<1x128xf32>
      %221 = vector.broadcast %220 : vector<1x128xf32> to vector<64x128xf32>
      %222 = arith.addf %219, %221 : vector<64x128xf32>
      %223 = arith.truncf %222 : vector<64x128xf32> to vector<64x128xbf16>
      %c2_114 = arith.constant 2 : index
      %c0_115 = arith.constant 0 : index
      %c0_116 = arith.constant 0 : index
      %224 = vector.load %arg10[%c2_114, %c0_115, %c0_116] : memref<4x128x128xbf16, #tpu.memory_space<vmem>>, vector<1x128x128xbf16>
      %225 = vector.shape_cast %224 : vector<1x128x128xbf16> to vector<128x128xbf16>
      %cst_117 = arith.constant dense<0.000000e+00> : vector<64x128xf32>
      %226 = tpu.matmul %223, %225, %cst_117 {dimension_numbers = #tpu.dot_dimension_numbers<[1], [0], [0], [1], [0, 0, 1, 1], [], []>} : vector<64x128xbf16>, vector<128x128xbf16>, vector<64x128xf32> -> vector<64x128xf32>
      %c3_118 = arith.constant 3 : index
      %c0_119 = arith.constant 0 : index
      %227 = vector.load %arg11[%c3_118, %c0_119] : memref<5x128xf32, #tpu.memory_space<vmem>>, vector<1x128xf32>
      %228 = vector.broadcast %227 : vector<1x128xf32> to vector<64x128xf32>
      %229 = arith.addf %226, %228 : vector<64x128xf32>
      %cst_120 = arith.constant 0.000000e+00 : f32
      %230 = vector.broadcast %cst_120 : f32 to vector<64x128xf32>
      %231 = arith.maximumf %229, %230 : vector<64x128xf32>
      %c2_121 = arith.constant 2 : index
      %c0_122 = arith.constant 0 : index
      %232 = vector.load %arg12[%c2_121, %c0_122] : memref<3x128xf32, #tpu.memory_space<vmem>>, vector<1x128xf32>
      %c2_123 = arith.constant 2 : index
      %c0_124 = arith.constant 0 : index
      %233 = vector.load %arg13[%c2_123, %c0_124] : memref<3x128xf32, #tpu.memory_space<vmem>>, vector<1x128xf32>
      %cst_125 = arith.constant dense<0.000000e+00> : vector<64xf32>
      %234 = vector.multi_reduction <add>, %231, %cst_125 [1] : vector<64x128xf32> to vector<64xf32>
      %235 = vector.shape_cast %234 : vector<64xf32> to vector<64x1xf32>
      %cst_126 = arith.constant 1.280000e+02 : f32
      %236 = vector.broadcast %cst_126 : f32 to vector<64x1xf32>
      %237 = arith.divf %235, %236 : vector<64x1xf32>
      %238 = vector.broadcast %237 : vector<64x1xf32> to vector<64x128xf32>
      %239 = arith.subf %231, %238 : vector<64x128xf32>
      %240 = arith.mulf %239, %239 : vector<64x128xf32>
      %cst_127 = arith.constant dense<0.000000e+00> : vector<64xf32>
      %241 = vector.multi_reduction <add>, %240, %cst_127 [1] : vector<64x128xf32> to vector<64xf32>
      %242 = vector.shape_cast %241 : vector<64xf32> to vector<64x1xf32>
      %cst_128 = arith.constant 1.280000e+02 : f32
      %243 = vector.broadcast %cst_128 : f32 to vector<64x1xf32>
      %244 = arith.divf %242, %243 : vector<64x1xf32>
      %245 = vector.broadcast %237 : vector<64x1xf32> to vector<64x128xf32>
      %246 = arith.subf %231, %245 : vector<64x128xf32>
      %cst_129 = arith.constant 9.99999974E-6 : f32
      %247 = vector.broadcast %cst_129 : f32 to vector<64x1xf32>
      %248 = arith.addf %244, %247 : vector<64x1xf32>
      %249 = math.rsqrt %248 : vector<64x1xf32>
      %250 = vector.broadcast %249 : vector<64x1xf32> to vector<64x128xf32>
      %251 = arith.mulf %246, %250 : vector<64x128xf32>
      %252 = vector.broadcast %232 : vector<1x128xf32> to vector<64x128xf32>
      %253 = arith.mulf %251, %252 : vector<64x128xf32>
      %254 = vector.broadcast %233 : vector<1x128xf32> to vector<64x128xf32>
      %255 = arith.addf %253, %254 : vector<64x128xf32>
      %256 = arith.truncf %255 : vector<64x128xf32> to vector<64x128xbf16>
      %c3_130 = arith.constant 3 : index
      %c0_131 = arith.constant 0 : index
      %c0_132 = arith.constant 0 : index
      %257 = vector.load %arg10[%c3_130, %c0_131, %c0_132] : memref<4x128x128xbf16, #tpu.memory_space<vmem>>, vector<1x128x128xbf16>
      %258 = vector.shape_cast %257 : vector<1x128x128xbf16> to vector<128x128xbf16>
      %cst_133 = arith.constant dense<0.000000e+00> : vector<64x128xf32>
      %259 = tpu.matmul %256, %258, %cst_133 {dimension_numbers = #tpu.dot_dimension_numbers<[1], [0], [0], [1], [0, 0, 1, 1], [], []>} : vector<64x128xbf16>, vector<128x128xbf16>, vector<64x128xf32> -> vector<64x128xf32>
      %c4_134 = arith.constant 4 : index
      %c0_135 = arith.constant 0 : index
      %260 = vector.load %arg11[%c4_134, %c0_135] : memref<5x128xf32, #tpu.memory_space<vmem>>, vector<1x128xf32>
      %261 = vector.broadcast %260 : vector<1x128xf32> to vector<64x128xf32>
      %262 = arith.addf %259, %261 : vector<64x128xf32>
      %263 = arith.addf %148, %262 : vector<64x128xf32>
      %c0_136 = arith.constant 0 : index
      %c0_137 = arith.constant 0 : index
      %264 = vector.load %arg15[%c0_136, %c0_137] : memref<64x128xf32, #tpu.memory_space<vmem>>, vector<64x128xf32>
      tpu.vector_store %arg15[%c0_136, %c0_137], %263 {strides = array<i32>} : memref<64x128xf32, #tpu.memory_space<vmem>>, vector<64x128xf32>,
    } else {
    }
    return
  }
  func.func @transform_0(%arg0: i32) -> (i32, i32) {
    %c0_i32 = arith.constant 0 : i32
    %c0_i32_0 = arith.constant 0 : i32
    return %c0_i32, %arg0 : i32, i32
  }
  func.func @transform_1(%arg0: i32) -> (i32, i32) {
    %c0_i32 = arith.constant 0 : i32
    %c0_i32_0 = arith.constant 0 : i32
    return %arg0, %c0_i32 : i32, i32
  }
  func.func @transform_2(%arg0: i32) -> (i32, i32) {
    %c0_i32 = arith.constant 0 : i32
    %c0_i32_0 = arith.constant 0 : i32
    %c0_i32_1 = arith.constant 0 : i32
    return %c0_i32, %c0_i32_0 : i32, i32
  }
  func.func @transform_3(%arg0: i32) -> (i32, i32) {
    %c0_i32 = arith.constant 0 : i32
    %c0_i32_0 = arith.constant 0 : i32
    %c0_i32_1 = arith.constant 0 : i32
    return %c0_i32, %c0_i32_0 : i32, i32
  }
  func.func @transform_4(%arg0: i32) -> (i32, i32, i32) {
    %c0_i32 = arith.constant 0 : i32
    %c0_i32_0 = arith.constant 0 : i32
    %c0_i32_1 = arith.constant 0 : i32
    %c0_i32_2 = arith.constant 0 : i32
    return %c0_i32, %c0_i32_0, %c0_i32_1 : i32, i32, i32
  }
  func.func @transform_5(%arg0: i32) -> (i32, i32) {
    %c0_i32 = arith.constant 0 : i32
    %c0_i32_0 = arith.constant 0 : i32
    %c0_i32_1 = arith.constant 0 : i32
    return %c0_i32, %c0_i32_0 : i32, i32
  }
  func.func @transform_6(%arg0: i32) -> (i32, i32) {
    %c0_i32 = arith.constant 0 : i32
    %c0_i32_0 = arith.constant 0 : i32
    %c0_i32_1 = arith.constant 0 : i32
    return %c0_i32, %c0_i32_0 : i32, i32
  }
  func.func @transform_7(%arg0: i32) -> (i32, i32) {
    %c0_i32 = arith.constant 0 : i32
    %c0_i32_0 = arith.constant 0 : i32
    %c0_i32_1 = arith.constant 0 : i32
    return %c0_i32, %c0_i32_0 : i32, i32
  }
  func.func @transform_8(%arg0: i32) -> (i32, i32) {
    %c0_i32 = arith.constant 0 : i32
    %c0_i32_0 = arith.constant 0 : i32
    %c0_i32_1 = arith.constant 0 : i32
    return %c0_i32, %c0_i32_0 : i32, i32
  }
  func.func @transform_9(%arg0: i32) -> (i32, i32, i32) {
    %c0_i32 = arith.constant 0 : i32
    %c0_i32_0 = arith.constant 0 : i32
    %c0_i32_1 = arith.constant 0 : i32
    %c0_i32_2 = arith.constant 0 : i32
    return %c0_i32, %c0_i32_0, %c0_i32_1 : i32, i32, i32
  }
  func.func @transform_10(%arg0: i32) -> (i32, i32) {
    %c0_i32 = arith.constant 0 : i32
    %c0_i32_0 = arith.constant 0 : i32
    %c0_i32_1 = arith.constant 0 : i32
    return %c0_i32, %c0_i32_0 : i32, i32
  }
  func.func @transform_11(%arg0: i32) -> (i32, i32) {
    %c0_i32 = arith.constant 0 : i32
    %c0_i32_0 = arith.constant 0 : i32
    %c0_i32_1 = arith.constant 0 : i32
    return %c0_i32, %c0_i32_0 : i32, i32
  }
  func.func @transform_12(%arg0: i32) -> (i32, i32) {
    %c0_i32 = arith.constant 0 : i32
    %c0_i32_0 = arith.constant 0 : i32
    %c0_i32_1 = arith.constant 0 : i32
    return %c0_i32, %c0_i32_0 : i32, i32
  }
  func.func @transform_13(%arg0: i32) -> (i32, i32) {
    %c0_i32 = arith.constant 0 : i32
    %c0_i32_0 = arith.constant 0 : i32
    return %arg0, %c0_i32 : i32, i32
  }
  func.func @transform_14(%arg0: i32) -> (i32, i32) {
    %c0_i32 = arith.constant 0 : i32
    %c0_i32_0 = arith.constant 0 : i32
    %c0_i32_1 = arith.constant 0 : i32
    return %c0_i32, %c0_i32_0 : i32, i32
  }
}

</mosaic_0001>

<llo_original>
// kernel: tpu_custom_call.1
$region0: #{tpu_custom_call.1}
  #allocation0 [shape = 'u32[]', space=smem, size = 0x4, offset = 0x4, fixed_abs, tag = 'smem constant byte address 0x4 - core index']
  #allocation1 [shape = 'u32[72,128]{1,0:T(1,128)}', space=vmem, size = 0x9000, scoped, tag = 'internal scratch']
  #allocation2 [shape = 'f32[128,128]{1,0:T(8,128)}', space=vmem, size = 0x10000, scoped, tag = 'scratch operand']
  #allocation3 [shape = 'f32[64,128]{1,0:T(8,128)}', space=vmem, size = 0x8000, scoped, tag = 'scratch operand']
  %s0 = inlined_call_operand.hbm [shape: s32[2,512], index: 0, kind: input, shape index: {}]
  %s1 = inlined_call_operand.hbm [shape: f32[512,128], index: 1, kind: input, shape index: {}]
  %s2 = inlined_call_operand.hbm [shape: f32[64,128], index: 2, kind: input, shape index: {}]
  %s3 = inlined_call_operand.hbm [shape: bf16[384,128], index: 3, kind: input, shape index: {}]
  %s4 = inlined_call_operand.hbm [shape: bf16[4,128,128], index: 4, kind: input, shape index: {}]
  %s5 = inlined_call_operand.hbm [shape: f32[5,128], index: 5, kind: input, shape index: {}]
  %s6 = inlined_call_operand.hbm [shape: f32[3,128], index: 6, kind: input, shape index: {}]
  %s7 = inlined_call_operand.hbm [shape: f32[3,128], index: 7, kind: input, shape index: {}]
  %s8 = inlined_call_operand.hbm [shape: bf16[256,128], index: 8, kind: input, shape index: {}]
  %s9 = inlined_call_operand.hbm [shape: bf16[4,128,128], index: 9, kind: input, shape index: {}]
  %s10 = inlined_call_operand.vmem [shape: f32[5,128], index: 10, kind: input, shape index: {}]
  %s11 = inlined_call_operand.hbm [shape: f32[3,128], index: 11, kind: input, shape index: {}]
  %s12 = inlined_call_operand.hbm [shape: f32[3,128], index: 12, kind: input, shape index: {}]
  %s13 = inlined_call_operand.hbm [shape: f32[512,128], index: 13, kind: output, shape index: {0}]
  %s14 = inlined_call_operand.hbm [shape: f32[64,128], index: 14, kind: output, shape index: {1}]
  %15 = xla_tuple %s13, %s14
  %s16 = sld [smem:[#allocation0]]
  $region149: #{tpu_custom_call.1} parent=0
    _
  %s18 = ssub.s32 1, %s16
  %s19 = scalar_select 0, %s18, %s16
  $region1: #{tpu_custom_call.1} parent=0
    #allocation4 [shape = 'u8[4096]{0}', space=vmem, size = 0x1000, scoped, tag = 'input window, operand 0']
    #allocation5 [shape = 's32[2]{0}', space=sflag, size = 0x8, scoped, tag = 'scoped memory for tpu_custom_call.1']
    #allocation6 [shape = 's32[2]{0}', space=sflag, size = 0x8, scoped, tag = 'scoped memory for tpu_custom_call.1']
    #allocation7 [shape = 'u8[262144]{0}', space=vmem, size = 0x40000, scoped, tag = 'input window, operand 1']
    #allocation8 [shape = 's32[2]{0}', space=sflag, size = 0x8, scoped, tag = 'scoped memory for tpu_custom_call.1']
    #allocation9 [shape = 'u8[32768]{0}', space=vmem, size = 0x8000, scoped, tag = 'input window, operand 2, single buffered']
    #allocation10 [shape = 'u8[98304]{0}', space=vmem, size = 0x18000, scoped, tag = 'input window, operand 3, single buffered']
    #allocation11 [shape = 's32[1]{0}', space=sflag, size = 0x4, scoped, tag = 'scoped memory for tpu_custom_call.1']
    #allocation12 [shape = 'u8[131072]{0}', space=vmem, size = 0x20000, scoped, tag = 'input window, operand 4, single buffered']
    #allocation13 [shape = 'u8[4096]{0}', space=vmem, size = 0x1000, scoped, tag = 'input window, operand 5, single buffered']
    #allocation14 [shape = 's32[1]{0}', space=sflag, size = 0x4, scoped, tag = 'scoped memory for tpu_custom_call.1']
    #allocation15 [shape = 'u8[2048]{0}', space=vmem, size = 0x800, scoped, tag = 'input window, operand 6, single buffered']
    #allocation16 [shape = 'u8[2048]{0}', space=vmem, size = 0x800, scoped, tag = 'input window, operand 7, single buffered']
    #allocation17 [shape = 's32[1]{0}', space=sflag, size = 0x4, scoped, tag = 'scoped memory for tpu_custom_call.1']
    #allocation18 [shape = 'u8[65536]{0}', space=vmem, size = 0x10000, scoped, tag = 'input window, operand 8, single buffered']
    #allocation19 [shape = 'u8[131072]{0}', space=vmem, size = 0x20000, scoped, tag = 'input window, operand 9, single buffered']
    #allocation20 [shape = 's32[1]{0}', space=sflag, size = 0x4, scoped, tag = 'scoped memory for tpu_custom_call.1']
    #allocation21 [shape = 'u8[2048]{0}', space=vmem, size = 0x800, scoped, tag = 'input window, operand 11, single buffered']
    #allocation22 [shape = 'u8[2048]{0}', space=vmem, size = 0x800, scoped, tag = 'input window, operand 12, single buffered']
    #allocation23 [shape = 's32[1]{0}', space=sflag, size = 0x4, scoped, tag = 'scoped memory for tpu_custom_call.1']
    #allocation24 [shape = 'u8[262144]{0}', space=vmem, size = 0x40000, scoped, tag = 'output window, operand 0']
    #allocation25 [shape = 'u8[32768]{0}', space=vmem, size = 0x8000, scoped, tag = 'output window, operand 1, single buffered']
    #allocation26 [shape = 's32[1]{0}', space=sflag, size = 0x4, scoped, tag = 'scoped memory for tpu_custom_call.1']
    %20 = vsyncpa [#allocation5], 0
    %s21 = scalar_lea.sflag [#allocation5], 1
    %22 = vsyncpa %s21, 0
    %23 = vsyncpa [#allocation8], 0
    %s24 = scalar_lea.sflag [#allocation8], 1
    %25 = vsyncpa %s24, 0
    %26 = vsyncpa [#allocation11], 0
    %27 = vsyncpa [#allocation14], 0
    %28 = vsyncpa [#allocation17], 0
    %29 = vsyncpa [#allocation20], 0
    %30 = vsyncpa [#allocation23], 0
    %31 = vsyncpa [#allocation6], 0
    %s32 = scalar_lea.sflag [#allocation6], 1
    %33 = vsyncpa %s32, 0
    %34 = vsyncpa [#allocation26], 0
    loop: start=0, step=1, limit=4
    $region2: #{tpu_custom_call.1} parent=1 // loop_pre_header
      _
    $region3: #{tpu_custom_call.1} parent=1 // loop_header
      %s36 = sphi 0, %s40
      %p37 = scmp.ge.s32.totalorder %s36, 4
      %s46 = sphi 0, %s48
      %s49 = sphi 0, %s46
      %s50 = sphi 0, %s49
      %s66 = sphi 0, %s50
      %s72 = sphi 0, %s74
      %s75 = sphi 0, %s72
      %s76 = sphi 0, %s75
      %s92 = sphi 0, %s76
      %s96 = sphi 0, %s96
      %s98 = sphi 0, %s96
      %s99 = sphi 0, %s98
      %s113 = sphi 0, %s99
      %s117 = sphi 0, %s117
      %s119 = sphi 0, %s117
      %s120 = sphi 0, %s119
      %s134 = sphi 0, %s120
      %s138 = sphi 0, %s138
      %s140 = sphi 0, %s138
      %s141 = sphi 0, %s140
      %s155 = sphi 0, %s141
      %s159 = sphi 0, %s159
      %s161 = sphi 0, %s159
      %s162 = sphi 0, %s161
      %s176 = sphi 0, %s162
      %s180 = sphi 0, %s180
      %s182 = sphi 0, %s180
      %s183 = sphi 0, %s182
      %s197 = sphi 0, %s183
      %s201 = sphi 0, %s201
      %s203 = sphi 0, %s201
      %s204 = sphi 0, %s203
      %s218 = sphi 0, %s204
      %s222 = sphi 0, %s222
      %s224 = sphi 0, %s222
      %s225 = sphi 0, %s224
      %s239 = sphi 0, %s225
      %s243 = sphi 0, %s243
      %s245 = sphi 0, %s243
      %s246 = sphi 0, %s245
      %s260 = sphi 0, %s246
      %s264 = sphi 0, %s264
      %s266 = sphi 0, %s264
      %s267 = sphi 0, %s266
      %s281 = sphi 0, %s267
      %s285 = sphi 0, %s285
      %s287 = sphi 0, %s285
      %s288 = sphi 0, %s287
      %s302 = sphi 0, %s288
      %s306 = sphi 0, %s306
      %s308 = sphi 0, %s306
      %s309 = sphi 0, %s308
      %s323 = sphi 0, %s309
      %s329 = sphi 0, %s331
      %s332 = sphi 0, %s329
      %s333 = sphi 0, %s332
      %s349 = sphi 0, %s333
      %s353 = sphi 0, %s353
      %s355 = sphi 0, %s353
      %s356 = sphi 0, %s355
      %s370 = sphi 0, %s356
    $region4: #{tpu_custom_call.1} parent=1 // loop_header_branch
      %39 = sbr.rel (%p37) target = $region8
    $region5: #{tpu_custom_call.1} parent=1 // loop_body
      %s41 = ssub.s32 %s36, 1
      %s42 = ssub.s32 %s36, 2
      %s43 = sadd.s32 %s36, 1
      %s44 = ssub.s32 %s36, %s43
      %p45 = scmp.eq.s32.totalorder %s44, 0
      %s47 = sadd.s32 %s46, 1
      %s48 = scalar_select %p45, %s46, %s47
      %p51 = pneg %p45
      %p52 = scmp.eq.s32.totalorder %s36, 1
      %p53 = por %p51, %p52
      %p54 = scmp.ne.s32.totalorder %s46, %s49
      %p55 = scmp.eq.s32.totalorder %s36, 0
      %p56 = por %p54, %p55
      %p57 = scmp.ne.s32.totalorder %s46, %s49
      %p58 = scmp.eq.s32.totalorder %s41, 1
      %p59 = por %p57, %p58
      %p60 = scmp.ne.s32.totalorder %s49, %s50
      %p61 = scmp.eq.s32.totalorder %s41, 0
      %p62 = por %p60, %p61
      %p63 = scmp.ne.s32.totalorder %s49, %s50
      %p64 = scmp.eq.s32.totalorder %s42, 1
      %p65 = por %p63, %p64
      %p67 = scmp.ne.s32.totalorder %s50, %s66
      %p68 = scmp.eq.s32.totalorder %s42, 0
      %p69 = por %p67, %p68
      %s70 = ssub.s32 %s36, %s43
      %p71 = scmp.eq.s32.totalorder %s70, 0
      %s73 = sadd.s32 %s72, 1
      %s74 = scalar_select %p71, %s72, %s73
      %p77 = pneg %p71
      %p78 = scmp.eq.s32.totalorder %s36, 1
      %p79 = por %p77, %p78
      %p80 = scmp.ne.s32.totalorder %s72, %s75
      %p81 = scmp.eq.s32.totalorder %s36, 0
      %p82 = por %p80, %p81
      %p83 = scmp.ne.s32.totalorder %s72, %s75
      %p84 = scmp.eq.s32.totalorder %s41, 1
      %p85 = por %p83, %p84
      %p86 = scmp.ne.s32.totalorder %s75, %s76
      %p87 = scmp.eq.s32.totalorder %s41, 0
      %p88 = por %p86, %p87
      %p89 = scmp.ne.s32.totalorder %s75, %s76
      %p90 = scmp.eq.s32.totalorder %s42, 1
      %p91 = por %p89, %p90
      %p93 = scmp.ne.s32.totalorder %s76, %s92
      %p94 = scmp.eq.s32.totalorder %s42, 0
      %p95 = por %p93, %p94
      %s97 = sadd.s32 %s96, 1
      %p100 = scmp.eq.s32.totalorder %s36, 1
      %p101 = scmp.ne.s32.totalorder %s96, %s98
      %p102 = scmp.eq.s32.totalorder %s36, 0
      %p103 = por %p101, %p102
      %p104 = scmp.ne.s32.totalorder %s96, %s98
      %p105 = scmp.eq.s32.totalorder %s41, 1
      %p106 = por %p104, %p105
      %p107 = scmp.ne.s32.totalorder %s98, %s99
      %p108 = scmp.eq.s32.totalorder %s41, 0
      %p109 = por %p107, %p108
      %p110 = scmp.ne.s32.totalorder %s98, %s99
      %p111 = scmp.eq.s32.totalorder %s42, 1
      %p112 = por %p110, %p111
      %p114 = scmp.ne.s32.totalorder %s99, %s113
      %p115 = scmp.eq.s32.totalorder %s42, 0
      %p116 = por %p114, %p115
      %s118 = sadd.s32 %s117, 1
      %p121 = scmp.eq.s32.totalorder %s36, 1
      %p122 = scmp.ne.s32.totalorder %s117, %s119
      %p123 = scmp.eq.s32.totalorder %s36, 0
      %p124 = por %p122, %p123
      %p125 = scmp.ne.s32.totalorder %s117, %s119
      %p126 = scmp.eq.s32.totalorder %s41, 1
      %p127 = por %p125, %p126
      %p128 = scmp.ne.s32.totalorder %s119, %s120
      %p129 = scmp.eq.s32.totalorder %s41, 0
      %p130 = por %p128, %p129
      %p131 = scmp.ne.s32.totalorder %s119, %s120
      %p132 = scmp.eq.s32.totalorder %s42, 1
      %p133 = por %p131, %p132
      %p135 = scmp.ne.s32.totalorder %s120, %s134
      %p136 = scmp.eq.s32.totalorder %s42, 0
      %p137 = por %p135, %p136
      %s139 = sadd.s32 %s138, 1
      %p142 = scmp.eq.s32.totalorder %s36, 1
      %p143 = scmp.ne.s32.totalorder %s138, %s140
      %p144 = scmp.eq.s32.totalorder %s36, 0
      %p145 = por %p143, %p144
      %p146 = scmp.ne.s32.totalorder %s138, %s140
      %p147 = scmp.eq.s32.totalorder %s41, 1
      %p148 = por %p146, %p147
      %p149 = scmp.ne.s32.totalorder %s140, %s141
      %p150 = scmp.eq.s32.totalorder %s41, 0
      %p151 = por %p149, %p150
      %p152 = scmp.ne.s32.totalorder %s140, %s141
      %p153 = scmp.eq.s32.totalorder %s42, 1
      %p154 = por %p152, %p153
      %p156 = scmp.ne.s32.totalorder %s141, %s155
      %p157 = scmp.eq.s32.totalorder %s42, 0
      %p158 = por %p156, %p157
      %s160 = sadd.s32 %s159, 1
      %p163 = scmp.eq.s32.totalorder %s36, 1
      %p164 = scmp.ne.s32.totalorder %s159, %s161
      %p165 = scmp.eq.s32.totalorder %s36, 0
      %p166 = por %p164, %p165
      %p167 = scmp.ne.s32.totalorder %s159, %s161
      %p168 = scmp.eq.s32.totalorder %s41, 1
      %p169 = por %p167, %p168
      %p170 = scmp.ne.s32.totalorder %s161, %s162
      %p171 = scmp.eq.s32.totalorder %s41, 0
      %p172 = por %p170, %p171
      %p173 = scmp.ne.s32.totalorder %s161, %s162
      %p174 = scmp.eq.s32.totalorder %s42, 1
      %p175 = por %p173, %p174
      %p177 = scmp.ne.s32.totalorder %s162, %s176
      %p178 = scmp.eq.s32.totalorder %s42, 0
      %p179 = por %p177, %p178
      %s181 = sadd.s32 %s180, 1
      %p184 = scmp.eq.s32.totalorder %s36, 1
      %p185 = scmp.ne.s32.totalorder %s180, %s182
      %p186 = scmp.eq.s32.totalorder %s36, 0
      %p187 = por %p185, %p186
      %p188 = scmp.ne.s32.totalorder %s180, %s182
      %p189 = scmp.eq.s32.totalorder %s41, 1
      %p190 = por %p188, %p189
      %p191 = scmp.ne.s32.totalorder %s182, %s183
      %p192 = scmp.eq.s32.totalorder %s41, 0
      %p193 = por %p191, %p192
      %p194 = scmp.ne.s32.totalorder %s182, %s183
      %p195 = scmp.eq.s32.totalorder %s42, 1
      %p196 = por %p194, %p195
      %p198 = scmp.ne.s32.totalorder %s183, %s197
      %p199 = scmp.eq.s32.totalorder %s42, 0
      %p200 = por %p198, %p199
      %s202 = sadd.s32 %s201, 1
      %p205 = scmp.eq.s32.totalorder %s36, 1
      %p206 = scmp.ne.s32.totalorder %s201, %s203
      %p207 = scmp.eq.s32.totalorder %s36, 0
      %p208 = por %p206, %p207
      %p209 = scmp.ne.s32.totalorder %s201, %s203
      %p210 = scmp.eq.s32.totalorder %s41, 1
      %p211 = por %p209, %p210
      %p212 = scmp.ne.s32.totalorder %s203, %s204
      %p213 = scmp.eq.s32.totalorder %s41, 0
      %p214 = por %p212, %p213
      %p215 = scmp.ne.s32.totalorder %s203, %s204
      %p216 = scmp.eq.s32.totalorder %s42, 1
      %p217 = por %p215, %p216
      %p219 = scmp.ne.s32.totalorder %s204, %s218
      %p220 = scmp.eq.s32.totalorder %s42, 0
      %p221 = por %p219, %p220
      %s223 = sadd.s32 %s222, 1
      %p226 = scmp.eq.s32.totalorder %s36, 1
      %p227 = scmp.ne.s32.totalorder %s222, %s224
      %p228 = scmp.eq.s32.totalorder %s36, 0
      %p229 = por %p227, %p228
      %p230 = scmp.ne.s32.totalorder %s222, %s224
      %p231 = scmp.eq.s32.totalorder %s41, 1
      %p232 = por %p230, %p231
      %p233 = scmp.ne.s32.totalorder %s224, %s225
      %p234 = scmp.eq.s32.totalorder %s41, 0
      %p235 = por %p233, %p234
      %p236 = scmp.ne.s32.totalorder %s224, %s225
      %p237 = scmp.eq.s32.totalorder %s42, 1
      %p238 = por %p236, %p237
      %p240 = scmp.ne.s32.totalorder %s225, %s239
      %p241 = scmp.eq.s32.totalorder %s42, 0
      %p242 = por %p240, %p241
      %s244 = sadd.s32 %s243, 1
      %p247 = scmp.eq.s32.totalorder %s36, 1
      %p248 = scmp.ne.s32.totalorder %s243, %s245
      %p249 = scmp.eq.s32.totalorder %s36, 0
      %p250 = por %p248, %p249
      %p251 = scmp.ne.s32.totalorder %s243, %s245
      %p252 = scmp.eq.s32.totalorder %s41, 1
      %p253 = por %p251, %p252
      %p254 = scmp.ne.s32.totalorder %s245, %s246
      %p255 = scmp.eq.s32.totalorder %s41, 0
      %p256 = por %p254, %p255
      %p257 = scmp.ne.s32.totalorder %s245, %s246
      %p258 = scmp.eq.s32.totalorder %s42, 1
      %p259 = por %p257, %p258
      %p261 = scmp.ne.s32.totalorder %s246, %s260
      %p262 = scmp.eq.s32.totalorder %s42, 0
      %p263 = por %p261, %p262
      %s265 = sadd.s32 %s264, 1
      %p268 = scmp.eq.s32.totalorder %s36, 1
      %p269 = scmp.ne.s32.totalorder %s264, %s266
      %p270 = scmp.eq.s32.totalorder %s36, 0
      %p271 = por %p269, %p270
      %p272 = scmp.ne.s32.totalorder %s264, %s266
      %p273 = scmp.eq.s32.totalorder %s41, 1
      %p274 = por %p272, %p273
      %p275 = scmp.ne.s32.totalorder %s266, %s267
      %p276 = scmp.eq.s32.totalorder %s41, 0
      %p277 = por %p275, %p276
      %p278 = scmp.ne.s32.totalorder %s266, %s267
      %p279 = scmp.eq.s32.totalorder %s42, 1
      %p280 = por %p278, %p279
      %p282 = scmp.ne.s32.totalorder %s267, %s281
      %p283 = scmp.eq.s32.totalorder %s42, 0
      %p284 = por %p282, %p283
      %s286 = sadd.s32 %s285, 1
      %p289 = scmp.eq.s32.totalorder %s36, 1
      %p290 = scmp.ne.s32.totalorder %s285, %s287
      %p291 = scmp.eq.s32.totalorder %s36, 0
      %p292 = por %p290, %p291
      %p293 = scmp.ne.s32.totalorder %s285, %s287
      %p294 = scmp.eq.s32.totalorder %s41, 1
      %p295 = por %p293, %p294
      %p296 = scmp.ne.s32.totalorder %s287, %s288
      %p297 = scmp.eq.s32.totalorder %s41, 0
      %p298 = por %p296, %p297
      %p299 = scmp.ne.s32.totalorder %s287, %s288
      %p300 = scmp.eq.s32.totalorder %s42, 1
      %p301 = por %p299, %p300
      %p303 = scmp.ne.s32.totalorder %s288, %s302
      %p304 = scmp.eq.s32.totalorder %s42, 0
      %p305 = por %p303, %p304
      %s307 = sadd.s32 %s306, 1
      %p310 = scmp.eq.s32.totalorder %s36, 1
      %p311 = scmp.ne.s32.totalorder %s306, %s308
      %p312 = scmp.eq.s32.totalorder %s36, 0
      %p313 = por %p311, %p312
      %p314 = scmp.ne.s32.totalorder %s306, %s308
      %p315 = scmp.eq.s32.totalorder %s41, 1
      %p316 = por %p314, %p315
      %p317 = scmp.ne.s32.totalorder %s308, %s309
      %p318 = scmp.eq.s32.totalorder %s41, 0
      %p319 = por %p317, %p318
      %p320 = scmp.ne.s32.totalorder %s308, %s309
      %p321 = scmp.eq.s32.totalorder %s42, 1
      %p322 = por %p320, %p321
      %p324 = scmp.ne.s32.totalorder %s309, %s323
      %p325 = scmp.eq.s32.totalorder %s42, 0
      %p326 = por %p324, %p325
      %s327 = ssub.s32 %s36, %s43
      %p328 = scmp.eq.s32.totalorder %s327, 0
      %s330 = sadd.s32 %s329, 1
      %s331 = scalar_select %p328, %s329, %s330
      %p334 = pneg %p328
      %p335 = scmp.eq.s32.totalorder %s36, 1
      %p336 = por %p334, %p335
      %p337 = scmp.ne.s32.totalorder %s329, %s332
      %p338 = scmp.eq.s32.totalorder %s36, 0
      %p339 = por %p337, %p338
      %p340 = scmp.ne.s32.totalorder %s329, %s332
      %p341 = scmp.eq.s32.totalorder %s41, 1
      %p342 = por %p340, %p341
      %p343 = scmp.ne.s32.totalorder %s332, %s333
      %p344 = scmp.eq.s32.totalorder %s41, 0
      %p345 = por %p343, %p344
      %p346 = scmp.ne.s32.totalorder %s332, %s333
      %p347 = scmp.eq.s32.totalorder %s42, 1
      %p348 = por %p346, %p347
      %p350 = scmp.ne.s32.totalorder %s333, %s349
      %p351 = scmp.eq.s32.totalorder %s42, 0
      %p352 = por %p350, %p351
      %s354 = sadd.s32 %s353, 1
      %p357 = scmp.eq.s32.totalorder %s36, 1
      %p358 = scmp.ne.s32.totalorder %s353, %s355
      %p359 = scmp.eq.s32.totalorder %s36, 0
      %p360 = por %p358, %p359
      %p361 = scmp.ne.s32.totalorder %s353, %s355
      %p362 = scmp.eq.s32.totalorder %s41, 1
      %p363 = por %p361, %p362
      %p364 = scmp.ne.s32.totalorder %s355, %s356
      %p365 = scmp.eq.s32.totalorder %s41, 0
      %p366 = por %p364, %p365
      %p367 = scmp.ne.s32.totalorder %s355, %s356
      %p368 = scmp.eq.s32.totalorder %s42, 1
      %p369 = por %p367, %p368
      %p371 = scmp.ne.s32.totalorder %s356, %s370
      %p372 = scmp.eq.s32.totalorder %s42, 0
      %p373 = por %p371, %p372
      %p374 = scmp.le.s32.totalorder 1, %s36
      %p375 = scmp.lt.s32.totalorder %s36, 3
      %p376 = pnand %p374, %p375
      %p377 = pneg %p376
      // Predicated region
      $region9: #{tpu_custom_call.1} parent=5 // pred_check
        _
      $region10: #{tpu_custom_call.1} parent=5 // pred_check_branch
        %379 = sbr.rel (%p376) target = $region12
      $region11: #{tpu_custom_call.1} parent=5 // pred_region
        %s380 = ssub.s32 %s36, 1
        // Predicated region
        $region13: #{tpu_custom_call.1} parent=11 // pred_check
          %p381 = pneg %p109
        $region14: #{tpu_custom_call.1} parent=11 // pred_check_branch
          %383 = sbr.rel (%p381) target = $region16
        $region15: #{tpu_custom_call.1} parent=11 // pred_region
          %385 = vsyncadd [#allocation8], 0
          %s386 = sshll.u32 %s2, 4
          %s387 = int_to_ptr.hbm [resolvable:$true] %s386
          %s388 = sshll.u32 [#allocation9], 4
          %s389 = int_to_ptr.vmem [resolvable:$true] %s388
          %394 = dma.hbm_to_vmem [thread:$0]  %s387, 1024, %s389, [#allocation8], 128, 128, 8
        $region16: #{tpu_custom_call.1} parent=11 // pred_fallthru
          _
        // Predicated region
        $region17: #{tpu_custom_call.1} parent=11 // pred_check
          %p395 = pneg %p130
        $region18: #{tpu_custom_call.1} parent=11 // pred_check_branch
          %397 = sbr.rel (%p395) target = $region20
        $region19: #{tpu_custom_call.1} parent=11 // pred_region
          %399 = vsyncadd [#allocation11], 0
          %s400 = sshll.u32 %s3, 4
          %s401 = int_to_ptr.hbm [resolvable:$true] %s400
          %s402 = sshll.u32 [#allocation10], 4
          %s403 = int_to_ptr.vmem [resolvable:$true] %s402
          %408 = dma.hbm_to_vmem [thread:$0]  %s401, 3072, %s403, [#allocation11], 64, 64, 4
        $region20: #{tpu_custom_call.1} parent=11 // pred_fallthru
          _
        // Predicated region
        $region21: #{tpu_custom_call.1} parent=11 // pred_check
          %p409 = pneg %p151
        $region22: #{tpu_custom_call.1} parent=11 // pred_check_branch
          %411 = sbr.rel (%p409) target = $region24
        $region23: #{tpu_custom_call.1} parent=11 // pred_region
          %413 = vsyncadd [#allocation11], 0
          %s414 = sshll.u32 %s4, 4
          %s415 = int_to_ptr.hbm [resolvable:$true] %s414
          %s416 = sshll.u32 [#allocation12], 4
          %s417 = int_to_ptr.vmem [resolvable:$true] %s416
          %422 = dma.hbm_to_vmem [thread:$0]  %s415, 4096, %s417, [#allocation11], 64, 64, 4
        $region24: #{tpu_custom_call.1} parent=11 // pred_fallthru
          _
        // Predicated region
        $region25: #{tpu_custom_call.1} parent=11 // pred_check
          %p423 = pneg %p172
        $region26: #{tpu_custom_call.1} parent=11 // pred_check_branch
          %425 = sbr.rel (%p423) target = $region28
        $region27: #{tpu_custom_call.1} parent=11 // pred_region
          %427 = vsyncadd [#allocation14], 0
          %s429 = sshll.u32 %s5, 4
          %s430 = int_to_ptr.hbm [resolvable:$true] %s429
          %s431 = sshll.u32 [#allocation13], 4
          %s432 = int_to_ptr.vmem [resolvable:$true] %s431
          %434 = dma.hbm_to_vmem [thread:$0]  %s430, 128, %s432, [#allocation14]
        $region28: #{tpu_custom_call.1} parent=11 // pred_fallthru
          _
        // Predicated region
        $region29: #{tpu_custom_call.1} parent=11 // pred_check
          %p435 = pneg %p193
        $region30: #{tpu_custom_call.1} parent=11 // pred_check_branch
          %437 = sbr.rel (%p435) target = $region32
        $region31: #{tpu_custom_call.1} parent=11 // pred_region
          %439 = vsyncadd [#allocation14], 0
          %s441 = sshll.u32 %s6, 4
          %s442 = int_to_ptr.hbm [resolvable:$true] %s441
          %s443 = sshll.u32 [#allocation15], 4
          %s444 = int_to_ptr.vmem [resolvable:$true] %s443
          %446 = dma.hbm_to_vmem [thread:$0]  %s442, 64, %s444, [#allocation14]
        $region32: #{tpu_custom_call.1} parent=11 // pred_fallthru
          _
        // Predicated region
        $region33: #{tpu_custom_call.1} parent=11 // pred_check
          %p447 = pneg %p214
        $region34: #{tpu_custom_call.1} parent=11 // pred_check_branch
          %449 = sbr.rel (%p447) target = $region36
        $region35: #{tpu_custom_call.1} parent=11 // pred_region
          %451 = vsyncadd [#allocation17], 0
          %s453 = sshll.u32 %s7, 4
          %s454 = int_to_ptr.hbm [resolvable:$true] %s453
          %s455 = sshll.u32 [#allocation16], 4
          %s456 = int_to_ptr.vmem [resolvable:$true] %s455
          %458 = dma.hbm_to_vmem [thread:$0]  %s454, 64, %s456, [#allocation17]
        $region36: #{tpu_custom_call.1} parent=11 // pred_fallthru
          _
        // Predicated region
        $region37: #{tpu_custom_call.1} parent=11 // pred_check
          %p459 = pneg %p235
        $region38: #{tpu_custom_call.1} parent=11 // pred_check_branch
          %461 = sbr.rel (%p459) target = $region40
        $region39: #{tpu_custom_call.1} parent=11 // pred_region
          %463 = vsyncadd [#allocation17], 0
          %s464 = sshll.u32 %s8, 4
          %s465 = int_to_ptr.hbm [resolvable:$true] %s464
          %s466 = sshll.u32 [#allocation18], 4
          %s467 = int_to_ptr.vmem [resolvable:$true] %s466
          %472 = dma.hbm_to_vmem [thread:$0]  %s465, 2048, %s467, [#allocation17], 64, 64, 4
        $region40: #{tpu_custom_call.1} parent=11 // pred_fallthru
          _
        // Predicated region
        $region41: #{tpu_custom_call.1} parent=11 // pred_check
          %p473 = pneg %p256
        $region42: #{tpu_custom_call.1} parent=11 // pred_check_branch
          %475 = sbr.rel (%p473) target = $region44
        $region43: #{tpu_custom_call.1} parent=11 // pred_region
          %477 = vsyncadd [#allocation20], 0
          %s478 = sshll.u32 %s9, 4
          %s479 = int_to_ptr.hbm [resolvable:$true] %s478
          %s480 = sshll.u32 [#allocation19], 4
          %s481 = int_to_ptr.vmem [resolvable:$true] %s480
          %486 = dma.hbm_to_vmem [thread:$0]  %s479, 4096, %s481, [#allocation20], 64, 64, 4
        $region44: #{tpu_custom_call.1} parent=11 // pred_fallthru
          _
        // Predicated region
        $region45: #{tpu_custom_call.1} parent=11 // pred_check
          %p487 = pneg %p277
        $region46: #{tpu_custom_call.1} parent=11 // pred_check_branch
          %489 = sbr.rel (%p487) target = $region48
        $region47: #{tpu_custom_call.1} parent=11 // pred_region
          _
        $region48: #{tpu_custom_call.1} parent=11 // pred_fallthru
          _
        // Predicated region
        $region49: #{tpu_custom_call.1} parent=11 // pred_check
          %p490 = pneg %p298
        $region50: #{tpu_custom_call.1} parent=11 // pred_check_branch
          %492 = sbr.rel (%p490) target = $region52
        $region51: #{tpu_custom_call.1} parent=11 // pred_region
          %494 = vsyncadd [#allocation20], 0
          %s496 = sshll.u32 %s11, 4
          %s497 = int_to_ptr.hbm [resolvable:$true] %s496
          %s498 = sshll.u32 [#allocation21], 4
          %s499 = int_to_ptr.vmem [resolvable:$true] %s498
          %501 = dma.hbm_to_vmem [thread:$0]  %s497, 64, %s499, [#allocation20]
        $region52: #{tpu_custom_call.1} parent=11 // pred_fallthru
          _
        // Predicated region
        $region53: #{tpu_custom_call.1} parent=11 // pred_check
          %p502 = pneg %p319
        $region54: #{tpu_custom_call.1} parent=11 // pred_check_branch
          %504 = sbr.rel (%p502) target = $region56
        $region55: #{tpu_custom_call.1} parent=11 // pred_region
          %506 = vsyncadd [#allocation23], 0
          %s508 = sshll.u32 %s12, 4
          %s509 = int_to_ptr.hbm [resolvable:$true] %s508
          %s510 = sshll.u32 [#allocation22], 4
          %s511 = int_to_ptr.vmem [resolvable:$true] %s510
          %513 = dma.hbm_to_vmem [thread:$0]  %s509, 64, %s511, [#allocation23]
        $region56: #{tpu_custom_call.1} parent=11 // pred_fallthru
          _
      $region12: #{tpu_custom_call.1} parent=5 // pred_fallthru
        _
      %p514 = scmp.lt.s32.totalorder %s36, 2
      // Predicated region
      $region57: #{tpu_custom_call.1} parent=5 // pred_check
        %p515 = pneg %p514
      $region58: #{tpu_custom_call.1} parent=5 // pred_check_branch
        %517 = sbr.rel (%p515) target = $region60
      $region59: #{tpu_custom_call.1} parent=5 // pred_region
        // Predicated region
        $region61: #{tpu_custom_call.1} parent=59 // pred_check
          %p518 = pneg %p56
        $region62: #{tpu_custom_call.1} parent=59 // pred_check_branch
          %520 = sbr.rel (%p518) target = $region64
        $region63: #{tpu_custom_call.1} parent=59 // pred_region
          %s521 = sand.u32 %s46, 1
          %s522 = scalar_lea.sflag [#allocation5], %s521
          %s523 = sand.u32 %s46, 1
          %s524 = smul.addr %s523, 4
          %s525 = scalar_lea.vmem [#allocation4], %s524
          %s526 = smul.u32 2, %s36
          %528 = vsyncadd %s522, 0
          %s529 = smul.addr %s526, 2
          %s530 = scalar_lea.hbm %s0, %s529
          %s532 = sshll.u32 %s530, 4
          %s533 = int_to_ptr.hbm [resolvable:$true] %s532
          %s534 = sshll.u32 %s525, 4
          %s535 = int_to_ptr.vmem [resolvable:$true] %s534
          %537 = dma.hbm_to_vmem [thread:$0]  %s533, 64, %s535, %s522
        $region64: #{tpu_custom_call.1} parent=59 // pred_fallthru
          _
        // Predicated region
        $region65: #{tpu_custom_call.1} parent=59 // pred_check
          %p538 = pneg %p82
        $region66: #{tpu_custom_call.1} parent=59 // pred_check_branch
          %540 = sbr.rel (%p538) target = $region68
        $region67: #{tpu_custom_call.1} parent=59 // pred_region
          %s541 = sand.u32 %s36, 1
          %s542 = scalar_lea.sflag [#allocation8], %s541
          %s543 = sand.u32 %s72, 1
          %s544 = smul.addr %s543, 256
          %s545 = scalar_lea.vmem [#allocation7], %s544
          %s546 = smul.u32 32, %s36
          %548 = vsyncadd %s542, 0
          %s549 = smul.addr %s546, 8
          %s550 = scalar_lea.hbm %s1, %s549
          %s551 = sshll.u32 %s550, 4
          %s552 = int_to_ptr.hbm [resolvable:$true] %s551
          %s553 = sshll.u32 %s545, 4
          %s554 = int_to_ptr.vmem [resolvable:$true] %s553
          %559 = dma.hbm_to_vmem [thread:$0]  %s552, 4096, %s554, %s542, 128, 128, 8
        $region68: #{tpu_custom_call.1} parent=59 // pred_fallthru
          _
      $region60: #{tpu_custom_call.1} parent=5 // pred_fallthru
        _
      %p560 = scmp.le.s32.totalorder 1, %s36
      %p561 = scmp.lt.s32.totalorder %s36, 3
      %p562 = pnand %p560, %p561
      %p563 = pneg %p562
      // Predicated region
      $region69: #{tpu_custom_call.1} parent=5 // pred_check
        _
      $region70: #{tpu_custom_call.1} parent=5 // pred_check_branch
        %565 = sbr.rel (%p562) target = $region72
      $region71: #{tpu_custom_call.1} parent=5 // pred_region
        %s566 = ssub.s32 %s36, 1
        %s567 = sand.u32 %s49, 1
        %s568 = scalar_lea.sflag [#allocation5], %s567
        %s569 = sand.u32 %s49, 1
        %s570 = smul.addr %s569, 4
        %s571 = scalar_lea.vmem [#allocation4], %s570
        // Predicated region
        $region73: #{tpu_custom_call.1} parent=71 // pred_check
          %p572 = pneg %p62
        $region74: #{tpu_custom_call.1} parent=71 // pred_check_branch
          %574 = sbr.rel (%p572) target = $region76
        $region75: #{tpu_custom_call.1} parent=71 // pred_region
          %576 = dma.done %s568, 64
        $region76: #{tpu_custom_call.1} parent=71 // pred_fallthru
          _
        %s577 = sand.u32 %s41, 1
        %s578 = scalar_lea.sflag [#allocation8], %s577
        %s579 = sand.u32 %s75, 1
        %s580 = smul.addr %s579, 256
        %s581 = scalar_lea.vmem [#allocation7], %s580
        // Predicated region
        $region77: #{tpu_custom_call.1} parent=71 // pred_check
          %p582 = pneg %p88
        $region78: #{tpu_custom_call.1} parent=71 // pred_check_branch
          %584 = sbr.rel (%p582) target = $region80
        $region79: #{tpu_custom_call.1} parent=71 // pred_region
          %586 = dma.done %s578, 4096
        $region80: #{tpu_custom_call.1} parent=71 // pred_fallthru
          _
        // Predicated region
        $region81: #{tpu_custom_call.1} parent=71 // pred_check
          %p587 = pneg %p109
        $region82: #{tpu_custom_call.1} parent=71 // pred_check_branch
          %589 = sbr.rel (%p587) target = $region84
        $region83: #{tpu_custom_call.1} parent=71 // pred_region
          %591 = dma.done [#allocation8], 1024
        $region84: #{tpu_custom_call.1} parent=71 // pred_fallthru
          _
        // Predicated region
        $region85: #{tpu_custom_call.1} parent=71 // pred_check
          %p592 = pneg %p130
        $region86: #{tpu_custom_call.1} parent=71 // pred_check_branch
          %594 = sbr.rel (%p592) target = $region88
        $region87: #{tpu_custom_call.1} parent=71 // pred_region
          %596 = dma.done [#allocation11], 3072
        $region88: #{tpu_custom_call.1} parent=71 // pred_fallthru
          _
        // Predicated region
        $region89: #{tpu_custom_call.1} parent=71 // pred_check
          %p597 = pneg %p151
        $region90: #{tpu_custom_call.1} parent=71 // pred_check_branch
          %599 = sbr.rel (%p597) target = $region92
        $region91: #{tpu_custom_call.1} parent=71 // pred_region
          %601 = dma.done [#allocation11], 4096
        $region92: #{tpu_custom_call.1} parent=71 // pred_fallthru
          _
        // Predicated region
        $region93: #{tpu_custom_call.1} parent=71 // pred_check
          %p602 = pneg %p172
        $region94: #{tpu_custom_call.1} parent=71 // pred_check_branch
          %604 = sbr.rel (%p602) target = $region96
        $region95: #{tpu_custom_call.1} parent=71 // pred_region
          %606 = dma.done [#allocation14], 128
        $region96: #{tpu_custom_call.1} parent=71 // pred_fallthru
          _
        // Predicated region
        $region97: #{tpu_custom_call.1} parent=71 // pred_check
          %p607 = pneg %p193
        $region98: #{tpu_custom_call.1} parent=71 // pred_check_branch
          %609 = sbr.rel (%p607) target = $region100
        $region99: #{tpu_custom_call.1} parent=71 // pred_region
          %611 = dma.done [#allocation14], 64
        $region100: #{tpu_custom_call.1} parent=71 // pred_fallthru
          _
        // Predicated region
        $region101: #{tpu_custom_call.1} parent=71 // pred_check
          %p612 = pneg %p214
        $region102: #{tpu_custom_call.1} parent=71 // pred_check_branch
          %614 = sbr.rel (%p612) target = $region104
        $region103: #{tpu_custom_call.1} parent=71 // pred_region
          %616 = dma.done [#allocation17], 64
        $region104: #{tpu_custom_call.1} parent=71 // pred_fallthru
          _
        // Predicated region
        $region105: #{tpu_custom_call.1} parent=71 // pred_check
          %p617 = pneg %p235
        $region106: #{tpu_custom_call.1} parent=71 // pred_check_branch
          %619 = sbr.rel (%p617) target = $region108
        $region107: #{tpu_custom_call.1} parent=71 // pred_region
          %621 = dma.done [#allocation17], 2048
        $region108: #{tpu_custom_call.1} parent=71 // pred_fallthru
          _
        // Predicated region
        $region109: #{tpu_custom_call.1} parent=71 // pred_check
          %p622 = pneg %p256
        $region110: #{tpu_custom_call.1} parent=71 // pred_check_branch
          %624 = sbr.rel (%p622) target = $region112
        $region111: #{tpu_custom_call.1} parent=71 // pred_region
          %626 = dma.done [#allocation20], 4096
        $region112: #{tpu_custom_call.1} parent=71 // pred_fallthru
          _
        // Predicated region
        $region113: #{tpu_custom_call.1} parent=71 // pred_check
          %p627 = pneg %p298
        $region114: #{tpu_custom_call.1} parent=71 // pred_check_branch
          %629 = sbr.rel (%p627) target = $region116
        $region115: #{tpu_custom_call.1} parent=71 // pred_region
          %631 = dma.done [#allocation20], 64
        $region116: #{tpu_custom_call.1} parent=71 // pred_fallthru
          _
        // Predicated region
        $region117: #{tpu_custom_call.1} parent=71 // pred_check
          %p632 = pneg %p319
        $region118: #{tpu_custom_call.1} parent=71 // pred_check_branch
          %634 = sbr.rel (%p632) target = $region120
        $region119: #{tpu_custom_call.1} parent=71 // pred_region
          %636 = dma.done [#allocation23], 64
        $region120: #{tpu_custom_call.1} parent=71 // pred_fallthru
          _
        %s637 = sand.u32 %s49, 1
        %s638 = scalar_lea.sflag [#allocation5], %s637
        %s639 = sand.u32 %s49, 1
        %s640 = smul.addr %s639, 4
        %s641 = scalar_lea.vmem [#allocation4], %s640
        %p642 = pneg %p62
        %p643 = pneg %p59
        %s644 = sand.u32 %s41, 1
        %s645 = scalar_lea.sflag [#allocation8], %s644
        %s646 = sand.u32 %s75, 1
        %s647 = smul.addr %s646, 256
        %s648 = scalar_lea.vmem [#allocation7], %s647
        %p649 = pneg %p88
        %p650 = pneg %p85
        %p651 = pneg %p109
        %p652 = pneg %p106
        %p653 = pneg %p130
        %p654 = pneg %p127
        %p655 = pneg %p151
        %p656 = pneg %p148
        %p657 = pneg %p172
        %p658 = pneg %p169
        %p659 = pneg %p193
        %p660 = pneg %p190
        %p661 = pneg %p214
        %p662 = pneg %p211
        %p663 = pneg %p235
        %p664 = pneg %p232
        %p665 = pneg %p256
        %p666 = pneg %p253
        %p667 = pneg %p277
        %p668 = pneg %p274
        %p669 = pneg %p298
        %p670 = pneg %p295
        %p671 = pneg %p319
        %p672 = pneg %p316
        %p673 = pneg %p345
        %p674 = pneg %p342
        %s675 = sand.u32 %s332, 1
        %s676 = scalar_lea.sflag [#allocation6], %s675
        %s677 = sand.u32 %s332, 1
        %s678 = smul.addr %s677, 256
        %s679 = scalar_lea.vmem [#allocation24], %s678
        %p680 = pneg %p366
        %p681 = pneg %p363
        %s682 = smul.u32 2, %s41
        %s683 = smul.u32 32, %s41
        %s684 = smul.u32 32, %s41
        %p685 = scmp.eq.s32.totalorder %s41, 0
        // Predicated region
        $region121: #{tpu_custom_call.1} parent=71 // pred_check
          %p686 = pneg %p685
        $region122: #{tpu_custom_call.1} parent=71 // pred_check_branch
          %688 = sbr.rel (%p686) target = $region124
        $region123: #{tpu_custom_call.1} parent=71 // pred_region
          %v689 = vld [vmem:[#allocation9] sm:$0xff]
          %v690 = vld [vmem:[#allocation9 + $0x8] sm:$0xff]
          %v691 = vld [vmem:[#allocation9 + $0x10] sm:$0xff]
          %v692 = vld [vmem:[#allocation9 + $0x18] sm:$0xff]
          %v693 = vld [vmem:[#allocation9 + $0x20] sm:$0xff]
          %v694 = vld [vmem:[#allocation9 + $0x28] sm:$0xff]
          %v695 = vld [vmem:[#allocation9 + $0x30] sm:$0xff]
          %v696 = vld [vmem:[#allocation9 + $0x38] sm:$0xff]
          %v697 = vpack.c.bf16 %v690, %v689
          %v698 = vpack.c.bf16 %v692, %v691
          %v699 = vpack.c.bf16 %v694, %v693
          %v700 = vpack.c.bf16 %v696, %v695
          %v701 = vld [vmem:[#allocation10 + $0x40] sm:$0xf]
          %v702 = vld [vmem:[#allocation10 + $0x44] sm:$0xf]
          %v703 = vld [vmem:[#allocation10 + $0x48] sm:$0xf]
          %v704 = vld [vmem:[#allocation10 + $0x4c] sm:$0xf]
          %v705 = vld [vmem:[#allocation10 + $0x50] sm:$0xf]
          %v706 = vld [vmem:[#allocation10 + $0x54] sm:$0xf]
          %v707 = vld [vmem:[#allocation10 + $0x58] sm:$0xf]
          %v708 = vld [vmem:[#allocation10 + $0x5c] sm:$0xf]
          %v709 = vld [vmem:[#allocation10 + $0x60] sm:$0xf]
          %v710 = vld [vmem:[#allocation10 + $0x64] sm:$0xf]
          %v711 = vld [vmem:[#allocation10 + $0x68] sm:$0xf]
          %v712 = vld [vmem:[#allocation10 + $0x6c] sm:$0xf]
          %v713 = vld [vmem:[#allocation10 + $0x70] sm:$0xf]
          %v714 = vld [vmem:[#allocation10 + $0x74] sm:$0xf]
          %v715 = vld [vmem:[#allocation10 + $0x78] sm:$0xf]
          %v716 = vld [vmem:[#allocation10 + $0x7c] sm:$0xf]
          %v733 = vunpack.c.l.b16 %v701
          %v734 = vunpack.c.l.b16 %v702
          %v735 = vunpack.c.l.b16 %v703
          %v736 = vunpack.c.l.b16 %v704
          %v737 = vunpack.c.l.b16 %v705
          %v738 = vunpack.c.l.b16 %v706
          %v739 = vunpack.c.l.b16 %v707
          %v740 = vunpack.c.l.b16 %v708
          %v741 = vunpack.c.l.b16 %v709
          %v742 = vunpack.c.l.b16 %v710
          %v743 = vunpack.c.l.b16 %v711
          %v744 = vunpack.c.l.b16 %v712
          %v745 = vunpack.c.l.b16 %v713
          %v746 = vunpack.c.l.b16 %v714
          %v747 = vunpack.c.l.b16 %v715
          %v748 = vunpack.c.l.b16 %v716
          %v749 = vpack.c.b16 %v734, %v733
          %v750 = vpack.c.b16 %v736, %v735
          %v751 = vpack.c.b16 %v738, %v737
          %v752 = vpack.c.b16 %v740, %v739
          %v753 = vpack.c.b16 %v742, %v741
          %v754 = vpack.c.b16 %v744, %v743
          %v755 = vpack.c.b16 %v746, %v745
          %v756 = vpack.c.b16 %v748, %v747
          %765 = vmatpush.bf16.msra.mxu0 %v756
          %766 = vmatpush.bf16.msra.mxu0 %v755
          %767 = vmatpush.bf16.msra.mxu0 %v754
          %768 = vmatpush.bf16.msra.mxu0 %v753
          %769 = vmatpush.bf16.msra.mxu0 %v752
          %770 = vmatpush.bf16.msra.mxu0 %v751
          %771 = vmatpush.bf16.msra.mxu0 %v750
          %772 = vmatpush.bf16.msra.mxu0 %v749
          %773 = vmatmul.bf16.gmra.mxu0 %v697
          %v774 = vpop.f32.mrf.mxu0
          %v775 = vadd.f32 0.0, %v774
          %v776 = vpop.f32.mrf.mxu0
          %v777 = vadd.f32 0.0, %v776
          %778 = vmatmul.bf16.gmra.mxu0 %v698
          %v779 = vpop.f32.mrf.mxu0
          %v780 = vadd.f32 0.0, %v779
          %v781 = vpop.f32.mrf.mxu0
          %v782 = vadd.f32 0.0, %v781
          %783 = vmatmul.bf16.gmra.mxu0 %v699
          %v784 = vpop.f32.mrf.mxu0
          %v785 = vadd.f32 0.0, %v784
          %v786 = vpop.f32.mrf.mxu0
          %v787 = vadd.f32 0.0, %v786
          %788 = vmatmul.bf16.gmra.mxu0 %v700
          %v789 = vpop.f32.mrf.mxu0
          %v790 = vadd.f32 0.0, %v789
          %v791 = vpop.f32.mrf.mxu0
          %v792 = vadd.f32 0.0, %v791
          %793 = vdwg.mxu0
          %794 = vst [vmem:[#allocation2] sm:$0xff] %v775
          %795 = vst [vmem:[#allocation2 + $0x8] sm:$0xff] %v777
          %796 = vst [vmem:[#allocation2 + $0x10] sm:$0xff] %v780
          %797 = vst [vmem:[#allocation2 + $0x18] sm:$0xff] %v782
          %798 = vst [vmem:[#allocation2 + $0x20] sm:$0xff] %v785
          %799 = vst [vmem:[#allocation2 + $0x28] sm:$0xff] %v787
          %800 = vst [vmem:[#allocation2 + $0x30] sm:$0xff] %v790
          %801 = vst [vmem:[#allocation2 + $0x38] sm:$0xff] %v792
          %v802 = vld [vmem:[#allocation10 + $0x80] sm:$0xf]
          %v803 = vld [vmem:[#allocation10 + $0x84] sm:$0xf]
          %v804 = vld [vmem:[#allocation10 + $0x88] sm:$0xf]
          %v805 = vld [vmem:[#allocation10 + $0x8c] sm:$0xf]
          %v806 = vld [vmem:[#allocation10 + $0x90] sm:$0xf]
          %v807 = vld [vmem:[#allocation10 + $0x94] sm:$0xf]
          %v808 = vld [vmem:[#allocation10 + $0x98] sm:$0xf]
          %v809 = vld [vmem:[#allocation10 + $0x9c] sm:$0xf]
          %v810 = vld [vmem:[#allocation10 + $0xa0] sm:$0xf]
          %v811 = vld [vmem:[#allocation10 + $0xa4] sm:$0xf]
          %v812 = vld [vmem:[#allocation10 + $0xa8] sm:$0xf]
          %v813 = vld [vmem:[#allocation10 + $0xac] sm:$0xf]
          %v814 = vld [vmem:[#allocation10 + $0xb0] sm:$0xf]
          %v815 = vld [vmem:[#allocation10 + $0xb4] sm:$0xf]
          %v816 = vld [vmem:[#allocation10 + $0xb8] sm:$0xf]
          %v817 = vld [vmem:[#allocation10 + $0xbc] sm:$0xf]
          %v834 = vunpack.c.l.b16 %v802
          %v835 = vunpack.c.l.b16 %v803
          %v836 = vunpack.c.l.b16 %v804
          %v837 = vunpack.c.l.b16 %v805
          %v838 = vunpack.c.l.b16 %v806
          %v839 = vunpack.c.l.b16 %v807
          %v840 = vunpack.c.l.b16 %v808
          %v841 = vunpack.c.l.b16 %v809
          %v842 = vunpack.c.l.b16 %v810
          %v843 = vunpack.c.l.b16 %v811
          %v844 = vunpack.c.l.b16 %v812
          %v845 = vunpack.c.l.b16 %v813
          %v846 = vunpack.c.l.b16 %v814
          %v847 = vunpack.c.l.b16 %v815
          %v848 = vunpack.c.l.b16 %v816
          %v849 = vunpack.c.l.b16 %v817
          %v850 = vpack.c.b16 %v835, %v834
          %v851 = vpack.c.b16 %v837, %v836
          %v852 = vpack.c.b16 %v839, %v838
          %v853 = vpack.c.b16 %v841, %v840
          %v854 = vpack.c.b16 %v843, %v842
          %v855 = vpack.c.b16 %v845, %v844
          %v856 = vpack.c.b16 %v847, %v846
          %v857 = vpack.c.b16 %v849, %v848
          %866 = vmatpush.bf16.msra.mxu0 %v857
          %867 = vmatpush.bf16.msra.mxu0 %v856
          %868 = vmatpush.bf16.msra.mxu0 %v855
          %869 = vmatpush.bf16.msra.mxu0 %v854
          %870 = vmatpush.bf16.msra.mxu0 %v853
          %871 = vmatpush.bf16.msra.mxu0 %v852
          %872 = vmatpush.bf16.msra.mxu0 %v851
          %873 = vmatpush.bf16.msra.mxu0 %v850
          %874 = vmatmul.bf16.gmra.mxu0 %v697
          %v875 = vpop.f32.mrf.mxu0
          %v876 = vadd.f32 0.0, %v875
          %v877 = vpop.f32.mrf.mxu0
          %v878 = vadd.f32 0.0, %v877
          %879 = vmatmul.bf16.gmra.mxu0 %v698
          %v880 = vpop.f32.mrf.mxu0
          %v881 = vadd.f32 0.0, %v880
          %v882 = vpop.f32.mrf.mxu0
          %v883 = vadd.f32 0.0, %v882
          %884 = vmatmul.bf16.gmra.mxu0 %v699
          %v885 = vpop.f32.mrf.mxu0
          %v886 = vadd.f32 0.0, %v885
          %v887 = vpop.f32.mrf.mxu0
          %v888 = vadd.f32 0.0, %v887
          %889 = vmatmul.bf16.gmra.mxu0 %v700
          %v890 = vpop.f32.mrf.mxu0
          %v891 = vadd.f32 0.0, %v890
          %v892 = vpop.f32.mrf.mxu0
          %v893 = vadd.f32 0.0, %v892
          %894 = vdwg.mxu0
          %895 = vst [vmem:[#allocation2 + $0x40] sm:$0xff] %v876
          %896 = vst [vmem:[#allocation2 + $0x48] sm:$0xff] %v878
          %897 = vst [vmem:[#allocation2 + $0x50] sm:$0xff] %v881
          %898 = vst [vmem:[#allocation2 + $0x58] sm:$0xff] %v883
          %899 = vst [vmem:[#allocation2 + $0x60] sm:$0xff] %v886
          %900 = vst [vmem:[#allocation2 + $0x68] sm:$0xff] %v888
          %901 = vst [vmem:[#allocation2 + $0x70] sm:$0xff] %v891
          %902 = vst [vmem:[#allocation2 + $0x78] sm:$0xff] %v893
          %903 = vst [vmem:[#allocation3] sm:$0xff] 0.0
          %904 = vst [vmem:[#allocation3 + $0x8] sm:$0xff] 0.0
          %905 = vst [vmem:[#allocation3 + $0x10] sm:$0xff] 0.0
          %906 = vst [vmem:[#allocation3 + $0x18] sm:$0xff] 0.0
          %907 = vst [vmem:[#allocation3 + $0x20] sm:$0xff] 0.0
          %908 = vst [vmem:[#allocation3 + $0x28] sm:$0xff] 0.0
          %909 = vst [vmem:[#allocation3 + $0x30] sm:$0xff] 0.0
          %910 = vst [vmem:[#allocation3 + $0x38] sm:$0xff] 0.0
        $region124: #{tpu_custom_call.1} parent=71 // pred_fallthru
          _
        %v911 = vld [vmem:[%s571] ss:$2 sm:$0x3]
        %s912 = scalar_lea.vmem %s571, 1 [#allocation4]
        %v913 = vld [vmem:[%s912] ss:$2 sm:$0x3]
        %v914 = vlaneseq
        %v915 = vshrl.u32 %v914, 7
        %v916 = vadd.s32 %v915, 8
        %v917 = vadd.s32 %v915, 16
        %v918 = vadd.s32 %v915, 24
        %v919 = vadd.s32 %v915, 32
        %v920 = vadd.s32 %v915, 40
        %v921 = vadd.s32 %v915, 48
        %v922 = vadd.s32 %v915, 56
        %v923 = vadd.s32 %v915, 64
        %v924 = vadd.s32 %v915, 72
        %v925 = vadd.s32 %v915, 80
        %v926 = vadd.s32 %v915, 88
        %v927 = vadd.s32 %v915, 96
        %v928 = vadd.s32 %v915, 104
        %v929 = vadd.s32 %v915, 112
        %v930 = vadd.s32 %v915, 120
        %v931 = vperm.slane %v911, 0
        %v932 = vperm.slane %v911, 1
        %vm933 = vcmp.eq.s32.totalorder %v915, %v931
        %vm934 = vcmp.eq.s32.totalorder %v915, %v932
        %vm935 = vcmp.eq.s32.totalorder %v916, %v931
        %vm936 = vcmp.eq.s32.totalorder %v916, %v932
        %vm937 = vcmp.eq.s32.totalorder %v917, %v931
        %vm938 = vcmp.eq.s32.totalorder %v917, %v932
        %vm939 = vcmp.eq.s32.totalorder %v918, %v931
        %vm940 = vcmp.eq.s32.totalorder %v918, %v932
        %vm941 = vcmp.eq.s32.totalorder %v919, %v931
        %vm942 = vcmp.eq.s32.totalorder %v919, %v932
        %vm943 = vcmp.eq.s32.totalorder %v920, %v931
        %vm944 = vcmp.eq.s32.totalorder %v920, %v932
        %vm945 = vcmp.eq.s32.totalorder %v921, %v931
        %vm946 = vcmp.eq.s32.totalorder %v921, %v932
        %vm947 = vcmp.eq.s32.totalorder %v922, %v931
        %vm948 = vcmp.eq.s32.totalorder %v922, %v932
        %vm949 = vcmp.eq.s32.totalorder %v923, %v931
        %vm950 = vcmp.eq.s32.totalorder %v923, %v932
        %vm951 = vcmp.eq.s32.totalorder %v924, %v931
        %vm952 = vcmp.eq.s32.totalorder %v924, %v932
        %vm953 = vcmp.eq.s32.totalorder %v925, %v931
        %vm954 = vcmp.eq.s32.totalorder %v925, %v932
        %vm955 = vcmp.eq.s32.totalorder %v926, %v931
        %vm956 = vcmp.eq.s32.totalorder %v926, %v932
        %vm957 = vcmp.eq.s32.totalorder %v927, %v931
        %vm958 = vcmp.eq.s32.totalorder %v927, %v932
        %vm959 = vcmp.eq.s32.totalorder %v928, %v931
        %vm960 = vcmp.eq.s32.totalorder %v928, %v932
        %vm961 = vcmp.eq.s32.totalorder %v929, %v931
        %vm962 = vcmp.eq.s32.totalorder %v929, %v932
        %vm963 = vcmp.eq.s32.totalorder %v930, %v931
        %vm964 = vcmp.eq.s32.totalorder %v930, %v932
        %v965 = vadd.s32 %v913, 64
        %v966 = vperm.slane %v965, 0
        %v967 = vperm.slane %v965, 1
        %vm968 = vcmp.eq.s32.totalorder %v915, %v966
        %vm969 = vcmp.eq.s32.totalorder %v915, %v967
        %vm970 = vcmp.eq.s32.totalorder %v916, %v966
        %vm971 = vcmp.eq.s32.totalorder %v916, %v967
        %vm972 = vcmp.eq.s32.totalorder %v917, %v966
        %vm973 = vcmp.eq.s32.totalorder %v917, %v967
        %vm974 = vcmp.eq.s32.totalorder %v918, %v966
        %vm975 = vcmp.eq.s32.totalorder %v918, %v967
        %vm976 = vcmp.eq.s32.totalorder %v919, %v966
        %vm977 = vcmp.eq.s32.totalorder %v919, %v967
        %vm978 = vcmp.eq.s32.totalorder %v920, %v966
        %vm979 = vcmp.eq.s32.totalorder %v920, %v967
        %vm980 = vcmp.eq.s32.totalorder %v921, %v966
        %vm981 = vcmp.eq.s32.totalorder %v921, %v967
        %vm982 = vcmp.eq.s32.totalorder %v922, %v966
        %vm983 = vcmp.eq.s32.totalorder %v922, %v967
        %vm984 = vcmp.eq.s32.totalorder %v923, %v966
        %vm985 = vcmp.eq.s32.totalorder %v923, %v967
        %vm986 = vcmp.eq.s32.totalorder %v924, %v966
        %vm987 = vcmp.eq.s32.totalorder %v924, %v967
        %vm988 = vcmp.eq.s32.totalorder %v925, %v966
        %vm989 = vcmp.eq.s32.totalorder %v925, %v967
        %vm990 = vcmp.eq.s32.totalorder %v926, %v966
        %vm991 = vcmp.eq.s32.totalorder %v926, %v967
        %vm992 = vcmp.eq.s32.totalorder %v927, %v966
        %vm993 = vcmp.eq.s32.totalorder %v927, %v967
        %vm994 = vcmp.eq.s32.totalorder %v928, %v966
        %vm995 = vcmp.eq.s32.totalorder %v928, %v967
        %vm996 = vcmp.eq.s32.totalorder %v929, %v966
        %vm997 = vcmp.eq.s32.totalorder %v929, %v967
        %vm998 = vcmp.eq.s32.totalorder %v930, %v966
        %vm999 = vcmp.eq.s32.totalorder %v930, %v967
        %vm1000 = vmor %vm933, %vm968
        %vm1001 = vmor %vm934, %vm969
        %vm1002 = vmor %vm935, %vm970
        %vm1003 = vmor %vm936, %vm971
        %vm1004 = vmor %vm937, %vm972
        %vm1005 = vmor %vm938, %vm973
        %vm1006 = vmor %vm939, %vm974
        %vm1007 = vmor %vm940, %vm975
        %vm1008 = vmor %vm941, %vm976
        %vm1009 = vmor %vm942, %vm977
        %vm1010 = vmor %vm943, %vm978
        %vm1011 = vmor %vm944, %vm979
        %vm1012 = vmor %vm945, %vm980
        %vm1013 = vmor %vm946, %vm981
        %vm1014 = vmor %vm947, %vm982
        %vm1015 = vmor %vm948, %vm983
        %vm1016 = vmor %vm949, %vm984
        %vm1017 = vmor %vm950, %vm985
        %vm1018 = vmor %vm951, %vm986
        %vm1019 = vmor %vm952, %vm987
        %vm1020 = vmor %vm953, %vm988
        %vm1021 = vmor %vm954, %vm989
        %vm1022 = vmor %vm955, %vm990
        %vm1023 = vmor %vm956, %vm991
        %vm1024 = vmor %vm957, %vm992
        %vm1025 = vmor %vm958, %vm993
        %vm1026 = vmor %vm959, %vm994
        %vm1027 = vmor %vm960, %vm995
        %vm1028 = vmor %vm961, %vm996
        %vm1029 = vmor %vm962, %vm997
        %vm1030 = vmor %vm963, %vm998
        %vm1031 = vmor %vm964, %vm999
        %v1032 = vsel %vm1000, 1, 0
        %v1033 = vsel %vm1001, 1, 0
        %v1034 = vsel %vm1002, 1, 0
        %v1035 = vsel %vm1003, 1, 0
        %v1036 = vsel %vm1004, 1, 0
        %v1037 = vsel %vm1005, 1, 0
        %v1038 = vsel %vm1006, 1, 0
        %v1039 = vsel %vm1007, 1, 0
        %v1040 = vsel %vm1008, 1, 0
        %v1041 = vsel %vm1009, 1, 0
        %v1042 = vsel %vm1010, 1, 0
        %v1043 = vsel %vm1011, 1, 0
        %v1044 = vsel %vm1012, 1, 0
        %v1045 = vsel %vm1013, 1, 0
        %v1046 = vsel %vm1014, 1, 0
        %v1047 = vsel %vm1015, 1, 0
        %v1048 = vsel %vm1016, 1, 0
        %v1049 = vsel %vm1017, 1, 0
        %v1050 = vsel %vm1018, 1, 0
        %v1051 = vsel %vm1019, 1, 0
        %v1052 = vsel %vm1020, 1, 0
        %v1053 = vsel %vm1021, 1, 0
        %v1054 = vsel %vm1022, 1, 0
        %v1055 = vsel %vm1023, 1, 0
        %v1056 = vsel %vm1024, 1, 0
        %v1057 = vsel %vm1025, 1, 0
        %v1058 = vsel %vm1026, 1, 0
        %v1059 = vsel %vm1027, 1, 0
        %v1060 = vsel %vm1028, 1, 0
        %v1061 = vsel %vm1029, 1, 0
        %v1062 = vsel %vm1030, 1, 0
        %v1063 = vsel %vm1031, 1, 0
        %v1064 = vcvt.s32.f32 %v1032
        %v1065 = vcvt.s32.f32 %v1033
        %v1066 = vcvt.s32.f32 %v1034
        %v1067 = vcvt.s32.f32 %v1035
        %v1068 = vcvt.s32.f32 %v1036
        %v1069 = vcvt.s32.f32 %v1037
        %v1070 = vcvt.s32.f32 %v1038
        %v1071 = vcvt.s32.f32 %v1039
        %v1072 = vcvt.s32.f32 %v1040
        %v1073 = vcvt.s32.f32 %v1041
        %v1074 = vcvt.s32.f32 %v1042
        %v1075 = vcvt.s32.f32 %v1043
        %v1076 = vcvt.s32.f32 %v1044
        %v1077 = vcvt.s32.f32 %v1045
        %v1078 = vcvt.s32.f32 %v1046
        %v1079 = vcvt.s32.f32 %v1047
        %v1080 = vcvt.s32.f32 %v1048
        %v1081 = vcvt.s32.f32 %v1049
        %v1082 = vcvt.s32.f32 %v1050
        %v1083 = vcvt.s32.f32 %v1051
        %v1084 = vcvt.s32.f32 %v1052
        %v1085 = vcvt.s32.f32 %v1053
        %v1086 = vcvt.s32.f32 %v1054
        %v1087 = vcvt.s32.f32 %v1055
        %v1088 = vcvt.s32.f32 %v1056
        %v1089 = vcvt.s32.f32 %v1057
        %v1090 = vcvt.s32.f32 %v1058
        %v1091 = vcvt.s32.f32 %v1059
        %v1092 = vcvt.s32.f32 %v1060
        %v1093 = vcvt.s32.f32 %v1061
        %v1094 = vcvt.s32.f32 %v1062
        %v1095 = vcvt.s32.f32 %v1063
        %v1096 = vld [vmem:[#allocation2] sm:$0xff]
        %v1097 = vld [vmem:[#allocation2 + $0x8] sm:$0xff]
        %v1098 = vld [vmem:[#allocation2 + $0x10] sm:$0xff]
        %v1099 = vld [vmem:[#allocation2 + $0x18] sm:$0xff]
        %v1100 = vld [vmem:[#allocation2 + $0x20] sm:$0xff]
        %v1101 = vld [vmem:[#allocation2 + $0x28] sm:$0xff]
        %v1102 = vld [vmem:[#allocation2 + $0x30] sm:$0xff]
        %v1103 = vld [vmem:[#allocation2 + $0x38] sm:$0xff]
        %v1104 = vld [vmem:[#allocation2 + $0x40] sm:$0xff]
        %v1105 = vld [vmem:[#allocation2 + $0x48] sm:$0xff]
        %v1106 = vld [vmem:[#allocation2 + $0x50] sm:$0xff]
        %v1107 = vld [vmem:[#allocation2 + $0x58] sm:$0xff]
        %v1108 = vld [vmem:[#allocation2 + $0x60] sm:$0xff]
        %v1109 = vld [vmem:[#allocation2 + $0x68] sm:$0xff]
        %v1110 = vld [vmem:[#allocation2 + $0x70] sm:$0xff]
        %v1111 = vld [vmem:[#allocation2 + $0x78] sm:$0xff]
        %1112 = vxpose.xlu0.b32.start [1/16] %v1064, 128
        %1113 = vxpose.xlu0.b32.cont [2/16] %v1066, 128
        %1114 = vxpose.xlu0.b32.cont [3/16] %v1068, 128
        %1115 = vxpose.xlu0.b32.cont [4/16] %v1070, 128
        %1116 = vxpose.xlu0.b32.cont [5/16] %v1072, 128
        %1117 = vxpose.xlu0.b32.cont [6/16] %v1074, 128
        %1118 = vxpose.xlu0.b32.cont [7/16] %v1076, 128
        %1119 = vxpose.xlu0.b32.cont [8/16] %v1078, 128
        %1120 = vxpose.xlu0.b32.cont [9/16] %v1080, 128
        %1121 = vxpose.xlu0.b32.cont [10/16] %v1082, 128
        %1122 = vxpose.xlu0.b32.cont [11/16] %v1084, 128
        %1123 = vxpose.xlu0.b32.cont [12/16] %v1086, 128
        %1124 = vxpose.xlu0.b32.cont [13/16] %v1088, 128
        %1125 = vxpose.xlu0.b32.cont [14/16] %v1090, 128
        %1126 = vxpose.xlu0.b32.cont [15/16] %v1092, 128
        %1127 = vxpose.xlu0.b32.end [16/16] %v1094, 128
        %v1128 = vpop.trf.xlu0
        %v1129 = vpop.trf.xlu0
        %v1130 = vpop.trf.xlu0
        %v1131 = vpop.trf.xlu0
        %v1132 = vpop.trf.xlu0
        %v1133 = vpop.trf.xlu0
        %v1134 = vpop.trf.xlu0
        %v1135 = vpop.trf.xlu0
        %v1136 = vpop.trf.xlu0
        %v1137 = vpop.trf.xlu0
        %v1138 = vpop.trf.xlu0
        %v1139 = vpop.trf.xlu0
        %v1140 = vpop.trf.xlu0
        %v1141 = vpop.trf.xlu0
        %v1142 = vpop.trf.xlu0
        %v1143 = vpop.trf.xlu0
        %1144 = vxpose.xlu0.b32.start [1/16] %v1065, 128
        %1145 = vxpose.xlu0.b32.cont [2/16] %v1067, 128
        %1146 = vxpose.xlu0.b32.cont [3/16] %v1069, 128
        %1147 = vxpose.xlu0.b32.cont [4/16] %v1071, 128
        %1148 = vxpose.xlu0.b32.cont [5/16] %v1073, 128
        %1149 = vxpose.xlu0.b32.cont [6/16] %v1075, 128
        %1150 = vxpose.xlu0.b32.cont [7/16] %v1077, 128
        %1151 = vxpose.xlu0.b32.cont [8/16] %v1079, 128
        %1152 = vxpose.xlu0.b32.cont [9/16] %v1081, 128
        %1153 = vxpose.xlu0.b32.cont [10/16] %v1083, 128
        %1154 = vxpose.xlu0.b32.cont [11/16] %v1085, 128
        %1155 = vxpose.xlu0.b32.cont [12/16] %v1087, 128
        %1156 = vxpose.xlu0.b32.cont [13/16] %v1089, 128
        %1157 = vxpose.xlu0.b32.cont [14/16] %v1091, 128
        %1158 = vxpose.xlu0.b32.cont [15/16] %v1093, 128
        %1159 = vxpose.xlu0.b32.end [16/16] %v1095, 128
        %v1160 = vpop.trf.xlu0
        %v1161 = vpop.trf.xlu0
        %v1162 = vpop.trf.xlu0
        %v1163 = vpop.trf.xlu0
        %v1164 = vpop.trf.xlu0
        %v1165 = vpop.trf.xlu0
        %v1166 = vpop.trf.xlu0
        %v1167 = vpop.trf.xlu0
        %v1168 = vpop.trf.xlu0
        %v1169 = vpop.trf.xlu0
        %v1170 = vpop.trf.xlu0
        %v1171 = vpop.trf.xlu0
        %v1172 = vpop.trf.xlu0
        %v1173 = vpop.trf.xlu0
        %v1174 = vpop.trf.xlu0
        %v1175 = vpop.trf.xlu0
        %1176 = vmatpush.msra.mxu0 %v1111
        %1177 = vmatpush.msra.mxu0 %v1110
        %1178 = vmatpush.msra.mxu0 %v1109
        %1179 = vmatpush.msra.mxu0 %v1108
        %1180 = vmatpush.msra.mxu0 %v1107
        %1181 = vmatpush.msra.mxu0 %v1106
        %1182 = vmatpush.msra.mxu0 %v1105
        %1183 = vmatpush.msra.mxu0 %v1104
        %1184 = vmatpush.msra.mxu0 %v1103
        %1185 = vmatpush.msra.mxu0 %v1102
        %1186 = vmatpush.msra.mxu0 %v1101
        %1187 = vmatpush.msra.mxu0 %v1100
        %1188 = vmatpush.msra.mxu0 %v1099
        %1189 = vmatpush.msra.mxu0 %v1098
        %1190 = vmatpush.msra.mxu0 %v1097
        %1191 = vmatpush.msra.mxu0 %v1096
        %1192 = vmatmul.f32.gmra.mxu0 %v1128
        %v1193 = vpop.f32.mrf.mxu0
        %v1194 = vadd.f32 0.0, %v1193
        %1195 = vmatmul.f32.gmra.mxu0 %v1129
        %v1196 = vpop.f32.mrf.mxu0
        %v1197 = vadd.f32 0.0, %v1196
        %1198 = vmatmul.f32.gmra.mxu0 %v1130
        %v1199 = vpop.f32.mrf.mxu0
        %v1200 = vadd.f32 0.0, %v1199
        %1201 = vmatmul.f32.gmra.mxu0 %v1131
        %v1202 = vpop.f32.mrf.mxu0
        %v1203 = vadd.f32 0.0, %v1202
        %1204 = vmatmul.f32.gmra.mxu0 %v1132
        %v1205 = vpop.f32.mrf.mxu0
        %v1206 = vadd.f32 0.0, %v1205
        %1207 = vmatmul.f32.gmra.mxu0 %v1133
        %v1208 = vpop.f32.mrf.mxu0
        %v1209 = vadd.f32 0.0, %v1208
        %1210 = vmatmul.f32.gmra.mxu0 %v1134
        %v1211 = vpop.f32.mrf.mxu0
        %v1212 = vadd.f32 0.0, %v1211
        %1213 = vmatmul.f32.gmra.mxu0 %v1135
        %v1214 = vpop.f32.mrf.mxu0
        %v1215 = vadd.f32 0.0, %v1214
        %1216 = vmatmul.f32.gmra.mxu0 %v1136
        %v1217 = vpop.f32.mrf.mxu0
        %v1218 = vadd.f32 0.0, %v1217
        %1219 = vmatmul.f32.gmra.mxu0 %v1137
        %v1220 = vpop.f32.mrf.mxu0
        %v1221 = vadd.f32 0.0, %v1220
        %1222 = vmatmul.f32.gmra.mxu0 %v1138
        %v1223 = vpop.f32.mrf.mxu0
        %v1224 = vadd.f32 0.0, %v1223
        %1225 = vmatmul.f32.gmra.mxu0 %v1139
        %v1226 = vpop.f32.mrf.mxu0
        %v1227 = vadd.f32 0.0, %v1226
        %1228 = vmatmul.f32.gmra.mxu0 %v1140
        %v1229 = vpop.f32.mrf.mxu0
        %v1230 = vadd.f32 0.0, %v1229
        %1231 = vmatmul.f32.gmra.mxu0 %v1141
        %v1232 = vpop.f32.mrf.mxu0
        %v1233 = vadd.f32 0.0, %v1232
        %1234 = vmatmul.f32.gmra.mxu0 %v1142
        %v1235 = vpop.f32.mrf.mxu0
        %v1236 = vadd.f32 0.0, %v1235
        %1237 = vmatmul.f32.gmra.mxu0 %v1143
        %v1238 = vpop.f32.mrf.mxu0
        %v1239 = vadd.f32 0.0, %v1238
        %1240 = vmatmul.f32.gmra.mxu0 %v1160
        %v1241 = vpop.f32.mrf.mxu0
        %v1242 = vadd.f32 0.0, %v1241
        %1243 = vmatmul.f32.gmra.mxu0 %v1161
        %v1244 = vpop.f32.mrf.mxu0
        %v1245 = vadd.f32 0.0, %v1244
        %1246 = vmatmul.f32.gmra.mxu0 %v1162
        %v1247 = vpop.f32.mrf.mxu0
        %v1248 = vadd.f32 0.0, %v1247
        %1249 = vmatmul.f32.gmra.mxu0 %v1163
        %v1250 = vpop.f32.mrf.mxu0
        %v1251 = vadd.f32 0.0, %v1250
        %1252 = vmatmul.f32.gmra.mxu0 %v1164
        %v1253 = vpop.f32.mrf.mxu0
        %v1254 = vadd.f32 0.0, %v1253
        %1255 = vmatmul.f32.gmra.mxu0 %v1165
        %v1256 = vpop.f32.mrf.mxu0
        %v1257 = vadd.f32 0.0, %v1256
        %1258 = vmatmul.f32.gmra.mxu0 %v1166
        %v1259 = vpop.f32.mrf.mxu0
        %v1260 = vadd.f32 0.0, %v1259
        %1261 = vmatmul.f32.gmra.mxu0 %v1167
        %v1262 = vpop.f32.mrf.mxu0
        %v1263 = vadd.f32 0.0, %v1262
        %1264 = vmatmul.f32.gmra.mxu0 %v1168
        %v1265 = vpop.f32.mrf.mxu0
        %v1266 = vadd.f32 0.0, %v1265
        %1267 = vmatmul.f32.gmra.mxu0 %v1169
        %v1268 = vpop.f32.mrf.mxu0
        %v1269 = vadd.f32 0.0, %v1268
        %1270 = vmatmul.f32.gmra.mxu0 %v1170
        %v1271 = vpop.f32.mrf.mxu0
        %v1272 = vadd.f32 0.0, %v1271
        %1273 = vmatmul.f32.gmra.mxu0 %v1171
        %v1274 = vpop.f32.mrf.mxu0
        %v1275 = vadd.f32 0.0, %v1274
        %1276 = vmatmul.f32.gmra.mxu0 %v1172
        %v1277 = vpop.f32.mrf.mxu0
        %v1278 = vadd.f32 0.0, %v1277
        %1279 = vmatmul.f32.gmra.mxu0 %v1173
        %v1280 = vpop.f32.mrf.mxu0
        %v1281 = vadd.f32 0.0, %v1280
        %1282 = vmatmul.f32.gmra.mxu0 %v1174
        %v1283 = vpop.f32.mrf.mxu0
        %v1284 = vadd.f32 0.0, %v1283
        %1285 = vmatmul.f32.gmra.mxu0 %v1175
        %v1286 = vpop.f32.mrf.mxu0
        %v1287 = vadd.f32 0.0, %v1286
        %1288 = vdwg.mxu0
        %v1289 = vld [vmem:[%s581] sm:$0xff]
        %v1290 = vld [vmem:[%s581 + $0x8] sm:$0xff]
        %v1291 = vld [vmem:[%s581 + $0x10] sm:$0xff]
        %v1292 = vld [vmem:[%s581 + $0x18] sm:$0xff]
        %v1293 = vld [vmem:[%s581 + $0x20] sm:$0xff]
        %v1294 = vld [vmem:[%s581 + $0x28] sm:$0xff]
        %v1295 = vld [vmem:[%s581 + $0x30] sm:$0xff]
        %v1296 = vld [vmem:[%s581 + $0x38] sm:$0xff]
        %v1297 = vld [vmem:[%s581 + $0x40] sm:$0xff]
        %v1298 = vld [vmem:[%s581 + $0x48] sm:$0xff]
        %v1299 = vld [vmem:[%s581 + $0x50] sm:$0xff]
        %v1300 = vld [vmem:[%s581 + $0x58] sm:$0xff]
        %v1301 = vld [vmem:[%s581 + $0x60] sm:$0xff]
        %v1302 = vld [vmem:[%s581 + $0x68] sm:$0xff]
        %v1303 = vld [vmem:[%s581 + $0x70] sm:$0xff]
        %v1304 = vld [vmem:[%s581 + $0x78] sm:$0xff]
        %v1305 = vld [vmem:[%s581 + $0x80] sm:$0xff]
        %v1306 = vld [vmem:[%s581 + $0x88] sm:$0xff]
        %v1307 = vld [vmem:[%s581 + $0x90] sm:$0xff]
        %v1308 = vld [vmem:[%s581 + $0x98] sm:$0xff]
        %v1309 = vld [vmem:[%s581 + $0xa0] sm:$0xff]
        %v1310 = vld [vmem:[%s581 + $0xa8] sm:$0xff]
        %v1311 = vld [vmem:[%s581 + $0xb0] sm:$0xff]
        %v1312 = vld [vmem:[%s581 + $0xb8] sm:$0xff]
        %v1313 = vld [vmem:[%s581 + $0xc0] sm:$0xff]
        %v1314 = vld [vmem:[%s581 + $0xc8] sm:$0xff]
        %v1315 = vld [vmem:[%s581 + $0xd0] sm:$0xff]
        %v1316 = vld [vmem:[%s581 + $0xd8] sm:$0xff]
        %v1317 = vld [vmem:[%s581 + $0xe0] sm:$0xff]
        %v1318 = vld [vmem:[%s581 + $0xe8] sm:$0xff]
        %v1319 = vld [vmem:[%s581 + $0xf0] sm:$0xff]
        %v1320 = vld [vmem:[%s581 + $0xf8] sm:$0xff]
        %v1321 = vpack.c.bf16 %v1290, %v1289
        %v1322 = vpack.c.bf16 %v1292, %v1291
        %v1323 = vpack.c.bf16 %v1294, %v1293
        %v1324 = vpack.c.bf16 %v1296, %v1295
        %v1325 = vpack.c.bf16 %v1298, %v1297
        %v1326 = vpack.c.bf16 %v1300, %v1299
        %v1327 = vpack.c.bf16 %v1302, %v1301
        %v1328 = vpack.c.bf16 %v1304, %v1303
        %v1329 = vpack.c.bf16 %v1306, %v1305
        %v1330 = vpack.c.bf16 %v1308, %v1307
        %v1331 = vpack.c.bf16 %v1310, %v1309
        %v1332 = vpack.c.bf16 %v1312, %v1311
        %v1333 = vpack.c.bf16 %v1314, %v1313
        %v1334 = vpack.c.bf16 %v1316, %v1315
        %v1335 = vpack.c.bf16 %v1318, %v1317
        %v1336 = vpack.c.bf16 %v1320, %v1319
        %v1337 = vld [vmem:[#allocation10] sm:$0xf]
        %v1338 = vld [vmem:[#allocation10 + $0x4] sm:$0xf]
        %v1339 = vld [vmem:[#allocation10 + $0x8] sm:$0xf]
        %v1340 = vld [vmem:[#allocation10 + $0xc] sm:$0xf]
        %v1341 = vld [vmem:[#allocation10 + $0x10] sm:$0xf]
        %v1342 = vld [vmem:[#allocation10 + $0x14] sm:$0xf]
        %v1343 = vld [vmem:[#allocation10 + $0x18] sm:$0xf]
        %v1344 = vld [vmem:[#allocation10 + $0x1c] sm:$0xf]
        %v1345 = vld [vmem:[#allocation10 + $0x20] sm:$0xf]
        %v1346 = vld [vmem:[#allocation10 + $0x24] sm:$0xf]
        %v1347 = vld [vmem:[#allocation10 + $0x28] sm:$0xf]
        %v1348 = vld [vmem:[#allocation10 + $0x2c] sm:$0xf]
        %v1349 = vld [vmem:[#allocation10 + $0x30] sm:$0xf]
        %v1350 = vld [vmem:[#allocation10 + $0x34] sm:$0xf]
        %v1351 = vld [vmem:[#allocation10 + $0x38] sm:$0xf]
        %v1352 = vld [vmem:[#allocation10 + $0x3c] sm:$0xf]
        %v1369 = vunpack.c.l.b16 %v1337
        %v1370 = vunpack.c.l.b16 %v1338
        %v1371 = vunpack.c.l.b16 %v1339
        %v1372 = vunpack.c.l.b16 %v1340
        %v1373 = vunpack.c.l.b16 %v1341
        %v1374 = vunpack.c.l.b16 %v1342
        %v1375 = vunpack.c.l.b16 %v1343
        %v1376 = vunpack.c.l.b16 %v1344
        %v1377 = vunpack.c.l.b16 %v1345
        %v1378 = vunpack.c.l.b16 %v1346
        %v1379 = vunpack.c.l.b16 %v1347
        %v1380 = vunpack.c.l.b16 %v1348
        %v1381 = vunpack.c.l.b16 %v1349
        %v1382 = vunpack.c.l.b16 %v1350
        %v1383 = vunpack.c.l.b16 %v1351
        %v1384 = vunpack.c.l.b16 %v1352
        %v1385 = vpack.c.b16 %v1370, %v1369
        %v1386 = vpack.c.b16 %v1372, %v1371
        %v1387 = vpack.c.b16 %v1374, %v1373
        %v1388 = vpack.c.b16 %v1376, %v1375
        %v1389 = vpack.c.b16 %v1378, %v1377
        %v1390 = vpack.c.b16 %v1380, %v1379
        %v1391 = vpack.c.b16 %v1382, %v1381
        %v1392 = vpack.c.b16 %v1384, %v1383
        %1401 = vmatpush.bf16.msra.mxu0 %v1392
        %1402 = vmatpush.bf16.msra.mxu0 %v1391
        %1403 = vmatpush.bf16.msra.mxu0 %v1390
        %1404 = vmatpush.bf16.msra.mxu0 %v1389
        %1405 = vmatpush.bf16.msra.mxu0 %v1388
        %1406 = vmatpush.bf16.msra.mxu0 %v1387
        %1407 = vmatpush.bf16.msra.mxu0 %v1386
        %1408 = vmatpush.bf16.msra.mxu0 %v1385
        %1409 = vmatmul.bf16.gmra.mxu0 %v1321
        %v1410 = vpop.f32.mrf.mxu0
        %v1411 = vadd.f32 %v1194, %v1410
        %v1412 = vpop.f32.mrf.mxu0
        %v1413 = vadd.f32 %v1197, %v1412
        %1414 = vmatmul.bf16.gmra.mxu0 %v1322
        %v1415 = vpop.f32.mrf.mxu0
        %v1416 = vadd.f32 %v1200, %v1415
        %v1417 = vpop.f32.mrf.mxu0
        %v1418 = vadd.f32 %v1203, %v1417
        %1419 = vmatmul.bf16.gmra.mxu0 %v1323
        %v1420 = vpop.f32.mrf.mxu0
        %v1421 = vadd.f32 %v1206, %v1420
        %v1422 = vpop.f32.mrf.mxu0
        %v1423 = vadd.f32 %v1209, %v1422
        %1424 = vmatmul.bf16.gmra.mxu0 %v1324
        %v1425 = vpop.f32.mrf.mxu0
        %v1426 = vadd.f32 %v1212, %v1425
        %v1427 = vpop.f32.mrf.mxu0
        %v1428 = vadd.f32 %v1215, %v1427
        %1429 = vmatmul.bf16.gmra.mxu0 %v1325
        %v1430 = vpop.f32.mrf.mxu0
        %v1431 = vadd.f32 %v1218, %v1430
        %v1432 = vpop.f32.mrf.mxu0
        %v1433 = vadd.f32 %v1221, %v1432
        %1434 = vmatmul.bf16.gmra.mxu0 %v1326
        %v1435 = vpop.f32.mrf.mxu0
        %v1436 = vadd.f32 %v1224, %v1435
        %v1437 = vpop.f32.mrf.mxu0
        %v1438 = vadd.f32 %v1227, %v1437
        %1439 = vmatmul.bf16.gmra.mxu0 %v1327
        %v1440 = vpop.f32.mrf.mxu0
        %v1441 = vadd.f32 %v1230, %v1440
        %v1442 = vpop.f32.mrf.mxu0
        %v1443 = vadd.f32 %v1233, %v1442
        %1444 = vmatmul.bf16.gmra.mxu0 %v1328
        %v1445 = vpop.f32.mrf.mxu0
        %v1446 = vadd.f32 %v1236, %v1445
        %v1447 = vpop.f32.mrf.mxu0
        %v1448 = vadd.f32 %v1239, %v1447
        %1449 = vmatmul.bf16.gmra.mxu0 %v1329
        %v1450 = vpop.f32.mrf.mxu0
        %v1451 = vadd.f32 %v1242, %v1450
        %v1452 = vpop.f32.mrf.mxu0
        %v1453 = vadd.f32 %v1245, %v1452
        %1454 = vmatmul.bf16.gmra.mxu0 %v1330
        %v1455 = vpop.f32.mrf.mxu0
        %v1456 = vadd.f32 %v1248, %v1455
        %v1457 = vpop.f32.mrf.mxu0
        %v1458 = vadd.f32 %v1251, %v1457
        %1459 = vmatmul.bf16.gmra.mxu0 %v1331
        %v1460 = vpop.f32.mrf.mxu0
        %v1461 = vadd.f32 %v1254, %v1460
        %v1462 = vpop.f32.mrf.mxu0
        %v1463 = vadd.f32 %v1257, %v1462
        %1464 = vmatmul.bf16.gmra.mxu0 %v1332
        %v1465 = vpop.f32.mrf.mxu0
        %v1466 = vadd.f32 %v1260, %v1465
        %v1467 = vpop.f32.mrf.mxu0
        %v1468 = vadd.f32 %v1263, %v1467
        %1469 = vmatmul.bf16.gmra.mxu0 %v1333
        %v1470 = vpop.f32.mrf.mxu0
        %v1471 = vadd.f32 %v1266, %v1470
        %v1472 = vpop.f32.mrf.mxu0
        %v1473 = vadd.f32 %v1269, %v1472
        %1474 = vmatmul.bf16.gmra.mxu0 %v1334
        %v1475 = vpop.f32.mrf.mxu0
        %v1476 = vadd.f32 %v1272, %v1475
        %v1477 = vpop.f32.mrf.mxu0
        %v1478 = vadd.f32 %v1275, %v1477
        %1479 = vmatmul.bf16.gmra.mxu0 %v1335
        %v1480 = vpop.f32.mrf.mxu0
        %v1481 = vadd.f32 %v1278, %v1480
        %v1482 = vpop.f32.mrf.mxu0
        %v1483 = vadd.f32 %v1281, %v1482
        %1484 = vmatmul.bf16.gmra.mxu0 %v1336
        %v1485 = vpop.f32.mrf.mxu0
        %v1486 = vadd.f32 %v1284, %v1485
        %v1487 = vpop.f32.mrf.mxu0
        %v1488 = vadd.f32 %v1287, %v1487
        %1489 = vdwg.mxu0
        %v1490 = vld [vmem:[#allocation13] sm:$0x1]
        %v1491 = vperm.slane %v1490, 0
        %v1492 = vadd.f32 %v1411, %v1491
        %v1493 = vadd.f32 %v1413, %v1491
        %v1494 = vadd.f32 %v1416, %v1491
        %v1495 = vadd.f32 %v1418, %v1491
        %v1496 = vadd.f32 %v1421, %v1491
        %v1497 = vadd.f32 %v1423, %v1491
        %v1498 = vadd.f32 %v1426, %v1491
        %v1499 = vadd.f32 %v1428, %v1491
        %v1500 = vadd.f32 %v1431, %v1491
        %v1501 = vadd.f32 %v1433, %v1491
        %v1502 = vadd.f32 %v1436, %v1491
        %v1503 = vadd.f32 %v1438, %v1491
        %v1504 = vadd.f32 %v1441, %v1491
        %v1505 = vadd.f32 %v1443, %v1491
        %v1506 = vadd.f32 %v1446, %v1491
        %v1507 = vadd.f32 %v1448, %v1491
        %v1508 = vadd.f32 %v1451, %v1491
        %v1509 = vadd.f32 %v1453, %v1491
        %v1510 = vadd.f32 %v1456, %v1491
        %v1511 = vadd.f32 %v1458, %v1491
        %v1512 = vadd.f32 %v1461, %v1491
        %v1513 = vadd.f32 %v1463, %v1491
        %v1514 = vadd.f32 %v1466, %v1491
        %v1515 = vadd.f32 %v1468, %v1491
        %v1516 = vadd.f32 %v1471, %v1491
        %v1517 = vadd.f32 %v1473, %v1491
        %v1518 = vadd.f32 %v1476, %v1491
        %v1519 = vadd.f32 %v1478, %v1491
        %v1520 = vadd.f32 %v1481, %v1491
        %v1521 = vadd.f32 %v1483, %v1491
        %v1522 = vadd.f32 %v1486, %v1491
        %v1523 = vadd.f32 %v1488, %v1491
        %v1524 = vmax.f32 %v1492, 0.0
        %v1525 = vmax.f32 %v1493, 0.0
        %v1526 = vmax.f32 %v1494, 0.0
        %v1527 = vmax.f32 %v1495, 0.0
        %v1528 = vmax.f32 %v1496, 0.0
        %v1529 = vmax.f32 %v1497, 0.0
        %v1530 = vmax.f32 %v1498, 0.0
        %v1531 = vmax.f32 %v1499, 0.0
        %v1532 = vmax.f32 %v1500, 0.0
        %v1533 = vmax.f32 %v1501, 0.0
        %v1534 = vmax.f32 %v1502, 0.0
        %v1535 = vmax.f32 %v1503, 0.0
        %v1536 = vmax.f32 %v1504, 0.0
        %v1537 = vmax.f32 %v1505, 0.0
        %v1538 = vmax.f32 %v1506, 0.0
        %v1539 = vmax.f32 %v1507, 0.0
        %v1540 = vmax.f32 %v1508, 0.0
        %v1541 = vmax.f32 %v1509, 0.0
        %v1542 = vmax.f32 %v1510, 0.0
        %v1543 = vmax.f32 %v1511, 0.0
        %v1544 = vmax.f32 %v1512, 0.0
        %v1545 = vmax.f32 %v1513, 0.0
        %v1546 = vmax.f32 %v1514, 0.0
        %v1547 = vmax.f32 %v1515, 0.0
        %v1548 = vmax.f32 %v1516, 0.0
        %v1549 = vmax.f32 %v1517, 0.0
        %v1550 = vmax.f32 %v1518, 0.0
        %v1551 = vmax.f32 %v1519, 0.0
        %v1552 = vmax.f32 %v1520, 0.0
        %v1553 = vmax.f32 %v1521, 0.0
        %v1554 = vmax.f32 %v1522, 0.0
        %v1555 = vmax.f32 %v1523, 0.0
        %v1556 = vld [vmem:[#allocation15] sm:$0x1]
        %v1557 = vld [vmem:[#allocation16] sm:$0x1]
        %1558 = vadd.xlane.f32.xlu0 %v1524
        %v1559 = vpop.xlane.xlu0 %1558
        %1560 = vadd.xlane.f32.xlu0 %v1525
        %v1561 = vpop.xlane.xlu0 %1560
        %1562 = vadd.xlane.f32.xlu0 %v1526
        %v1563 = vpop.xlane.xlu0 %1562
        %1564 = vadd.xlane.f32.xlu0 %v1527
        %v1565 = vpop.xlane.xlu0 %1564
        %1566 = vadd.xlane.f32.xlu0 %v1528
        %v1567 = vpop.xlane.xlu0 %1566
        %1568 = vadd.xlane.f32.xlu0 %v1529
        %v1569 = vpop.xlane.xlu0 %1568
        %1570 = vadd.xlane.f32.xlu0 %v1530
        %v1571 = vpop.xlane.xlu0 %1570
        %1572 = vadd.xlane.f32.xlu0 %v1531
        %v1573 = vpop.xlane.xlu0 %1572
        %1574 = vadd.xlane.f32.xlu0 %v1532
        %v1575 = vpop.xlane.xlu0 %1574
        %1576 = vadd.xlane.f32.xlu0 %v1533
        %v1577 = vpop.xlane.xlu0 %1576
        %1578 = vadd.xlane.f32.xlu0 %v1534
        %v1579 = vpop.xlane.xlu0 %1578
        %1580 = vadd.xlane.f32.xlu0 %v1535
        %v1581 = vpop.xlane.xlu0 %1580
        %1582 = vadd.xlane.f32.xlu0 %v1536
        %v1583 = vpop.xlane.xlu0 %1582
        %1584 = vadd.xlane.f32.xlu0 %v1537
        %v1585 = vpop.xlane.xlu0 %1584
        %1586 = vadd.xlane.f32.xlu0 %v1538
        %v1587 = vpop.xlane.xlu0 %1586
        %1588 = vadd.xlane.f32.xlu0 %v1539
        %v1589 = vpop.xlane.xlu0 %1588
        %1590 = vadd.xlane.f32.xlu0 %v1540
        %v1591 = vpop.xlane.xlu0 %1590
        %1592 = vadd.xlane.f32.xlu0 %v1541
        %v1593 = vpop.xlane.xlu0 %1592
        %1594 = vadd.xlane.f32.xlu0 %v1542
        %v1595 = vpop.xlane.xlu0 %1594
        %1596 = vadd.xlane.f32.xlu0 %v1543
        %v1597 = vpop.xlane.xlu0 %1596
        %1598 = vadd.xlane.f32.xlu0 %v1544
        %v1599 = vpop.xlane.xlu0 %1598
        %1600 = vadd.xlane.f32.xlu0 %v1545
        %v1601 = vpop.xlane.xlu0 %1600
        %1602 = vadd.xlane.f32.xlu0 %v1546
        %v1603 = vpop.xlane.xlu0 %1602
        %1604 = vadd.xlane.f32.xlu0 %v1547
        %v1605 = vpop.xlane.xlu0 %1604
        %1606 = vadd.xlane.f32.xlu0 %v1548
        %v1607 = vpop.xlane.xlu0 %1606
        %1608 = vadd.xlane.f32.xlu0 %v1549
        %v1609 = vpop.xlane.xlu0 %1608
        %1610 = vadd.xlane.f32.xlu0 %v1550
        %v1611 = vpop.xlane.xlu0 %1610
        %1612 = vadd.xlane.f32.xlu0 %v1551
        %v1613 = vpop.xlane.xlu0 %1612
        %1614 = vadd.xlane.f32.xlu0 %v1552
        %v1615 = vpop.xlane.xlu0 %1614
        %1616 = vadd.xlane.f32.xlu0 %v1553
        %v1617 = vpop.xlane.xlu0 %1616
        %1618 = vadd.xlane.f32.xlu0 %v1554
        %v1619 = vpop.xlane.xlu0 %1618
        %1620 = vadd.xlane.f32.xlu0 %v1555
        %v1621 = vpop.xlane.xlu0 %1620
        %v1622 = vrcp.pop 128.0
        %v1623 = vmul.f32 128.0, %v1622
        %v1624 = vsub.f32 1.0, %v1623
        %v1625 = vmul.f32 %v1622, %v1624
        %v1626 = vadd.f32 %v1622, %v1625
        %vm1627 = vweird.f32 %v1622
        %v1628 = vsel %vm1627, %v1622, %v1626
        %v1629 = vmul.f32 %v1559, %v1628
        %v1630 = vmul.f32 %v1561, %v1628
        %v1631 = vmul.f32 %v1563, %v1628
        %v1632 = vmul.f32 %v1565, %v1628
        %v1633 = vmul.f32 %v1567, %v1628
        %v1634 = vmul.f32 %v1569, %v1628
        %v1635 = vmul.f32 %v1571, %v1628
        %v1636 = vmul.f32 %v1573, %v1628
        %v1637 = vmul.f32 %v1575, %v1628
        %v1638 = vmul.f32 %v1577, %v1628
        %v1639 = vmul.f32 %v1579, %v1628
        %v1640 = vmul.f32 %v1581, %v1628
        %v1641 = vmul.f32 %v1583, %v1628
        %v1642 = vmul.f32 %v1585, %v1628
        %v1643 = vmul.f32 %v1587, %v1628
        %v1644 = vmul.f32 %v1589, %v1628
        %v1645 = vmul.f32 %v1591, %v1628
        %v1646 = vmul.f32 %v1593, %v1628
        %v1647 = vmul.f32 %v1595, %v1628
        %v1648 = vmul.f32 %v1597, %v1628
        %v1649 = vmul.f32 %v1599, %v1628
        %v1650 = vmul.f32 %v1601, %v1628
        %v1651 = vmul.f32 %v1603, %v1628
        %v1652 = vmul.f32 %v1605, %v1628
        %v1653 = vmul.f32 %v1607, %v1628
        %v1654 = vmul.f32 %v1609, %v1628
        %v1655 = vmul.f32 %v1611, %v1628
        %v1656 = vmul.f32 %v1613, %v1628
        %v1657 = vmul.f32 %v1615, %v1628
        %v1658 = vmul.f32 %v1617, %v1628
        %v1659 = vmul.f32 %v1619, %v1628
        %v1660 = vmul.f32 %v1621, %v1628
        %v1661 = vsub.f32 %v1524, %v1629
        %v1662 = vsub.f32 %v1525, %v1630
        %v1663 = vsub.f32 %v1526, %v1631
        %v1664 = vsub.f32 %v1527, %v1632
        %v1665 = vsub.f32 %v1528, %v1633
        %v1666 = vsub.f32 %v1529, %v1634
        %v1667 = vsub.f32 %v1530, %v1635
        %v1668 = vsub.f32 %v1531, %v1636
        %v1669 = vsub.f32 %v1532, %v1637
        %v1670 = vsub.f32 %v1533, %v1638
        %v1671 = vsub.f32 %v1534, %v1639
        %v1672 = vsub.f32 %v1535, %v1640
        %v1673 = vsub.f32 %v1536, %v1641
        %v1674 = vsub.f32 %v1537, %v1642
        %v1675 = vsub.f32 %v1538, %v1643
        %v1676 = vsub.f32 %v1539, %v1644
        %v1677 = vsub.f32 %v1540, %v1645
        %v1678 = vsub.f32 %v1541, %v1646
        %v1679 = vsub.f32 %v1542, %v1647
        %v1680 = vsub.f32 %v1543, %v1648
        %v1681 = vsub.f32 %v1544, %v1649
        %v1682 = vsub.f32 %v1545, %v1650
        %v1683 = vsub.f32 %v1546, %v1651
        %v1684 = vsub.f32 %v1547, %v1652
        %v1685 = vsub.f32 %v1548, %v1653
        %v1686 = vsub.f32 %v1549, %v1654
        %v1687 = vsub.f32 %v1550, %v1655
        %v1688 = vsub.f32 %v1551, %v1656
        %v1689 = vsub.f32 %v1552, %v1657
        %v1690 = vsub.f32 %v1553, %v1658
        %v1691 = vsub.f32 %v1554, %v1659
        %v1692 = vsub.f32 %v1555, %v1660
        %v1693 = vmul.f32 %v1661, %v1661
        %v1694 = vmul.f32 %v1662, %v1662
        %v1695 = vmul.f32 %v1663, %v1663
        %v1696 = vmul.f32 %v1664, %v1664
        %v1697 = vmul.f32 %v1665, %v1665
        %v1698 = vmul.f32 %v1666, %v1666
        %v1699 = vmul.f32 %v1667, %v1667
        %v1700 = vmul.f32 %v1668, %v1668
        %v1701 = vmul.f32 %v1669, %v1669
        %v1702 = vmul.f32 %v1670, %v1670
        %v1703 = vmul.f32 %v1671, %v1671
        %v1704 = vmul.f32 %v1672, %v1672
        %v1705 = vmul.f32 %v1673, %v1673
        %v1706 = vmul.f32 %v1674, %v1674
        %v1707 = vmul.f32 %v1675, %v1675
        %v1708 = vmul.f32 %v1676, %v1676
        %v1709 = vmul.f32 %v1677, %v1677
        %v1710 = vmul.f32 %v1678, %v1678
        %v1711 = vmul.f32 %v1679, %v1679
        %v1712 = vmul.f32 %v1680, %v1680
        %v1713 = vmul.f32 %v1681, %v1681
        %v1714 = vmul.f32 %v1682, %v1682
        %v1715 = vmul.f32 %v1683, %v1683
        %v1716 = vmul.f32 %v1684, %v1684
        %v1717 = vmul.f32 %v1685, %v1685
        %v1718 = vmul.f32 %v1686, %v1686
        %v1719 = vmul.f32 %v1687, %v1687
        %v1720 = vmul.f32 %v1688, %v1688
        %v1721 = vmul.f32 %v1689, %v1689
        %v1722 = vmul.f32 %v1690, %v1690
        %v1723 = vmul.f32 %v1691, %v1691
        %v1724 = vmul.f32 %v1692, %v1692
        %1725 = vadd.xlane.f32.xlu0 %v1693
        %v1726 = vpop.xlane.xlu0 %1725
        %1727 = vadd.xlane.f32.xlu0 %v1694
        %v1728 = vpop.xlane.xlu0 %1727
        %1729 = vadd.xlane.f32.xlu0 %v1695
        %v1730 = vpop.xlane.xlu0 %1729
        %1731 = vadd.xlane.f32.xlu0 %v1696
        %v1732 = vpop.xlane.xlu0 %1731
        %1733 = vadd.xlane.f32.xlu0 %v1697
        %v1734 = vpop.xlane.xlu0 %1733
        %1735 = vadd.xlane.f32.xlu0 %v1698
        %v1736 = vpop.xlane.xlu0 %1735
        %1737 = vadd.xlane.f32.xlu0 %v1699
        %v1738 = vpop.xlane.xlu0 %1737
        %1739 = vadd.xlane.f32.xlu0 %v1700
        %v1740 = vpop.xlane.xlu0 %1739
        %1741 = vadd.xlane.f32.xlu0 %v1701
        %v1742 = vpop.xlane.xlu0 %1741
        %1743 = vadd.xlane.f32.xlu0 %v1702
        %v1744 = vpop.xlane.xlu0 %1743
        %1745 = vadd.xlane.f32.xlu0 %v1703
        %v1746 = vpop.xlane.xlu0 %1745
        %1747 = vadd.xlane.f32.xlu0 %v1704
        %v1748 = vpop.xlane.xlu0 %1747
        %1749 = vadd.xlane.f32.xlu0 %v1705
        %v1750 = vpop.xlane.xlu0 %1749
        %1751 = vadd.xlane.f32.xlu0 %v1706
        %v1752 = vpop.xlane.xlu0 %1751
        %1753 = vadd.xlane.f32.xlu0 %v1707
        %v1754 = vpop.xlane.xlu0 %1753
        %1755 = vadd.xlane.f32.xlu0 %v1708
        %v1756 = vpop.xlane.xlu0 %1755
        %1757 = vadd.xlane.f32.xlu0 %v1709
        %v1758 = vpop.xlane.xlu0 %1757
        %1759 = vadd.xlane.f32.xlu0 %v1710
        %v1760 = vpop.xlane.xlu0 %1759
        %1761 = vadd.xlane.f32.xlu0 %v1711
        %v1762 = vpop.xlane.xlu0 %1761
        %1763 = vadd.xlane.f32.xlu0 %v1712
        %v1764 = vpop.xlane.xlu0 %1763
        %1765 = vadd.xlane.f32.xlu0 %v1713
        %v1766 = vpop.xlane.xlu0 %1765
        %1767 = vadd.xlane.f32.xlu0 %v1714
        %v1768 = vpop.xlane.xlu0 %1767
        %1769 = vadd.xlane.f32.xlu0 %v1715
        %v1770 = vpop.xlane.xlu0 %1769
        %1771 = vadd.xlane.f32.xlu0 %v1716
        %v1772 = vpop.xlane.xlu0 %1771
        %1773 = vadd.xlane.f32.xlu0 %v1717
        %v1774 = vpop.xlane.xlu0 %1773
        %1775 = vadd.xlane.f32.xlu0 %v1718
        %v1776 = vpop.xlane.xlu0 %1775
        %1777 = vadd.xlane.f32.xlu0 %v1719
        %v1778 = vpop.xlane.xlu0 %1777
        %1779 = vadd.xlane.f32.xlu0 %v1720
        %v1780 = vpop.xlane.xlu0 %1779
        %1781 = vadd.xlane.f32.xlu0 %v1721
        %v1782 = vpop.xlane.xlu0 %1781
        %1783 = vadd.xlane.f32.xlu0 %v1722
        %v1784 = vpop.xlane.xlu0 %1783
        %1785 = vadd.xlane.f32.xlu0 %v1723
        %v1786 = vpop.xlane.xlu0 %1785
        %1787 = vadd.xlane.f32.xlu0 %v1724
        %v1788 = vpop.xlane.xlu0 %1787
        %v1789 = vmul.f32 %v1726, %v1628
        %v1790 = vmul.f32 %v1728, %v1628
        %v1791 = vmul.f32 %v1730, %v1628
        %v1792 = vmul.f32 %v1732, %v1628
        %v1793 = vmul.f32 %v1734, %v1628
        %v1794 = vmul.f32 %v1736, %v1628
        %v1795 = vmul.f32 %v1738, %v1628
        %v1796 = vmul.f32 %v1740, %v1628
        %v1797 = vmul.f32 %v1742, %v1628
        %v1798 = vmul.f32 %v1744, %v1628
        %v1799 = vmul.f32 %v1746, %v1628
        %v1800 = vmul.f32 %v1748, %v1628
        %v1801 = vmul.f32 %v1750, %v1628
        %v1802 = vmul.f32 %v1752, %v1628
        %v1803 = vmul.f32 %v1754, %v1628
        %v1804 = vmul.f32 %v1756, %v1628
        %v1805 = vmul.f32 %v1758, %v1628
        %v1806 = vmul.f32 %v1760, %v1628
        %v1807 = vmul.f32 %v1762, %v1628
        %v1808 = vmul.f32 %v1764, %v1628
        %v1809 = vmul.f32 %v1766, %v1628
        %v1810 = vmul.f32 %v1768, %v1628
        %v1811 = vmul.f32 %v1770, %v1628
        %v1812 = vmul.f32 %v1772, %v1628
        %v1813 = vmul.f32 %v1774, %v1628
        %v1814 = vmul.f32 %v1776, %v1628
        %v1815 = vmul.f32 %v1778, %v1628
        %v1816 = vmul.f32 %v1780, %v1628
        %v1817 = vmul.f32 %v1782, %v1628
        %v1818 = vmul.f32 %v1784, %v1628
        %v1819 = vmul.f32 %v1786, %v1628
        %v1820 = vmul.f32 %v1788, %v1628
        %v1821 = vadd.f32 %v1789, 1e-05
        %v1822 = vadd.f32 %v1790, 1e-05
        %v1823 = vadd.f32 %v1791, 1e-05
        %v1824 = vadd.f32 %v1792, 1e-05
        %v1825 = vadd.f32 %v1793, 1e-05
        %v1826 = vadd.f32 %v1794, 1e-05
        %v1827 = vadd.f32 %v1795, 1e-05
        %v1828 = vadd.f32 %v1796, 1e-05
        %v1829 = vadd.f32 %v1797, 1e-05
        %v1830 = vadd.f32 %v1798, 1e-05
        %v1831 = vadd.f32 %v1799, 1e-05
        %v1832 = vadd.f32 %v1800, 1e-05
        %v1833 = vadd.f32 %v1801, 1e-05
        %v1834 = vadd.f32 %v1802, 1e-05
        %v1835 = vadd.f32 %v1803, 1e-05
        %v1836 = vadd.f32 %v1804, 1e-05
        %v1837 = vadd.f32 %v1805, 1e-05
        %v1838 = vadd.f32 %v1806, 1e-05
        %v1839 = vadd.f32 %v1807, 1e-05
        %v1840 = vadd.f32 %v1808, 1e-05
        %v1841 = vadd.f32 %v1809, 1e-05
        %v1842 = vadd.f32 %v1810, 1e-05
        %v1843 = vadd.f32 %v1811, 1e-05
        %v1844 = vadd.f32 %v1812, 1e-05
        %v1845 = vadd.f32 %v1813, 1e-05
        %v1846 = vadd.f32 %v1814, 1e-05
        %v1847 = vadd.f32 %v1815, 1e-05
        %v1848 = vadd.f32 %v1816, 1e-05
        %v1849 = vadd.f32 %v1817, 1e-05
        %v1850 = vadd.f32 %v1818, 1e-05
        %v1851 = vadd.f32 %v1819, 1e-05
        %v1852 = vadd.f32 %v1820, 1e-05
        %v1853 = vrsqrt.pop %v1821
        %v1854 = vmul.f32 %v1853, %v1821
        %v1855 = vmul.f32 %v1854, %v1853
        %v1856 = vmul.f32 0.5, %v1855
        %v1857 = vsub.f32 1.5, %v1856
        %v1858 = vmul.f32 %v1853, %v1857
        %vm1859 = vweird.f32 %v1821
        %vm1860 = vweird.f32 %v1853
        %vm1861 = vmor %vm1859, %vm1860
        %v1862 = vsel %vm1861, %v1853, %v1858
        %v1863 = vrsqrt.pop %v1822
        %v1864 = vmul.f32 %v1863, %v1822
        %v1865 = vmul.f32 %v1864, %v1863
        %v1866 = vmul.f32 0.5, %v1865
        %v1867 = vsub.f32 1.5, %v1866
        %v1868 = vmul.f32 %v1863, %v1867
        %vm1869 = vweird.f32 %v1822
        %vm1870 = vweird.f32 %v1863
        %vm1871 = vmor %vm1869, %vm1870
        %v1872 = vsel %vm1871, %v1863, %v1868
        %v1873 = vrsqrt.pop %v1823
        %v1874 = vmul.f32 %v1873, %v1823
        %v1875 = vmul.f32 %v1874, %v1873
        %v1876 = vmul.f32 0.5, %v1875
        %v1877 = vsub.f32 1.5, %v1876
        %v1878 = vmul.f32 %v1873, %v1877
        %vm1879 = vweird.f32 %v1823
        %vm1880 = vweird.f32 %v1873
        %vm1881 = vmor %vm1879, %vm1880
        %v1882 = vsel %vm1881, %v1873, %v1878
        %v1883 = vrsqrt.pop %v1824
        %v1884 = vmul.f32 %v1883, %v1824
        %v1885 = vmul.f32 %v1884, %v1883
        %v1886 = vmul.f32 0.5, %v1885
        %v1887 = vsub.f32 1.5, %v1886
        %v1888 = vmul.f32 %v1883, %v1887
        %vm1889 = vweird.f32 %v1824
        %vm1890 = vweird.f32 %v1883
        %vm1891 = vmor %vm1889, %vm1890
        %v1892 = vsel %vm1891, %v1883, %v1888
        %v1893 = vrsqrt.pop %v1825
        %v1894 = vmul.f32 %v1893, %v1825
        %v1895 = vmul.f32 %v1894, %v1893
        %v1896 = vmul.f32 0.5, %v1895
        %v1897 = vsub.f32 1.5, %v1896
        %v1898 = vmul.f32 %v1893, %v1897
        %vm1899 = vweird.f32 %v1825
        %vm1900 = vweird.f32 %v1893
        %vm1901 = vmor %vm1899, %vm1900
        %v1902 = vsel %vm1901, %v1893, %v1898
        %v1903 = vrsqrt.pop %v1826
        %v1904 = vmul.f32 %v1903, %v1826
        %v1905 = vmul.f32 %v1904, %v1903
        %v1906 = vmul.f32 0.5, %v1905
        %v1907 = vsub.f32 1.5, %v1906
        %v1908 = vmul.f32 %v1903, %v1907
        %vm1909 = vweird.f32 %v1826
        %vm1910 = vweird.f32 %v1903
        %vm1911 = vmor %vm1909, %vm1910
        %v1912 = vsel %vm1911, %v1903, %v1908
        %v1913 = vrsqrt.pop %v1827
        %v1914 = vmul.f32 %v1913, %v1827
        %v1915 = vmul.f32 %v1914, %v1913
        %v1916 = vmul.f32 0.5, %v1915
        %v1917 = vsub.f32 1.5, %v1916
        %v1918 = vmul.f32 %v1913, %v1917
        %vm1919 = vweird.f32 %v1827
        %vm1920 = vweird.f32 %v1913
        %vm1921 = vmor %vm1919, %vm1920
        %v1922 = vsel %vm1921, %v1913, %v1918
        %v1923 = vrsqrt.pop %v1828
        %v1924 = vmul.f32 %v1923, %v1828
        %v1925 = vmul.f32 %v1924, %v1923
        %v1926 = vmul.f32 0.5, %v1925
        %v1927 = vsub.f32 1.5, %v1926
        %v1928 = vmul.f32 %v1923, %v1927
        %vm1929 = vweird.f32 %v1828
        %vm1930 = vweird.f32 %v1923
        %vm1931 = vmor %vm1929, %vm1930
        %v1932 = vsel %vm1931, %v1923, %v1928
        %v1933 = vrsqrt.pop %v1829
        %v1934 = vmul.f32 %v1933, %v1829
        %v1935 = vmul.f32 %v1934, %v1933
        %v1936 = vmul.f32 0.5, %v1935
        %v1937 = vsub.f32 1.5, %v1936
        %v1938 = vmul.f32 %v1933, %v1937
        %vm1939 = vweird.f32 %v1829
        %vm1940 = vweird.f32 %v1933
        %vm1941 = vmor %vm1939, %vm1940
        %v1942 = vsel %vm1941, %v1933, %v1938
        %v1943 = vrsqrt.pop %v1830
        %v1944 = vmul.f32 %v1943, %v1830
        %v1945 = vmul.f32 %v1944, %v1943
        %v1946 = vmul.f32 0.5, %v1945
        %v1947 = vsub.f32 1.5, %v1946
        %v1948 = vmul.f32 %v1943, %v1947
        %vm1949 = vweird.f32 %v1830
        %vm1950 = vweird.f32 %v1943
        %vm1951 = vmor %vm1949, %vm1950
        %v1952 = vsel %vm1951, %v1943, %v1948
        %v1953 = vrsqrt.pop %v1831
        %v1954 = vmul.f32 %v1953, %v1831
        %v1955 = vmul.f32 %v1954, %v1953
        %v1956 = vmul.f32 0.5, %v1955
        %v1957 = vsub.f32 1.5, %v1956
        %v1958 = vmul.f32 %v1953, %v1957
        %vm1959 = vweird.f32 %v1831
        %vm1960 = vweird.f32 %v1953
        %vm1961 = vmor %vm1959, %vm1960
        %v1962 = vsel %vm1961, %v1953, %v1958
        %v1963 = vrsqrt.pop %v1832
        %v1964 = vmul.f32 %v1963, %v1832
        %v1965 = vmul.f32 %v1964, %v1963
        %v1966 = vmul.f32 0.5, %v1965
        %v1967 = vsub.f32 1.5, %v1966
        %v1968 = vmul.f32 %v1963, %v1967
        %vm1969 = vweird.f32 %v1832
        %vm1970 = vweird.f32 %v1963
        %vm1971 = vmor %vm1969, %vm1970
        %v1972 = vsel %vm1971, %v1963, %v1968
        %v1973 = vrsqrt.pop %v1833
        %v1974 = vmul.f32 %v1973, %v1833
        %v1975 = vmul.f32 %v1974, %v1973
        %v1976 = vmul.f32 0.5, %v1975
        %v1977 = vsub.f32 1.5, %v1976
        %v1978 = vmul.f32 %v1973, %v1977
        %vm1979 = vweird.f32 %v1833
        %vm1980 = vweird.f32 %v1973
        %vm1981 = vmor %vm1979, %vm1980
        %v1982 = vsel %vm1981, %v1973, %v1978
        %v1983 = vrsqrt.pop %v1834
        %v1984 = vmul.f32 %v1983, %v1834
        %v1985 = vmul.f32 %v1984, %v1983
        %v1986 = vmul.f32 0.5, %v1985
        %v1987 = vsub.f32 1.5, %v1986
        %v1988 = vmul.f32 %v1983, %v1987
        %vm1989 = vweird.f32 %v1834
        %vm1990 = vweird.f32 %v1983
        %vm1991 = vmor %vm1989, %vm1990
        %v1992 = vsel %vm1991, %v1983, %v1988
        %v1993 = vrsqrt.pop %v1835
        %v1994 = vmul.f32 %v1993, %v1835
        %v1995 = vmul.f32 %v1994, %v1993
        %v1996 = vmul.f32 0.5, %v1995
        %v1997 = vsub.f32 1.5, %v1996
        %v1998 = vmul.f32 %v1993, %v1997
        %vm1999 = vweird.f32 %v1835
        %vm2000 = vweird.f32 %v1993
        %vm2001 = vmor %vm1999, %vm2000
        %v2002 = vsel %vm2001, %v1993, %v1998
        %v2003 = vrsqrt.pop %v1836
        %v2004 = vmul.f32 %v2003, %v1836
        %v2005 = vmul.f32 %v2004, %v2003
        %v2006 = vmul.f32 0.5, %v2005
        %v2007 = vsub.f32 1.5, %v2006
        %v2008 = vmul.f32 %v2003, %v2007
        %vm2009 = vweird.f32 %v1836
        %vm2010 = vweird.f32 %v2003
        %vm2011 = vmor %vm2009, %vm2010
        %v2012 = vsel %vm2011, %v2003, %v2008
        %v2013 = vrsqrt.pop %v1837
        %v2014 = vmul.f32 %v2013, %v1837
        %v2015 = vmul.f32 %v2014, %v2013
        %v2016 = vmul.f32 0.5, %v2015
        %v2017 = vsub.f32 1.5, %v2016
        %v2018 = vmul.f32 %v2013, %v2017
        %vm2019 = vweird.f32 %v1837
        %vm2020 = vweird.f32 %v2013
        %vm2021 = vmor %vm2019, %vm2020
        %v2022 = vsel %vm2021, %v2013, %v2018
        %v2023 = vrsqrt.pop %v1838
        %v2024 = vmul.f32 %v2023, %v1838
        %v2025 = vmul.f32 %v2024, %v2023
        %v2026 = vmul.f32 0.5, %v2025
        %v2027 = vsub.f32 1.5, %v2026
        %v2028 = vmul.f32 %v2023, %v2027
        %vm2029 = vweird.f32 %v1838
        %vm2030 = vweird.f32 %v2023
        %vm2031 = vmor %vm2029, %vm2030
        %v2032 = vsel %vm2031, %v2023, %v2028
        %v2033 = vrsqrt.pop %v1839
        %v2034 = vmul.f32 %v2033, %v1839
        %v2035 = vmul.f32 %v2034, %v2033
        %v2036 = vmul.f32 0.5, %v2035
        %v2037 = vsub.f32 1.5, %v2036
        %v2038 = vmul.f32 %v2033, %v2037
        %vm2039 = vweird.f32 %v1839
        %vm2040 = vweird.f32 %v2033
        %vm2041 = vmor %vm2039, %vm2040
        %v2042 = vsel %vm2041, %v2033, %v2038
        %v2043 = vrsqrt.pop %v1840
        %v2044 = vmul.f32 %v2043, %v1840
        %v2045 = vmul.f32 %v2044, %v2043
        %v2046 = vmul.f32 0.5, %v2045
        %v2047 = vsub.f32 1.5, %v2046
        %v2048 = vmul.f32 %v2043, %v2047
        %vm2049 = vweird.f32 %v1840
        %vm2050 = vweird.f32 %v2043
        %vm2051 = vmor %vm2049, %vm2050
        %v2052 = vsel %vm2051, %v2043, %v2048
        %v2053 = vrsqrt.pop %v1841
        %v2054 = vmul.f32 %v2053, %v1841
        %v2055 = vmul.f32 %v2054, %v2053
        %v2056 = vmul.f32 0.5, %v2055
        %v2057 = vsub.f32 1.5, %v2056
        %v2058 = vmul.f32 %v2053, %v2057
        %vm2059 = vweird.f32 %v1841
        %vm2060 = vweird.f32 %v2053
        %vm2061 = vmor %vm2059, %vm2060
        %v2062 = vsel %vm2061, %v2053, %v2058
        %v2063 = vrsqrt.pop %v1842
        %v2064 = vmul.f32 %v2063, %v1842
        %v2065 = vmul.f32 %v2064, %v2063
        %v2066 = vmul.f32 0.5, %v2065
        %v2067 = vsub.f32 1.5, %v2066
        %v2068 = vmul.f32 %v2063, %v2067
        %vm2069 = vweird.f32 %v1842
        %vm2070 = vweird.f32 %v2063
        %vm2071 = vmor %vm2069, %vm2070
        %v2072 = vsel %vm2071, %v2063, %v2068
        %v2073 = vrsqrt.pop %v1843
        %v2074 = vmul.f32 %v2073, %v1843
        %v2075 = vmul.f32 %v2074, %v2073
        %v2076 = vmul.f32 0.5, %v2075
        %v2077 = vsub.f32 1.5, %v2076
        %v2078 = vmul.f32 %v2073, %v2077
        %vm2079 = vweird.f32 %v1843
        %vm2080 = vweird.f32 %v2073
        %vm2081 = vmor %vm2079, %vm2080
        %v2082 = vsel %vm2081, %v2073, %v2078
        %v2083 = vrsqrt.pop %v1844
        %v2084 = vmul.f32 %v2083, %v1844
        %v2085 = vmul.f32 %v2084, %v2083
        %v2086 = vmul.f32 0.5, %v2085
        %v2087 = vsub.f32 1.5, %v2086
        %v2088 = vmul.f32 %v2083, %v2087
        %vm2089 = vweird.f32 %v1844
        %vm2090 = vweird.f32 %v2083
        %vm2091 = vmor %vm2089, %vm2090
        %v2092 = vsel %vm2091, %v2083, %v2088
        %v2093 = vrsqrt.pop %v1845
        %v2094 = vmul.f32 %v2093, %v1845
        %v2095 = vmul.f32 %v2094, %v2093
        %v2096 = vmul.f32 0.5, %v2095
        %v2097 = vsub.f32 1.5, %v2096
        %v2098 = vmul.f32 %v2093, %v2097
        %vm2099 = vweird.f32 %v1845
        %vm2100 = vweird.f32 %v2093
        %vm2101 = vmor %vm2099, %vm2100
        %v2102 = vsel %vm2101, %v2093, %v2098
        %v2103 = vrsqrt.pop %v1846
        %v2104 = vmul.f32 %v2103, %v1846
        %v2105 = vmul.f32 %v2104, %v2103
        %v2106 = vmul.f32 0.5, %v2105
        %v2107 = vsub.f32 1.5, %v2106
        %v2108 = vmul.f32 %v2103, %v2107
        %vm2109 = vweird.f32 %v1846
        %vm2110 = vweird.f32 %v2103
        %vm2111 = vmor %vm2109, %vm2110
        %v2112 = vsel %vm2111, %v2103, %v2108
        %v2113 = vrsqrt.pop %v1847
        %v2114 = vmul.f32 %v2113, %v1847
        %v2115 = vmul.f32 %v2114, %v2113
        %v2116 = vmul.f32 0.5, %v2115
        %v2117 = vsub.f32 1.5, %v2116
        %v2118 = vmul.f32 %v2113, %v2117
        %vm2119 = vweird.f32 %v1847
        %vm2120 = vweird.f32 %v2113
        %vm2121 = vmor %vm2119, %vm2120
        %v2122 = vsel %vm2121, %v2113, %v2118
        %v2123 = vrsqrt.pop %v1848
        %v2124 = vmul.f32 %v2123, %v1848
        %v2125 = vmul.f32 %v2124, %v2123
        %v2126 = vmul.f32 0.5, %v2125
        %v2127 = vsub.f32 1.5, %v2126
        %v2128 = vmul.f32 %v2123, %v2127
        %vm2129 = vweird.f32 %v1848
        %vm2130 = vweird.f32 %v2123
        %vm2131 = vmor %vm2129, %vm2130
        %v2132 = vsel %vm2131, %v2123, %v2128
        %v2133 = vrsqrt.pop %v1849
        %v2134 = vmul.f32 %v2133, %v1849
        %v2135 = vmul.f32 %v2134, %v2133
        %v2136 = vmul.f32 0.5, %v2135
        %v2137 = vsub.f32 1.5, %v2136
        %v2138 = vmul.f32 %v2133, %v2137
        %vm2139 = vweird.f32 %v1849
        %vm2140 = vweird.f32 %v2133
        %vm2141 = vmor %vm2139, %vm2140
        %v2142 = vsel %vm2141, %v2133, %v2138
        %v2143 = vrsqrt.pop %v1850
        %v2144 = vmul.f32 %v2143, %v1850
        %v2145 = vmul.f32 %v2144, %v2143
        %v2146 = vmul.f32 0.5, %v2145
        %v2147 = vsub.f32 1.5, %v2146
        %v2148 = vmul.f32 %v2143, %v2147
        %vm2149 = vweird.f32 %v1850
        %vm2150 = vweird.f32 %v2143
        %vm2151 = vmor %vm2149, %vm2150
        %v2152 = vsel %vm2151, %v2143, %v2148
        %v2153 = vrsqrt.pop %v1851
        %v2154 = vmul.f32 %v2153, %v1851
        %v2155 = vmul.f32 %v2154, %v2153
        %v2156 = vmul.f32 0.5, %v2155
        %v2157 = vsub.f32 1.5, %v2156
        %v2158 = vmul.f32 %v2153, %v2157
        %vm2159 = vweird.f32 %v1851
        %vm2160 = vweird.f32 %v2153
        %vm2161 = vmor %vm2159, %vm2160
        %v2162 = vsel %vm2161, %v2153, %v2158
        %v2163 = vrsqrt.pop %v1852
        %v2164 = vmul.f32 %v2163, %v1852
        %v2165 = vmul.f32 %v2164, %v2163
        %v2166 = vmul.f32 0.5, %v2165
        %v2167 = vsub.f32 1.5, %v2166
        %v2168 = vmul.f32 %v2163, %v2167
        %vm2169 = vweird.f32 %v1852
        %vm2170 = vweird.f32 %v2163
        %vm2171 = vmor %vm2169, %vm2170
        %v2172 = vsel %vm2171, %v2163, %v2168
        %v2173 = vmul.f32 %v1661, %v1862
        %v2174 = vmul.f32 %v1662, %v1872
        %v2175 = vmul.f32 %v1663, %v1882
        %v2176 = vmul.f32 %v1664, %v1892
        %v2177 = vmul.f32 %v1665, %v1902
        %v2178 = vmul.f32 %v1666, %v1912
        %v2179 = vmul.f32 %v1667, %v1922
        %v2180 = vmul.f32 %v1668, %v1932
        %v2181 = vmul.f32 %v1669, %v1942
        %v2182 = vmul.f32 %v1670, %v1952
        %v2183 = vmul.f32 %v1671, %v1962
        %v2184 = vmul.f32 %v1672, %v1972
        %v2185 = vmul.f32 %v1673, %v1982
        %v2186 = vmul.f32 %v1674, %v1992
        %v2187 = vmul.f32 %v1675, %v2002
        %v2188 = vmul.f32 %v1676, %v2012
        %v2189 = vmul.f32 %v1677, %v2022
        %v2190 = vmul.f32 %v1678, %v2032
        %v2191 = vmul.f32 %v1679, %v2042
        %v2192 = vmul.f32 %v1680, %v2052
        %v2193 = vmul.f32 %v1681, %v2062
        %v2194 = vmul.f32 %v1682, %v2072
        %v2195 = vmul.f32 %v1683, %v2082
        %v2196 = vmul.f32 %v1684, %v2092
        %v2197 = vmul.f32 %v1685, %v2102
        %v2198 = vmul.f32 %v1686, %v2112
        %v2199 = vmul.f32 %v1687, %v2122
        %v2200 = vmul.f32 %v1688, %v2132
        %v2201 = vmul.f32 %v1689, %v2142
        %v2202 = vmul.f32 %v1690, %v2152
        %v2203 = vmul.f32 %v1691, %v2162
        %v2204 = vmul.f32 %v1692, %v2172
        %v2205 = vperm.slane %v1556, 0
        %v2206 = vmul.f32 %v2173, %v2205
        %v2207 = vmul.f32 %v2174, %v2205
        %v2208 = vmul.f32 %v2175, %v2205
        %v2209 = vmul.f32 %v2176, %v2205
        %v2210 = vmul.f32 %v2177, %v2205
        %v2211 = vmul.f32 %v2178, %v2205
        %v2212 = vmul.f32 %v2179, %v2205
        %v2213 = vmul.f32 %v2180, %v2205
        %v2214 = vmul.f32 %v2181, %v2205
        %v2215 = vmul.f32 %v2182, %v2205
        %v2216 = vmul.f32 %v2183, %v2205
        %v2217 = vmul.f32 %v2184, %v2205
        %v2218 = vmul.f32 %v2185, %v2205
        %v2219 = vmul.f32 %v2186, %v2205
        %v2220 = vmul.f32 %v2187, %v2205
        %v2221 = vmul.f32 %v2188, %v2205
        %v2222 = vmul.f32 %v2189, %v2205
        %v2223 = vmul.f32 %v2190, %v2205
        %v2224 = vmul.f32 %v2191, %v2205
        %v2225 = vmul.f32 %v2192, %v2205
        %v2226 = vmul.f32 %v2193, %v2205
        %v2227 = vmul.f32 %v2194, %v2205
        %v2228 = vmul.f32 %v2195, %v2205
        %v2229 = vmul.f32 %v2196, %v2205
        %v2230 = vmul.f32 %v2197, %v2205
        %v2231 = vmul.f32 %v2198, %v2205
        %v2232 = vmul.f32 %v2199, %v2205
        %v2233 = vmul.f32 %v2200, %v2205
        %v2234 = vmul.f32 %v2201, %v2205
        %v2235 = vmul.f32 %v2202, %v2205
        %v2236 = vmul.f32 %v2203, %v2205
        %v2237 = vmul.f32 %v2204, %v2205
        %v2238 = vperm.slane %v1557, 0
        %v2239 = vadd.f32 %v2206, %v2238
        %v2240 = vadd.f32 %v2207, %v2238
        %v2241 = vadd.f32 %v2208, %v2238
        %v2242 = vadd.f32 %v2209, %v2238
        %v2243 = vadd.f32 %v2210, %v2238
        %v2244 = vadd.f32 %v2211, %v2238
        %v2245 = vadd.f32 %v2212, %v2238
        %v2246 = vadd.f32 %v2213, %v2238
        %v2247 = vadd.f32 %v2214, %v2238
        %v2248 = vadd.f32 %v2215, %v2238
        %v2249 = vadd.f32 %v2216, %v2238
        %v2250 = vadd.f32 %v2217, %v2238
        %v2251 = vadd.f32 %v2218, %v2238
        %v2252 = vadd.f32 %v2219, %v2238
        %v2253 = vadd.f32 %v2220, %v2238
        %v2254 = vadd.f32 %v2221, %v2238
        %v2255 = vadd.f32 %v2222, %v2238
        %v2256 = vadd.f32 %v2223, %v2238
        %v2257 = vadd.f32 %v2224, %v2238
        %v2258 = vadd.f32 %v2225, %v2238
        %v2259 = vadd.f32 %v2226, %v2238
        %v2260 = vadd.f32 %v2227, %v2238
        %v2261 = vadd.f32 %v2228, %v2238
        %v2262 = vadd.f32 %v2229, %v2238
        %v2263 = vadd.f32 %v2230, %v2238
        %v2264 = vadd.f32 %v2231, %v2238
        %v2265 = vadd.f32 %v2232, %v2238
        %v2266 = vadd.f32 %v2233, %v2238
        %v2267 = vadd.f32 %v2234, %v2238
        %v2268 = vadd.f32 %v2235, %v2238
        %v2269 = vadd.f32 %v2236, %v2238
        %v2270 = vadd.f32 %v2237, %v2238
        %v2271 = vpack.c.bf16 %v2240, %v2239
        %v2272 = vpack.c.bf16 %v2242, %v2241
        %v2273 = vpack.c.bf16 %v2244, %v2243
        %v2274 = vpack.c.bf16 %v2246, %v2245
        %v2275 = vpack.c.bf16 %v2248, %v2247
        %v2276 = vpack.c.bf16 %v2250, %v2249
        %v2277 = vpack.c.bf16 %v2252, %v2251
        %v2278 = vpack.c.bf16 %v2254, %v2253
        %v2279 = vpack.c.bf16 %v2256, %v2255
        %v2280 = vpack.c.bf16 %v2258, %v2257
        %v2281 = vpack.c.bf16 %v2260, %v2259
        %v2282 = vpack.c.bf16 %v2262, %v2261
        %v2283 = vpack.c.bf16 %v2264, %v2263
        %v2284 = vpack.c.bf16 %v2266, %v2265
        %v2285 = vpack.c.bf16 %v2268, %v2267
        %v2286 = vpack.c.bf16 %v2270, %v2269
        %v2287 = vld [vmem:[#allocation12] sm:$0xf]
        %v2288 = vld [vmem:[#allocation12 + $0x4] sm:$0xf]
        %v2289 = vld [vmem:[#allocation12 + $0x8] sm:$0xf]
        %v2290 = vld [vmem:[#allocation12 + $0xc] sm:$0xf]
        %v2291 = vld [vmem:[#allocation12 + $0x10] sm:$0xf]
        %v2292 = vld [vmem:[#allocation12 + $0x14] sm:$0xf]
        %v2293 = vld [vmem:[#allocation12 + $0x18] sm:$0xf]
        %v2294 = vld [vmem:[#allocation12 + $0x1c] sm:$0xf]
        %v2295 = vld [vmem:[#allocation12 + $0x20] sm:$0xf]
        %v2296 = vld [vmem:[#allocation12 + $0x24] sm:$0xf]
        %v2297 = vld [vmem:[#allocation12 + $0x28] sm:$0xf]
        %v2298 = vld [vmem:[#allocation12 + $0x2c] sm:$0xf]
        %v2299 = vld [vmem:[#allocation12 + $0x30] sm:$0xf]
        %v2300 = vld [vmem:[#allocation12 + $0x34] sm:$0xf]
        %v2301 = vld [vmem:[#allocation12 + $0x38] sm:$0xf]
        %v2302 = vld [vmem:[#allocation12 + $0x3c] sm:$0xf]
        %v2303 = vld [vmem:[#allocation13 + $0x1] sm:$0x1]
        %v2304 = vperm.slane %v2303, 0
        %v2321 = vunpack.c.l.b16 %v2287
        %v2322 = vunpack.c.l.b16 %v2288
        %v2323 = vunpack.c.l.b16 %v2289
        %v2324 = vunpack.c.l.b16 %v2290
        %v2325 = vunpack.c.l.b16 %v2291
        %v2326 = vunpack.c.l.b16 %v2292
        %v2327 = vunpack.c.l.b16 %v2293
        %v2328 = vunpack.c.l.b16 %v2294
        %v2329 = vunpack.c.l.b16 %v2295
        %v2330 = vunpack.c.l.b16 %v2296
        %v2331 = vunpack.c.l.b16 %v2297
        %v2332 = vunpack.c.l.b16 %v2298
        %v2333 = vunpack.c.l.b16 %v2299
        %v2334 = vunpack.c.l.b16 %v2300
        %v2335 = vunpack.c.l.b16 %v2301
        %v2336 = vunpack.c.l.b16 %v2302
        %v2337 = vpack.c.b16 %v2322, %v2321
        %v2338 = vpack.c.b16 %v2324, %v2323
        %v2339 = vpack.c.b16 %v2326, %v2325
        %v2340 = vpack.c.b16 %v2328, %v2327
        %v2341 = vpack.c.b16 %v2330, %v2329
        %v2342 = vpack.c.b16 %v2332, %v2331
        %v2343 = vpack.c.b16 %v2334, %v2333
        %v2344 = vpack.c.b16 %v2336, %v2335
        %2353 = vmatpush.bf16.msra.mxu0 %v2344
        %2354 = vmatpush.bf16.msra.mxu0 %v2343
        %2355 = vmatpush.bf16.msra.mxu0 %v2342
        %2356 = vmatpush.bf16.msra.mxu0 %v2341
        %2357 = vmatpush.bf16.msra.mxu0 %v2340
        %2358 = vmatpush.bf16.msra.mxu0 %v2339
        %2359 = vmatpush.bf16.msra.mxu0 %v2338
        %2360 = vmatpush.bf16.msra.mxu0 %v2337
        %2361 = vmatmul.bf16.gmra.mxu0 %v2271
        %v2362 = vpop.f32.mrf.mxu0
        %v2363 = vadd.f32 %v2304, %v2362
        %v2364 = vpop.f32.mrf.mxu0
        %v2365 = vadd.f32 %v2304, %v2364
        %2366 = vmatmul.bf16.gmra.mxu0 %v2272
        %v2367 = vpop.f32.mrf.mxu0
        %v2368 = vadd.f32 %v2304, %v2367
        %v2369 = vpop.f32.mrf.mxu0
        %v2370 = vadd.f32 %v2304, %v2369
        %2371 = vmatmul.bf16.gmra.mxu0 %v2273
        %v2372 = vpop.f32.mrf.mxu0
        %v2373 = vadd.f32 %v2304, %v2372
        %v2374 = vpop.f32.mrf.mxu0
        %v2375 = vadd.f32 %v2304, %v2374
        %2376 = vmatmul.bf16.gmra.mxu0 %v2274
        %v2377 = vpop.f32.mrf.mxu0
        %v2378 = vadd.f32 %v2304, %v2377
        %v2379 = vpop.f32.mrf.mxu0
        %v2380 = vadd.f32 %v2304, %v2379
        %2381 = vmatmul.bf16.gmra.mxu0 %v2275
        %v2382 = vpop.f32.mrf.mxu0
        %v2383 = vadd.f32 %v2304, %v2382
        %v2384 = vpop.f32.mrf.mxu0
        %v2385 = vadd.f32 %v2304, %v2384
        %2386 = vmatmul.bf16.gmra.mxu0 %v2276
        %v2387 = vpop.f32.mrf.mxu0
        %v2388 = vadd.f32 %v2304, %v2387
        %v2389 = vpop.f32.mrf.mxu0
        %v2390 = vadd.f32 %v2304, %v2389
        %2391 = vmatmul.bf16.gmra.mxu0 %v2277
        %v2392 = vpop.f32.mrf.mxu0
        %v2393 = vadd.f32 %v2304, %v2392
        %v2394 = vpop.f32.mrf.mxu0
        %v2395 = vadd.f32 %v2304, %v2394
        %2396 = vmatmul.bf16.gmra.mxu0 %v2278
        %v2397 = vpop.f32.mrf.mxu0
        %v2398 = vadd.f32 %v2304, %v2397
        %v2399 = vpop.f32.mrf.mxu0
        %v2400 = vadd.f32 %v2304, %v2399
        %2401 = vmatmul.bf16.gmra.mxu0 %v2279
        %v2402 = vpop.f32.mrf.mxu0
        %v2403 = vadd.f32 %v2304, %v2402
        %v2404 = vpop.f32.mrf.mxu0
        %v2405 = vadd.f32 %v2304, %v2404
        %2406 = vmatmul.bf16.gmra.mxu0 %v2280
        %v2407 = vpop.f32.mrf.mxu0
        %v2408 = vadd.f32 %v2304, %v2407
        %v2409 = vpop.f32.mrf.mxu0
        %v2410 = vadd.f32 %v2304, %v2409
        %2411 = vmatmul.bf16.gmra.mxu0 %v2281
        %v2412 = vpop.f32.mrf.mxu0
        %v2413 = vadd.f32 %v2304, %v2412
        %v2414 = vpop.f32.mrf.mxu0
        %v2415 = vadd.f32 %v2304, %v2414
        %2416 = vmatmul.bf16.gmra.mxu0 %v2282
        %v2417 = vpop.f32.mrf.mxu0
        %v2418 = vadd.f32 %v2304, %v2417
        %v2419 = vpop.f32.mrf.mxu0
        %v2420 = vadd.f32 %v2304, %v2419
        %2421 = vmatmul.bf16.gmra.mxu0 %v2283
        %v2422 = vpop.f32.mrf.mxu0
        %v2423 = vadd.f32 %v2304, %v2422
        %v2424 = vpop.f32.mrf.mxu0
        %v2425 = vadd.f32 %v2304, %v2424
        %2426 = vmatmul.bf16.gmra.mxu0 %v2284
        %v2427 = vpop.f32.mrf.mxu0
        %v2428 = vadd.f32 %v2304, %v2427
        %v2429 = vpop.f32.mrf.mxu0
        %v2430 = vadd.f32 %v2304, %v2429
        %2431 = vmatmul.bf16.gmra.mxu0 %v2285
        %v2432 = vpop.f32.mrf.mxu0
        %v2433 = vadd.f32 %v2304, %v2432
        %v2434 = vpop.f32.mrf.mxu0
        %v2435 = vadd.f32 %v2304, %v2434
        %2436 = vmatmul.bf16.gmra.mxu0 %v2286
        %v2437 = vpop.f32.mrf.mxu0
        %v2438 = vadd.f32 %v2304, %v2437
        %v2439 = vpop.f32.mrf.mxu0
        %v2440 = vadd.f32 %v2304, %v2439
        %2441 = vdwg.mxu0
        %v2442 = vmax.f32 %v2363, 0.0
        %v2443 = vmax.f32 %v2365, 0.0
        %v2444 = vmax.f32 %v2368, 0.0
        %v2445 = vmax.f32 %v2370, 0.0
        %v2446 = vmax.f32 %v2373, 0.0
        %v2447 = vmax.f32 %v2375, 0.0
        %v2448 = vmax.f32 %v2378, 0.0
        %v2449 = vmax.f32 %v2380, 0.0
        %v2450 = vmax.f32 %v2383, 0.0
        %v2451 = vmax.f32 %v2385, 0.0
        %v2452 = vmax.f32 %v2388, 0.0
        %v2453 = vmax.f32 %v2390, 0.0
        %v2454 = vmax.f32 %v2393, 0.0
        %v2455 = vmax.f32 %v2395, 0.0
        %v2456 = vmax.f32 %v2398, 0.0
        %v2457 = vmax.f32 %v2400, 0.0
        %v2458 = vmax.f32 %v2403, 0.0
        %v2459 = vmax.f32 %v2405, 0.0
        %v2460 = vmax.f32 %v2408, 0.0
        %v2461 = vmax.f32 %v2410, 0.0
        %v2462 = vmax.f32 %v2413, 0.0
        %v2463 = vmax.f32 %v2415, 0.0
        %v2464 = vmax.f32 %v2418, 0.0
        %v2465 = vmax.f32 %v2420, 0.0
        %v2466 = vmax.f32 %v2423, 0.0
        %v2467 = vmax.f32 %v2425, 0.0
        %v2468 = vmax.f32 %v2428, 0.0
        %v2469 = vmax.f32 %v2430, 0.0
        %v2470 = vmax.f32 %v2433, 0.0
        %v2471 = vmax.f32 %v2435, 0.0
        %v2472 = vmax.f32 %v2438, 0.0
        %v2473 = vmax.f32 %v2440, 0.0
        %v2474 = vld [vmem:[#allocation15 + $0x1] sm:$0x1]
        %v2475 = vld [vmem:[#allocation16 + $0x1] sm:$0x1]
        %2476 = vadd.xlane.f32.xlu0 %v2442
        %v2477 = vpop.xlane.xlu0 %2476
        %2478 = vadd.xlane.f32.xlu0 %v2443
        %v2479 = vpop.xlane.xlu0 %2478
        %2480 = vadd.xlane.f32.xlu0 %v2444
        %v2481 = vpop.xlane.xlu0 %2480
        %2482 = vadd.xlane.f32.xlu0 %v2445
        %v2483 = vpop.xlane.xlu0 %2482
        %2484 = vadd.xlane.f32.xlu0 %v2446
        %v2485 = vpop.xlane.xlu0 %2484
        %2486 = vadd.xlane.f32.xlu0 %v2447
        %v2487 = vpop.xlane.xlu0 %2486
        %2488 = vadd.xlane.f32.xlu0 %v2448
        %v2489 = vpop.xlane.xlu0 %2488
        %2490 = vadd.xlane.f32.xlu0 %v2449
        %v2491 = vpop.xlane.xlu0 %2490
        %2492 = vadd.xlane.f32.xlu0 %v2450
        %v2493 = vpop.xlane.xlu0 %2492
        %2494 = vadd.xlane.f32.xlu0 %v2451
        %v2495 = vpop.xlane.xlu0 %2494
        %2496 = vadd.xlane.f32.xlu0 %v2452
        %v2497 = vpop.xlane.xlu0 %2496
        %2498 = vadd.xlane.f32.xlu0 %v2453
        %v2499 = vpop.xlane.xlu0 %2498
        %2500 = vadd.xlane.f32.xlu0 %v2454
        %v2501 = vpop.xlane.xlu0 %2500
        %2502 = vadd.xlane.f32.xlu0 %v2455
        %v2503 = vpop.xlane.xlu0 %2502
        %2504 = vadd.xlane.f32.xlu0 %v2456
        %v2505 = vpop.xlane.xlu0 %2504
        %2506 = vadd.xlane.f32.xlu0 %v2457
        %v2507 = vpop.xlane.xlu0 %2506
        %2508 = vadd.xlane.f32.xlu0 %v2458
        %v2509 = vpop.xlane.xlu0 %2508
        %2510 = vadd.xlane.f32.xlu0 %v2459
        %v2511 = vpop.xlane.xlu0 %2510
        %2512 = vadd.xlane.f32.xlu0 %v2460
        %v2513 = vpop.xlane.xlu0 %2512
        %2514 = vadd.xlane.f32.xlu0 %v2461
        %v2515 = vpop.xlane.xlu0 %2514
        %2516 = vadd.xlane.f32.xlu0 %v2462
        %v2517 = vpop.xlane.xlu0 %2516
        %2518 = vadd.xlane.f32.xlu0 %v2463
        %v2519 = vpop.xlane.xlu0 %2518
        %2520 = vadd.xlane.f32.xlu0 %v2464
        %v2521 = vpop.xlane.xlu0 %2520
        %2522 = vadd.xlane.f32.xlu0 %v2465
        %v2523 = vpop.xlane.xlu0 %2522
        %2524 = vadd.xlane.f32.xlu0 %v2466
        %v2525 = vpop.xlane.xlu0 %2524
        %2526 = vadd.xlane.f32.xlu0 %v2467
        %v2527 = vpop.xlane.xlu0 %2526
        %2528 = vadd.xlane.f32.xlu0 %v2468
        %v2529 = vpop.xlane.xlu0 %2528
        %2530 = vadd.xlane.f32.xlu0 %v2469
        %v2531 = vpop.xlane.xlu0 %2530
        %2532 = vadd.xlane.f32.xlu0 %v2470
        %v2533 = vpop.xlane.xlu0 %2532
        %2534 = vadd.xlane.f32.xlu0 %v2471
        %v2535 = vpop.xlane.xlu0 %2534
        %2536 = vadd.xlane.f32.xlu0 %v2472
        %v2537 = vpop.xlane.xlu0 %2536
        %2538 = vadd.xlane.f32.xlu0 %v2473
        %v2539 = vpop.xlane.xlu0 %2538
        %v2540 = vmul.f32 %v2477, %v1628
        %v2541 = vmul.f32 %v2479, %v1628
        %v2542 = vmul.f32 %v2481, %v1628
        %v2543 = vmul.f32 %v2483, %v1628
        %v2544 = vmul.f32 %v2485, %v1628
        %v2545 = vmul.f32 %v2487, %v1628
        %v2546 = vmul.f32 %v2489, %v1628
        %v2547 = vmul.f32 %v2491, %v1628
        %v2548 = vmul.f32 %v2493, %v1628
        %v2549 = vmul.f32 %v2495, %v1628
        %v2550 = vmul.f32 %v2497, %v1628
        %v2551 = vmul.f32 %v2499, %v1628
        %v2552 = vmul.f32 %v2501, %v1628
        %v2553 = vmul.f32 %v2503, %v1628
        %v2554 = vmul.f32 %v2505, %v1628
        %v2555 = vmul.f32 %v2507, %v1628
        %v2556 = vmul.f32 %v2509, %v1628
        %v2557 = vmul.f32 %v2511, %v1628
        %v2558 = vmul.f32 %v2513, %v1628
        %v2559 = vmul.f32 %v2515, %v1628
        %v2560 = vmul.f32 %v2517, %v1628
        %v2561 = vmul.f32 %v2519, %v1628
        %v2562 = vmul.f32 %v2521, %v1628
        %v2563 = vmul.f32 %v2523, %v1628
        %v2564 = vmul.f32 %v2525, %v1628
        %v2565 = vmul.f32 %v2527, %v1628
        %v2566 = vmul.f32 %v2529, %v1628
        %v2567 = vmul.f32 %v2531, %v1628
        %v2568 = vmul.f32 %v2533, %v1628
        %v2569 = vmul.f32 %v2535, %v1628
        %v2570 = vmul.f32 %v2537, %v1628
        %v2571 = vmul.f32 %v2539, %v1628
        %v2572 = vsub.f32 %v2442, %v2540
        %v2573 = vsub.f32 %v2443, %v2541
        %v2574 = vsub.f32 %v2444, %v2542
        %v2575 = vsub.f32 %v2445, %v2543
        %v2576 = vsub.f32 %v2446, %v2544
        %v2577 = vsub.f32 %v2447, %v2545
        %v2578 = vsub.f32 %v2448, %v2546
        %v2579 = vsub.f32 %v2449, %v2547
        %v2580 = vsub.f32 %v2450, %v2548
        %v2581 = vsub.f32 %v2451, %v2549
        %v2582 = vsub.f32 %v2452, %v2550
        %v2583 = vsub.f32 %v2453, %v2551
        %v2584 = vsub.f32 %v2454, %v2552
        %v2585 = vsub.f32 %v2455, %v2553
        %v2586 = vsub.f32 %v2456, %v2554
        %v2587 = vsub.f32 %v2457, %v2555
        %v2588 = vsub.f32 %v2458, %v2556
        %v2589 = vsub.f32 %v2459, %v2557
        %v2590 = vsub.f32 %v2460, %v2558
        %v2591 = vsub.f32 %v2461, %v2559
        %v2592 = vsub.f32 %v2462, %v2560
        %v2593 = vsub.f32 %v2463, %v2561
        %v2594 = vsub.f32 %v2464, %v2562
        %v2595 = vsub.f32 %v2465, %v2563
        %v2596 = vsub.f32 %v2466, %v2564
        %v2597 = vsub.f32 %v2467, %v2565
        %v2598 = vsub.f32 %v2468, %v2566
        %v2599 = vsub.f32 %v2469, %v2567
        %v2600 = vsub.f32 %v2470, %v2568
        %v2601 = vsub.f32 %v2471, %v2569
        %v2602 = vsub.f32 %v2472, %v2570
        %v2603 = vsub.f32 %v2473, %v2571
        %v2604 = vmul.f32 %v2572, %v2572
        %v2605 = vmul.f32 %v2573, %v2573
        %v2606 = vmul.f32 %v2574, %v2574
        %v2607 = vmul.f32 %v2575, %v2575
        %v2608 = vmul.f32 %v2576, %v2576
        %v2609 = vmul.f32 %v2577, %v2577
        %v2610 = vmul.f32 %v2578, %v2578
        %v2611 = vmul.f32 %v2579, %v2579
        %v2612 = vmul.f32 %v2580, %v2580
        %v2613 = vmul.f32 %v2581, %v2581
        %v2614 = vmul.f32 %v2582, %v2582
        %v2615 = vmul.f32 %v2583, %v2583
        %v2616 = vmul.f32 %v2584, %v2584
        %v2617 = vmul.f32 %v2585, %v2585
        %v2618 = vmul.f32 %v2586, %v2586
        %v2619 = vmul.f32 %v2587, %v2587
        %v2620 = vmul.f32 %v2588, %v2588
        %v2621 = vmul.f32 %v2589, %v2589
        %v2622 = vmul.f32 %v2590, %v2590
        %v2623 = vmul.f32 %v2591, %v2591
        %v2624 = vmul.f32 %v2592, %v2592
        %v2625 = vmul.f32 %v2593, %v2593
        %v2626 = vmul.f32 %v2594, %v2594
        %v2627 = vmul.f32 %v2595, %v2595
        %v2628 = vmul.f32 %v2596, %v2596
        %v2629 = vmul.f32 %v2597, %v2597
        %v2630 = vmul.f32 %v2598, %v2598
        %v2631 = vmul.f32 %v2599, %v2599
        %v2632 = vmul.f32 %v2600, %v2600
        %v2633 = vmul.f32 %v2601, %v2601
        %v2634 = vmul.f32 %v2602, %v2602
        %v2635 = vmul.f32 %v2603, %v2603
        %2636 = vadd.xlane.f32.xlu0 %v2604
        %v2637 = vpop.xlane.xlu0 %2636
        %2638 = vadd.xlane.f32.xlu0 %v2605
        %v2639 = vpop.xlane.xlu0 %2638
        %2640 = vadd.xlane.f32.xlu0 %v2606
        %v2641 = vpop.xlane.xlu0 %2640
        %2642 = vadd.xlane.f32.xlu0 %v2607
        %v2643 = vpop.xlane.xlu0 %2642
        %2644 = vadd.xlane.f32.xlu0 %v2608
        %v2645 = vpop.xlane.xlu0 %2644
        %2646 = vadd.xlane.f32.xlu0 %v2609
        %v2647 = vpop.xlane.xlu0 %2646
        %2648 = vadd.xlane.f32.xlu0 %v2610
        %v2649 = vpop.xlane.xlu0 %2648
        %2650 = vadd.xlane.f32.xlu0 %v2611
        %v2651 = vpop.xlane.xlu0 %2650
        %2652 = vadd.xlane.f32.xlu0 %v2612
        %v2653 = vpop.xlane.xlu0 %2652
        %2654 = vadd.xlane.f32.xlu0 %v2613
        %v2655 = vpop.xlane.xlu0 %2654
        %2656 = vadd.xlane.f32.xlu0 %v2614
        %v2657 = vpop.xlane.xlu0 %2656
        %2658 = vadd.xlane.f32.xlu0 %v2615
        %v2659 = vpop.xlane.xlu0 %2658
        %2660 = vadd.xlane.f32.xlu0 %v2616
        %v2661 = vpop.xlane.xlu0 %2660
        %2662 = vadd.xlane.f32.xlu0 %v2617
        %v2663 = vpop.xlane.xlu0 %2662
        %2664 = vadd.xlane.f32.xlu0 %v2618
        %v2665 = vpop.xlane.xlu0 %2664
        %2666 = vadd.xlane.f32.xlu0 %v2619
        %v2667 = vpop.xlane.xlu0 %2666
        %2668 = vadd.xlane.f32.xlu0 %v2620
        %v2669 = vpop.xlane.xlu0 %2668
        %2670 = vadd.xlane.f32.xlu0 %v2621
        %v2671 = vpop.xlane.xlu0 %2670
        %2672 = vadd.xlane.f32.xlu0 %v2622
        %v2673 = vpop.xlane.xlu0 %2672
        %2674 = vadd.xlane.f32.xlu0 %v2623
        %v2675 = vpop.xlane.xlu0 %2674
        %2676 = vadd.xlane.f32.xlu0 %v2624
        %v2677 = vpop.xlane.xlu0 %2676
        %2678 = vadd.xlane.f32.xlu0 %v2625
        %v2679 = vpop.xlane.xlu0 %2678
        %2680 = vadd.xlane.f32.xlu0 %v2626
        %v2681 = vpop.xlane.xlu0 %2680
        %2682 = vadd.xlane.f32.xlu0 %v2627
        %v2683 = vpop.xlane.xlu0 %2682
        %2684 = vadd.xlane.f32.xlu0 %v2628
        %v2685 = vpop.xlane.xlu0 %2684
        %2686 = vadd.xlane.f32.xlu0 %v2629
        %v2687 = vpop.xlane.xlu0 %2686
        %2688 = vadd.xlane.f32.xlu0 %v2630
        %v2689 = vpop.xlane.xlu0 %2688
        %2690 = vadd.xlane.f32.xlu0 %v2631
        %v2691 = vpop.xlane.xlu0 %2690
        %2692 = vadd.xlane.f32.xlu0 %v2632
        %v2693 = vpop.xlane.xlu0 %2692
        %2694 = vadd.xlane.f32.xlu0 %v2633
        %v2695 = vpop.xlane.xlu0 %2694
        %2696 = vadd.xlane.f32.xlu0 %v2634
        %v2697 = vpop.xlane.xlu0 %2696
        %2698 = vadd.xlane.f32.xlu0 %v2635
        %v2699 = vpop.xlane.xlu0 %2698
        %v2700 = vmul.f32 %v2637, %v1628
        %v2701 = vmul.f32 %v2639, %v1628
        %v2702 = vmul.f32 %v2641, %v1628
        %v2703 = vmul.f32 %v2643, %v1628
        %v2704 = vmul.f32 %v2645, %v1628
        %v2705 = vmul.f32 %v2647, %v1628
        %v2706 = vmul.f32 %v2649, %v1628
        %v2707 = vmul.f32 %v2651, %v1628
        %v2708 = vmul.f32 %v2653, %v1628
        %v2709 = vmul.f32 %v2655, %v1628
        %v2710 = vmul.f32 %v2657, %v1628
        %v2711 = vmul.f32 %v2659, %v1628
        %v2712 = vmul.f32 %v2661, %v1628
        %v2713 = vmul.f32 %v2663, %v1628
        %v2714 = vmul.f32 %v2665, %v1628
        %v2715 = vmul.f32 %v2667, %v1628
        %v2716 = vmul.f32 %v2669, %v1628
        %v2717 = vmul.f32 %v2671, %v1628
        %v2718 = vmul.f32 %v2673, %v1628
        %v2719 = vmul.f32 %v2675, %v1628
        %v2720 = vmul.f32 %v2677, %v1628
        %v2721 = vmul.f32 %v2679, %v1628
        %v2722 = vmul.f32 %v2681, %v1628
        %v2723 = vmul.f32 %v2683, %v1628
        %v2724 = vmul.f32 %v2685, %v1628
        %v2725 = vmul.f32 %v2687, %v1628
        %v2726 = vmul.f32 %v2689, %v1628
        %v2727 = vmul.f32 %v2691, %v1628
        %v2728 = vmul.f32 %v2693, %v1628
        %v2729 = vmul.f32 %v2695, %v1628
        %v2730 = vmul.f32 %v2697, %v1628
        %v2731 = vmul.f32 %v2699, %v1628
        %v2732 = vadd.f32 %v2700, 1e-05
        %v2733 = vadd.f32 %v2701, 1e-05
        %v2734 = vadd.f32 %v2702, 1e-05
        %v2735 = vadd.f32 %v2703, 1e-05
        %v2736 = vadd.f32 %v2704, 1e-05
        %v2737 = vadd.f32 %v2705, 1e-05
        %v2738 = vadd.f32 %v2706, 1e-05
        %v2739 = vadd.f32 %v2707, 1e-05
        %v2740 = vadd.f32 %v2708, 1e-05
        %v2741 = vadd.f32 %v2709, 1e-05
        %v2742 = vadd.f32 %v2710, 1e-05
        %v2743 = vadd.f32 %v2711, 1e-05
        %v2744 = vadd.f32 %v2712, 1e-05
        %v2745 = vadd.f32 %v2713, 1e-05
        %v2746 = vadd.f32 %v2714, 1e-05
        %v2747 = vadd.f32 %v2715, 1e-05
        %v2748 = vadd.f32 %v2716, 1e-05
        %v2749 = vadd.f32 %v2717, 1e-05
        %v2750 = vadd.f32 %v2718, 1e-05
        %v2751 = vadd.f32 %v2719, 1e-05
        %v2752 = vadd.f32 %v2720, 1e-05
        %v2753 = vadd.f32 %v2721, 1e-05
        %v2754 = vadd.f32 %v2722, 1e-05
        %v2755 = vadd.f32 %v2723, 1e-05
        %v2756 = vadd.f32 %v2724, 1e-05
        %v2757 = vadd.f32 %v2725, 1e-05
        %v2758 = vadd.f32 %v2726, 1e-05
        %v2759 = vadd.f32 %v2727, 1e-05
        %v2760 = vadd.f32 %v2728, 1e-05
        %v2761 = vadd.f32 %v2729, 1e-05
        %v2762 = vadd.f32 %v2730, 1e-05
        %v2763 = vadd.f32 %v2731, 1e-05
        %v2764 = vrsqrt.pop %v2732
        %v2765 = vmul.f32 %v2764, %v2732
        %v2766 = vmul.f32 %v2765, %v2764
        %v2767 = vmul.f32 0.5, %v2766
        %v2768 = vsub.f32 1.5, %v2767
        %v2769 = vmul.f32 %v2764, %v2768
        %vm2770 = vweird.f32 %v2732
        %vm2771 = vweird.f32 %v2764
        %vm2772 = vmor %vm2770, %vm2771
        %v2773 = vsel %vm2772, %v2764, %v2769
        %v2774 = vrsqrt.pop %v2733
        %v2775 = vmul.f32 %v2774, %v2733
        %v2776 = vmul.f32 %v2775, %v2774
        %v2777 = vmul.f32 0.5, %v2776
        %v2778 = vsub.f32 1.5, %v2777
        %v2779 = vmul.f32 %v2774, %v2778
        %vm2780 = vweird.f32 %v2733
        %vm2781 = vweird.f32 %v2774
        %vm2782 = vmor %vm2780, %vm2781
        %v2783 = vsel %vm2782, %v2774, %v2779
        %v2784 = vrsqrt.pop %v2734
        %v2785 = vmul.f32 %v2784, %v2734
        %v2786 = vmul.f32 %v2785, %v2784
        %v2787 = vmul.f32 0.5, %v2786
        %v2788 = vsub.f32 1.5, %v2787
        %v2789 = vmul.f32 %v2784, %v2788
        %vm2790 = vweird.f32 %v2734
        %vm2791 = vweird.f32 %v2784
        %vm2792 = vmor %vm2790, %vm2791
        %v2793 = vsel %vm2792, %v2784, %v2789
        %v2794 = vrsqrt.pop %v2735
        %v2795 = vmul.f32 %v2794, %v2735
        %v2796 = vmul.f32 %v2795, %v2794
        %v2797 = vmul.f32 0.5, %v2796
        %v2798 = vsub.f32 1.5, %v2797
        %v2799 = vmul.f32 %v2794, %v2798
        %vm2800 = vweird.f32 %v2735
        %vm2801 = vweird.f32 %v2794
        %vm2802 = vmor %vm2800, %vm2801
        %v2803 = vsel %vm2802, %v2794, %v2799
        %v2804 = vrsqrt.pop %v2736
        %v2805 = vmul.f32 %v2804, %v2736
        %v2806 = vmul.f32 %v2805, %v2804
        %v2807 = vmul.f32 0.5, %v2806
        %v2808 = vsub.f32 1.5, %v2807
        %v2809 = vmul.f32 %v2804, %v2808
        %vm2810 = vweird.f32 %v2736
        %vm2811 = vweird.f32 %v2804
        %vm2812 = vmor %vm2810, %vm2811
        %v2813 = vsel %vm2812, %v2804, %v2809
        %v2814 = vrsqrt.pop %v2737
        %v2815 = vmul.f32 %v2814, %v2737
        %v2816 = vmul.f32 %v2815, %v2814
        %v2817 = vmul.f32 0.5, %v2816
        %v2818 = vsub.f32 1.5, %v2817
        %v2819 = vmul.f32 %v2814, %v2818
        %vm2820 = vweird.f32 %v2737
        %vm2821 = vweird.f32 %v2814
        %vm2822 = vmor %vm2820, %vm2821
        %v2823 = vsel %vm2822, %v2814, %v2819
        %v2824 = vrsqrt.pop %v2738
        %v2825 = vmul.f32 %v2824, %v2738
        %v2826 = vmul.f32 %v2825, %v2824
        %v2827 = vmul.f32 0.5, %v2826
        %v2828 = vsub.f32 1.5, %v2827
        %v2829 = vmul.f32 %v2824, %v2828
        %vm2830 = vweird.f32 %v2738
        %vm2831 = vweird.f32 %v2824
        %vm2832 = vmor %vm2830, %vm2831
        %v2833 = vsel %vm2832, %v2824, %v2829
        %v2834 = vrsqrt.pop %v2739
        %v2835 = vmul.f32 %v2834, %v2739
        %v2836 = vmul.f32 %v2835, %v2834
        %v2837 = vmul.f32 0.5, %v2836
        %v2838 = vsub.f32 1.5, %v2837
        %v2839 = vmul.f32 %v2834, %v2838
        %vm2840 = vweird.f32 %v2739
        %vm2841 = vweird.f32 %v2834
        %vm2842 = vmor %vm2840, %vm2841
        %v2843 = vsel %vm2842, %v2834, %v2839
        %v2844 = vrsqrt.pop %v2740
        %v2845 = vmul.f32 %v2844, %v2740
        %v2846 = vmul.f32 %v2845, %v2844
        %v2847 = vmul.f32 0.5, %v2846
        %v2848 = vsub.f32 1.5, %v2847
        %v2849 = vmul.f32 %v2844, %v2848
        %vm2850 = vweird.f32 %v2740
        %vm2851 = vweird.f32 %v2844
        %vm2852 = vmor %vm2850, %vm2851
        %v2853 = vsel %vm2852, %v2844, %v2849
        %v2854 = vrsqrt.pop %v2741
        %v2855 = vmul.f32 %v2854, %v2741
        %v2856 = vmul.f32 %v2855, %v2854
        %v2857 = vmul.f32 0.5, %v2856
        %v2858 = vsub.f32 1.5, %v2857
        %v2859 = vmul.f32 %v2854, %v2858
        %vm2860 = vweird.f32 %v2741
        %vm2861 = vweird.f32 %v2854
        %vm2862 = vmor %vm2860, %vm2861
        %v2863 = vsel %vm2862, %v2854, %v2859
        %v2864 = vrsqrt.pop %v2742
        %v2865 = vmul.f32 %v2864, %v2742
        %v2866 = vmul.f32 %v2865, %v2864
        %v2867 = vmul.f32 0.5, %v2866
        %v2868 = vsub.f32 1.5, %v2867
        %v2869 = vmul.f32 %v2864, %v2868
        %vm2870 = vweird.f32 %v2742
        %vm2871 = vweird.f32 %v2864
        %vm2872 = vmor %vm2870, %vm2871
        %v2873 = vsel %vm2872, %v2864, %v2869
        %v2874 = vrsqrt.pop %v2743
        %v2875 = vmul.f32 %v2874, %v2743
        %v2876 = vmul.f32 %v2875, %v2874
        %v2877 = vmul.f32 0.5, %v2876
        %v2878 = vsub.f32 1.5, %v2877
        %v2879 = vmul.f32 %v2874, %v2878
        %vm2880 = vweird.f32 %v2743
        %vm2881 = vweird.f32 %v2874
        %vm2882 = vmor %vm2880, %vm2881
        %v2883 = vsel %vm2882, %v2874, %v2879
        %v2884 = vrsqrt.pop %v2744
        %v2885 = vmul.f32 %v2884, %v2744
        %v2886 = vmul.f32 %v2885, %v2884
        %v2887 = vmul.f32 0.5, %v2886
        %v2888 = vsub.f32 1.5, %v2887
        %v2889 = vmul.f32 %v2884, %v2888
        %vm2890 = vweird.f32 %v2744
        %vm2891 = vweird.f32 %v2884
        %vm2892 = vmor %vm2890, %vm2891
        %v2893 = vsel %vm2892, %v2884, %v2889
        %v2894 = vrsqrt.pop %v2745
        %v2895 = vmul.f32 %v2894, %v2745
        %v2896 = vmul.f32 %v2895, %v2894
        %v2897 = vmul.f32 0.5, %v2896
        %v2898 = vsub.f32 1.5, %v2897
        %v2899 = vmul.f32 %v2894, %v2898
        %vm2900 = vweird.f32 %v2745
        %vm2901 = vweird.f32 %v2894
        %vm2902 = vmor %vm2900, %vm2901
        %v2903 = vsel %vm2902, %v2894, %v2899
        %v2904 = vrsqrt.pop %v2746
        %v2905 = vmul.f32 %v2904, %v2746
        %v2906 = vmul.f32 %v2905, %v2904
        %v2907 = vmul.f32 0.5, %v2906
        %v2908 = vsub.f32 1.5, %v2907
        %v2909 = vmul.f32 %v2904, %v2908
        %vm2910 = vweird.f32 %v2746
        %vm2911 = vweird.f32 %v2904
        %vm2912 = vmor %vm2910, %vm2911
        %v2913 = vsel %vm2912, %v2904, %v2909
        %v2914 = vrsqrt.pop %v2747
        %v2915 = vmul.f32 %v2914, %v2747
        %v2916 = vmul.f32 %v2915, %v2914
        %v2917 = vmul.f32 0.5, %v2916
        %v2918 = vsub.f32 1.5, %v2917
        %v2919 = vmul.f32 %v2914, %v2918
        %vm2920 = vweird.f32 %v2747
        %vm2921 = vweird.f32 %v2914
        %vm2922 = vmor %vm2920, %vm2921
        %v2923 = vsel %vm2922, %v2914, %v2919
        %v2924 = vrsqrt.pop %v2748
        %v2925 = vmul.f32 %v2924, %v2748
        %v2926 = vmul.f32 %v2925, %v2924
        %v2927 = vmul.f32 0.5, %v2926
        %v2928 = vsub.f32 1.5, %v2927
        %v2929 = vmul.f32 %v2924, %v2928
        %vm2930 = vweird.f32 %v2748
        %vm2931 = vweird.f32 %v2924
        %vm2932 = vmor %vm2930, %vm2931
        %v2933 = vsel %vm2932, %v2924, %v2929
        %v2934 = vrsqrt.pop %v2749
        %v2935 = vmul.f32 %v2934, %v2749
        %v2936 = vmul.f32 %v2935, %v2934
        %v2937 = vmul.f32 0.5, %v2936
        %v2938 = vsub.f32 1.5, %v2937
        %v2939 = vmul.f32 %v2934, %v2938
        %vm2940 = vweird.f32 %v2749
        %vm2941 = vweird.f32 %v2934
        %vm2942 = vmor %vm2940, %vm2941
        %v2943 = vsel %vm2942, %v2934, %v2939
        %v2944 = vrsqrt.pop %v2750
        %v2945 = vmul.f32 %v2944, %v2750
        %v2946 = vmul.f32 %v2945, %v2944
        %v2947 = vmul.f32 0.5, %v2946
        %v2948 = vsub.f32 1.5, %v2947
        %v2949 = vmul.f32 %v2944, %v2948
        %vm2950 = vweird.f32 %v2750
        %vm2951 = vweird.f32 %v2944
        %vm2952 = vmor %vm2950, %vm2951
        %v2953 = vsel %vm2952, %v2944, %v2949
        %v2954 = vrsqrt.pop %v2751
        %v2955 = vmul.f32 %v2954, %v2751
        %v2956 = vmul.f32 %v2955, %v2954
        %v2957 = vmul.f32 0.5, %v2956
        %v2958 = vsub.f32 1.5, %v2957
        %v2959 = vmul.f32 %v2954, %v2958
        %vm2960 = vweird.f32 %v2751
        %vm2961 = vweird.f32 %v2954
        %vm2962 = vmor %vm2960, %vm2961
        %v2963 = vsel %vm2962, %v2954, %v2959
        %v2964 = vrsqrt.pop %v2752
        %v2965 = vmul.f32 %v2964, %v2752
        %v2966 = vmul.f32 %v2965, %v2964
        %v2967 = vmul.f32 0.5, %v2966
        %v2968 = vsub.f32 1.5, %v2967
        %v2969 = vmul.f32 %v2964, %v2968
        %vm2970 = vweird.f32 %v2752
        %vm2971 = vweird.f32 %v2964
        %vm2972 = vmor %vm2970, %vm2971
        %v2973 = vsel %vm2972, %v2964, %v2969
        %v2974 = vrsqrt.pop %v2753
        %v2975 = vmul.f32 %v2974, %v2753
        %v2976 = vmul.f32 %v2975, %v2974
        %v2977 = vmul.f32 0.5, %v2976
        %v2978 = vsub.f32 1.5, %v2977
        %v2979 = vmul.f32 %v2974, %v2978
        %vm2980 = vweird.f32 %v2753
        %vm2981 = vweird.f32 %v2974
        %vm2982 = vmor %vm2980, %vm2981
        %v2983 = vsel %vm2982, %v2974, %v2979
        %v2984 = vrsqrt.pop %v2754
        %v2985 = vmul.f32 %v2984, %v2754
        %v2986 = vmul.f32 %v2985, %v2984
        %v2987 = vmul.f32 0.5, %v2986
        %v2988 = vsub.f32 1.5, %v2987
        %v2989 = vmul.f32 %v2984, %v2988
        %vm2990 = vweird.f32 %v2754
        %vm2991 = vweird.f32 %v2984
        %vm2992 = vmor %vm2990, %vm2991
        %v2993 = vsel %vm2992, %v2984, %v2989
        %v2994 = vrsqrt.pop %v2755
        %v2995 = vmul.f32 %v2994, %v2755
        %v2996 = vmul.f32 %v2995, %v2994
        %v2997 = vmul.f32 0.5, %v2996
        %v2998 = vsub.f32 1.5, %v2997
        %v2999 = vmul.f32 %v2994, %v2998
        %vm3000 = vweird.f32 %v2755
        %vm3001 = vweird.f32 %v2994
        %vm3002 = vmor %vm3000, %vm3001
        %v3003 = vsel %vm3002, %v2994, %v2999
        %v3004 = vrsqrt.pop %v2756
        %v3005 = vmul.f32 %v3004, %v2756
        %v3006 = vmul.f32 %v3005, %v3004
        %v3007 = vmul.f32 0.5, %v3006
        %v3008 = vsub.f32 1.5, %v3007
        %v3009 = vmul.f32 %v3004, %v3008
        %vm3010 = vweird.f32 %v2756
        %vm3011 = vweird.f32 %v3004
        %vm3012 = vmor %vm3010, %vm3011
        %v3013 = vsel %vm3012, %v3004, %v3009
        %v3014 = vrsqrt.pop %v2757
        %v3015 = vmul.f32 %v3014, %v2757
        %v3016 = vmul.f32 %v3015, %v3014
        %v3017 = vmul.f32 0.5, %v3016
        %v3018 = vsub.f32 1.5, %v3017
        %v3019 = vmul.f32 %v3014, %v3018
        %vm3020 = vweird.f32 %v2757
        %vm3021 = vweird.f32 %v3014
        %vm3022 = vmor %vm3020, %vm3021
        %v3023 = vsel %vm3022, %v3014, %v3019
        %v3024 = vrsqrt.pop %v2758
        %v3025 = vmul.f32 %v3024, %v2758
        %v3026 = vmul.f32 %v3025, %v3024
        %v3027 = vmul.f32 0.5, %v3026
        %v3028 = vsub.f32 1.5, %v3027
        %v3029 = vmul.f32 %v3024, %v3028
        %vm3030 = vweird.f32 %v2758
        %vm3031 = vweird.f32 %v3024
        %vm3032 = vmor %vm3030, %vm3031
        %v3033 = vsel %vm3032, %v3024, %v3029
        %v3034 = vrsqrt.pop %v2759
        %v3035 = vmul.f32 %v3034, %v2759
        %v3036 = vmul.f32 %v3035, %v3034
        %v3037 = vmul.f32 0.5, %v3036
        %v3038 = vsub.f32 1.5, %v3037
        %v3039 = vmul.f32 %v3034, %v3038
        %vm3040 = vweird.f32 %v2759
        %vm3041 = vweird.f32 %v3034
        %vm3042 = vmor %vm3040, %vm3041
        %v3043 = vsel %vm3042, %v3034, %v3039
        %v3044 = vrsqrt.pop %v2760
        %v3045 = vmul.f32 %v3044, %v2760
        %v3046 = vmul.f32 %v3045, %v3044
        %v3047 = vmul.f32 0.5, %v3046
        %v3048 = vsub.f32 1.5, %v3047
        %v3049 = vmul.f32 %v3044, %v3048
        %vm3050 = vweird.f32 %v2760
        %vm3051 = vweird.f32 %v3044
        %vm3052 = vmor %vm3050, %vm3051
        %v3053 = vsel %vm3052, %v3044, %v3049
        %v3054 = vrsqrt.pop %v2761
        %v3055 = vmul.f32 %v3054, %v2761
        %v3056 = vmul.f32 %v3055, %v3054
        %v3057 = vmul.f32 0.5, %v3056
        %v3058 = vsub.f32 1.5, %v3057
        %v3059 = vmul.f32 %v3054, %v3058
        %vm3060 = vweird.f32 %v2761
        %vm3061 = vweird.f32 %v3054
        %vm3062 = vmor %vm3060, %vm3061
        %v3063 = vsel %vm3062, %v3054, %v3059
        %v3064 = vrsqrt.pop %v2762
        %v3065 = vmul.f32 %v3064, %v2762
        %v3066 = vmul.f32 %v3065, %v3064
        %v3067 = vmul.f32 0.5, %v3066
        %v3068 = vsub.f32 1.5, %v3067
        %v3069 = vmul.f32 %v3064, %v3068
        %vm3070 = vweird.f32 %v2762
        %vm3071 = vweird.f32 %v3064
        %vm3072 = vmor %vm3070, %vm3071
        %v3073 = vsel %vm3072, %v3064, %v3069
        %v3074 = vrsqrt.pop %v2763
        %v3075 = vmul.f32 %v3074, %v2763
        %v3076 = vmul.f32 %v3075, %v3074
        %v3077 = vmul.f32 0.5, %v3076
        %v3078 = vsub.f32 1.5, %v3077
        %v3079 = vmul.f32 %v3074, %v3078
        %vm3080 = vweird.f32 %v2763
        %vm3081 = vweird.f32 %v3074
        %vm3082 = vmor %vm3080, %vm3081
        %v3083 = vsel %vm3082, %v3074, %v3079
        %v3084 = vmul.f32 %v2572, %v2773
        %v3085 = vmul.f32 %v2573, %v2783
        %v3086 = vmul.f32 %v2574, %v2793
        %v3087 = vmul.f32 %v2575, %v2803
        %v3088 = vmul.f32 %v2576, %v2813
        %v3089 = vmul.f32 %v2577, %v2823
        %v3090 = vmul.f32 %v2578, %v2833
        %v3091 = vmul.f32 %v2579, %v2843
        %v3092 = vmul.f32 %v2580, %v2853
        %v3093 = vmul.f32 %v2581, %v2863
        %v3094 = vmul.f32 %v2582, %v2873
        %v3095 = vmul.f32 %v2583, %v2883
        %v3096 = vmul.f32 %v2584, %v2893
        %v3097 = vmul.f32 %v2585, %v2903
        %v3098 = vmul.f32 %v2586, %v2913
        %v3099 = vmul.f32 %v2587, %v2923
        %v3100 = vmul.f32 %v2588, %v2933
        %v3101 = vmul.f32 %v2589, %v2943
        %v3102 = vmul.f32 %v2590, %v2953
        %v3103 = vmul.f32 %v2591, %v2963
        %v3104 = vmul.f32 %v2592, %v2973
        %v3105 = vmul.f32 %v2593, %v2983
        %v3106 = vmul.f32 %v2594, %v2993
        %v3107 = vmul.f32 %v2595, %v3003
        %v3108 = vmul.f32 %v2596, %v3013
        %v3109 = vmul.f32 %v2597, %v3023
        %v3110 = vmul.f32 %v2598, %v3033
        %v3111 = vmul.f32 %v2599, %v3043
        %v3112 = vmul.f32 %v2600, %v3053
        %v3113 = vmul.f32 %v2601, %v3063
        %v3114 = vmul.f32 %v2602, %v3073
        %v3115 = vmul.f32 %v2603, %v3083
        %v3116 = vperm.slane %v2474, 0
        %v3117 = vmul.f32 %v3084, %v3116
        %v3118 = vmul.f32 %v3085, %v3116
        %v3119 = vmul.f32 %v3086, %v3116
        %v3120 = vmul.f32 %v3087, %v3116
        %v3121 = vmul.f32 %v3088, %v3116
        %v3122 = vmul.f32 %v3089, %v3116
        %v3123 = vmul.f32 %v3090, %v3116
        %v3124 = vmul.f32 %v3091, %v3116
        %v3125 = vmul.f32 %v3092, %v3116
        %v3126 = vmul.f32 %v3093, %v3116
        %v3127 = vmul.f32 %v3094, %v3116
        %v3128 = vmul.f32 %v3095, %v3116
        %v3129 = vmul.f32 %v3096, %v3116
        %v3130 = vmul.f32 %v3097, %v3116
        %v3131 = vmul.f32 %v3098, %v3116
        %v3132 = vmul.f32 %v3099, %v3116
        %v3133 = vmul.f32 %v3100, %v3116
        %v3134 = vmul.f32 %v3101, %v3116
        %v3135 = vmul.f32 %v3102, %v3116
        %v3136 = vmul.f32 %v3103, %v3116
        %v3137 = vmul.f32 %v3104, %v3116
        %v3138 = vmul.f32 %v3105, %v3116
        %v3139 = vmul.f32 %v3106, %v3116
        %v3140 = vmul.f32 %v3107, %v3116
        %v3141 = vmul.f32 %v3108, %v3116
        %v3142 = vmul.f32 %v3109, %v3116
        %v3143 = vmul.f32 %v3110, %v3116
        %v3144 = vmul.f32 %v3111, %v3116
        %v3145 = vmul.f32 %v3112, %v3116
        %v3146 = vmul.f32 %v3113, %v3116
        %v3147 = vmul.f32 %v3114, %v3116
        %v3148 = vmul.f32 %v3115, %v3116
        %v3149 = vperm.slane %v2475, 0
        %v3150 = vadd.f32 %v3117, %v3149
        %v3151 = vadd.f32 %v3118, %v3149
        %v3152 = vadd.f32 %v3119, %v3149
        %v3153 = vadd.f32 %v3120, %v3149
        %v3154 = vadd.f32 %v3121, %v3149
        %v3155 = vadd.f32 %v3122, %v3149
        %v3156 = vadd.f32 %v3123, %v3149
        %v3157 = vadd.f32 %v3124, %v3149
        %v3158 = vadd.f32 %v3125, %v3149
        %v3159 = vadd.f32 %v3126, %v3149
        %v3160 = vadd.f32 %v3127, %v3149
        %v3161 = vadd.f32 %v3128, %v3149
        %v3162 = vadd.f32 %v3129, %v3149
        %v3163 = vadd.f32 %v3130, %v3149
        %v3164 = vadd.f32 %v3131, %v3149
        %v3165 = vadd.f32 %v3132, %v3149
        %v3166 = vadd.f32 %v3133, %v3149
        %v3167 = vadd.f32 %v3134, %v3149
        %v3168 = vadd.f32 %v3135, %v3149
        %v3169 = vadd.f32 %v3136, %v3149
        %v3170 = vadd.f32 %v3137, %v3149
        %v3171 = vadd.f32 %v3138, %v3149
        %v3172 = vadd.f32 %v3139, %v3149
        %v3173 = vadd.f32 %v3140, %v3149
        %v3174 = vadd.f32 %v3141, %v3149
        %v3175 = vadd.f32 %v3142, %v3149
        %v3176 = vadd.f32 %v3143, %v3149
        %v3177 = vadd.f32 %v3144, %v3149
        %v3178 = vadd.f32 %v3145, %v3149
        %v3179 = vadd.f32 %v3146, %v3149
        %v3180 = vadd.f32 %v3147, %v3149
        %v3181 = vadd.f32 %v3148, %v3149
        %v3182 = vpack.c.bf16 %v3151, %v3150
        %v3183 = vpack.c.bf16 %v3153, %v3152
        %v3184 = vpack.c.bf16 %v3155, %v3154
        %v3185 = vpack.c.bf16 %v3157, %v3156
        %v3186 = vpack.c.bf16 %v3159, %v3158
        %v3187 = vpack.c.bf16 %v3161, %v3160
        %v3188 = vpack.c.bf16 %v3163, %v3162
        %v3189 = vpack.c.bf16 %v3165, %v3164
        %v3190 = vpack.c.bf16 %v3167, %v3166
        %v3191 = vpack.c.bf16 %v3169, %v3168
        %v3192 = vpack.c.bf16 %v3171, %v3170
        %v3193 = vpack.c.bf16 %v3173, %v3172
        %v3194 = vpack.c.bf16 %v3175, %v3174
        %v3195 = vpack.c.bf16 %v3177, %v3176
        %v3196 = vpack.c.bf16 %v3179, %v3178
        %v3197 = vpack.c.bf16 %v3181, %v3180
        %s3198 = scalar_lea.vmem [#allocation12], 64
        %v3199 = vld [vmem:[%s3198] sm:$0xf]
        %v3200 = vld [vmem:[%s3198 + $0x4] sm:$0xf]
        %v3201 = vld [vmem:[%s3198 + $0x8] sm:$0xf]
        %v3202 = vld [vmem:[%s3198 + $0xc] sm:$0xf]
        %v3203 = vld [vmem:[%s3198 + $0x10] sm:$0xf]
        %v3204 = vld [vmem:[%s3198 + $0x14] sm:$0xf]
        %v3205 = vld [vmem:[%s3198 + $0x18] sm:$0xf]
        %v3206 = vld [vmem:[%s3198 + $0x1c] sm:$0xf]
        %v3207 = vld [vmem:[%s3198 + $0x20] sm:$0xf]
        %v3208 = vld [vmem:[%s3198 + $0x24] sm:$0xf]
        %v3209 = vld [vmem:[%s3198 + $0x28] sm:$0xf]
        %v3210 = vld [vmem:[%s3198 + $0x2c] sm:$0xf]
        %v3211 = vld [vmem:[%s3198 + $0x30] sm:$0xf]
        %v3212 = vld [vmem:[%s3198 + $0x34] sm:$0xf]
        %v3213 = vld [vmem:[%s3198 + $0x38] sm:$0xf]
        %v3214 = vld [vmem:[%s3198 + $0x3c] sm:$0xf]
        %v3215 = vld [vmem:[#allocation13 + $0x2] sm:$0x1]
        %v3216 = vperm.slane %v3215, 0
        %v3233 = vunpack.c.l.b16 %v3199
        %v3234 = vunpack.c.l.b16 %v3200
        %v3235 = vunpack.c.l.b16 %v3201
        %v3236 = vunpack.c.l.b16 %v3202
        %v3237 = vunpack.c.l.b16 %v3203
        %v3238 = vunpack.c.l.b16 %v3204
        %v3239 = vunpack.c.l.b16 %v3205
        %v3240 = vunpack.c.l.b16 %v3206
        %v3241 = vunpack.c.l.b16 %v3207
        %v3242 = vunpack.c.l.b16 %v3208
        %v3243 = vunpack.c.l.b16 %v3209
        %v3244 = vunpack.c.l.b16 %v3210
        %v3245 = vunpack.c.l.b16 %v3211
        %v3246 = vunpack.c.l.b16 %v3212
        %v3247 = vunpack.c.l.b16 %v3213
        %v3248 = vunpack.c.l.b16 %v3214
        %v3249 = vpack.c.b16 %v3234, %v3233
        %v3250 = vpack.c.b16 %v3236, %v3235
        %v3251 = vpack.c.b16 %v3238, %v3237
        %v3252 = vpack.c.b16 %v3240, %v3239
        %v3253 = vpack.c.b16 %v3242, %v3241
        %v3254 = vpack.c.b16 %v3244, %v3243
        %v3255 = vpack.c.b16 %v3246, %v3245
        %v3256 = vpack.c.b16 %v3248, %v3247
        %3265 = vmatpush.bf16.msra.mxu0 %v3256
        %3266 = vmatpush.bf16.msra.mxu0 %v3255
        %3267 = vmatpush.bf16.msra.mxu0 %v3254
        %3268 = vmatpush.bf16.msra.mxu0 %v3253
        %3269 = vmatpush.bf16.msra.mxu0 %v3252
        %3270 = vmatpush.bf16.msra.mxu0 %v3251
        %3271 = vmatpush.bf16.msra.mxu0 %v3250
        %3272 = vmatpush.bf16.msra.mxu0 %v3249
        %3273 = vmatmul.bf16.gmra.mxu0 %v3182
        %v3274 = vpop.f32.mrf.mxu0
        %v3275 = vadd.f32 %v3216, %v3274
        %v3276 = vpop.f32.mrf.mxu0
        %v3277 = vadd.f32 %v3216, %v3276
        %3278 = vmatmul.bf16.gmra.mxu0 %v3183
        %v3279 = vpop.f32.mrf.mxu0
        %v3280 = vadd.f32 %v3216, %v3279
        %v3281 = vpop.f32.mrf.mxu0
        %v3282 = vadd.f32 %v3216, %v3281
        %3283 = vmatmul.bf16.gmra.mxu0 %v3184
        %v3284 = vpop.f32.mrf.mxu0
        %v3285 = vadd.f32 %v3216, %v3284
        %v3286 = vpop.f32.mrf.mxu0
        %v3287 = vadd.f32 %v3216, %v3286
        %3288 = vmatmul.bf16.gmra.mxu0 %v3185
        %v3289 = vpop.f32.mrf.mxu0
        %v3290 = vadd.f32 %v3216, %v3289
        %v3291 = vpop.f32.mrf.mxu0
        %v3292 = vadd.f32 %v3216, %v3291
        %3293 = vmatmul.bf16.gmra.mxu0 %v3186
        %v3294 = vpop.f32.mrf.mxu0
        %v3295 = vadd.f32 %v3216, %v3294
        %v3296 = vpop.f32.mrf.mxu0
        %v3297 = vadd.f32 %v3216, %v3296
        %3298 = vmatmul.bf16.gmra.mxu0 %v3187
        %v3299 = vpop.f32.mrf.mxu0
        %v3300 = vadd.f32 %v3216, %v3299
        %v3301 = vpop.f32.mrf.mxu0
        %v3302 = vadd.f32 %v3216, %v3301
        %3303 = vmatmul.bf16.gmra.mxu0 %v3188
        %v3304 = vpop.f32.mrf.mxu0
        %v3305 = vadd.f32 %v3216, %v3304
        %v3306 = vpop.f32.mrf.mxu0
        %v3307 = vadd.f32 %v3216, %v3306
        %3308 = vmatmul.bf16.gmra.mxu0 %v3189
        %v3309 = vpop.f32.mrf.mxu0
        %v3310 = vadd.f32 %v3216, %v3309
        %v3311 = vpop.f32.mrf.mxu0
        %v3312 = vadd.f32 %v3216, %v3311
        %3313 = vmatmul.bf16.gmra.mxu0 %v3190
        %v3314 = vpop.f32.mrf.mxu0
        %v3315 = vadd.f32 %v3216, %v3314
        %v3316 = vpop.f32.mrf.mxu0
        %v3317 = vadd.f32 %v3216, %v3316
        %3318 = vmatmul.bf16.gmra.mxu0 %v3191
        %v3319 = vpop.f32.mrf.mxu0
        %v3320 = vadd.f32 %v3216, %v3319
        %v3321 = vpop.f32.mrf.mxu0
        %v3322 = vadd.f32 %v3216, %v3321
        %3323 = vmatmul.bf16.gmra.mxu0 %v3192
        %v3324 = vpop.f32.mrf.mxu0
        %v3325 = vadd.f32 %v3216, %v3324
        %v3326 = vpop.f32.mrf.mxu0
        %v3327 = vadd.f32 %v3216, %v3326
        %3328 = vmatmul.bf16.gmra.mxu0 %v3193
        %v3329 = vpop.f32.mrf.mxu0
        %v3330 = vadd.f32 %v3216, %v3329
        %v3331 = vpop.f32.mrf.mxu0
        %v3332 = vadd.f32 %v3216, %v3331
        %3333 = vmatmul.bf16.gmra.mxu0 %v3194
        %v3334 = vpop.f32.mrf.mxu0
        %v3335 = vadd.f32 %v3216, %v3334
        %v3336 = vpop.f32.mrf.mxu0
        %v3337 = vadd.f32 %v3216, %v3336
        %3338 = vmatmul.bf16.gmra.mxu0 %v3195
        %v3339 = vpop.f32.mrf.mxu0
        %v3340 = vadd.f32 %v3216, %v3339
        %v3341 = vpop.f32.mrf.mxu0
        %v3342 = vadd.f32 %v3216, %v3341
        %3343 = vmatmul.bf16.gmra.mxu0 %v3196
        %v3344 = vpop.f32.mrf.mxu0
        %v3345 = vadd.f32 %v3216, %v3344
        %v3346 = vpop.f32.mrf.mxu0
        %v3347 = vadd.f32 %v3216, %v3346
        %3348 = vmatmul.bf16.gmra.mxu0 %v3197
        %v3349 = vpop.f32.mrf.mxu0
        %v3350 = vadd.f32 %v3216, %v3349
        %v3351 = vpop.f32.mrf.mxu0
        %v3352 = vadd.f32 %v3216, %v3351
        %3353 = vdwg.mxu0
        %v3354 = vpack.c.bf16 %v3277, %v3275
        %v3355 = vpack.c.bf16 %v3282, %v3280
        %v3356 = vpack.c.bf16 %v3287, %v3285
        %v3357 = vpack.c.bf16 %v3292, %v3290
        %v3358 = vpack.c.bf16 %v3297, %v3295
        %v3359 = vpack.c.bf16 %v3302, %v3300
        %v3360 = vpack.c.bf16 %v3307, %v3305
        %v3361 = vpack.c.bf16 %v3312, %v3310
        %v3362 = vpack.c.bf16 %v3317, %v3315
        %v3363 = vpack.c.bf16 %v3322, %v3320
        %v3364 = vpack.c.bf16 %v3327, %v3325
        %v3365 = vpack.c.bf16 %v3332, %v3330
        %v3366 = vpack.c.bf16 %v3337, %v3335
        %v3367 = vpack.c.bf16 %v3342, %v3340
        %v3368 = vpack.c.bf16 %v3347, %v3345
        %v3369 = vpack.c.bf16 %v3352, %v3350
        %s3370 = scalar_lea.vmem [#allocation12], 128
        %v3371 = vld [vmem:[%s3370] sm:$0xf]
        %v3372 = vld [vmem:[%s3370 + $0x4] sm:$0xf]
        %v3373 = vld [vmem:[%s3370 + $0x8] sm:$0xf]
        %v3374 = vld [vmem:[%s3370 + $0xc] sm:$0xf]
        %v3375 = vld [vmem:[%s3370 + $0x10] sm:$0xf]
        %v3376 = vld [vmem:[%s3370 + $0x14] sm:$0xf]
        %v3377 = vld [vmem:[%s3370 + $0x18] sm:$0xf]
        %v3378 = vld [vmem:[%s3370 + $0x1c] sm:$0xf]
        %v3379 = vld [vmem:[%s3370 + $0x20] sm:$0xf]
        %v3380 = vld [vmem:[%s3370 + $0x24] sm:$0xf]
        %v3381 = vld [vmem:[%s3370 + $0x28] sm:$0xf]
        %v3382 = vld [vmem:[%s3370 + $0x2c] sm:$0xf]
        %v3383 = vld [vmem:[%s3370 + $0x30] sm:$0xf]
        %v3384 = vld [vmem:[%s3370 + $0x34] sm:$0xf]
        %v3385 = vld [vmem:[%s3370 + $0x38] sm:$0xf]
        %v3386 = vld [vmem:[%s3370 + $0x3c] sm:$0xf]
        %v3387 = vld [vmem:[#allocation13 + $0x3] sm:$0x1]
        %v3388 = vperm.slane %v3387, 0
        %v3405 = vunpack.c.l.b16 %v3371
        %v3406 = vunpack.c.l.b16 %v3372
        %v3407 = vunpack.c.l.b16 %v3373
        %v3408 = vunpack.c.l.b16 %v3374
        %v3409 = vunpack.c.l.b16 %v3375
        %v3410 = vunpack.c.l.b16 %v3376
        %v3411 = vunpack.c.l.b16 %v3377
        %v3412 = vunpack.c.l.b16 %v3378
        %v3413 = vunpack.c.l.b16 %v3379
        %v3414 = vunpack.c.l.b16 %v3380
        %v3415 = vunpack.c.l.b16 %v3381
        %v3416 = vunpack.c.l.b16 %v3382
        %v3417 = vunpack.c.l.b16 %v3383
        %v3418 = vunpack.c.l.b16 %v3384
        %v3419 = vunpack.c.l.b16 %v3385
        %v3420 = vunpack.c.l.b16 %v3386
        %v3421 = vpack.c.b16 %v3406, %v3405
        %v3422 = vpack.c.b16 %v3408, %v3407
        %v3423 = vpack.c.b16 %v3410, %v3409
        %v3424 = vpack.c.b16 %v3412, %v3411
        %v3425 = vpack.c.b16 %v3414, %v3413
        %v3426 = vpack.c.b16 %v3416, %v3415
        %v3427 = vpack.c.b16 %v3418, %v3417
        %v3428 = vpack.c.b16 %v3420, %v3419
        %3437 = vmatpush.bf16.msra.mxu0 %v3428
        %3438 = vmatpush.bf16.msra.mxu0 %v3427
        %3439 = vmatpush.bf16.msra.mxu0 %v3426
        %3440 = vmatpush.bf16.msra.mxu0 %v3425
        %3441 = vmatpush.bf16.msra.mxu0 %v3424
        %3442 = vmatpush.bf16.msra.mxu0 %v3423
        %3443 = vmatpush.bf16.msra.mxu0 %v3422
        %3444 = vmatpush.bf16.msra.mxu0 %v3421
        %3445 = vmatmul.bf16.gmra.mxu0 %v3354
        %v3446 = vpop.f32.mrf.mxu0
        %v3447 = vadd.f32 %v3388, %v3446
        %v3448 = vpop.f32.mrf.mxu0
        %v3449 = vadd.f32 %v3388, %v3448
        %3450 = vmatmul.bf16.gmra.mxu0 %v3355
        %v3451 = vpop.f32.mrf.mxu0
        %v3452 = vadd.f32 %v3388, %v3451
        %v3453 = vpop.f32.mrf.mxu0
        %v3454 = vadd.f32 %v3388, %v3453
        %3455 = vmatmul.bf16.gmra.mxu0 %v3356
        %v3456 = vpop.f32.mrf.mxu0
        %v3457 = vadd.f32 %v3388, %v3456
        %v3458 = vpop.f32.mrf.mxu0
        %v3459 = vadd.f32 %v3388, %v3458
        %3460 = vmatmul.bf16.gmra.mxu0 %v3357
        %v3461 = vpop.f32.mrf.mxu0
        %v3462 = vadd.f32 %v3388, %v3461
        %v3463 = vpop.f32.mrf.mxu0
        %v3464 = vadd.f32 %v3388, %v3463
        %3465 = vmatmul.bf16.gmra.mxu0 %v3358
        %v3466 = vpop.f32.mrf.mxu0
        %v3467 = vadd.f32 %v3388, %v3466
        %v3468 = vpop.f32.mrf.mxu0
        %v3469 = vadd.f32 %v3388, %v3468
        %3470 = vmatmul.bf16.gmra.mxu0 %v3359
        %v3471 = vpop.f32.mrf.mxu0
        %v3472 = vadd.f32 %v3388, %v3471
        %v3473 = vpop.f32.mrf.mxu0
        %v3474 = vadd.f32 %v3388, %v3473
        %3475 = vmatmul.bf16.gmra.mxu0 %v3360
        %v3476 = vpop.f32.mrf.mxu0
        %v3477 = vadd.f32 %v3388, %v3476
        %v3478 = vpop.f32.mrf.mxu0
        %v3479 = vadd.f32 %v3388, %v3478
        %3480 = vmatmul.bf16.gmra.mxu0 %v3361
        %v3481 = vpop.f32.mrf.mxu0
        %v3482 = vadd.f32 %v3388, %v3481
        %v3483 = vpop.f32.mrf.mxu0
        %v3484 = vadd.f32 %v3388, %v3483
        %3485 = vmatmul.bf16.gmra.mxu0 %v3362
        %v3486 = vpop.f32.mrf.mxu0
        %v3487 = vadd.f32 %v3388, %v3486
        %v3488 = vpop.f32.mrf.mxu0
        %v3489 = vadd.f32 %v3388, %v3488
        %3490 = vmatmul.bf16.gmra.mxu0 %v3363
        %v3491 = vpop.f32.mrf.mxu0
        %v3492 = vadd.f32 %v3388, %v3491
        %v3493 = vpop.f32.mrf.mxu0
        %v3494 = vadd.f32 %v3388, %v3493
        %3495 = vmatmul.bf16.gmra.mxu0 %v3364
        %v3496 = vpop.f32.mrf.mxu0
        %v3497 = vadd.f32 %v3388, %v3496
        %v3498 = vpop.f32.mrf.mxu0
        %v3499 = vadd.f32 %v3388, %v3498
        %3500 = vmatmul.bf16.gmra.mxu0 %v3365
        %v3501 = vpop.f32.mrf.mxu0
        %v3502 = vadd.f32 %v3388, %v3501
        %v3503 = vpop.f32.mrf.mxu0
        %v3504 = vadd.f32 %v3388, %v3503
        %3505 = vmatmul.bf16.gmra.mxu0 %v3366
        %v3506 = vpop.f32.mrf.mxu0
        %v3507 = vadd.f32 %v3388, %v3506
        %v3508 = vpop.f32.mrf.mxu0
        %v3509 = vadd.f32 %v3388, %v3508
        %3510 = vmatmul.bf16.gmra.mxu0 %v3367
        %v3511 = vpop.f32.mrf.mxu0
        %v3512 = vadd.f32 %v3388, %v3511
        %v3513 = vpop.f32.mrf.mxu0
        %v3514 = vadd.f32 %v3388, %v3513
        %3515 = vmatmul.bf16.gmra.mxu0 %v3368
        %v3516 = vpop.f32.mrf.mxu0
        %v3517 = vadd.f32 %v3388, %v3516
        %v3518 = vpop.f32.mrf.mxu0
        %v3519 = vadd.f32 %v3388, %v3518
        %3520 = vmatmul.bf16.gmra.mxu0 %v3369
        %v3521 = vpop.f32.mrf.mxu0
        %v3522 = vadd.f32 %v3388, %v3521
        %v3523 = vpop.f32.mrf.mxu0
        %v3524 = vadd.f32 %v3388, %v3523
        %3525 = vdwg.mxu0
        %v3526 = vmax.f32 %v3447, 0.0
        %v3527 = vmax.f32 %v3449, 0.0
        %v3528 = vmax.f32 %v3452, 0.0
        %v3529 = vmax.f32 %v3454, 0.0
        %v3530 = vmax.f32 %v3457, 0.0
        %v3531 = vmax.f32 %v3459, 0.0
        %v3532 = vmax.f32 %v3462, 0.0
        %v3533 = vmax.f32 %v3464, 0.0
        %v3534 = vmax.f32 %v3467, 0.0
        %v3535 = vmax.f32 %v3469, 0.0
        %v3536 = vmax.f32 %v3472, 0.0
        %v3537 = vmax.f32 %v3474, 0.0
        %v3538 = vmax.f32 %v3477, 0.0
        %v3539 = vmax.f32 %v3479, 0.0
        %v3540 = vmax.f32 %v3482, 0.0
        %v3541 = vmax.f32 %v3484, 0.0
        %v3542 = vmax.f32 %v3487, 0.0
        %v3543 = vmax.f32 %v3489, 0.0
        %v3544 = vmax.f32 %v3492, 0.0
        %v3545 = vmax.f32 %v3494, 0.0
        %v3546 = vmax.f32 %v3497, 0.0
        %v3547 = vmax.f32 %v3499, 0.0
        %v3548 = vmax.f32 %v3502, 0.0
        %v3549 = vmax.f32 %v3504, 0.0
        %v3550 = vmax.f32 %v3507, 0.0
        %v3551 = vmax.f32 %v3509, 0.0
        %v3552 = vmax.f32 %v3512, 0.0
        %v3553 = vmax.f32 %v3514, 0.0
        %v3554 = vmax.f32 %v3517, 0.0
        %v3555 = vmax.f32 %v3519, 0.0
        %v3556 = vmax.f32 %v3522, 0.0
        %v3557 = vmax.f32 %v3524, 0.0
        %v3558 = vld [vmem:[#allocation15 + $0x2] sm:$0x1]
        %v3559 = vld [vmem:[#allocation16 + $0x2] sm:$0x1]
        %3560 = vadd.xlane.f32.xlu0 %v3526
        %v3561 = vpop.xlane.xlu0 %3560
        %3562 = vadd.xlane.f32.xlu0 %v3527
        %v3563 = vpop.xlane.xlu0 %3562
        %3564 = vadd.xlane.f32.xlu0 %v3528
        %v3565 = vpop.xlane.xlu0 %3564
        %3566 = vadd.xlane.f32.xlu0 %v3529
        %v3567 = vpop.xlane.xlu0 %3566
        %3568 = vadd.xlane.f32.xlu0 %v3530
        %v3569 = vpop.xlane.xlu0 %3568
        %3570 = vadd.xlane.f32.xlu0 %v3531
        %v3571 = vpop.xlane.xlu0 %3570
        %3572 = vadd.xlane.f32.xlu0 %v3532
        %v3573 = vpop.xlane.xlu0 %3572
        %3574 = vadd.xlane.f32.xlu0 %v3533
        %v3575 = vpop.xlane.xlu0 %3574
        %3576 = vadd.xlane.f32.xlu0 %v3534
        %v3577 = vpop.xlane.xlu0 %3576
        %3578 = vadd.xlane.f32.xlu0 %v3535
        %v3579 = vpop.xlane.xlu0 %3578
        %3580 = vadd.xlane.f32.xlu0 %v3536
        %v3581 = vpop.xlane.xlu0 %3580
        %3582 = vadd.xlane.f32.xlu0 %v3537
        %v3583 = vpop.xlane.xlu0 %3582
        %3584 = vadd.xlane.f32.xlu0 %v3538
        %v3585 = vpop.xlane.xlu0 %3584
        %3586 = vadd.xlane.f32.xlu0 %v3539
        %v3587 = vpop.xlane.xlu0 %3586
        %3588 = vadd.xlane.f32.xlu0 %v3540
        %v3589 = vpop.xlane.xlu0 %3588
        %3590 = vadd.xlane.f32.xlu0 %v3541
        %v3591 = vpop.xlane.xlu0 %3590
        %3592 = vadd.xlane.f32.xlu0 %v3542
        %v3593 = vpop.xlane.xlu0 %3592
        %3594 = vadd.xlane.f32.xlu0 %v3543
        %v3595 = vpop.xlane.xlu0 %3594
        %3596 = vadd.xlane.f32.xlu0 %v3544
        %v3597 = vpop.xlane.xlu0 %3596
        %3598 = vadd.xlane.f32.xlu0 %v3545
        %v3599 = vpop.xlane.xlu0 %3598
        %3600 = vadd.xlane.f32.xlu0 %v3546
        %v3601 = vpop.xlane.xlu0 %3600
        %3602 = vadd.xlane.f32.xlu0 %v3547
        %v3603 = vpop.xlane.xlu0 %3602
        %3604 = vadd.xlane.f32.xlu0 %v3548
        %v3605 = vpop.xlane.xlu0 %3604
        %3606 = vadd.xlane.f32.xlu0 %v3549
        %v3607 = vpop.xlane.xlu0 %3606
        %3608 = vadd.xlane.f32.xlu0 %v3550
        %v3609 = vpop.xlane.xlu0 %3608
        %3610 = vadd.xlane.f32.xlu0 %v3551
        %v3611 = vpop.xlane.xlu0 %3610
        %3612 = vadd.xlane.f32.xlu0 %v3552
        %v3613 = vpop.xlane.xlu0 %3612
        %3614 = vadd.xlane.f32.xlu0 %v3553
        %v3615 = vpop.xlane.xlu0 %3614
        %3616 = vadd.xlane.f32.xlu0 %v3554
        %v3617 = vpop.xlane.xlu0 %3616
        %3618 = vadd.xlane.f32.xlu0 %v3555
        %v3619 = vpop.xlane.xlu0 %3618
        %3620 = vadd.xlane.f32.xlu0 %v3556
        %v3621 = vpop.xlane.xlu0 %3620
        %3622 = vadd.xlane.f32.xlu0 %v3557
        %v3623 = vpop.xlane.xlu0 %3622
        %v3624 = vmul.f32 %v3561, %v1628
        %v3625 = vmul.f32 %v3563, %v1628
        %v3626 = vmul.f32 %v3565, %v1628
        %v3627 = vmul.f32 %v3567, %v1628
        %v3628 = vmul.f32 %v3569, %v1628
        %v3629 = vmul.f32 %v3571, %v1628
        %v3630 = vmul.f32 %v3573, %v1628
        %v3631 = vmul.f32 %v3575, %v1628
        %v3632 = vmul.f32 %v3577, %v1628
        %v3633 = vmul.f32 %v3579, %v1628
        %v3634 = vmul.f32 %v3581, %v1628
        %v3635 = vmul.f32 %v3583, %v1628
        %v3636 = vmul.f32 %v3585, %v1628
        %v3637 = vmul.f32 %v3587, %v1628
        %v3638 = vmul.f32 %v3589, %v1628
        %v3639 = vmul.f32 %v3591, %v1628
        %v3640 = vmul.f32 %v3593, %v1628
        %v3641 = vmul.f32 %v3595, %v1628
        %v3642 = vmul.f32 %v3597, %v1628
        %v3643 = vmul.f32 %v3599, %v1628
        %v3644 = vmul.f32 %v3601, %v1628
        %v3645 = vmul.f32 %v3603, %v1628
        %v3646 = vmul.f32 %v3605, %v1628
        %v3647 = vmul.f32 %v3607, %v1628
        %v3648 = vmul.f32 %v3609, %v1628
        %v3649 = vmul.f32 %v3611, %v1628
        %v3650 = vmul.f32 %v3613, %v1628
        %v3651 = vmul.f32 %v3615, %v1628
        %v3652 = vmul.f32 %v3617, %v1628
        %v3653 = vmul.f32 %v3619, %v1628
        %v3654 = vmul.f32 %v3621, %v1628
        %v3655 = vmul.f32 %v3623, %v1628
        %v3656 = vsub.f32 %v3526, %v3624
        %v3657 = vsub.f32 %v3527, %v3625
        %v3658 = vsub.f32 %v3528, %v3626
        %v3659 = vsub.f32 %v3529, %v3627
        %v3660 = vsub.f32 %v3530, %v3628
        %v3661 = vsub.f32 %v3531, %v3629
        %v3662 = vsub.f32 %v3532, %v3630
        %v3663 = vsub.f32 %v3533, %v3631
        %v3664 = vsub.f32 %v3534, %v3632
        %v3665 = vsub.f32 %v3535, %v3633
        %v3666 = vsub.f32 %v3536, %v3634
        %v3667 = vsub.f32 %v3537, %v3635
        %v3668 = vsub.f32 %v3538, %v3636
        %v3669 = vsub.f32 %v3539, %v3637
        %v3670 = vsub.f32 %v3540, %v3638
        %v3671 = vsub.f32 %v3541, %v3639
        %v3672 = vsub.f32 %v3542, %v3640
        %v3673 = vsub.f32 %v3543, %v3641
        %v3674 = vsub.f32 %v3544, %v3642
        %v3675 = vsub.f32 %v3545, %v3643
        %v3676 = vsub.f32 %v3546, %v3644
        %v3677 = vsub.f32 %v3547, %v3645
        %v3678 = vsub.f32 %v3548, %v3646
        %v3679 = vsub.f32 %v3549, %v3647
        %v3680 = vsub.f32 %v3550, %v3648
        %v3681 = vsub.f32 %v3551, %v3649
        %v3682 = vsub.f32 %v3552, %v3650
        %v3683 = vsub.f32 %v3553, %v3651
        %v3684 = vsub.f32 %v3554, %v3652
        %v3685 = vsub.f32 %v3555, %v3653
        %v3686 = vsub.f32 %v3556, %v3654
        %v3687 = vsub.f32 %v3557, %v3655
        %v3688 = vmul.f32 %v3656, %v3656
        %v3689 = vmul.f32 %v3657, %v3657
        %v3690 = vmul.f32 %v3658, %v3658
        %v3691 = vmul.f32 %v3659, %v3659
        %v3692 = vmul.f32 %v3660, %v3660
        %v3693 = vmul.f32 %v3661, %v3661
        %v3694 = vmul.f32 %v3662, %v3662
        %v3695 = vmul.f32 %v3663, %v3663
        %v3696 = vmul.f32 %v3664, %v3664
        %v3697 = vmul.f32 %v3665, %v3665
        %v3698 = vmul.f32 %v3666, %v3666
        %v3699 = vmul.f32 %v3667, %v3667
        %v3700 = vmul.f32 %v3668, %v3668
        %v3701 = vmul.f32 %v3669, %v3669
        %v3702 = vmul.f32 %v3670, %v3670
        %v3703 = vmul.f32 %v3671, %v3671
        %v3704 = vmul.f32 %v3672, %v3672
        %v3705 = vmul.f32 %v3673, %v3673
        %v3706 = vmul.f32 %v3674, %v3674
        %v3707 = vmul.f32 %v3675, %v3675
        %v3708 = vmul.f32 %v3676, %v3676
        %v3709 = vmul.f32 %v3677, %v3677
        %v3710 = vmul.f32 %v3678, %v3678
        %v3711 = vmul.f32 %v3679, %v3679
        %v3712 = vmul.f32 %v3680, %v3680
        %v3713 = vmul.f32 %v3681, %v3681
        %v3714 = vmul.f32 %v3682, %v3682
        %v3715 = vmul.f32 %v3683, %v3683
        %v3716 = vmul.f32 %v3684, %v3684
        %v3717 = vmul.f32 %v3685, %v3685
        %v3718 = vmul.f32 %v3686, %v3686
        %v3719 = vmul.f32 %v3687, %v3687
        %3720 = vadd.xlane.f32.xlu0 %v3688
        %v3721 = vpop.xlane.xlu0 %3720
        %3722 = vadd.xlane.f32.xlu0 %v3689
        %v3723 = vpop.xlane.xlu0 %3722
        %3724 = vadd.xlane.f32.xlu0 %v3690
        %v3725 = vpop.xlane.xlu0 %3724
        %3726 = vadd.xlane.f32.xlu0 %v3691
        %v3727 = vpop.xlane.xlu0 %3726
        %3728 = vadd.xlane.f32.xlu0 %v3692
        %v3729 = vpop.xlane.xlu0 %3728
        %3730 = vadd.xlane.f32.xlu0 %v3693
        %v3731 = vpop.xlane.xlu0 %3730
        %3732 = vadd.xlane.f32.xlu0 %v3694
        %v3733 = vpop.xlane.xlu0 %3732
        %3734 = vadd.xlane.f32.xlu0 %v3695
        %v3735 = vpop.xlane.xlu0 %3734
        %3736 = vadd.xlane.f32.xlu0 %v3696
        %v3737 = vpop.xlane.xlu0 %3736
        %3738 = vadd.xlane.f32.xlu0 %v3697
        %v3739 = vpop.xlane.xlu0 %3738
        %3740 = vadd.xlane.f32.xlu0 %v3698
        %v3741 = vpop.xlane.xlu0 %3740
        %3742 = vadd.xlane.f32.xlu0 %v3699
        %v3743 = vpop.xlane.xlu0 %3742
        %3744 = vadd.xlane.f32.xlu0 %v3700
        %v3745 = vpop.xlane.xlu0 %3744
        %3746 = vadd.xlane.f32.xlu0 %v3701
        %v3747 = vpop.xlane.xlu0 %3746
        %3748 = vadd.xlane.f32.xlu0 %v3702
        %v3749 = vpop.xlane.xlu0 %3748
        %3750 = vadd.xlane.f32.xlu0 %v3703
        %v3751 = vpop.xlane.xlu0 %3750
        %3752 = vadd.xlane.f32.xlu0 %v3704
        %v3753 = vpop.xlane.xlu0 %3752
        %3754 = vadd.xlane.f32.xlu0 %v3705
        %v3755 = vpop.xlane.xlu0 %3754
        %3756 = vadd.xlane.f32.xlu0 %v3706
        %v3757 = vpop.xlane.xlu0 %3756
        %3758 = vadd.xlane.f32.xlu0 %v3707
        %v3759 = vpop.xlane.xlu0 %3758
        %3760 = vadd.xlane.f32.xlu0 %v3708
        %v3761 = vpop.xlane.xlu0 %3760
        %3762 = vadd.xlane.f32.xlu0 %v3709
        %v3763 = vpop.xlane.xlu0 %3762
        %3764 = vadd.xlane.f32.xlu0 %v3710
        %v3765 = vpop.xlane.xlu0 %3764
        %3766 = vadd.xlane.f32.xlu0 %v3711
        %v3767 = vpop.xlane.xlu0 %3766
        %3768 = vadd.xlane.f32.xlu0 %v3712
        %v3769 = vpop.xlane.xlu0 %3768
        %3770 = vadd.xlane.f32.xlu0 %v3713
        %v3771 = vpop.xlane.xlu0 %3770
        %3772 = vadd.xlane.f32.xlu0 %v3714
        %v3773 = vpop.xlane.xlu0 %3772
        %3774 = vadd.xlane.f32.xlu0 %v3715
        %v3775 = vpop.xlane.xlu0 %3774
        %3776 = vadd.xlane.f32.xlu0 %v3716
        %v3777 = vpop.xlane.xlu0 %3776
        %3778 = vadd.xlane.f32.xlu0 %v3717
        %v3779 = vpop.xlane.xlu0 %3778
        %3780 = vadd.xlane.f32.xlu0 %v3718
        %v3781 = vpop.xlane.xlu0 %3780
        %3782 = vadd.xlane.f32.xlu0 %v3719
        %v3783 = vpop.xlane.xlu0 %3782
        %v3784 = vmul.f32 %v3721, %v1628
        %v3785 = vmul.f32 %v3723, %v1628
        %v3786 = vmul.f32 %v3725, %v1628
        %v3787 = vmul.f32 %v3727, %v1628
        %v3788 = vmul.f32 %v3729, %v1628
        %v3789 = vmul.f32 %v3731, %v1628
        %v3790 = vmul.f32 %v3733, %v1628
        %v3791 = vmul.f32 %v3735, %v1628
        %v3792 = vmul.f32 %v3737, %v1628
        %v3793 = vmul.f32 %v3739, %v1628
        %v3794 = vmul.f32 %v3741, %v1628
        %v3795 = vmul.f32 %v3743, %v1628
        %v3796 = vmul.f32 %v3745, %v1628
        %v3797 = vmul.f32 %v3747, %v1628
        %v3798 = vmul.f32 %v3749, %v1628
        %v3799 = vmul.f32 %v3751, %v1628
        %v3800 = vmul.f32 %v3753, %v1628
        %v3801 = vmul.f32 %v3755, %v1628
        %v3802 = vmul.f32 %v3757, %v1628
        %v3803 = vmul.f32 %v3759, %v1628
        %v3804 = vmul.f32 %v3761, %v1628
        %v3805 = vmul.f32 %v3763, %v1628
        %v3806 = vmul.f32 %v3765, %v1628
        %v3807 = vmul.f32 %v3767, %v1628
        %v3808 = vmul.f32 %v3769, %v1628
        %v3809 = vmul.f32 %v3771, %v1628
        %v3810 = vmul.f32 %v3773, %v1628
        %v3811 = vmul.f32 %v3775, %v1628
        %v3812 = vmul.f32 %v3777, %v1628
        %v3813 = vmul.f32 %v3779, %v1628
        %v3814 = vmul.f32 %v3781, %v1628
        %v3815 = vmul.f32 %v3783, %v1628
        %v3816 = vadd.f32 %v3784, 1e-05
        %v3817 = vadd.f32 %v3785, 1e-05
        %v3818 = vadd.f32 %v3786, 1e-05
        %v3819 = vadd.f32 %v3787, 1e-05
        %v3820 = vadd.f32 %v3788, 1e-05
        %v3821 = vadd.f32 %v3789, 1e-05
        %v3822 = vadd.f32 %v3790, 1e-05
        %v3823 = vadd.f32 %v3791, 1e-05
        %v3824 = vadd.f32 %v3792, 1e-05
        %v3825 = vadd.f32 %v3793, 1e-05
        %v3826 = vadd.f32 %v3794, 1e-05
        %v3827 = vadd.f32 %v3795, 1e-05
        %v3828 = vadd.f32 %v3796, 1e-05
        %v3829 = vadd.f32 %v3797, 1e-05
        %v3830 = vadd.f32 %v3798, 1e-05
        %v3831 = vadd.f32 %v3799, 1e-05
        %v3832 = vadd.f32 %v3800, 1e-05
        %v3833 = vadd.f32 %v3801, 1e-05
        %v3834 = vadd.f32 %v3802, 1e-05
        %v3835 = vadd.f32 %v3803, 1e-05
        %v3836 = vadd.f32 %v3804, 1e-05
        %v3837 = vadd.f32 %v3805, 1e-05
        %v3838 = vadd.f32 %v3806, 1e-05
        %v3839 = vadd.f32 %v3807, 1e-05
        %v3840 = vadd.f32 %v3808, 1e-05
        %v3841 = vadd.f32 %v3809, 1e-05
        %v3842 = vadd.f32 %v3810, 1e-05
        %v3843 = vadd.f32 %v3811, 1e-05
        %v3844 = vadd.f32 %v3812, 1e-05
        %v3845 = vadd.f32 %v3813, 1e-05
        %v3846 = vadd.f32 %v3814, 1e-05
        %v3847 = vadd.f32 %v3815, 1e-05
        %v3848 = vrsqrt.pop %v3816
        %v3849 = vmul.f32 %v3848, %v3816
        %v3850 = vmul.f32 %v3849, %v3848
        %v3851 = vmul.f32 0.5, %v3850
        %v3852 = vsub.f32 1.5, %v3851
        %v3853 = vmul.f32 %v3848, %v3852
        %vm3854 = vweird.f32 %v3816
        %vm3855 = vweird.f32 %v3848
        %vm3856 = vmor %vm3854, %vm3855
        %v3857 = vsel %vm3856, %v3848, %v3853
        %v3858 = vrsqrt.pop %v3817
        %v3859 = vmul.f32 %v3858, %v3817
        %v3860 = vmul.f32 %v3859, %v3858
        %v3861 = vmul.f32 0.5, %v3860
        %v3862 = vsub.f32 1.5, %v3861
        %v3863 = vmul.f32 %v3858, %v3862
        %vm3864 = vweird.f32 %v3817
        %vm3865 = vweird.f32 %v3858
        %vm3866 = vmor %vm3864, %vm3865
        %v3867 = vsel %vm3866, %v3858, %v3863
        %v3868 = vrsqrt.pop %v3818
        %v3869 = vmul.f32 %v3868, %v3818
        %v3870 = vmul.f32 %v3869, %v3868
        %v3871 = vmul.f32 0.5, %v3870
        %v3872 = vsub.f32 1.5, %v3871
        %v3873 = vmul.f32 %v3868, %v3872
        %vm3874 = vweird.f32 %v3818
        %vm3875 = vweird.f32 %v3868
        %vm3876 = vmor %vm3874, %vm3875
        %v3877 = vsel %vm3876, %v3868, %v3873
        %v3878 = vrsqrt.pop %v3819
        %v3879 = vmul.f32 %v3878, %v3819
        %v3880 = vmul.f32 %v3879, %v3878
        %v3881 = vmul.f32 0.5, %v3880
        %v3882 = vsub.f32 1.5, %v3881
        %v3883 = vmul.f32 %v3878, %v3882
        %vm3884 = vweird.f32 %v3819
        %vm3885 = vweird.f32 %v3878
        %vm3886 = vmor %vm3884, %vm3885
        %v3887 = vsel %vm3886, %v3878, %v3883
        %v3888 = vrsqrt.pop %v3820
        %v3889 = vmul.f32 %v3888, %v3820
        %v3890 = vmul.f32 %v3889, %v3888
        %v3891 = vmul.f32 0.5, %v3890
        %v3892 = vsub.f32 1.5, %v3891
        %v3893 = vmul.f32 %v3888, %v3892
        %vm3894 = vweird.f32 %v3820
        %vm3895 = vweird.f32 %v3888
        %vm3896 = vmor %vm3894, %vm3895
        %v3897 = vsel %vm3896, %v3888, %v3893
        %v3898 = vrsqrt.pop %v3821
        %v3899 = vmul.f32 %v3898, %v3821
        %v3900 = vmul.f32 %v3899, %v3898
        %v3901 = vmul.f32 0.5, %v3900
        %v3902 = vsub.f32 1.5, %v3901
        %v3903 = vmul.f32 %v3898, %v3902
        %vm3904 = vweird.f32 %v3821
        %vm3905 = vweird.f32 %v3898
        %vm3906 = vmor %vm3904, %vm3905
        %v3907 = vsel %vm3906, %v3898, %v3903
        %v3908 = vrsqrt.pop %v3822
        %v3909 = vmul.f32 %v3908, %v3822
        %v3910 = vmul.f32 %v3909, %v3908
        %v3911 = vmul.f32 0.5, %v3910
        %v3912 = vsub.f32 1.5, %v3911
        %v3913 = vmul.f32 %v3908, %v3912
        %vm3914 = vweird.f32 %v3822
        %vm3915 = vweird.f32 %v3908
        %vm3916 = vmor %vm3914, %vm3915
        %v3917 = vsel %vm3916, %v3908, %v3913
        %v3918 = vrsqrt.pop %v3823
        %v3919 = vmul.f32 %v3918, %v3823
        %v3920 = vmul.f32 %v3919, %v3918
        %v3921 = vmul.f32 0.5, %v3920
        %v3922 = vsub.f32 1.5, %v3921
        %v3923 = vmul.f32 %v3918, %v3922
        %vm3924 = vweird.f32 %v3823
        %vm3925 = vweird.f32 %v3918
        %vm3926 = vmor %vm3924, %vm3925
        %v3927 = vsel %vm3926, %v3918, %v3923
        %v3928 = vrsqrt.pop %v3824
        %v3929 = vmul.f32 %v3928, %v3824
        %v3930 = vmul.f32 %v3929, %v3928
        %v3931 = vmul.f32 0.5, %v3930
        %v3932 = vsub.f32 1.5, %v3931
        %v3933 = vmul.f32 %v3928, %v3932
        %vm3934 = vweird.f32 %v3824
        %vm3935 = vweird.f32 %v3928
        %vm3936 = vmor %vm3934, %vm3935
        %v3937 = vsel %vm3936, %v3928, %v3933
        %v3938 = vrsqrt.pop %v3825
        %v3939 = vmul.f32 %v3938, %v3825
        %v3940 = vmul.f32 %v3939, %v3938
        %v3941 = vmul.f32 0.5, %v3940
        %v3942 = vsub.f32 1.5, %v3941
        %v3943 = vmul.f32 %v3938, %v3942
        %vm3944 = vweird.f32 %v3825
        %vm3945 = vweird.f32 %v3938
        %vm3946 = vmor %vm3944, %vm3945
        %v3947 = vsel %vm3946, %v3938, %v3943
        %v3948 = vrsqrt.pop %v3826
        %v3949 = vmul.f32 %v3948, %v3826
        %v3950 = vmul.f32 %v3949, %v3948
        %v3951 = vmul.f32 0.5, %v3950
        %v3952 = vsub.f32 1.5, %v3951
        %v3953 = vmul.f32 %v3948, %v3952
        %vm3954 = vweird.f32 %v3826
        %vm3955 = vweird.f32 %v3948
        %vm3956 = vmor %vm3954, %vm3955
        %v3957 = vsel %vm3956, %v3948, %v3953
        %v3958 = vrsqrt.pop %v3827
        %v3959 = vmul.f32 %v3958, %v3827
        %v3960 = vmul.f32 %v3959, %v3958
        %v3961 = vmul.f32 0.5, %v3960
        %v3962 = vsub.f32 1.5, %v3961
        %v3963 = vmul.f32 %v3958, %v3962
        %vm3964 = vweird.f32 %v3827
        %vm3965 = vweird.f32 %v3958
        %vm3966 = vmor %vm3964, %vm3965
        %v3967 = vsel %vm3966, %v3958, %v3963
        %v3968 = vrsqrt.pop %v3828
        %v3969 = vmul.f32 %v3968, %v3828
        %v3970 = vmul.f32 %v3969, %v3968
        %v3971 = vmul.f32 0.5, %v3970
        %v3972 = vsub.f32 1.5, %v3971
        %v3973 = vmul.f32 %v3968, %v3972
        %vm3974 = vweird.f32 %v3828
        %vm3975 = vweird.f32 %v3968
        %vm3976 = vmor %vm3974, %vm3975
        %v3977 = vsel %vm3976, %v3968, %v3973
        %v3978 = vrsqrt.pop %v3829
        %v3979 = vmul.f32 %v3978, %v3829
        %v3980 = vmul.f32 %v3979, %v3978
        %v3981 = vmul.f32 0.5, %v3980
        %v3982 = vsub.f32 1.5, %v3981
        %v3983 = vmul.f32 %v3978, %v3982
        %vm3984 = vweird.f32 %v3829
        %vm3985 = vweird.f32 %v3978
        %vm3986 = vmor %vm3984, %vm3985
        %v3987 = vsel %vm3986, %v3978, %v3983
        %v3988 = vrsqrt.pop %v3830
        %v3989 = vmul.f32 %v3988, %v3830
        %v3990 = vmul.f32 %v3989, %v3988
        %v3991 = vmul.f32 0.5, %v3990
        %v3992 = vsub.f32 1.5, %v3991
        %v3993 = vmul.f32 %v3988, %v3992
        %vm3994 = vweird.f32 %v3830
        %vm3995 = vweird.f32 %v3988
        %vm3996 = vmor %vm3994, %vm3995
        %v3997 = vsel %vm3996, %v3988, %v3993
        %v3998 = vrsqrt.pop %v3831
        %v3999 = vmul.f32 %v3998, %v3831
        %v4000 = vmul.f32 %v3999, %v3998
        %v4001 = vmul.f32 0.5, %v4000
        %v4002 = vsub.f32 1.5, %v4001
        %v4003 = vmul.f32 %v3998, %v4002
        %vm4004 = vweird.f32 %v3831
        %vm4005 = vweird.f32 %v3998
        %vm4006 = vmor %vm4004, %vm4005
        %v4007 = vsel %vm4006, %v3998, %v4003
        %v4008 = vrsqrt.pop %v3832
        %v4009 = vmul.f32 %v4008, %v3832
        %v4010 = vmul.f32 %v4009, %v4008
        %v4011 = vmul.f32 0.5, %v4010
        %v4012 = vsub.f32 1.5, %v4011
        %v4013 = vmul.f32 %v4008, %v4012
        %vm4014 = vweird.f32 %v3832
        %vm4015 = vweird.f32 %v4008
        %vm4016 = vmor %vm4014, %vm4015
        %v4017 = vsel %vm4016, %v4008, %v4013
        %v4018 = vrsqrt.pop %v3833
        %v4019 = vmul.f32 %v4018, %v3833
        %v4020 = vmul.f32 %v4019, %v4018
        %v4021 = vmul.f32 0.5, %v4020
        %v4022 = vsub.f32 1.5, %v4021
        %v4023 = vmul.f32 %v4018, %v4022
        %vm4024 = vweird.f32 %v3833
        %vm4025 = vweird.f32 %v4018
        %vm4026 = vmor %vm4024, %vm4025
        %v4027 = vsel %vm4026, %v4018, %v4023
        %v4028 = vrsqrt.pop %v3834
        %v4029 = vmul.f32 %v4028, %v3834
        %v4030 = vmul.f32 %v4029, %v4028
        %v4031 = vmul.f32 0.5, %v4030
        %v4032 = vsub.f32 1.5, %v4031
        %v4033 = vmul.f32 %v4028, %v4032
        %vm4034 = vweird.f32 %v3834
        %vm4035 = vweird.f32 %v4028
        %vm4036 = vmor %vm4034, %vm4035
        %v4037 = vsel %vm4036, %v4028, %v4033
        %v4038 = vrsqrt.pop %v3835
        %v4039 = vmul.f32 %v4038, %v3835
        %v4040 = vmul.f32 %v4039, %v4038
        %v4041 = vmul.f32 0.5, %v4040
        %v4042 = vsub.f32 1.5, %v4041
        %v4043 = vmul.f32 %v4038, %v4042
        %vm4044 = vweird.f32 %v3835
        %vm4045 = vweird.f32 %v4038
        %vm4046 = vmor %vm4044, %vm4045
        %v4047 = vsel %vm4046, %v4038, %v4043
        %v4048 = vrsqrt.pop %v3836
        %v4049 = vmul.f32 %v4048, %v3836
        %v4050 = vmul.f32 %v4049, %v4048
        %v4051 = vmul.f32 0.5, %v4050
        %v4052 = vsub.f32 1.5, %v4051
        %v4053 = vmul.f32 %v4048, %v4052
        %vm4054 = vweird.f32 %v3836
        %vm4055 = vweird.f32 %v4048
        %vm4056 = vmor %vm4054, %vm4055
        %v4057 = vsel %vm4056, %v4048, %v4053
        %v4058 = vrsqrt.pop %v3837
        %v4059 = vmul.f32 %v4058, %v3837
        %v4060 = vmul.f32 %v4059, %v4058
        %v4061 = vmul.f32 0.5, %v4060
        %v4062 = vsub.f32 1.5, %v4061
        %v4063 = vmul.f32 %v4058, %v4062
        %vm4064 = vweird.f32 %v3837
        %vm4065 = vweird.f32 %v4058
        %vm4066 = vmor %vm4064, %vm4065
        %v4067 = vsel %vm4066, %v4058, %v4063
        %v4068 = vrsqrt.pop %v3838
        %v4069 = vmul.f32 %v4068, %v3838
        %v4070 = vmul.f32 %v4069, %v4068
        %v4071 = vmul.f32 0.5, %v4070
        %v4072 = vsub.f32 1.5, %v4071
        %v4073 = vmul.f32 %v4068, %v4072
        %vm4074 = vweird.f32 %v3838
        %vm4075 = vweird.f32 %v4068
        %vm4076 = vmor %vm4074, %vm4075
        %v4077 = vsel %vm4076, %v4068, %v4073
        %v4078 = vrsqrt.pop %v3839
        %v4079 = vmul.f32 %v4078, %v3839
        %v4080 = vmul.f32 %v4079, %v4078
        %v4081 = vmul.f32 0.5, %v4080
        %v4082 = vsub.f32 1.5, %v4081
        %v4083 = vmul.f32 %v4078, %v4082
        %vm4084 = vweird.f32 %v3839
        %vm4085 = vweird.f32 %v4078
        %vm4086 = vmor %vm4084, %vm4085
        %v4087 = vsel %vm4086, %v4078, %v4083
        %v4088 = vrsqrt.pop %v3840
        %v4089 = vmul.f32 %v4088, %v3840
        %v4090 = vmul.f32 %v4089, %v4088
        %v4091 = vmul.f32 0.5, %v4090
        %v4092 = vsub.f32 1.5, %v4091
        %v4093 = vmul.f32 %v4088, %v4092
        %vm4094 = vweird.f32 %v3840
        %vm4095 = vweird.f32 %v4088
        %vm4096 = vmor %vm4094, %vm4095
        %v4097 = vsel %vm4096, %v4088, %v4093
        %v4098 = vrsqrt.pop %v3841
        %v4099 = vmul.f32 %v4098, %v3841
        %v4100 = vmul.f32 %v4099, %v4098
        %v4101 = vmul.f32 0.5, %v4100
        %v4102 = vsub.f32 1.5, %v4101
        %v4103 = vmul.f32 %v4098, %v4102
        %vm4104 = vweird.f32 %v3841
        %vm4105 = vweird.f32 %v4098
        %vm4106 = vmor %vm4104, %vm4105
        %v4107 = vsel %vm4106, %v4098, %v4103
        %v4108 = vrsqrt.pop %v3842
        %v4109 = vmul.f32 %v4108, %v3842
        %v4110 = vmul.f32 %v4109, %v4108
        %v4111 = vmul.f32 0.5, %v4110
        %v4112 = vsub.f32 1.5, %v4111
        %v4113 = vmul.f32 %v4108, %v4112
        %vm4114 = vweird.f32 %v3842
        %vm4115 = vweird.f32 %v4108
        %vm4116 = vmor %vm4114, %vm4115
        %v4117 = vsel %vm4116, %v4108, %v4113
        %v4118 = vrsqrt.pop %v3843
        %v4119 = vmul.f32 %v4118, %v3843
        %v4120 = vmul.f32 %v4119, %v4118
        %v4121 = vmul.f32 0.5, %v4120
        %v4122 = vsub.f32 1.5, %v4121
        %v4123 = vmul.f32 %v4118, %v4122
        %vm4124 = vweird.f32 %v3843
        %vm4125 = vweird.f32 %v4118
        %vm4126 = vmor %vm4124, %vm4125
        %v4127 = vsel %vm4126, %v4118, %v4123
        %v4128 = vrsqrt.pop %v3844
        %v4129 = vmul.f32 %v4128, %v3844
        %v4130 = vmul.f32 %v4129, %v4128
        %v4131 = vmul.f32 0.5, %v4130
        %v4132 = vsub.f32 1.5, %v4131
        %v4133 = vmul.f32 %v4128, %v4132
        %vm4134 = vweird.f32 %v3844
        %vm4135 = vweird.f32 %v4128
        %vm4136 = vmor %vm4134, %vm4135
        %v4137 = vsel %vm4136, %v4128, %v4133
        %v4138 = vrsqrt.pop %v3845
        %v4139 = vmul.f32 %v4138, %v3845
        %v4140 = vmul.f32 %v4139, %v4138
        %v4141 = vmul.f32 0.5, %v4140
        %v4142 = vsub.f32 1.5, %v4141
        %v4143 = vmul.f32 %v4138, %v4142
        %vm4144 = vweird.f32 %v3845
        %vm4145 = vweird.f32 %v4138
        %vm4146 = vmor %vm4144, %vm4145
        %v4147 = vsel %vm4146, %v4138, %v4143
        %v4148 = vrsqrt.pop %v3846
        %v4149 = vmul.f32 %v4148, %v3846
        %v4150 = vmul.f32 %v4149, %v4148
        %v4151 = vmul.f32 0.5, %v4150
        %v4152 = vsub.f32 1.5, %v4151
        %v4153 = vmul.f32 %v4148, %v4152
        %vm4154 = vweird.f32 %v3846
        %vm4155 = vweird.f32 %v4148
        %vm4156 = vmor %vm4154, %vm4155
        %v4157 = vsel %vm4156, %v4148, %v4153
        %v4158 = vrsqrt.pop %v3847
        %v4159 = vmul.f32 %v4158, %v3847
        %v4160 = vmul.f32 %v4159, %v4158
        %v4161 = vmul.f32 0.5, %v4160
        %v4162 = vsub.f32 1.5, %v4161
        %v4163 = vmul.f32 %v4158, %v4162
        %vm4164 = vweird.f32 %v3847
        %vm4165 = vweird.f32 %v4158
        %vm4166 = vmor %vm4164, %vm4165
        %v4167 = vsel %vm4166, %v4158, %v4163
        %v4168 = vmul.f32 %v3656, %v3857
        %v4169 = vmul.f32 %v3657, %v3867
        %v4170 = vmul.f32 %v3658, %v3877
        %v4171 = vmul.f32 %v3659, %v3887
        %v4172 = vmul.f32 %v3660, %v3897
        %v4173 = vmul.f32 %v3661, %v3907
        %v4174 = vmul.f32 %v3662, %v3917
        %v4175 = vmul.f32 %v3663, %v3927
        %v4176 = vmul.f32 %v3664, %v3937
        %v4177 = vmul.f32 %v3665, %v3947
        %v4178 = vmul.f32 %v3666, %v3957
        %v4179 = vmul.f32 %v3667, %v3967
        %v4180 = vmul.f32 %v3668, %v3977
        %v4181 = vmul.f32 %v3669, %v3987
        %v4182 = vmul.f32 %v3670, %v3997
        %v4183 = vmul.f32 %v3671, %v4007
        %v4184 = vmul.f32 %v3672, %v4017
        %v4185 = vmul.f32 %v3673, %v4027
        %v4186 = vmul.f32 %v3674, %v4037
        %v4187 = vmul.f32 %v3675, %v4047
        %v4188 = vmul.f32 %v3676, %v4057
        %v4189 = vmul.f32 %v3677, %v4067
        %v4190 = vmul.f32 %v3678, %v4077
        %v4191 = vmul.f32 %v3679, %v4087
        %v4192 = vmul.f32 %v3680, %v4097
        %v4193 = vmul.f32 %v3681, %v4107
        %v4194 = vmul.f32 %v3682, %v4117
        %v4195 = vmul.f32 %v3683, %v4127
        %v4196 = vmul.f32 %v3684, %v4137
        %v4197 = vmul.f32 %v3685, %v4147
        %v4198 = vmul.f32 %v3686, %v4157
        %v4199 = vmul.f32 %v3687, %v4167
        %v4200 = vperm.slane %v3558, 0
        %v4201 = vmul.f32 %v4168, %v4200
        %v4202 = vmul.f32 %v4169, %v4200
        %v4203 = vmul.f32 %v4170, %v4200
        %v4204 = vmul.f32 %v4171, %v4200
        %v4205 = vmul.f32 %v4172, %v4200
        %v4206 = vmul.f32 %v4173, %v4200
        %v4207 = vmul.f32 %v4174, %v4200
        %v4208 = vmul.f32 %v4175, %v4200
        %v4209 = vmul.f32 %v4176, %v4200
        %v4210 = vmul.f32 %v4177, %v4200
        %v4211 = vmul.f32 %v4178, %v4200
        %v4212 = vmul.f32 %v4179, %v4200
        %v4213 = vmul.f32 %v4180, %v4200
        %v4214 = vmul.f32 %v4181, %v4200
        %v4215 = vmul.f32 %v4182, %v4200
        %v4216 = vmul.f32 %v4183, %v4200
        %v4217 = vmul.f32 %v4184, %v4200
        %v4218 = vmul.f32 %v4185, %v4200
        %v4219 = vmul.f32 %v4186, %v4200
        %v4220 = vmul.f32 %v4187, %v4200
        %v4221 = vmul.f32 %v4188, %v4200
        %v4222 = vmul.f32 %v4189, %v4200
        %v4223 = vmul.f32 %v4190, %v4200
        %v4224 = vmul.f32 %v4191, %v4200
        %v4225 = vmul.f32 %v4192, %v4200
        %v4226 = vmul.f32 %v4193, %v4200
        %v4227 = vmul.f32 %v4194, %v4200
        %v4228 = vmul.f32 %v4195, %v4200
        %v4229 = vmul.f32 %v4196, %v4200
        %v4230 = vmul.f32 %v4197, %v4200
        %v4231 = vmul.f32 %v4198, %v4200
        %v4232 = vmul.f32 %v4199, %v4200
        %v4233 = vperm.slane %v3559, 0
        %v4234 = vadd.f32 %v4201, %v4233
        %v4235 = vadd.f32 %v4202, %v4233
        %v4236 = vadd.f32 %v4203, %v4233
        %v4237 = vadd.f32 %v4204, %v4233
        %v4238 = vadd.f32 %v4205, %v4233
        %v4239 = vadd.f32 %v4206, %v4233
        %v4240 = vadd.f32 %v4207, %v4233
        %v4241 = vadd.f32 %v4208, %v4233
        %v4242 = vadd.f32 %v4209, %v4233
        %v4243 = vadd.f32 %v4210, %v4233
        %v4244 = vadd.f32 %v4211, %v4233
        %v4245 = vadd.f32 %v4212, %v4233
        %v4246 = vadd.f32 %v4213, %v4233
        %v4247 = vadd.f32 %v4214, %v4233
        %v4248 = vadd.f32 %v4215, %v4233
        %v4249 = vadd.f32 %v4216, %v4233
        %v4250 = vadd.f32 %v4217, %v4233
        %v4251 = vadd.f32 %v4218, %v4233
        %v4252 = vadd.f32 %v4219, %v4233
        %v4253 = vadd.f32 %v4220, %v4233
        %v4254 = vadd.f32 %v4221, %v4233
        %v4255 = vadd.f32 %v4222, %v4233
        %v4256 = vadd.f32 %v4223, %v4233
        %v4257 = vadd.f32 %v4224, %v4233
        %v4258 = vadd.f32 %v4225, %v4233
        %v4259 = vadd.f32 %v4226, %v4233
        %v4260 = vadd.f32 %v4227, %v4233
        %v4261 = vadd.f32 %v4228, %v4233
        %v4262 = vadd.f32 %v4229, %v4233
        %v4263 = vadd.f32 %v4230, %v4233
        %v4264 = vadd.f32 %v4231, %v4233
        %v4265 = vadd.f32 %v4232, %v4233
        %v4266 = vpack.c.bf16 %v4235, %v4234
        %v4267 = vpack.c.bf16 %v4237, %v4236
        %v4268 = vpack.c.bf16 %v4239, %v4238
        %v4269 = vpack.c.bf16 %v4241, %v4240
        %v4270 = vpack.c.bf16 %v4243, %v4242
        %v4271 = vpack.c.bf16 %v4245, %v4244
        %v4272 = vpack.c.bf16 %v4247, %v4246
        %v4273 = vpack.c.bf16 %v4249, %v4248
        %v4274 = vpack.c.bf16 %v4251, %v4250
        %v4275 = vpack.c.bf16 %v4253, %v4252
        %v4276 = vpack.c.bf16 %v4255, %v4254
        %v4277 = vpack.c.bf16 %v4257, %v4256
        %v4278 = vpack.c.bf16 %v4259, %v4258
        %v4279 = vpack.c.bf16 %v4261, %v4260
        %v4280 = vpack.c.bf16 %v4263, %v4262
        %v4281 = vpack.c.bf16 %v4265, %v4264
        %s4282 = scalar_lea.vmem [#allocation12], 192
        %v4283 = vld [vmem:[%s4282] sm:$0xf]
        %v4284 = vld [vmem:[%s4282 + $0x4] sm:$0xf]
        %v4285 = vld [vmem:[%s4282 + $0x8] sm:$0xf]
        %v4286 = vld [vmem:[%s4282 + $0xc] sm:$0xf]
        %v4287 = vld [vmem:[%s4282 + $0x10] sm:$0xf]
        %v4288 = vld [vmem:[%s4282 + $0x14] sm:$0xf]
        %v4289 = vld [vmem:[%s4282 + $0x18] sm:$0xf]
        %v4290 = vld [vmem:[%s4282 + $0x1c] sm:$0xf]
        %v4291 = vld [vmem:[%s4282 + $0x20] sm:$0xf]
        %v4292 = vld [vmem:[%s4282 + $0x24] sm:$0xf]
        %v4293 = vld [vmem:[%s4282 + $0x28] sm:$0xf]
        %v4294 = vld [vmem:[%s4282 + $0x2c] sm:$0xf]
        %v4295 = vld [vmem:[%s4282 + $0x30] sm:$0xf]
        %v4296 = vld [vmem:[%s4282 + $0x34] sm:$0xf]
        %v4297 = vld [vmem:[%s4282 + $0x38] sm:$0xf]
        %v4298 = vld [vmem:[%s4282 + $0x3c] sm:$0xf]
        %v4299 = vld [vmem:[#allocation13 + $0x4] sm:$0x1]
        %v4300 = vperm.slane %v4299, 0
        %v4317 = vunpack.c.l.b16 %v4283
        %v4318 = vunpack.c.l.b16 %v4284
        %v4319 = vunpack.c.l.b16 %v4285
        %v4320 = vunpack.c.l.b16 %v4286
        %v4321 = vunpack.c.l.b16 %v4287
        %v4322 = vunpack.c.l.b16 %v4288
        %v4323 = vunpack.c.l.b16 %v4289
        %v4324 = vunpack.c.l.b16 %v4290
        %v4325 = vunpack.c.l.b16 %v4291
        %v4326 = vunpack.c.l.b16 %v4292
        %v4327 = vunpack.c.l.b16 %v4293
        %v4328 = vunpack.c.l.b16 %v4294
        %v4329 = vunpack.c.l.b16 %v4295
        %v4330 = vunpack.c.l.b16 %v4296
        %v4331 = vunpack.c.l.b16 %v4297
        %v4332 = vunpack.c.l.b16 %v4298
        %v4333 = vpack.c.b16 %v4318, %v4317
        %v4334 = vpack.c.b16 %v4320, %v4319
        %v4335 = vpack.c.b16 %v4322, %v4321
        %v4336 = vpack.c.b16 %v4324, %v4323
        %v4337 = vpack.c.b16 %v4326, %v4325
        %v4338 = vpack.c.b16 %v4328, %v4327
        %v4339 = vpack.c.b16 %v4330, %v4329
        %v4340 = vpack.c.b16 %v4332, %v4331
        %4349 = vmatpush.bf16.msra.mxu0 %v4340
        %4350 = vmatpush.bf16.msra.mxu0 %v4339
        %4351 = vmatpush.bf16.msra.mxu0 %v4338
        %4352 = vmatpush.bf16.msra.mxu0 %v4337
        %4353 = vmatpush.bf16.msra.mxu0 %v4336
        %4354 = vmatpush.bf16.msra.mxu0 %v4335
        %4355 = vmatpush.bf16.msra.mxu0 %v4334
        %4356 = vmatpush.bf16.msra.mxu0 %v4333
        %4357 = vmatmul.bf16.gmra.mxu0 %v4266
        %v4358 = vpop.f32.mrf.mxu0
        %v4359 = vadd.f32 %v4300, %v4358
        %v4360 = vpop.f32.mrf.mxu0
        %v4361 = vadd.f32 %v4300, %v4360
        %4362 = vmatmul.bf16.gmra.mxu0 %v4267
        %v4363 = vpop.f32.mrf.mxu0
        %v4364 = vadd.f32 %v4300, %v4363
        %v4365 = vpop.f32.mrf.mxu0
        %v4366 = vadd.f32 %v4300, %v4365
        %4367 = vmatmul.bf16.gmra.mxu0 %v4268
        %v4368 = vpop.f32.mrf.mxu0
        %v4369 = vadd.f32 %v4300, %v4368
        %v4370 = vpop.f32.mrf.mxu0
        %v4371 = vadd.f32 %v4300, %v4370
        %4372 = vmatmul.bf16.gmra.mxu0 %v4269
        %v4373 = vpop.f32.mrf.mxu0
        %v4374 = vadd.f32 %v4300, %v4373
        %v4375 = vpop.f32.mrf.mxu0
        %v4376 = vadd.f32 %v4300, %v4375
        %4377 = vmatmul.bf16.gmra.mxu0 %v4270
        %v4378 = vpop.f32.mrf.mxu0
        %v4379 = vadd.f32 %v4300, %v4378
        %v4380 = vpop.f32.mrf.mxu0
        %v4381 = vadd.f32 %v4300, %v4380
        %4382 = vmatmul.bf16.gmra.mxu0 %v4271
        %v4383 = vpop.f32.mrf.mxu0
        %v4384 = vadd.f32 %v4300, %v4383
        %v4385 = vpop.f32.mrf.mxu0
        %v4386 = vadd.f32 %v4300, %v4385
        %4387 = vmatmul.bf16.gmra.mxu0 %v4272
        %v4388 = vpop.f32.mrf.mxu0
        %v4389 = vadd.f32 %v4300, %v4388
        %v4390 = vpop.f32.mrf.mxu0
        %v4391 = vadd.f32 %v4300, %v4390
        %4392 = vmatmul.bf16.gmra.mxu0 %v4273
        %v4393 = vpop.f32.mrf.mxu0
        %v4394 = vadd.f32 %v4300, %v4393
        %v4395 = vpop.f32.mrf.mxu0
        %v4396 = vadd.f32 %v4300, %v4395
        %4397 = vmatmul.bf16.gmra.mxu0 %v4274
        %v4398 = vpop.f32.mrf.mxu0
        %v4399 = vadd.f32 %v4300, %v4398
        %v4400 = vpop.f32.mrf.mxu0
        %v4401 = vadd.f32 %v4300, %v4400
        %4402 = vmatmul.bf16.gmra.mxu0 %v4275
        %v4403 = vpop.f32.mrf.mxu0
        %v4404 = vadd.f32 %v4300, %v4403
        %v4405 = vpop.f32.mrf.mxu0
        %v4406 = vadd.f32 %v4300, %v4405
        %4407 = vmatmul.bf16.gmra.mxu0 %v4276
        %v4408 = vpop.f32.mrf.mxu0
        %v4409 = vadd.f32 %v4300, %v4408
        %v4410 = vpop.f32.mrf.mxu0
        %v4411 = vadd.f32 %v4300, %v4410
        %4412 = vmatmul.bf16.gmra.mxu0 %v4277
        %v4413 = vpop.f32.mrf.mxu0
        %v4414 = vadd.f32 %v4300, %v4413
        %v4415 = vpop.f32.mrf.mxu0
        %v4416 = vadd.f32 %v4300, %v4415
        %4417 = vmatmul.bf16.gmra.mxu0 %v4278
        %v4418 = vpop.f32.mrf.mxu0
        %v4419 = vadd.f32 %v4300, %v4418
        %v4420 = vpop.f32.mrf.mxu0
        %v4421 = vadd.f32 %v4300, %v4420
        %4422 = vmatmul.bf16.gmra.mxu0 %v4279
        %v4423 = vpop.f32.mrf.mxu0
        %v4424 = vadd.f32 %v4300, %v4423
        %v4425 = vpop.f32.mrf.mxu0
        %v4426 = vadd.f32 %v4300, %v4425
        %4427 = vmatmul.bf16.gmra.mxu0 %v4280
        %v4428 = vpop.f32.mrf.mxu0
        %v4429 = vadd.f32 %v4300, %v4428
        %v4430 = vpop.f32.mrf.mxu0
        %v4431 = vadd.f32 %v4300, %v4430
        %4432 = vmatmul.bf16.gmra.mxu0 %v4281
        %v4433 = vpop.f32.mrf.mxu0
        %v4434 = vadd.f32 %v4300, %v4433
        %v4435 = vpop.f32.mrf.mxu0
        %v4436 = vadd.f32 %v4300, %v4435
        %4437 = vdwg.mxu0
        %v4438 = vadd.f32 %v1289, %v4359
        %v4439 = vadd.f32 %v1290, %v4361
        %v4440 = vadd.f32 %v1291, %v4364
        %v4441 = vadd.f32 %v1292, %v4366
        %v4442 = vadd.f32 %v1293, %v4369
        %v4443 = vadd.f32 %v1294, %v4371
        %v4444 = vadd.f32 %v1295, %v4374
        %v4445 = vadd.f32 %v1296, %v4376
        %v4446 = vadd.f32 %v1297, %v4379
        %v4447 = vadd.f32 %v1298, %v4381
        %v4448 = vadd.f32 %v1299, %v4384
        %v4449 = vadd.f32 %v1300, %v4386
        %v4450 = vadd.f32 %v1301, %v4389
        %v4451 = vadd.f32 %v1302, %v4391
        %v4452 = vadd.f32 %v1303, %v4394
        %v4453 = vadd.f32 %v1304, %v4396
        %v4454 = vadd.f32 %v1305, %v4399
        %v4455 = vadd.f32 %v1306, %v4401
        %v4456 = vadd.f32 %v1307, %v4404
        %v4457 = vadd.f32 %v1308, %v4406
        %v4458 = vadd.f32 %v1309, %v4409
        %v4459 = vadd.f32 %v1310, %v4411
        %v4460 = vadd.f32 %v1311, %v4414
        %v4461 = vadd.f32 %v1312, %v4416
        %v4462 = vadd.f32 %v1313, %v4419
        %v4463 = vadd.f32 %v1314, %v4421
        %v4464 = vadd.f32 %v1315, %v4424
        %v4465 = vadd.f32 %v1316, %v4426
        %v4466 = vadd.f32 %v1317, %v4429
        %v4467 = vadd.f32 %v1318, %v4431
        %v4468 = vadd.f32 %v1319, %v4434
        %v4469 = vadd.f32 %v1320, %v4436
        %4470 = vst [vmem:[%s679] sm:$0xff] %v4438
        %4471 = vst [vmem:[%s679 + $0x8] sm:$0xff] %v4439
        %4472 = vst [vmem:[%s679 + $0x10] sm:$0xff] %v4440
        %4473 = vst [vmem:[%s679 + $0x18] sm:$0xff] %v4441
        %4474 = vst [vmem:[%s679 + $0x20] sm:$0xff] %v4442
        %4475 = vst [vmem:[%s679 + $0x28] sm:$0xff] %v4443
        %4476 = vst [vmem:[%s679 + $0x30] sm:$0xff] %v4444
        %4477 = vst [vmem:[%s679 + $0x38] sm:$0xff] %v4445
        %4478 = vst [vmem:[%s679 + $0x40] sm:$0xff] %v4446
        %4479 = vst [vmem:[%s679 + $0x48] sm:$0xff] %v4447
        %4480 = vst [vmem:[%s679 + $0x50] sm:$0xff] %v4448
        %4481 = vst [vmem:[%s679 + $0x58] sm:$0xff] %v4449
        %4482 = vst [vmem:[%s679 + $0x60] sm:$0xff] %v4450
        %4483 = vst [vmem:[%s679 + $0x68] sm:$0xff] %v4451
        %4484 = vst [vmem:[%s679 + $0x70] sm:$0xff] %v4452
        %4485 = vst [vmem:[%s679 + $0x78] sm:$0xff] %v4453
        %4486 = vst [vmem:[%s679 + $0x80] sm:$0xff] %v4454
        %4487 = vst [vmem:[%s679 + $0x88] sm:$0xff] %v4455
        %4488 = vst [vmem:[%s679 + $0x90] sm:$0xff] %v4456
        %4489 = vst [vmem:[%s679 + $0x98] sm:$0xff] %v4457
        %4490 = vst [vmem:[%s679 + $0xa0] sm:$0xff] %v4458
        %4491 = vst [vmem:[%s679 + $0xa8] sm:$0xff] %v4459
        %4492 = vst [vmem:[%s679 + $0xb0] sm:$0xff] %v4460
        %4493 = vst [vmem:[%s679 + $0xb8] sm:$0xff] %v4461
        %4494 = vst [vmem:[%s679 + $0xc0] sm:$0xff] %v4462
        %4495 = vst [vmem:[%s679 + $0xc8] sm:$0xff] %v4463
        %4496 = vst [vmem:[%s679 + $0xd0] sm:$0xff] %v4464
        %4497 = vst [vmem:[%s679 + $0xd8] sm:$0xff] %v4465
        %4498 = vst [vmem:[%s679 + $0xe0] sm:$0xff] %v4466
        %4499 = vst [vmem:[%s679 + $0xe8] sm:$0xff] %v4467
        %4500 = vst [vmem:[%s679 + $0xf0] sm:$0xff] %v4468
        %4501 = vst [vmem:[%s679 + $0xf8] sm:$0xff] %v4469
        %v4502 = vpack.c.bf16 %v4361, %v4359
        %v4503 = vpack.c.bf16 %v4366, %v4364
        %v4504 = vpack.c.bf16 %v4371, %v4369
        %v4505 = vpack.c.bf16 %v4376, %v4374
        %v4506 = vpack.c.bf16 %v4381, %v4379
        %v4507 = vpack.c.bf16 %v4386, %v4384
        %v4508 = vpack.c.bf16 %v4391, %v4389
        %v4509 = vpack.c.bf16 %v4396, %v4394
        %v4510 = vpack.c.bf16 %v4401, %v4399
        %v4511 = vpack.c.bf16 %v4406, %v4404
        %v4512 = vpack.c.bf16 %v4411, %v4409
        %v4513 = vpack.c.bf16 %v4416, %v4414
        %v4514 = vpack.c.bf16 %v4421, %v4419
        %v4515 = vpack.c.bf16 %v4426, %v4424
        %v4516 = vpack.c.bf16 %v4431, %v4429
        %v4517 = vpack.c.bf16 %v4436, %v4434
        %v4518 = vld [vmem:[#allocation18 + $0x40] sm:$0xf]
        %v4519 = vld [vmem:[#allocation18 + $0x44] sm:$0xf]
        %v4520 = vld [vmem:[#allocation18 + $0x48] sm:$0xf]
        %v4521 = vld [vmem:[#allocation18 + $0x4c] sm:$0xf]
        %v4522 = vld [vmem:[#allocation18 + $0x50] sm:$0xf]
        %v4523 = vld [vmem:[#allocation18 + $0x54] sm:$0xf]
        %v4524 = vld [vmem:[#allocation18 + $0x58] sm:$0xf]
        %v4525 = vld [vmem:[#allocation18 + $0x5c] sm:$0xf]
        %v4526 = vld [vmem:[#allocation18 + $0x60] sm:$0xf]
        %v4527 = vld [vmem:[#allocation18 + $0x64] sm:$0xf]
        %v4528 = vld [vmem:[#allocation18 + $0x68] sm:$0xf]
        %v4529 = vld [vmem:[#allocation18 + $0x6c] sm:$0xf]
        %v4530 = vld [vmem:[#allocation18 + $0x70] sm:$0xf]
        %v4531 = vld [vmem:[#allocation18 + $0x74] sm:$0xf]
        %v4532 = vld [vmem:[#allocation18 + $0x78] sm:$0xf]
        %v4533 = vld [vmem:[#allocation18 + $0x7c] sm:$0xf]
        %v4550 = vunpack.c.l.b16 %v4518
        %v4551 = vunpack.c.l.b16 %v4519
        %v4552 = vunpack.c.l.b16 %v4520
        %v4553 = vunpack.c.l.b16 %v4521
        %v4554 = vunpack.c.l.b16 %v4522
        %v4555 = vunpack.c.l.b16 %v4523
        %v4556 = vunpack.c.l.b16 %v4524
        %v4557 = vunpack.c.l.b16 %v4525
        %v4558 = vunpack.c.l.b16 %v4526
        %v4559 = vunpack.c.l.b16 %v4527
        %v4560 = vunpack.c.l.b16 %v4528
        %v4561 = vunpack.c.l.b16 %v4529
        %v4562 = vunpack.c.l.b16 %v4530
        %v4563 = vunpack.c.l.b16 %v4531
        %v4564 = vunpack.c.l.b16 %v4532
        %v4565 = vunpack.c.l.b16 %v4533
        %v4566 = vpack.c.b16 %v4551, %v4550
        %v4567 = vpack.c.b16 %v4553, %v4552
        %v4568 = vpack.c.b16 %v4555, %v4554
        %v4569 = vpack.c.b16 %v4557, %v4556
        %v4570 = vpack.c.b16 %v4559, %v4558
        %v4571 = vpack.c.b16 %v4561, %v4560
        %v4572 = vpack.c.b16 %v4563, %v4562
        %v4573 = vpack.c.b16 %v4565, %v4564
        %4582 = vmatpush.bf16.msra.mxu0 %v4573
        %4583 = vmatpush.bf16.msra.mxu0 %v4572
        %4584 = vmatpush.bf16.msra.mxu0 %v4571
        %4585 = vmatpush.bf16.msra.mxu0 %v4570
        %4586 = vmatpush.bf16.msra.mxu0 %v4569
        %4587 = vmatpush.bf16.msra.mxu0 %v4568
        %4588 = vmatpush.bf16.msra.mxu0 %v4567
        %4589 = vmatpush.bf16.msra.mxu0 %v4566
        %4590 = vmatmul.bf16.gmra.mxu0 %v4502
        %v4591 = vpop.f32.mrf.mxu0
        %v4592 = vadd.f32 0.0, %v4591
        %v4593 = vpop.f32.mrf.mxu0
        %v4594 = vadd.f32 0.0, %v4593
        %4595 = vmatmul.bf16.gmra.mxu0 %v4503
        %v4596 = vpop.f32.mrf.mxu0
        %v4597 = vadd.f32 0.0, %v4596
        %v4598 = vpop.f32.mrf.mxu0
        %v4599 = vadd.f32 0.0, %v4598
        %4600 = vmatmul.bf16.gmra.mxu0 %v4504
        %v4601 = vpop.f32.mrf.mxu0
        %v4602 = vadd.f32 0.0, %v4601
        %v4603 = vpop.f32.mrf.mxu0
        %v4604 = vadd.f32 0.0, %v4603
        %4605 = vmatmul.bf16.gmra.mxu0 %v4505
        %v4606 = vpop.f32.mrf.mxu0
        %v4607 = vadd.f32 0.0, %v4606
        %v4608 = vpop.f32.mrf.mxu0
        %v4609 = vadd.f32 0.0, %v4608
        %4610 = vmatmul.bf16.gmra.mxu0 %v4506
        %v4611 = vpop.f32.mrf.mxu0
        %v4612 = vadd.f32 0.0, %v4611
        %v4613 = vpop.f32.mrf.mxu0
        %v4614 = vadd.f32 0.0, %v4613
        %4615 = vmatmul.bf16.gmra.mxu0 %v4507
        %v4616 = vpop.f32.mrf.mxu0
        %v4617 = vadd.f32 0.0, %v4616
        %v4618 = vpop.f32.mrf.mxu0
        %v4619 = vadd.f32 0.0, %v4618
        %4620 = vmatmul.bf16.gmra.mxu0 %v4508
        %v4621 = vpop.f32.mrf.mxu0
        %v4622 = vadd.f32 0.0, %v4621
        %v4623 = vpop.f32.mrf.mxu0
        %v4624 = vadd.f32 0.0, %v4623
        %4625 = vmatmul.bf16.gmra.mxu0 %v4509
        %v4626 = vpop.f32.mrf.mxu0
        %v4627 = vadd.f32 0.0, %v4626
        %v4628 = vpop.f32.mrf.mxu0
        %v4629 = vadd.f32 0.0, %v4628
        %4630 = vmatmul.bf16.gmra.mxu0 %v4510
        %v4631 = vpop.f32.mrf.mxu0
        %v4632 = vadd.f32 0.0, %v4631
        %v4633 = vpop.f32.mrf.mxu0
        %v4634 = vadd.f32 0.0, %v4633
        %4635 = vmatmul.bf16.gmra.mxu0 %v4511
        %v4636 = vpop.f32.mrf.mxu0
        %v4637 = vadd.f32 0.0, %v4636
        %v4638 = vpop.f32.mrf.mxu0
        %v4639 = vadd.f32 0.0, %v4638
        %4640 = vmatmul.bf16.gmra.mxu0 %v4512
        %v4641 = vpop.f32.mrf.mxu0
        %v4642 = vadd.f32 0.0, %v4641
        %v4643 = vpop.f32.mrf.mxu0
        %v4644 = vadd.f32 0.0, %v4643
        %4645 = vmatmul.bf16.gmra.mxu0 %v4513
        %v4646 = vpop.f32.mrf.mxu0
        %v4647 = vadd.f32 0.0, %v4646
        %v4648 = vpop.f32.mrf.mxu0
        %v4649 = vadd.f32 0.0, %v4648
        %4650 = vmatmul.bf16.gmra.mxu0 %v4514
        %v4651 = vpop.f32.mrf.mxu0
        %v4652 = vadd.f32 0.0, %v4651
        %v4653 = vpop.f32.mrf.mxu0
        %v4654 = vadd.f32 0.0, %v4653
        %4655 = vmatmul.bf16.gmra.mxu0 %v4515
        %v4656 = vpop.f32.mrf.mxu0
        %v4657 = vadd.f32 0.0, %v4656
        %v4658 = vpop.f32.mrf.mxu0
        %v4659 = vadd.f32 0.0, %v4658
        %4660 = vmatmul.bf16.gmra.mxu0 %v4516
        %v4661 = vpop.f32.mrf.mxu0
        %v4662 = vadd.f32 0.0, %v4661
        %v4663 = vpop.f32.mrf.mxu0
        %v4664 = vadd.f32 0.0, %v4663
        %4665 = vmatmul.bf16.gmra.mxu0 %v4517
        %v4666 = vpop.f32.mrf.mxu0
        %v4667 = vadd.f32 0.0, %v4666
        %v4668 = vpop.f32.mrf.mxu0
        %v4669 = vadd.f32 0.0, %v4668
        %4670 = vdwg.mxu0
        %v4671 = vperm.slane %v913, 0
        %v4672 = vperm.slane %v913, 1
        %vm4673 = vcmp.eq.s32.totalorder %v915, %v4671
        %vm4674 = vcmp.eq.s32.totalorder %v915, %v4672
        %vm4675 = vcmp.eq.s32.totalorder %v916, %v4671
        %vm4676 = vcmp.eq.s32.totalorder %v916, %v4672
        %vm4677 = vcmp.eq.s32.totalorder %v917, %v4671
        %vm4678 = vcmp.eq.s32.totalorder %v917, %v4672
        %vm4679 = vcmp.eq.s32.totalorder %v918, %v4671
        %vm4680 = vcmp.eq.s32.totalorder %v918, %v4672
        %vm4681 = vcmp.eq.s32.totalorder %v919, %v4671
        %vm4682 = vcmp.eq.s32.totalorder %v919, %v4672
        %vm4683 = vcmp.eq.s32.totalorder %v920, %v4671
        %vm4684 = vcmp.eq.s32.totalorder %v920, %v4672
        %vm4685 = vcmp.eq.s32.totalorder %v921, %v4671
        %vm4686 = vcmp.eq.s32.totalorder %v921, %v4672
        %vm4687 = vcmp.eq.s32.totalorder %v922, %v4671
        %vm4688 = vcmp.eq.s32.totalorder %v922, %v4672
        %v4689 = vsel %vm4673, 1, 0
        %v4690 = vsel %vm4674, 1, 0
        %v4691 = vsel %vm4675, 1, 0
        %v4692 = vsel %vm4676, 1, 0
        %v4693 = vsel %vm4677, 1, 0
        %v4694 = vsel %vm4678, 1, 0
        %v4695 = vsel %vm4679, 1, 0
        %v4696 = vsel %vm4680, 1, 0
        %v4697 = vsel %vm4681, 1, 0
        %v4698 = vsel %vm4682, 1, 0
        %v4699 = vsel %vm4683, 1, 0
        %v4700 = vsel %vm4684, 1, 0
        %v4701 = vsel %vm4685, 1, 0
        %v4702 = vsel %vm4686, 1, 0
        %v4703 = vsel %vm4687, 1, 0
        %v4704 = vsel %vm4688, 1, 0
        %v4705 = vcvt.s32.f32 %v4689
        %v4706 = vcvt.s32.f32 %v4690
        %v4707 = vcvt.s32.f32 %v4691
        %v4708 = vcvt.s32.f32 %v4692
        %v4709 = vcvt.s32.f32 %v4693
        %v4710 = vcvt.s32.f32 %v4694
        %v4711 = vcvt.s32.f32 %v4695
        %v4712 = vcvt.s32.f32 %v4696
        %v4713 = vcvt.s32.f32 %v4697
        %v4714 = vcvt.s32.f32 %v4698
        %v4715 = vcvt.s32.f32 %v4699
        %v4716 = vcvt.s32.f32 %v4700
        %v4717 = vcvt.s32.f32 %v4701
        %v4718 = vcvt.s32.f32 %v4702
        %v4719 = vcvt.s32.f32 %v4703
        %v4720 = vcvt.s32.f32 %v4704
        %v4721 = vld [vmem:[#allocation3] sm:$0xff]
        %v4722 = vld [vmem:[#allocation3 + $0x8] sm:$0xff]
        %v4723 = vld [vmem:[#allocation3 + $0x10] sm:$0xff]
        %v4724 = vld [vmem:[#allocation3 + $0x18] sm:$0xff]
        %v4725 = vld [vmem:[#allocation3 + $0x20] sm:$0xff]
        %v4726 = vld [vmem:[#allocation3 + $0x28] sm:$0xff]
        %v4727 = vld [vmem:[#allocation3 + $0x30] sm:$0xff]
        %v4728 = vld [vmem:[#allocation3 + $0x38] sm:$0xff]
        %4729 = vmatpush.msra.mxu0 %v4629
        %4730 = vmatpush.msra.mxu0 %v4627
        %4731 = vmatpush.msra.mxu0 %v4624
        %4732 = vmatpush.msra.mxu0 %v4622
        %4733 = vmatpush.msra.mxu0 %v4619
        %4734 = vmatpush.msra.mxu0 %v4617
        %4735 = vmatpush.msra.mxu0 %v4614
        %4736 = vmatpush.msra.mxu0 %v4612
        %4737 = vmatpush.msra.mxu0 %v4609
        %4738 = vmatpush.msra.mxu0 %v4607
        %4739 = vmatpush.msra.mxu0 %v4604
        %4740 = vmatpush.msra.mxu0 %v4602
        %4741 = vmatpush.msra.mxu0 %v4599
        %4742 = vmatpush.msra.mxu0 %v4597
        %4743 = vmatpush.msra.mxu0 %v4594
        %4744 = vmatpush.msra.mxu0 %v4592
        %4745 = vmatmul.f32.gmra.mxu0 %v4705
        %v4746 = vpop.f32.mrf.mxu0
        %v4747 = vadd.f32 0.0, %v4746
        %4748 = vmatmul.f32.gmra.mxu0 %v4707
        %v4749 = vpop.f32.mrf.mxu0
        %v4750 = vadd.f32 0.0, %v4749
        %4751 = vmatmul.f32.gmra.mxu0 %v4709
        %v4752 = vpop.f32.mrf.mxu0
        %v4753 = vadd.f32 0.0, %v4752
        %4754 = vmatmul.f32.gmra.mxu0 %v4711
        %v4755 = vpop.f32.mrf.mxu0
        %v4756 = vadd.f32 0.0, %v4755
        %4757 = vmatmul.f32.gmra.mxu0 %v4713
        %v4758 = vpop.f32.mrf.mxu0
        %v4759 = vadd.f32 0.0, %v4758
        %4760 = vmatmul.f32.gmra.mxu0 %v4715
        %v4761 = vpop.f32.mrf.mxu0
        %v4762 = vadd.f32 0.0, %v4761
        %4763 = vmatmul.f32.gmra.mxu0 %v4717
        %v4764 = vpop.f32.mrf.mxu0
        %v4765 = vadd.f32 0.0, %v4764
        %4766 = vmatmul.f32.gmra.mxu0 %v4719
        %v4767 = vpop.f32.mrf.mxu0
        %v4768 = vadd.f32 0.0, %v4767
        %4769 = vdwg.mxu0
        %4770 = vmatpush.msra.mxu0 %v4669
        %4771 = vmatpush.msra.mxu0 %v4667
        %4772 = vmatpush.msra.mxu0 %v4664
        %4773 = vmatpush.msra.mxu0 %v4662
        %4774 = vmatpush.msra.mxu0 %v4659
        %4775 = vmatpush.msra.mxu0 %v4657
        %4776 = vmatpush.msra.mxu0 %v4654
        %4777 = vmatpush.msra.mxu0 %v4652
        %4778 = vmatpush.msra.mxu0 %v4649
        %4779 = vmatpush.msra.mxu0 %v4647
        %4780 = vmatpush.msra.mxu0 %v4644
        %4781 = vmatpush.msra.mxu0 %v4642
        %4782 = vmatpush.msra.mxu0 %v4639
        %4783 = vmatpush.msra.mxu0 %v4637
        %4784 = vmatpush.msra.mxu0 %v4634
        %4785 = vmatpush.msra.mxu0 %v4632
        %4786 = vmatmul.f32.gmra.mxu0 %v4706
        %v4787 = vpop.f32.mrf.mxu0
        %v4788 = vadd.f32 %v4747, %v4787
        %4789 = vmatmul.f32.gmra.mxu0 %v4708
        %v4790 = vpop.f32.mrf.mxu0
        %v4791 = vadd.f32 %v4750, %v4790
        %4792 = vmatmul.f32.gmra.mxu0 %v4710
        %v4793 = vpop.f32.mrf.mxu0
        %v4794 = vadd.f32 %v4753, %v4793
        %4795 = vmatmul.f32.gmra.mxu0 %v4712
        %v4796 = vpop.f32.mrf.mxu0
        %v4797 = vadd.f32 %v4756, %v4796
        %4798 = vmatmul.f32.gmra.mxu0 %v4714
        %v4799 = vpop.f32.mrf.mxu0
        %v4800 = vadd.f32 %v4759, %v4799
        %4801 = vmatmul.f32.gmra.mxu0 %v4716
        %v4802 = vpop.f32.mrf.mxu0
        %v4803 = vadd.f32 %v4762, %v4802
        %4804 = vmatmul.f32.gmra.mxu0 %v4718
        %v4805 = vpop.f32.mrf.mxu0
        %v4806 = vadd.f32 %v4765, %v4805
        %4807 = vmatmul.f32.gmra.mxu0 %v4720
        %v4808 = vpop.f32.mrf.mxu0
        %v4809 = vadd.f32 %v4768, %v4808
        %4810 = vdwg.mxu0
        %v4811 = vadd.f32 %v4721, %v4788
        %v4812 = vadd.f32 %v4722, %v4791
        %v4813 = vadd.f32 %v4723, %v4794
        %v4814 = vadd.f32 %v4724, %v4797
        %v4815 = vadd.f32 %v4725, %v4800
        %v4816 = vadd.f32 %v4726, %v4803
        %v4817 = vadd.f32 %v4727, %v4806
        %v4818 = vadd.f32 %v4728, %v4809
        %4819 = vst [vmem:[#allocation3] sm:$0xff] %v4811
        %4820 = vst [vmem:[#allocation3 + $0x8] sm:$0xff] %v4812
        %4821 = vst [vmem:[#allocation3 + $0x10] sm:$0xff] %v4813
        %4822 = vst [vmem:[#allocation3 + $0x18] sm:$0xff] %v4814
        %4823 = vst [vmem:[#allocation3 + $0x20] sm:$0xff] %v4815
        %4824 = vst [vmem:[#allocation3 + $0x28] sm:$0xff] %v4816
        %4825 = vst [vmem:[#allocation3 + $0x30] sm:$0xff] %v4817
        %4826 = vst [vmem:[#allocation3 + $0x38] sm:$0xff] %v4818
        %p4827 = scmp.eq.s32.totalorder %s41, 1
        // Predicated region
        $region125: #{tpu_custom_call.1} parent=71 // pred_check
          %p4828 = pneg %p4827
        $region126: #{tpu_custom_call.1} parent=71 // pred_check_branch
          %4830 = sbr.rel (%p4828) target = $region128
        $region127: #{tpu_custom_call.1} parent=71 // pred_region
          %v4831 = vld [vmem:[#allocation9] sm:$0xff]
          %v4832 = vld [vmem:[#allocation9 + $0x8] sm:$0xff]
          %v4833 = vld [vmem:[#allocation9 + $0x10] sm:$0xff]
          %v4834 = vld [vmem:[#allocation9 + $0x18] sm:$0xff]
          %v4835 = vld [vmem:[#allocation9 + $0x20] sm:$0xff]
          %v4836 = vld [vmem:[#allocation9 + $0x28] sm:$0xff]
          %v4837 = vld [vmem:[#allocation9 + $0x30] sm:$0xff]
          %v4838 = vld [vmem:[#allocation9 + $0x38] sm:$0xff]
          %v4839 = vpack.c.bf16 %v4832, %v4831
          %v4840 = vpack.c.bf16 %v4834, %v4833
          %v4841 = vpack.c.bf16 %v4836, %v4835
          %v4842 = vpack.c.bf16 %v4838, %v4837
          %v4843 = vld [vmem:[#allocation18] sm:$0xf]
          %v4844 = vld [vmem:[#allocation18 + $0x4] sm:$0xf]
          %v4845 = vld [vmem:[#allocation18 + $0x8] sm:$0xf]
          %v4846 = vld [vmem:[#allocation18 + $0xc] sm:$0xf]
          %v4847 = vld [vmem:[#allocation18 + $0x10] sm:$0xf]
          %v4848 = vld [vmem:[#allocation18 + $0x14] sm:$0xf]
          %v4849 = vld [vmem:[#allocation18 + $0x18] sm:$0xf]
          %v4850 = vld [vmem:[#allocation18 + $0x1c] sm:$0xf]
          %v4851 = vld [vmem:[#allocation18 + $0x20] sm:$0xf]
          %v4852 = vld [vmem:[#allocation18 + $0x24] sm:$0xf]
          %v4853 = vld [vmem:[#allocation18 + $0x28] sm:$0xf]
          %v4854 = vld [vmem:[#allocation18 + $0x2c] sm:$0xf]
          %v4855 = vld [vmem:[#allocation18 + $0x30] sm:$0xf]
          %v4856 = vld [vmem:[#allocation18 + $0x34] sm:$0xf]
          %v4857 = vld [vmem:[#allocation18 + $0x38] sm:$0xf]
          %v4858 = vld [vmem:[#allocation18 + $0x3c] sm:$0xf]
          %v4859 = vld [vmem:[#allocation3] sm:$0xff]
          %v4860 = vld [vmem:[#allocation3 + $0x8] sm:$0xff]
          %v4861 = vld [vmem:[#allocation3 + $0x10] sm:$0xff]
          %v4862 = vld [vmem:[#allocation3 + $0x18] sm:$0xff]
          %v4863 = vld [vmem:[#allocation3 + $0x20] sm:$0xff]
          %v4864 = vld [vmem:[#allocation3 + $0x28] sm:$0xff]
          %v4865 = vld [vmem:[#allocation3 + $0x30] sm:$0xff]
          %v4866 = vld [vmem:[#allocation3 + $0x38] sm:$0xff]
          %v4883 = vunpack.c.l.b16 %v4843
          %v4884 = vunpack.c.l.b16 %v4844
          %v4885 = vunpack.c.l.b16 %v4845
          %v4886 = vunpack.c.l.b16 %v4846
          %v4887 = vunpack.c.l.b16 %v4847
          %v4888 = vunpack.c.l.b16 %v4848
          %v4889 = vunpack.c.l.b16 %v4849
          %v4890 = vunpack.c.l.b16 %v4850
          %v4891 = vunpack.c.l.b16 %v4851
          %v4892 = vunpack.c.l.b16 %v4852
          %v4893 = vunpack.c.l.b16 %v4853
          %v4894 = vunpack.c.l.b16 %v4854
          %v4895 = vunpack.c.l.b16 %v4855
          %v4896 = vunpack.c.l.b16 %v4856
          %v4897 = vunpack.c.l.b16 %v4857
          %v4898 = vunpack.c.l.b16 %v4858
          %v4899 = vpack.c.b16 %v4884, %v4883
          %v4900 = vpack.c.b16 %v4886, %v4885
          %v4901 = vpack.c.b16 %v4888, %v4887
          %v4902 = vpack.c.b16 %v4890, %v4889
          %v4903 = vpack.c.b16 %v4892, %v4891
          %v4904 = vpack.c.b16 %v4894, %v4893
          %v4905 = vpack.c.b16 %v4896, %v4895
          %v4906 = vpack.c.b16 %v4898, %v4897
          %4915 = vmatpush.bf16.msra.mxu0 %v4906
          %4916 = vmatpush.bf16.msra.mxu0 %v4905
          %4917 = vmatpush.bf16.msra.mxu0 %v4904
          %4918 = vmatpush.bf16.msra.mxu0 %v4903
          %4919 = vmatpush.bf16.msra.mxu0 %v4902
          %4920 = vmatpush.bf16.msra.mxu0 %v4901
          %4921 = vmatpush.bf16.msra.mxu0 %v4900
          %4922 = vmatpush.bf16.msra.mxu0 %v4899
          %4923 = vmatmul.bf16.gmra.mxu0 %v4839
          %v4924 = vpop.f32.mrf.mxu0
          %v4925 = vadd.f32 %v4859, %v4924
          %v4926 = vpop.f32.mrf.mxu0
          %v4927 = vadd.f32 %v4860, %v4926
          %4928 = vmatmul.bf16.gmra.mxu0 %v4840
          %v4929 = vpop.f32.mrf.mxu0
          %v4930 = vadd.f32 %v4861, %v4929
          %v4931 = vpop.f32.mrf.mxu0
          %v4932 = vadd.f32 %v4862, %v4931
          %4933 = vmatmul.bf16.gmra.mxu0 %v4841
          %v4934 = vpop.f32.mrf.mxu0
          %v4935 = vadd.f32 %v4863, %v4934
          %v4936 = vpop.f32.mrf.mxu0
          %v4937 = vadd.f32 %v4864, %v4936
          %4938 = vmatmul.bf16.gmra.mxu0 %v4842
          %v4939 = vpop.f32.mrf.mxu0
          %v4940 = vadd.f32 %v4865, %v4939
          %v4941 = vpop.f32.mrf.mxu0
          %v4942 = vadd.f32 %v4866, %v4941
          %4943 = vdwg.mxu0
          %v4944 = vld [vmem:[%s10] sm:$0x1]
          %v4945 = vperm.slane %v4944, 0
          %v4946 = vadd.f32 %v4925, %v4945
          %v4947 = vadd.f32 %v4927, %v4945
          %v4948 = vadd.f32 %v4930, %v4945
          %v4949 = vadd.f32 %v4932, %v4945
          %v4950 = vadd.f32 %v4935, %v4945
          %v4951 = vadd.f32 %v4937, %v4945
          %v4952 = vadd.f32 %v4940, %v4945
          %v4953 = vadd.f32 %v4942, %v4945
          %v4954 = vmax.f32 %v4946, 0.0
          %v4955 = vmax.f32 %v4947, 0.0
          %v4956 = vmax.f32 %v4948, 0.0
          %v4957 = vmax.f32 %v4949, 0.0
          %v4958 = vmax.f32 %v4950, 0.0
          %v4959 = vmax.f32 %v4951, 0.0
          %v4960 = vmax.f32 %v4952, 0.0
          %v4961 = vmax.f32 %v4953, 0.0
          %v4962 = vld [vmem:[#allocation21] sm:$0x1]
          %v4963 = vld [vmem:[#allocation22] sm:$0x1]
          %4964 = vadd.xlane.f32.xlu0 %v4954
          %v4965 = vpop.xlane.xlu0 %4964
          %4966 = vadd.xlane.f32.xlu0 %v4955
          %v4967 = vpop.xlane.xlu0 %4966
          %4968 = vadd.xlane.f32.xlu0 %v4956
          %v4969 = vpop.xlane.xlu0 %4968
          %4970 = vadd.xlane.f32.xlu0 %v4957
          %v4971 = vpop.xlane.xlu0 %4970
          %4972 = vadd.xlane.f32.xlu0 %v4958
          %v4973 = vpop.xlane.xlu0 %4972
          %4974 = vadd.xlane.f32.xlu0 %v4959
          %v4975 = vpop.xlane.xlu0 %4974
          %4976 = vadd.xlane.f32.xlu0 %v4960
          %v4977 = vpop.xlane.xlu0 %4976
          %4978 = vadd.xlane.f32.xlu0 %v4961
          %v4979 = vpop.xlane.xlu0 %4978
          %v4980 = vmul.f32 %v4965, %v1628
          %v4981 = vmul.f32 %v4967, %v1628
          %v4982 = vmul.f32 %v4969, %v1628
          %v4983 = vmul.f32 %v4971, %v1628
          %v4984 = vmul.f32 %v4973, %v1628
          %v4985 = vmul.f32 %v4975, %v1628
          %v4986 = vmul.f32 %v4977, %v1628
          %v4987 = vmul.f32 %v4979, %v1628
          %v4988 = vsub.f32 %v4954, %v4980
          %v4989 = vsub.f32 %v4955, %v4981
          %v4990 = vsub.f32 %v4956, %v4982
          %v4991 = vsub.f32 %v4957, %v4983
          %v4992 = vsub.f32 %v4958, %v4984
          %v4993 = vsub.f32 %v4959, %v4985
          %v4994 = vsub.f32 %v4960, %v4986
          %v4995 = vsub.f32 %v4961, %v4987
          %v4996 = vmul.f32 %v4988, %v4988
          %v4997 = vmul.f32 %v4989, %v4989
          %v4998 = vmul.f32 %v4990, %v4990
          %v4999 = vmul.f32 %v4991, %v4991
          %v5000 = vmul.f32 %v4992, %v4992
          %v5001 = vmul.f32 %v4993, %v4993
          %v5002 = vmul.f32 %v4994, %v4994
          %v5003 = vmul.f32 %v4995, %v4995
          %5004 = vadd.xlane.f32.xlu0 %v4996
          %v5005 = vpop.xlane.xlu0 %5004
          %5006 = vadd.xlane.f32.xlu0 %v4997
          %v5007 = vpop.xlane.xlu0 %5006
          %5008 = vadd.xlane.f32.xlu0 %v4998
          %v5009 = vpop.xlane.xlu0 %5008
          %5010 = vadd.xlane.f32.xlu0 %v4999
          %v5011 = vpop.xlane.xlu0 %5010
          %5012 = vadd.xlane.f32.xlu0 %v5000
          %v5013 = vpop.xlane.xlu0 %5012
          %5014 = vadd.xlane.f32.xlu0 %v5001
          %v5015 = vpop.xlane.xlu0 %5014
          %5016 = vadd.xlane.f32.xlu0 %v5002
          %v5017 = vpop.xlane.xlu0 %5016
          %5018 = vadd.xlane.f32.xlu0 %v5003
          %v5019 = vpop.xlane.xlu0 %5018
          %v5020 = vmul.f32 %v5005, %v1628
          %v5021 = vmul.f32 %v5007, %v1628
          %v5022 = vmul.f32 %v5009, %v1628
          %v5023 = vmul.f32 %v5011, %v1628
          %v5024 = vmul.f32 %v5013, %v1628
          %v5025 = vmul.f32 %v5015, %v1628
          %v5026 = vmul.f32 %v5017, %v1628
          %v5027 = vmul.f32 %v5019, %v1628
          %v5028 = vadd.f32 %v5020, 1e-05
          %v5029 = vadd.f32 %v5021, 1e-05
          %v5030 = vadd.f32 %v5022, 1e-05
          %v5031 = vadd.f32 %v5023, 1e-05
          %v5032 = vadd.f32 %v5024, 1e-05
          %v5033 = vadd.f32 %v5025, 1e-05
          %v5034 = vadd.f32 %v5026, 1e-05
          %v5035 = vadd.f32 %v5027, 1e-05
          %v5036 = vrsqrt.pop %v5028
          %v5037 = vmul.f32 %v5036, %v5028
          %v5038 = vmul.f32 %v5037, %v5036
          %v5039 = vmul.f32 0.5, %v5038
          %v5040 = vsub.f32 1.5, %v5039
          %v5041 = vmul.f32 %v5036, %v5040
          %vm5042 = vweird.f32 %v5028
          %vm5043 = vweird.f32 %v5036
          %vm5044 = vmor %vm5042, %vm5043
          %v5045 = vsel %vm5044, %v5036, %v5041
          %v5046 = vrsqrt.pop %v5029
          %v5047 = vmul.f32 %v5046, %v5029
          %v5048 = vmul.f32 %v5047, %v5046
          %v5049 = vmul.f32 0.5, %v5048
          %v5050 = vsub.f32 1.5, %v5049
          %v5051 = vmul.f32 %v5046, %v5050
          %vm5052 = vweird.f32 %v5029
          %vm5053 = vweird.f32 %v5046
          %vm5054 = vmor %vm5052, %vm5053
          %v5055 = vsel %vm5054, %v5046, %v5051
          %v5056 = vrsqrt.pop %v5030
          %v5057 = vmul.f32 %v5056, %v5030
          %v5058 = vmul.f32 %v5057, %v5056
          %v5059 = vmul.f32 0.5, %v5058
          %v5060 = vsub.f32 1.5, %v5059
          %v5061 = vmul.f32 %v5056, %v5060
          %vm5062 = vweird.f32 %v5030
          %vm5063 = vweird.f32 %v5056
          %vm5064 = vmor %vm5062, %vm5063
          %v5065 = vsel %vm5064, %v5056, %v5061
          %v5066 = vrsqrt.pop %v5031
          %v5067 = vmul.f32 %v5066, %v5031
          %v5068 = vmul.f32 %v5067, %v5066
          %v5069 = vmul.f32 0.5, %v5068
          %v5070 = vsub.f32 1.5, %v5069
          %v5071 = vmul.f32 %v5066, %v5070
          %vm5072 = vweird.f32 %v5031
          %vm5073 = vweird.f32 %v5066
          %vm5074 = vmor %vm5072, %vm5073
          %v5075 = vsel %vm5074, %v5066, %v5071
          %v5076 = vrsqrt.pop %v5032
          %v5077 = vmul.f32 %v5076, %v5032
          %v5078 = vmul.f32 %v5077, %v5076
          %v5079 = vmul.f32 0.5, %v5078
          %v5080 = vsub.f32 1.5, %v5079
          %v5081 = vmul.f32 %v5076, %v5080
          %vm5082 = vweird.f32 %v5032
          %vm5083 = vweird.f32 %v5076
          %vm5084 = vmor %vm5082, %vm5083
          %v5085 = vsel %vm5084, %v5076, %v5081
          %v5086 = vrsqrt.pop %v5033
          %v5087 = vmul.f32 %v5086, %v5033
          %v5088 = vmul.f32 %v5087, %v5086
          %v5089 = vmul.f32 0.5, %v5088
          %v5090 = vsub.f32 1.5, %v5089
          %v5091 = vmul.f32 %v5086, %v5090
          %vm5092 = vweird.f32 %v5033
          %vm5093 = vweird.f32 %v5086
          %vm5094 = vmor %vm5092, %vm5093
          %v5095 = vsel %vm5094, %v5086, %v5091
          %v5096 = vrsqrt.pop %v5034
          %v5097 = vmul.f32 %v5096, %v5034
          %v5098 = vmul.f32 %v5097, %v5096
          %v5099 = vmul.f32 0.5, %v5098
          %v5100 = vsub.f32 1.5, %v5099
          %v5101 = vmul.f32 %v5096, %v5100
          %vm5102 = vweird.f32 %v5034
          %vm5103 = vweird.f32 %v5096
          %vm5104 = vmor %vm5102, %vm5103
          %v5105 = vsel %vm5104, %v5096, %v5101
          %v5106 = vrsqrt.pop %v5035
          %v5107 = vmul.f32 %v5106, %v5035
          %v5108 = vmul.f32 %v5107, %v5106
          %v5109 = vmul.f32 0.5, %v5108
          %v5110 = vsub.f32 1.5, %v5109
          %v5111 = vmul.f32 %v5106, %v5110
          %vm5112 = vweird.f32 %v5035
          %vm5113 = vweird.f32 %v5106
          %vm5114 = vmor %vm5112, %vm5113
          %v5115 = vsel %vm5114, %v5106, %v5111
          %v5116 = vmul.f32 %v4988, %v5045
          %v5117 = vmul.f32 %v4989, %v5055
          %v5118 = vmul.f32 %v4990, %v5065
          %v5119 = vmul.f32 %v4991, %v5075
          %v5120 = vmul.f32 %v4992, %v5085
          %v5121 = vmul.f32 %v4993, %v5095
          %v5122 = vmul.f32 %v4994, %v5105
          %v5123 = vmul.f32 %v4995, %v5115
          %v5124 = vperm.slane %v4962, 0
          %v5125 = vmul.f32 %v5116, %v5124
          %v5126 = vmul.f32 %v5117, %v5124
          %v5127 = vmul.f32 %v5118, %v5124
          %v5128 = vmul.f32 %v5119, %v5124
          %v5129 = vmul.f32 %v5120, %v5124
          %v5130 = vmul.f32 %v5121, %v5124
          %v5131 = vmul.f32 %v5122, %v5124
          %v5132 = vmul.f32 %v5123, %v5124
          %v5133 = vperm.slane %v4963, 0
          %v5134 = vadd.f32 %v5125, %v5133
          %v5135 = vadd.f32 %v5126, %v5133
          %v5136 = vadd.f32 %v5127, %v5133
          %v5137 = vadd.f32 %v5128, %v5133
          %v5138 = vadd.f32 %v5129, %v5133
          %v5139 = vadd.f32 %v5130, %v5133
          %v5140 = vadd.f32 %v5131, %v5133
          %v5141 = vadd.f32 %v5132, %v5133
          %v5142 = vpack.c.bf16 %v5135, %v5134
          %v5143 = vpack.c.bf16 %v5137, %v5136
          %v5144 = vpack.c.bf16 %v5139, %v5138
          %v5145 = vpack.c.bf16 %v5141, %v5140
          %v5146 = vld [vmem:[#allocation19] sm:$0xf]
          %v5147 = vld [vmem:[#allocation19 + $0x4] sm:$0xf]
          %v5148 = vld [vmem:[#allocation19 + $0x8] sm:$0xf]
          %v5149 = vld [vmem:[#allocation19 + $0xc] sm:$0xf]
          %v5150 = vld [vmem:[#allocation19 + $0x10] sm:$0xf]
          %v5151 = vld [vmem:[#allocation19 + $0x14] sm:$0xf]
          %v5152 = vld [vmem:[#allocation19 + $0x18] sm:$0xf]
          %v5153 = vld [vmem:[#allocation19 + $0x1c] sm:$0xf]
          %v5154 = vld [vmem:[#allocation19 + $0x20] sm:$0xf]
          %v5155 = vld [vmem:[#allocation19 + $0x24] sm:$0xf]
          %v5156 = vld [vmem:[#allocation19 + $0x28] sm:$0xf]
          %v5157 = vld [vmem:[#allocation19 + $0x2c] sm:$0xf]
          %v5158 = vld [vmem:[#allocation19 + $0x30] sm:$0xf]
          %v5159 = vld [vmem:[#allocation19 + $0x34] sm:$0xf]
          %v5160 = vld [vmem:[#allocation19 + $0x38] sm:$0xf]
          %v5161 = vld [vmem:[#allocation19 + $0x3c] sm:$0xf]
          %v5162 = vld [vmem:[%s10 + $0x1] sm:$0x1]
          %v5163 = vperm.slane %v5162, 0
          %v5180 = vunpack.c.l.b16 %v5146
          %v5181 = vunpack.c.l.b16 %v5147
          %v5182 = vunpack.c.l.b16 %v5148
          %v5183 = vunpack.c.l.b16 %v5149
          %v5184 = vunpack.c.l.b16 %v5150
          %v5185 = vunpack.c.l.b16 %v5151
          %v5186 = vunpack.c.l.b16 %v5152
          %v5187 = vunpack.c.l.b16 %v5153
          %v5188 = vunpack.c.l.b16 %v5154
          %v5189 = vunpack.c.l.b16 %v5155
          %v5190 = vunpack.c.l.b16 %v5156
          %v5191 = vunpack.c.l.b16 %v5157
          %v5192 = vunpack.c.l.b16 %v5158
          %v5193 = vunpack.c.l.b16 %v5159
          %v5194 = vunpack.c.l.b16 %v5160
          %v5195 = vunpack.c.l.b16 %v5161
          %v5196 = vpack.c.b16 %v5181, %v5180
          %v5197 = vpack.c.b16 %v5183, %v5182
          %v5198 = vpack.c.b16 %v5185, %v5184
          %v5199 = vpack.c.b16 %v5187, %v5186
          %v5200 = vpack.c.b16 %v5189, %v5188
          %v5201 = vpack.c.b16 %v5191, %v5190
          %v5202 = vpack.c.b16 %v5193, %v5192
          %v5203 = vpack.c.b16 %v5195, %v5194
          %5212 = vmatpush.bf16.msra.mxu0 %v5203
          %5213 = vmatpush.bf16.msra.mxu0 %v5202
          %5214 = vmatpush.bf16.msra.mxu0 %v5201
          %5215 = vmatpush.bf16.msra.mxu0 %v5200
          %5216 = vmatpush.bf16.msra.mxu0 %v5199
          %5217 = vmatpush.bf16.msra.mxu0 %v5198
          %5218 = vmatpush.bf16.msra.mxu0 %v5197
          %5219 = vmatpush.bf16.msra.mxu0 %v5196
          %5220 = vmatmul.bf16.gmra.mxu0 %v5142
          %v5221 = vpop.f32.mrf.mxu0
          %v5222 = vadd.f32 %v5163, %v5221
          %v5223 = vpop.f32.mrf.mxu0
          %v5224 = vadd.f32 %v5163, %v5223
          %5225 = vmatmul.bf16.gmra.mxu0 %v5143
          %v5226 = vpop.f32.mrf.mxu0
          %v5227 = vadd.f32 %v5163, %v5226
          %v5228 = vpop.f32.mrf.mxu0
          %v5229 = vadd.f32 %v5163, %v5228
          %5230 = vmatmul.bf16.gmra.mxu0 %v5144
          %v5231 = vpop.f32.mrf.mxu0
          %v5232 = vadd.f32 %v5163, %v5231
          %v5233 = vpop.f32.mrf.mxu0
          %v5234 = vadd.f32 %v5163, %v5233
          %5235 = vmatmul.bf16.gmra.mxu0 %v5145
          %v5236 = vpop.f32.mrf.mxu0
          %v5237 = vadd.f32 %v5163, %v5236
          %v5238 = vpop.f32.mrf.mxu0
          %v5239 = vadd.f32 %v5163, %v5238
          %5240 = vdwg.mxu0
          %v5241 = vmax.f32 %v5222, 0.0
          %v5242 = vmax.f32 %v5224, 0.0
          %v5243 = vmax.f32 %v5227, 0.0
          %v5244 = vmax.f32 %v5229, 0.0
          %v5245 = vmax.f32 %v5232, 0.0
          %v5246 = vmax.f32 %v5234, 0.0
          %v5247 = vmax.f32 %v5237, 0.0
          %v5248 = vmax.f32 %v5239, 0.0
          %v5249 = vld [vmem:[#allocation21 + $0x1] sm:$0x1]
          %v5250 = vld [vmem:[#allocation22 + $0x1] sm:$0x1]
          %5251 = vadd.xlane.f32.xlu0 %v5241
          %v5252 = vpop.xlane.xlu0 %5251
          %5253 = vadd.xlane.f32.xlu0 %v5242
          %v5254 = vpop.xlane.xlu0 %5253
          %5255 = vadd.xlane.f32.xlu0 %v5243
          %v5256 = vpop.xlane.xlu0 %5255
          %5257 = vadd.xlane.f32.xlu0 %v5244
          %v5258 = vpop.xlane.xlu0 %5257
          %5259 = vadd.xlane.f32.xlu0 %v5245
          %v5260 = vpop.xlane.xlu0 %5259
          %5261 = vadd.xlane.f32.xlu0 %v5246
          %v5262 = vpop.xlane.xlu0 %5261
          %5263 = vadd.xlane.f32.xlu0 %v5247
          %v5264 = vpop.xlane.xlu0 %5263
          %5265 = vadd.xlane.f32.xlu0 %v5248
          %v5266 = vpop.xlane.xlu0 %5265
          %v5267 = vmul.f32 %v5252, %v1628
          %v5268 = vmul.f32 %v5254, %v1628
          %v5269 = vmul.f32 %v5256, %v1628
          %v5270 = vmul.f32 %v5258, %v1628
          %v5271 = vmul.f32 %v5260, %v1628
          %v5272 = vmul.f32 %v5262, %v1628
          %v5273 = vmul.f32 %v5264, %v1628
          %v5274 = vmul.f32 %v5266, %v1628
          %v5275 = vsub.f32 %v5241, %v5267
          %v5276 = vsub.f32 %v5242, %v5268
          %v5277 = vsub.f32 %v5243, %v5269
          %v5278 = vsub.f32 %v5244, %v5270
          %v5279 = vsub.f32 %v5245, %v5271
          %v5280 = vsub.f32 %v5246, %v5272
          %v5281 = vsub.f32 %v5247, %v5273
          %v5282 = vsub.f32 %v5248, %v5274
          %v5283 = vmul.f32 %v5275, %v5275
          %v5284 = vmul.f32 %v5276, %v5276
          %v5285 = vmul.f32 %v5277, %v5277
          %v5286 = vmul.f32 %v5278, %v5278
          %v5287 = vmul.f32 %v5279, %v5279
          %v5288 = vmul.f32 %v5280, %v5280
          %v5289 = vmul.f32 %v5281, %v5281
          %v5290 = vmul.f32 %v5282, %v5282
          %5291 = vadd.xlane.f32.xlu0 %v5283
          %v5292 = vpop.xlane.xlu0 %5291
          %5293 = vadd.xlane.f32.xlu0 %v5284
          %v5294 = vpop.xlane.xlu0 %5293
          %5295 = vadd.xlane.f32.xlu0 %v5285
          %v5296 = vpop.xlane.xlu0 %5295
          %5297 = vadd.xlane.f32.xlu0 %v5286
          %v5298 = vpop.xlane.xlu0 %5297
          %5299 = vadd.xlane.f32.xlu0 %v5287
          %v5300 = vpop.xlane.xlu0 %5299
          %5301 = vadd.xlane.f32.xlu0 %v5288
          %v5302 = vpop.xlane.xlu0 %5301
          %5303 = vadd.xlane.f32.xlu0 %v5289
          %v5304 = vpop.xlane.xlu0 %5303
          %5305 = vadd.xlane.f32.xlu0 %v5290
          %v5306 = vpop.xlane.xlu0 %5305
          %v5307 = vmul.f32 %v5292, %v1628
          %v5308 = vmul.f32 %v5294, %v1628
          %v5309 = vmul.f32 %v5296, %v1628
          %v5310 = vmul.f32 %v5298, %v1628
          %v5311 = vmul.f32 %v5300, %v1628
          %v5312 = vmul.f32 %v5302, %v1628
          %v5313 = vmul.f32 %v5304, %v1628
          %v5314 = vmul.f32 %v5306, %v1628
          %v5315 = vadd.f32 %v5307, 1e-05
          %v5316 = vadd.f32 %v5308, 1e-05
          %v5317 = vadd.f32 %v5309, 1e-05
          %v5318 = vadd.f32 %v5310, 1e-05
          %v5319 = vadd.f32 %v5311, 1e-05
          %v5320 = vadd.f32 %v5312, 1e-05
          %v5321 = vadd.f32 %v5313, 1e-05
          %v5322 = vadd.f32 %v5314, 1e-05
          %v5323 = vrsqrt.pop %v5315
          %v5324 = vmul.f32 %v5323, %v5315
          %v5325 = vmul.f32 %v5324, %v5323
          %v5326 = vmul.f32 0.5, %v5325
          %v5327 = vsub.f32 1.5, %v5326
          %v5328 = vmul.f32 %v5323, %v5327
          %vm5329 = vweird.f32 %v5315
          %vm5330 = vweird.f32 %v5323
          %vm5331 = vmor %vm5329, %vm5330
          %v5332 = vsel %vm5331, %v5323, %v5328
          %v5333 = vrsqrt.pop %v5316
          %v5334 = vmul.f32 %v5333, %v5316
          %v5335 = vmul.f32 %v5334, %v5333
          %v5336 = vmul.f32 0.5, %v5335
          %v5337 = vsub.f32 1.5, %v5336
          %v5338 = vmul.f32 %v5333, %v5337
          %vm5339 = vweird.f32 %v5316
          %vm5340 = vweird.f32 %v5333
          %vm5341 = vmor %vm5339, %vm5340
          %v5342 = vsel %vm5341, %v5333, %v5338
          %v5343 = vrsqrt.pop %v5317
          %v5344 = vmul.f32 %v5343, %v5317
          %v5345 = vmul.f32 %v5344, %v5343
          %v5346 = vmul.f32 0.5, %v5345
          %v5347 = vsub.f32 1.5, %v5346
          %v5348 = vmul.f32 %v5343, %v5347
          %vm5349 = vweird.f32 %v5317
          %vm5350 = vweird.f32 %v5343
          %vm5351 = vmor %vm5349, %vm5350
          %v5352 = vsel %vm5351, %v5343, %v5348
          %v5353 = vrsqrt.pop %v5318
          %v5354 = vmul.f32 %v5353, %v5318
          %v5355 = vmul.f32 %v5354, %v5353
          %v5356 = vmul.f32 0.5, %v5355
          %v5357 = vsub.f32 1.5, %v5356
          %v5358 = vmul.f32 %v5353, %v5357
          %vm5359 = vweird.f32 %v5318
          %vm5360 = vweird.f32 %v5353
          %vm5361 = vmor %vm5359, %vm5360
          %v5362 = vsel %vm5361, %v5353, %v5358
          %v5363 = vrsqrt.pop %v5319
          %v5364 = vmul.f32 %v5363, %v5319
          %v5365 = vmul.f32 %v5364, %v5363
          %v5366 = vmul.f32 0.5, %v5365
          %v5367 = vsub.f32 1.5, %v5366
          %v5368 = vmul.f32 %v5363, %v5367
          %vm5369 = vweird.f32 %v5319
          %vm5370 = vweird.f32 %v5363
          %vm5371 = vmor %vm5369, %vm5370
          %v5372 = vsel %vm5371, %v5363, %v5368
          %v5373 = vrsqrt.pop %v5320
          %v5374 = vmul.f32 %v5373, %v5320
          %v5375 = vmul.f32 %v5374, %v5373
          %v5376 = vmul.f32 0.5, %v5375
          %v5377 = vsub.f32 1.5, %v5376
          %v5378 = vmul.f32 %v5373, %v5377
          %vm5379 = vweird.f32 %v5320
          %vm5380 = vweird.f32 %v5373
          %vm5381 = vmor %vm5379, %vm5380
          %v5382 = vsel %vm5381, %v5373, %v5378
          %v5383 = vrsqrt.pop %v5321
          %v5384 = vmul.f32 %v5383, %v5321
          %v5385 = vmul.f32 %v5384, %v5383
          %v5386 = vmul.f32 0.5, %v5385
          %v5387 = vsub.f32 1.5, %v5386
          %v5388 = vmul.f32 %v5383, %v5387
          %vm5389 = vweird.f32 %v5321
          %vm5390 = vweird.f32 %v5383
          %vm5391 = vmor %vm5389, %vm5390
          %v5392 = vsel %vm5391, %v5383, %v5388
          %v5393 = vrsqrt.pop %v5322
          %v5394 = vmul.f32 %v5393, %v5322
          %v5395 = vmul.f32 %v5394, %v5393
          %v5396 = vmul.f32 0.5, %v5395
          %v5397 = vsub.f32 1.5, %v5396
          %v5398 = vmul.f32 %v5393, %v5397
          %vm5399 = vweird.f32 %v5322
          %vm5400 = vweird.f32 %v5393
          %vm5401 = vmor %vm5399, %vm5400
          %v5402 = vsel %vm5401, %v5393, %v5398
          %v5403 = vmul.f32 %v5275, %v5332
          %v5404 = vmul.f32 %v5276, %v5342
          %v5405 = vmul.f32 %v5277, %v5352
          %v5406 = vmul.f32 %v5278, %v5362
          %v5407 = vmul.f32 %v5279, %v5372
          %v5408 = vmul.f32 %v5280, %v5382
          %v5409 = vmul.f32 %v5281, %v5392
          %v5410 = vmul.f32 %v5282, %v5402
          %v5411 = vperm.slane %v5249, 0
          %v5412 = vmul.f32 %v5403, %v5411
          %v5413 = vmul.f32 %v5404, %v5411
          %v5414 = vmul.f32 %v5405, %v5411
          %v5415 = vmul.f32 %v5406, %v5411
          %v5416 = vmul.f32 %v5407, %v5411
          %v5417 = vmul.f32 %v5408, %v5411
          %v5418 = vmul.f32 %v5409, %v5411
          %v5419 = vmul.f32 %v5410, %v5411
          %v5420 = vperm.slane %v5250, 0
          %v5421 = vadd.f32 %v5412, %v5420
          %v5422 = vadd.f32 %v5413, %v5420
          %v5423 = vadd.f32 %v5414, %v5420
          %v5424 = vadd.f32 %v5415, %v5420
          %v5425 = vadd.f32 %v5416, %v5420
          %v5426 = vadd.f32 %v5417, %v5420
          %v5427 = vadd.f32 %v5418, %v5420
          %v5428 = vadd.f32 %v5419, %v5420
          %v5429 = vpack.c.bf16 %v5422, %v5421
          %v5430 = vpack.c.bf16 %v5424, %v5423
          %v5431 = vpack.c.bf16 %v5426, %v5425
          %v5432 = vpack.c.bf16 %v5428, %v5427
          %s5433 = scalar_lea.vmem [#allocation19], 64
          %v5434 = vld [vmem:[%s5433] sm:$0xf]
          %v5435 = vld [vmem:[%s5433 + $0x4] sm:$0xf]
          %v5436 = vld [vmem:[%s5433 + $0x8] sm:$0xf]
          %v5437 = vld [vmem:[%s5433 + $0xc] sm:$0xf]
          %v5438 = vld [vmem:[%s5433 + $0x10] sm:$0xf]
          %v5439 = vld [vmem:[%s5433 + $0x14] sm:$0xf]
          %v5440 = vld [vmem:[%s5433 + $0x18] sm:$0xf]
          %v5441 = vld [vmem:[%s5433 + $0x1c] sm:$0xf]
          %v5442 = vld [vmem:[%s5433 + $0x20] sm:$0xf]
          %v5443 = vld [vmem:[%s5433 + $0x24] sm:$0xf]
          %v5444 = vld [vmem:[%s5433 + $0x28] sm:$0xf]
          %v5445 = vld [vmem:[%s5433 + $0x2c] sm:$0xf]
          %v5446 = vld [vmem:[%s5433 + $0x30] sm:$0xf]
          %v5447 = vld [vmem:[%s5433 + $0x34] sm:$0xf]
          %v5448 = vld [vmem:[%s5433 + $0x38] sm:$0xf]
          %v5449 = vld [vmem:[%s5433 + $0x3c] sm:$0xf]
          %v5450 = vld [vmem:[%s10 + $0x2] sm:$0x1]
          %v5451 = vperm.slane %v5450, 0
          %v5468 = vunpack.c.l.b16 %v5434
          %v5469 = vunpack.c.l.b16 %v5435
          %v5470 = vunpack.c.l.b16 %v5436
          %v5471 = vunpack.c.l.b16 %v5437
          %v5472 = vunpack.c.l.b16 %v5438
          %v5473 = vunpack.c.l.b16 %v5439
          %v5474 = vunpack.c.l.b16 %v5440
          %v5475 = vunpack.c.l.b16 %v5441
          %v5476 = vunpack.c.l.b16 %v5442
          %v5477 = vunpack.c.l.b16 %v5443
          %v5478 = vunpack.c.l.b16 %v5444
          %v5479 = vunpack.c.l.b16 %v5445
          %v5480 = vunpack.c.l.b16 %v5446
          %v5481 = vunpack.c.l.b16 %v5447
          %v5482 = vunpack.c.l.b16 %v5448
          %v5483 = vunpack.c.l.b16 %v5449
          %v5484 = vpack.c.b16 %v5469, %v5468
          %v5485 = vpack.c.b16 %v5471, %v5470
          %v5486 = vpack.c.b16 %v5473, %v5472
          %v5487 = vpack.c.b16 %v5475, %v5474
          %v5488 = vpack.c.b16 %v5477, %v5476
          %v5489 = vpack.c.b16 %v5479, %v5478
          %v5490 = vpack.c.b16 %v5481, %v5480
          %v5491 = vpack.c.b16 %v5483, %v5482
          %5500 = vmatpush.bf16.msra.mxu0 %v5491
          %5501 = vmatpush.bf16.msra.mxu0 %v5490
          %5502 = vmatpush.bf16.msra.mxu0 %v5489
          %5503 = vmatpush.bf16.msra.mxu0 %v5488
          %5504 = vmatpush.bf16.msra.mxu0 %v5487
          %5505 = vmatpush.bf16.msra.mxu0 %v5486
          %5506 = vmatpush.bf16.msra.mxu0 %v5485
          %5507 = vmatpush.bf16.msra.mxu0 %v5484
          %5508 = vmatmul.bf16.gmra.mxu0 %v5429
          %v5509 = vpop.f32.mrf.mxu0
          %v5510 = vadd.f32 %v5451, %v5509
          %v5511 = vpop.f32.mrf.mxu0
          %v5512 = vadd.f32 %v5451, %v5511
          %5513 = vmatmul.bf16.gmra.mxu0 %v5430
          %v5514 = vpop.f32.mrf.mxu0
          %v5515 = vadd.f32 %v5451, %v5514
          %v5516 = vpop.f32.mrf.mxu0
          %v5517 = vadd.f32 %v5451, %v5516
          %5518 = vmatmul.bf16.gmra.mxu0 %v5431
          %v5519 = vpop.f32.mrf.mxu0
          %v5520 = vadd.f32 %v5451, %v5519
          %v5521 = vpop.f32.mrf.mxu0
          %v5522 = vadd.f32 %v5451, %v5521
          %5523 = vmatmul.bf16.gmra.mxu0 %v5432
          %v5524 = vpop.f32.mrf.mxu0
          %v5525 = vadd.f32 %v5451, %v5524
          %v5526 = vpop.f32.mrf.mxu0
          %v5527 = vadd.f32 %v5451, %v5526
          %5528 = vdwg.mxu0
          %v5529 = vpack.c.bf16 %v5512, %v5510
          %v5530 = vpack.c.bf16 %v5517, %v5515
          %v5531 = vpack.c.bf16 %v5522, %v5520
          %v5532 = vpack.c.bf16 %v5527, %v5525
          %s5533 = scalar_lea.vmem [#allocation19], 128
          %v5534 = vld [vmem:[%s5533] sm:$0xf]
          %v5535 = vld [vmem:[%s5533 + $0x4] sm:$0xf]
          %v5536 = vld [vmem:[%s5533 + $0x8] sm:$0xf]
          %v5537 = vld [vmem:[%s5533 + $0xc] sm:$0xf]
          %v5538 = vld [vmem:[%s5533 + $0x10] sm:$0xf]
          %v5539 = vld [vmem:[%s5533 + $0x14] sm:$0xf]
          %v5540 = vld [vmem:[%s5533 + $0x18] sm:$0xf]
          %v5541 = vld [vmem:[%s5533 + $0x1c] sm:$0xf]
          %v5542 = vld [vmem:[%s5533 + $0x20] sm:$0xf]
          %v5543 = vld [vmem:[%s5533 + $0x24] sm:$0xf]
          %v5544 = vld [vmem:[%s5533 + $0x28] sm:$0xf]
          %v5545 = vld [vmem:[%s5533 + $0x2c] sm:$0xf]
          %v5546 = vld [vmem:[%s5533 + $0x30] sm:$0xf]
          %v5547 = vld [vmem:[%s5533 + $0x34] sm:$0xf]
          %v5548 = vld [vmem:[%s5533 + $0x38] sm:$0xf]
          %v5549 = vld [vmem:[%s5533 + $0x3c] sm:$0xf]
          %v5550 = vld [vmem:[%s10 + $0x3] sm:$0x1]
          %v5551 = vperm.slane %v5550, 0
          %v5568 = vunpack.c.l.b16 %v5534
          %v5569 = vunpack.c.l.b16 %v5535
          %v5570 = vunpack.c.l.b16 %v5536
          %v5571 = vunpack.c.l.b16 %v5537
          %v5572 = vunpack.c.l.b16 %v5538
          %v5573 = vunpack.c.l.b16 %v5539
          %v5574 = vunpack.c.l.b16 %v5540
          %v5575 = vunpack.c.l.b16 %v5541
          %v5576 = vunpack.c.l.b16 %v5542
          %v5577 = vunpack.c.l.b16 %v5543
          %v5578 = vunpack.c.l.b16 %v5544
          %v5579 = vunpack.c.l.b16 %v5545
          %v5580 = vunpack.c.l.b16 %v5546
          %v5581 = vunpack.c.l.b16 %v5547
          %v5582 = vunpack.c.l.b16 %v5548
          %v5583 = vunpack.c.l.b16 %v5549
          %v5584 = vpack.c.b16 %v5569, %v5568
          %v5585 = vpack.c.b16 %v5571, %v5570
          %v5586 = vpack.c.b16 %v5573, %v5572
          %v5587 = vpack.c.b16 %v5575, %v5574
          %v5588 = vpack.c.b16 %v5577, %v5576
          %v5589 = vpack.c.b16 %v5579, %v5578
          %v5590 = vpack.c.b16 %v5581, %v5580
          %v5591 = vpack.c.b16 %v5583, %v5582
          %5600 = vmatpush.bf16.msra.mxu0 %v5591
          %5601 = vmatpush.bf16.msra.mxu0 %v5590
          %5602 = vmatpush.bf16.msra.mxu0 %v5589
          %5603 = vmatpush.bf16.msra.mxu0 %v5588
          %5604 = vmatpush.bf16.msra.mxu0 %v5587
          %5605 = vmatpush.bf16.msra.mxu0 %v5586
          %5606 = vmatpush.bf16.msra.mxu0 %v5585
          %5607 = vmatpush.bf16.msra.mxu0 %v5584
          %5608 = vmatmul.bf16.gmra.mxu0 %v5529
          %v5609 = vpop.f32.mrf.mxu0
          %v5610 = vadd.f32 %v5551, %v5609
          %v5611 = vpop.f32.mrf.mxu0
          %v5612 = vadd.f32 %v5551, %v5611
          %5613 = vmatmul.bf16.gmra.mxu0 %v5530
          %v5614 = vpop.f32.mrf.mxu0
          %v5615 = vadd.f32 %v5551, %v5614
          %v5616 = vpop.f32.mrf.mxu0
          %v5617 = vadd.f32 %v5551, %v5616
          %5618 = vmatmul.bf16.gmra.mxu0 %v5531
          %v5619 = vpop.f32.mrf.mxu0
          %v5620 = vadd.f32 %v5551, %v5619
          %v5621 = vpop.f32.mrf.mxu0
          %v5622 = vadd.f32 %v5551, %v5621
          %5623 = vmatmul.bf16.gmra.mxu0 %v5532
          %v5624 = vpop.f32.mrf.mxu0
          %v5625 = vadd.f32 %v5551, %v5624
          %v5626 = vpop.f32.mrf.mxu0
          %v5627 = vadd.f32 %v5551, %v5626
          %5628 = vdwg.mxu0
          %v5629 = vmax.f32 %v5610, 0.0
          %v5630 = vmax.f32 %v5612, 0.0
          %v5631 = vmax.f32 %v5615, 0.0
          %v5632 = vmax.f32 %v5617, 0.0
          %v5633 = vmax.f32 %v5620, 0.0
          %v5634 = vmax.f32 %v5622, 0.0
          %v5635 = vmax.f32 %v5625, 0.0
          %v5636 = vmax.f32 %v5627, 0.0
          %v5637 = vld [vmem:[#allocation21 + $0x2] sm:$0x1]
          %v5638 = vld [vmem:[#allocation22 + $0x2] sm:$0x1]
          %5639 = vadd.xlane.f32.xlu0 %v5629
          %v5640 = vpop.xlane.xlu0 %5639
          %5641 = vadd.xlane.f32.xlu0 %v5630
          %v5642 = vpop.xlane.xlu0 %5641
          %5643 = vadd.xlane.f32.xlu0 %v5631
          %v5644 = vpop.xlane.xlu0 %5643
          %5645 = vadd.xlane.f32.xlu0 %v5632
          %v5646 = vpop.xlane.xlu0 %5645
          %5647 = vadd.xlane.f32.xlu0 %v5633
          %v5648 = vpop.xlane.xlu0 %5647
          %5649 = vadd.xlane.f32.xlu0 %v5634
          %v5650 = vpop.xlane.xlu0 %5649
          %5651 = vadd.xlane.f32.xlu0 %v5635
          %v5652 = vpop.xlane.xlu0 %5651
          %5653 = vadd.xlane.f32.xlu0 %v5636
          %v5654 = vpop.xlane.xlu0 %5653
          %v5655 = vmul.f32 %v5640, %v1628
          %v5656 = vmul.f32 %v5642, %v1628
          %v5657 = vmul.f32 %v5644, %v1628
          %v5658 = vmul.f32 %v5646, %v1628
          %v5659 = vmul.f32 %v5648, %v1628
          %v5660 = vmul.f32 %v5650, %v1628
          %v5661 = vmul.f32 %v5652, %v1628
          %v5662 = vmul.f32 %v5654, %v1628
          %v5663 = vsub.f32 %v5629, %v5655
          %v5664 = vsub.f32 %v5630, %v5656
          %v5665 = vsub.f32 %v5631, %v5657
          %v5666 = vsub.f32 %v5632, %v5658
          %v5667 = vsub.f32 %v5633, %v5659
          %v5668 = vsub.f32 %v5634, %v5660
          %v5669 = vsub.f32 %v5635, %v5661
          %v5670 = vsub.f32 %v5636, %v5662
          %v5671 = vmul.f32 %v5663, %v5663
          %v5672 = vmul.f32 %v5664, %v5664
          %v5673 = vmul.f32 %v5665, %v5665
          %v5674 = vmul.f32 %v5666, %v5666
          %v5675 = vmul.f32 %v5667, %v5667
          %v5676 = vmul.f32 %v5668, %v5668
          %v5677 = vmul.f32 %v5669, %v5669
          %v5678 = vmul.f32 %v5670, %v5670
          %5679 = vadd.xlane.f32.xlu0 %v5671
          %v5680 = vpop.xlane.xlu0 %5679
          %5681 = vadd.xlane.f32.xlu0 %v5672
          %v5682 = vpop.xlane.xlu0 %5681
          %5683 = vadd.xlane.f32.xlu0 %v5673
          %v5684 = vpop.xlane.xlu0 %5683
          %5685 = vadd.xlane.f32.xlu0 %v5674
          %v5686 = vpop.xlane.xlu0 %5685
          %5687 = vadd.xlane.f32.xlu0 %v5675
          %v5688 = vpop.xlane.xlu0 %5687
          %5689 = vadd.xlane.f32.xlu0 %v5676
          %v5690 = vpop.xlane.xlu0 %5689
          %5691 = vadd.xlane.f32.xlu0 %v5677
          %v5692 = vpop.xlane.xlu0 %5691
          %5693 = vadd.xlane.f32.xlu0 %v5678
          %v5694 = vpop.xlane.xlu0 %5693
          %v5695 = vmul.f32 %v5680, %v1628
          %v5696 = vmul.f32 %v5682, %v1628
          %v5697 = vmul.f32 %v5684, %v1628
          %v5698 = vmul.f32 %v5686, %v1628
          %v5699 = vmul.f32 %v5688, %v1628
          %v5700 = vmul.f32 %v5690, %v1628
          %v5701 = vmul.f32 %v5692, %v1628
          %v5702 = vmul.f32 %v5694, %v1628
          %v5703 = vadd.f32 %v5695, 1e-05
          %v5704 = vadd.f32 %v5696, 1e-05
          %v5705 = vadd.f32 %v5697, 1e-05
          %v5706 = vadd.f32 %v5698, 1e-05
          %v5707 = vadd.f32 %v5699, 1e-05
          %v5708 = vadd.f32 %v5700, 1e-05
          %v5709 = vadd.f32 %v5701, 1e-05
          %v5710 = vadd.f32 %v5702, 1e-05
          %v5711 = vrsqrt.pop %v5703
          %v5712 = vmul.f32 %v5711, %v5703
          %v5713 = vmul.f32 %v5712, %v5711
          %v5714 = vmul.f32 0.5, %v5713
          %v5715 = vsub.f32 1.5, %v5714
          %v5716 = vmul.f32 %v5711, %v5715
          %vm5717 = vweird.f32 %v5703
          %vm5718 = vweird.f32 %v5711
          %vm5719 = vmor %vm5717, %vm5718
          %v5720 = vsel %vm5719, %v5711, %v5716
          %v5721 = vrsqrt.pop %v5704
          %v5722 = vmul.f32 %v5721, %v5704
          %v5723 = vmul.f32 %v5722, %v5721
          %v5724 = vmul.f32 0.5, %v5723
          %v5725 = vsub.f32 1.5, %v5724
          %v5726 = vmul.f32 %v5721, %v5725
          %vm5727 = vweird.f32 %v5704
          %vm5728 = vweird.f32 %v5721
          %vm5729 = vmor %vm5727, %vm5728
          %v5730 = vsel %vm5729, %v5721, %v5726
          %v5731 = vrsqrt.pop %v5705
          %v5732 = vmul.f32 %v5731, %v5705
          %v5733 = vmul.f32 %v5732, %v5731
          %v5734 = vmul.f32 0.5, %v5733
          %v5735 = vsub.f32 1.5, %v5734
          %v5736 = vmul.f32 %v5731, %v5735
          %vm5737 = vweird.f32 %v5705
          %vm5738 = vweird.f32 %v5731
          %vm5739 = vmor %vm5737, %vm5738
          %v5740 = vsel %vm5739, %v5731, %v5736
          %v5741 = vrsqrt.pop %v5706
          %v5742 = vmul.f32 %v5741, %v5706
          %v5743 = vmul.f32 %v5742, %v5741
          %v5744 = vmul.f32 0.5, %v5743
          %v5745 = vsub.f32 1.5, %v5744
          %v5746 = vmul.f32 %v5741, %v5745
          %vm5747 = vweird.f32 %v5706
          %vm5748 = vweird.f32 %v5741
          %vm5749 = vmor %vm5747, %vm5748
          %v5750 = vsel %vm5749, %v5741, %v5746
          %v5751 = vrsqrt.pop %v5707
          %v5752 = vmul.f32 %v5751, %v5707
          %v5753 = vmul.f32 %v5752, %v5751
          %v5754 = vmul.f32 0.5, %v5753
          %v5755 = vsub.f32 1.5, %v5754
          %v5756 = vmul.f32 %v5751, %v5755
          %vm5757 = vweird.f32 %v5707
          %vm5758 = vweird.f32 %v5751
          %vm5759 = vmor %vm5757, %vm5758
          %v5760 = vsel %vm5759, %v5751, %v5756
          %v5761 = vrsqrt.pop %v5708
          %v5762 = vmul.f32 %v5761, %v5708
          %v5763 = vmul.f32 %v5762, %v5761
          %v5764 = vmul.f32 0.5, %v5763
          %v5765 = vsub.f32 1.5, %v5764
          %v5766 = vmul.f32 %v5761, %v5765
          %vm5767 = vweird.f32 %v5708
          %vm5768 = vweird.f32 %v5761
          %vm5769 = vmor %vm5767, %vm5768
          %v5770 = vsel %vm5769, %v5761, %v5766
          %v5771 = vrsqrt.pop %v5709
          %v5772 = vmul.f32 %v5771, %v5709
          %v5773 = vmul.f32 %v5772, %v5771
          %v5774 = vmul.f32 0.5, %v5773
          %v5775 = vsub.f32 1.5, %v5774
          %v5776 = vmul.f32 %v5771, %v5775
          %vm5777 = vweird.f32 %v5709
          %vm5778 = vweird.f32 %v5771
          %vm5779 = vmor %vm5777, %vm5778
          %v5780 = vsel %vm5779, %v5771, %v5776
          %v5781 = vrsqrt.pop %v5710
          %v5782 = vmul.f32 %v5781, %v5710
          %v5783 = vmul.f32 %v5782, %v5781
          %v5784 = vmul.f32 0.5, %v5783
          %v5785 = vsub.f32 1.5, %v5784
          %v5786 = vmul.f32 %v5781, %v5785
          %vm5787 = vweird.f32 %v5710
          %vm5788 = vweird.f32 %v5781
          %vm5789 = vmor %vm5787, %vm5788
          %v5790 = vsel %vm5789, %v5781, %v5786
          %v5791 = vmul.f32 %v5663, %v5720
          %v5792 = vmul.f32 %v5664, %v5730
          %v5793 = vmul.f32 %v5665, %v5740
          %v5794 = vmul.f32 %v5666, %v5750
          %v5795 = vmul.f32 %v5667, %v5760
          %v5796 = vmul.f32 %v5668, %v5770
          %v5797 = vmul.f32 %v5669, %v5780
          %v5798 = vmul.f32 %v5670, %v5790
          %v5799 = vperm.slane %v5637, 0
          %v5800 = vmul.f32 %v5791, %v5799
          %v5801 = vmul.f32 %v5792, %v5799
          %v5802 = vmul.f32 %v5793, %v5799
          %v5803 = vmul.f32 %v5794, %v5799
          %v5804 = vmul.f32 %v5795, %v5799
          %v5805 = vmul.f32 %v5796, %v5799
          %v5806 = vmul.f32 %v5797, %v5799
          %v5807 = vmul.f32 %v5798, %v5799
          %v5808 = vperm.slane %v5638, 0
          %v5809 = vadd.f32 %v5800, %v5808
          %v5810 = vadd.f32 %v5801, %v5808
          %v5811 = vadd.f32 %v5802, %v5808
          %v5812 = vadd.f32 %v5803, %v5808
          %v5813 = vadd.f32 %v5804, %v5808
          %v5814 = vadd.f32 %v5805, %v5808
          %v5815 = vadd.f32 %v5806, %v5808
          %v5816 = vadd.f32 %v5807, %v5808
          %v5817 = vpack.c.bf16 %v5810, %v5809
          %v5818 = vpack.c.bf16 %v5812, %v5811
          %v5819 = vpack.c.bf16 %v5814, %v5813
          %v5820 = vpack.c.bf16 %v5816, %v5815
          %s5821 = scalar_lea.vmem [#allocation19], 192
          %v5822 = vld [vmem:[%s5821] sm:$0xf]
          %v5823 = vld [vmem:[%s5821 + $0x4] sm:$0xf]
          %v5824 = vld [vmem:[%s5821 + $0x8] sm:$0xf]
          %v5825 = vld [vmem:[%s5821 + $0xc] sm:$0xf]
          %v5826 = vld [vmem:[%s5821 + $0x10] sm:$0xf]
          %v5827 = vld [vmem:[%s5821 + $0x14] sm:$0xf]
          %v5828 = vld [vmem:[%s5821 + $0x18] sm:$0xf]
          %v5829 = vld [vmem:[%s5821 + $0x1c] sm:$0xf]
          %v5830 = vld [vmem:[%s5821 + $0x20] sm:$0xf]
          %v5831 = vld [vmem:[%s5821 + $0x24] sm:$0xf]
          %v5832 = vld [vmem:[%s5821 + $0x28] sm:$0xf]
          %v5833 = vld [vmem:[%s5821 + $0x2c] sm:$0xf]
          %v5834 = vld [vmem:[%s5821 + $0x30] sm:$0xf]
          %v5835 = vld [vmem:[%s5821 + $0x34] sm:$0xf]
          %v5836 = vld [vmem:[%s5821 + $0x38] sm:$0xf]
          %v5837 = vld [vmem:[%s5821 + $0x3c] sm:$0xf]
          %v5838 = vld [vmem:[%s10 + $0x4] sm:$0x1]
          %v5839 = vperm.slane %v5838, 0
          %v5856 = vunpack.c.l.b16 %v5822
          %v5857 = vunpack.c.l.b16 %v5823
          %v5858 = vunpack.c.l.b16 %v5824
          %v5859 = vunpack.c.l.b16 %v5825
          %v5860 = vunpack.c.l.b16 %v5826
          %v5861 = vunpack.c.l.b16 %v5827
          %v5862 = vunpack.c.l.b16 %v5828
          %v5863 = vunpack.c.l.b16 %v5829
          %v5864 = vunpack.c.l.b16 %v5830
          %v5865 = vunpack.c.l.b16 %v5831
          %v5866 = vunpack.c.l.b16 %v5832
          %v5867 = vunpack.c.l.b16 %v5833
          %v5868 = vunpack.c.l.b16 %v5834
          %v5869 = vunpack.c.l.b16 %v5835
          %v5870 = vunpack.c.l.b16 %v5836
          %v5871 = vunpack.c.l.b16 %v5837
          %v5872 = vpack.c.b16 %v5857, %v5856
          %v5873 = vpack.c.b16 %v5859, %v5858
          %v5874 = vpack.c.b16 %v5861, %v5860
          %v5875 = vpack.c.b16 %v5863, %v5862
          %v5876 = vpack.c.b16 %v5865, %v5864
          %v5877 = vpack.c.b16 %v5867, %v5866
          %v5878 = vpack.c.b16 %v5869, %v5868
          %v5879 = vpack.c.b16 %v5871, %v5870
          %5888 = vmatpush.bf16.msra.mxu0 %v5879
          %5889 = vmatpush.bf16.msra.mxu0 %v5878
          %5890 = vmatpush.bf16.msra.mxu0 %v5877
          %5891 = vmatpush.bf16.msra.mxu0 %v5876
          %5892 = vmatpush.bf16.msra.mxu0 %v5875
          %5893 = vmatpush.bf16.msra.mxu0 %v5874
          %5894 = vmatpush.bf16.msra.mxu0 %v5873
          %5895 = vmatpush.bf16.msra.mxu0 %v5872
          %5896 = vmatmul.bf16.gmra.mxu0 %v5817
          %v5897 = vpop.f32.mrf.mxu0
          %v5898 = vadd.f32 %v5839, %v5897
          %v5899 = vpop.f32.mrf.mxu0
          %v5900 = vadd.f32 %v5839, %v5899
          %5901 = vmatmul.bf16.gmra.mxu0 %v5818
          %v5902 = vpop.f32.mrf.mxu0
          %v5903 = vadd.f32 %v5839, %v5902
          %v5904 = vpop.f32.mrf.mxu0
          %v5905 = vadd.f32 %v5839, %v5904
          %5906 = vmatmul.bf16.gmra.mxu0 %v5819
          %v5907 = vpop.f32.mrf.mxu0
          %v5908 = vadd.f32 %v5839, %v5907
          %v5909 = vpop.f32.mrf.mxu0
          %v5910 = vadd.f32 %v5839, %v5909
          %5911 = vmatmul.bf16.gmra.mxu0 %v5820
          %v5912 = vpop.f32.mrf.mxu0
          %v5913 = vadd.f32 %v5839, %v5912
          %v5914 = vpop.f32.mrf.mxu0
          %v5915 = vadd.f32 %v5839, %v5914
          %5916 = vdwg.mxu0
          %v5917 = vadd.f32 %v4831, %v5898
          %v5918 = vadd.f32 %v4832, %v5900
          %v5919 = vadd.f32 %v4833, %v5903
          %v5920 = vadd.f32 %v4834, %v5905
          %v5921 = vadd.f32 %v4835, %v5908
          %v5922 = vadd.f32 %v4836, %v5910
          %v5923 = vadd.f32 %v4837, %v5913
          %v5924 = vadd.f32 %v4838, %v5915
          %5925 = vst [vmem:[#allocation25] sm:$0xff] %v5917
          %5926 = vst [vmem:[#allocation25 + $0x8] sm:$0xff] %v5918
          %5927 = vst [vmem:[#allocation25 + $0x10] sm:$0xff] %v5919
          %5928 = vst [vmem:[#allocation25 + $0x18] sm:$0xff] %v5920
          %5929 = vst [vmem:[#allocation25 + $0x20] sm:$0xff] %v5921
          %5930 = vst [vmem:[#allocation25 + $0x28] sm:$0xff] %v5922
          %5931 = vst [vmem:[#allocation25 + $0x30] sm:$0xff] %v5923
          %5932 = vst [vmem:[#allocation25 + $0x38] sm:$0xff] %v5924
        $region128: #{tpu_custom_call.1} parent=71 // pred_fallthru
          _
        %s5933 = sand.u32 %s332, 1
        %s5934 = scalar_lea.sflag [#allocation6], %s5933
        %s5935 = sand.u32 %s332, 1
        %s5936 = smul.addr %s5935, 256
        %s5937 = scalar_lea.vmem [#allocation24], %s5936
        // Predicated region
        $region129: #{tpu_custom_call.1} parent=71 // pred_check
          %p5938 = pneg %p342
        $region130: #{tpu_custom_call.1} parent=71 // pred_check_branch
          %5940 = sbr.rel (%p5938) target = $region132
        $region131: #{tpu_custom_call.1} parent=71 // pred_region
          %s5941 = smul.u32 32, %s41
          %5943 = vsyncadd %s5934, 0
          %s5944 = smul.addr %s5941, 8
          %s5945 = scalar_lea.hbm %s13, %s5944
          %s5946 = sshll.u32 %s5937, 4
          %s5947 = int_to_ptr.vmem [resolvable:$true] %s5946
          %s5948 = sshll.u32 %s5945, 4
          %s5949 = int_to_ptr.hbm [resolvable:$true] %s5948
          %5954 = dma.vmem_to_hbm [thread:$0]  %s5947, 4096, %s5949, %s5934, 128, 128, 8
        $region132: #{tpu_custom_call.1} parent=71 // pred_fallthru
          _
        // Predicated region
        $region133: #{tpu_custom_call.1} parent=71 // pred_check
          %p5955 = pneg %p363
        $region134: #{tpu_custom_call.1} parent=71 // pred_check_branch
          %5957 = sbr.rel (%p5955) target = $region136
        $region135: #{tpu_custom_call.1} parent=71 // pred_region
          %5959 = vsyncadd [#allocation26], 0
          %s5960 = sshll.u32 [#allocation25], 4
          %s5961 = int_to_ptr.vmem [resolvable:$true] %s5960
          %s5962 = sshll.u32 %s14, 4
          %s5963 = int_to_ptr.hbm [resolvable:$true] %s5962
          %5968 = dma.vmem_to_hbm [thread:$0]  %s5961, 1024, %s5963, [#allocation26], 128, 128, 8
        $region136: #{tpu_custom_call.1} parent=71 // pred_fallthru
          _
        // Predicated region
        $region137: #{tpu_custom_call.1} parent=71 // pred_check
          %p5969 = pneg %p363
        $region138: #{tpu_custom_call.1} parent=71 // pred_check_branch
          %5971 = sbr.rel (%p5969) target = $region140
        $region139: #{tpu_custom_call.1} parent=71 // pred_region
          %5973 = dma.done [#allocation26], 1024
        $region140: #{tpu_custom_call.1} parent=71 // pred_fallthru
          _
      $region72: #{tpu_custom_call.1} parent=5 // pred_fallthru
        _
      %p5974 = scmp.le.s32.totalorder 2, %s36
      // Predicated region
      $region141: #{tpu_custom_call.1} parent=5 // pred_check
        %p5975 = pneg %p5974
      $region142: #{tpu_custom_call.1} parent=5 // pred_check_branch
        %5977 = sbr.rel (%p5975) target = $region144
      $region143: #{tpu_custom_call.1} parent=5 // pred_region
        %s5978 = ssub.s32 %s36, 2
        // Predicated region
        $region145: #{tpu_custom_call.1} parent=143 // pred_check
          %p5979 = pneg %p348
        $region146: #{tpu_custom_call.1} parent=143 // pred_check_branch
          %5981 = sbr.rel (%p5979) target = $region148
        $region147: #{tpu_custom_call.1} parent=143 // pred_region
          %s5982 = sand.u32 %s333, 1
          %s5983 = scalar_lea.sflag [#allocation6], %s5982
          %s5984 = sand.u32 %s333, 1
          %s5985 = smul.addr %s5984, 256
          %s5986 = scalar_lea.vmem [#allocation24], %s5985
          %5988 = dma.done %s5983, 4096
        $region148: #{tpu_custom_call.1} parent=143 // pred_fallthru
          _
      $region144: #{tpu_custom_call.1} parent=5 // pred_fallthru
        _
    $region6: #{tpu_custom_call.1} parent=1 // loop_footer
      %s40 = sadd.s32 1, %s36
    $region7: #{tpu_custom_call.1} parent=1 // loop_footer_branch
      %35 = sbr.rel target = $region3
    $region8: #{tpu_custom_call.1} parent=1 // loop_exit
      _
    %5989 = vsyncpa [#allocation5], 1
    %s5990 = scalar_lea.sflag [#allocation5], 1
    %5991 = vsyncpa %s5990, 1
    %5992 = vsyncpa [#allocation8], 1
    %s5993 = scalar_lea.sflag [#allocation8], 1
    %5994 = vsyncpa %s5993, 1
    %5995 = vsyncpa [#allocation11], 1
    %5996 = vsyncpa [#allocation14], 1
    %5997 = vsyncpa [#allocation17], 1
    %5998 = vsyncpa [#allocation20], 1
    %5999 = vsyncpa [#allocation23], 1
    %6000 = vsyncpa [#allocation6], 1
    %s6001 = scalar_lea.sflag [#allocation6], 1
    %6002 = vsyncpa %s6001, 1
    %6003 = vsyncpa [#allocation26], 1

</llo_original>
